<compile_context>
chip_gen: v7x
topology: tpu7x:2x2x1
jax: 0.10.0
libtpu: 0.0.40
codegen_flags: <defaults>
</compile_context>

<pallas_src>
import math
import functools

import jax
import jax.numpy as jnp
from jax.experimental import pallas as pl
from jax.experimental.pallas import tpu as pltpu


def _softplus(v):
    # Numerically-stable softplus, matches torch.nn.Softplus (beta=1) to float tolerance.
    return jnp.maximum(v, 0.0) + jnp.log(1.0 + jnp.exp(-jnp.abs(v)))


def _round_up(x, m):
    return ((x + m - 1) // m) * m


def dff_kernel(sigma_ref, eps_ref,                     # SMEM scalars
               x_ref,
               w1_ref, b1_ref, w2_ref, b2_ref,
               w3_ref, b3_ref, w4_ref, b4_ref,
               w_xc_ref, w_lat_ref,                    # packed RFF weights
               out_ref,
               *, n_rff):
    x = x_ref[...]

    # ---- latent MLP: Linear -> Softplus (x3) -> Linear ----
    h = _softplus(jnp.dot(x, w1_ref[...], preferred_element_type=jnp.float32) + b1_ref[...])
    h = _softplus(jnp.dot(h, w2_ref[...], preferred_element_type=jnp.float32) + b2_ref[...])
    h = _softplus(jnp.dot(h, w3_ref[...], preferred_element_type=jnp.float32) + b3_ref[...])
    lat = jnp.dot(h, w4_ref[...], preferred_element_type=jnp.float32) + b4_ref[...]

    sigma = sigma_ref[0, 0]
    eps = eps_ref[0, 0]
    inv_sigma = 1.0 / sigma

    # eps_exp = exp(eps)/(1+exp(eps)) computed as a stable sigmoid (no overflow for large eps).
    m = jnp.maximum(eps, 0.0)
    num = jnp.exp(eps - m)
    eps_exp = num / (jnp.exp(-m) + num)

    rff_scale = math.sqrt(1.0 / n_rff)                 # np.sqrt(1 / d_out) in RFF_tuneable
    c_prod = rff_scale * jnp.sqrt(1.0 - eps_exp)
    c_in = rff_scale * jnp.sqrt(eps_exp)

    # Scale the (small) activations by 1/sigma instead of the weight matrices.
    x_s = x * inv_sigma
    lat_s = lat * inv_sigma

    # One shared-LHS matmul covers both x-projections (W_prod[:d_in] | W_in), width 2*n_rff;
    # the latent rows of W_prod are applied separately and added to the first half.
    wx_comb = jnp.dot(x_s, w_xc_ref[...], preferred_element_type=jnp.float32)
    wx_p = wx_comb[:, :n_rff] + jnp.dot(lat_s, w_lat_ref[...],
                                        preferred_element_type=jnp.float32)
    wx_in = wx_comb[:, n_rff:]

    # Direct, lane-dense writes into the output slab (no concatenates).
    out_ref[:, 0 * n_rff:1 * n_rff] = (c_prod * jnp.cos(wx_p)).astype(out_ref.dtype)
    out_ref[:, 1 * n_rff:2 * n_rff] = (c_prod * jnp.sin(wx_p)).astype(out_ref.dtype)
    out_ref[:, 2 * n_rff:3 * n_rff] = (c_in * jnp.cos(wx_in)).astype(out_ref.dtype)
    out_ref[:, 3 * n_rff:4 * n_rff] = (c_in * jnp.sin(wx_in)).astype(out_ref.dtype)


def deep_fourier_features(x, params, tile_n=512):
    """Grid over batch rows; weights stay VMEM-resident; one fused kernel per tile."""
    n, d_in = x.shape
    H = params["w1"].shape[1]
    d_latent = params["w4"].shape[1]
    n_rff = params["w_rff_in"].shape[1]

    # Pack the two RFF projections that share LHS x: (d_in, 2*n_rff) and the latent rows.
    w_xc = jnp.concatenate([params["w_rff_prod"][:d_in], params["w_rff_in"]], axis=1)
    w_lat = params["w_rff_prod"][d_in:]

    # Batch tiling (pad to a multiple of the tile so every block is full).
    tile_n = max(8, min(tile_n, _round_up(n, 8)))
    n_pad = _round_up(n, tile_n)
    if n_pad != n:
        x = jnp.pad(x, ((0, n_pad - n), (0, 0)))
    grid = (n_pad // tile_n,)

    const = lambda i: (0, 0)
    row = lambda i: (i, 0)
    smem = functools.partial(pl.BlockSpec, memory_space=pltpu.MemorySpace.SMEM)

    in_specs = [
        smem((1, 1), const),                               # sigma
        smem((1, 1), const),                               # eps
        pl.BlockSpec((tile_n, d_in), row),                 # x tile
        pl.BlockSpec((d_in, H), const), pl.BlockSpec((1, H), const),            # w1, b1
        pl.BlockSpec((H, H), const),    pl.BlockSpec((1, H), const),            # w2, b2
        pl.BlockSpec((H, H), const),    pl.BlockSpec((1, H), const),            # w3, b3
        pl.BlockSpec((H, d_latent), const), pl.BlockSpec((1, d_latent), const), # w4, b4
        pl.BlockSpec((d_in, 2 * n_rff), const),            # packed x-projection weights
        pl.BlockSpec((d_latent, n_rff), const),            # latent-projection weights
    ]
    out_spec = pl.BlockSpec((tile_n, 4 * n_rff), row)

    # VMEM budget: double-buffered x/out tiles + resident weights + intermediates (with margin),
    # clamped so it stays within v7x's 64 MiB physical VMEM with headroom.
    f32 = 4
    io_bytes = 2 * tile_n * (d_in + 4 * n_rff) * f32
    w_bytes = (d_in * H + 2 * H * H + H * d_latent + 3 * H + d_latent
               + d_in * 2 * n_rff + d_latent * n_rff) * f32
    scratch_bytes = tile_n * (3 * H + d_latent + 4 * n_rff) * f32
    vmem_limit = int(min(100 * 1024 * 1024,
                         max(32 * 1024 * 1024,
                             2 * (io_bytes + w_bytes + scratch_bytes))))

    flops = 2 * n_pad * (d_in * H + 2 * H * H + H * d_latent
                         + d_in * 2 * n_rff + d_latent * n_rff)
    transcendentals = n_pad * (4 * n_rff + 6 * H)          # cos/sin + exp/log in 3 softplus
    bytes_accessed = n_pad * (d_in + 4 * n_rff) * f32 + w_bytes + 8

    kernel = functools.partial(dff_kernel, n_rff=n_rff)

    out = pl.pallas_call(
        kernel,
        out_shape=jax.ShapeDtypeStruct((n_pad, 4 * n_rff), jnp.float32),
        grid=grid,
        in_specs=in_specs,
        out_specs=out_spec,
        compiler_params=pltpu.CompilerParams(
            dimension_semantics=("parallel",),
            vmem_limit_bytes=vmem_limit,
        ),
        cost_estimate=pl.CostEstimate(
            flops=flops,
            transcendentals=transcendentals,
            bytes_accessed=bytes_accessed,
        ),
    )(
        params["sigma"], params["eps"], x,
        params["w1"], params["b1"],
        params["w2"], params["b2"],
        params["w3"], params["b3"],
        params["w4"], params["b4"],
        w_xc, w_lat,
    )
    return out[:n]


def init_params(key, d_in, H, d_latent, n_rff, sigma_init=1.0):
    """Deterministic synthetic init (shapes match the torch module; W stored (in, out))."""
    ks = jax.random.split(key, 10)
    s = 0.1
    p = {
        "w1": s * jax.random.normal(ks[0], (d_in, H), jnp.float32),
        "b1": s * jax.random.normal(ks[1], (1, H), jnp.float32),
        "w2": s * jax.random.normal(ks[2], (H, H), jnp.float32),
        "b2": s * jax.random.normal(ks[3], (1, H), jnp.float32),
        "w3": s * jax.random.normal(ks[4], (H, H), jnp.float32),
        "b3": s * jax.random.normal(ks[5], (1, H), jnp.float32),
        "w4": s * jax.random.normal(ks[6], (H, d_latent), jnp.float32),
        "b4": s * jax.random.normal(ks[7], (1, d_latent), jnp.float32),
        # RFF weights ~ N(0,1) as in torch.randn
        "w_rff_in": jax.random.normal(ks[8], (d_in, n_rff), jnp.float32),
        "w_rff_prod": jax.random.normal(ks[9], (d_in + d_latent, n_rff), jnp.float32),
        # scalars (as (1,1) for SMEM)
        "sigma": jnp.full((1, 1), sigma_init, jnp.float32),
        "eps": jnp.zeros((1, 1), jnp.float32),   # eps is a frozen 0.0 parameter in the module
    }
    # NOTE: the RFF bias exists in the torch module but is unused in the 'cosine_sine' variant.
    return p


def reference_forward(x, p):
    """Pure-JAX reference mirroring the PyTorch forward exactly."""
    sigma = p["sigma"][0, 0]
    eps = p["eps"][0, 0]
    eps_exp = jnp.exp(eps) / (1.0 + jnp.exp(eps))

    h = jax.nn.softplus(x @ p["w1"] + p["b1"])
    h = jax.nn.softplus(h @ p["w2"] + p["b2"])
    h = jax.nn.softplus(h @ p["w3"] + p["b3"])
    lat = h @ p["w4"] + p["b4"]

    n_rff = p["w_rff_in"].shape[1]
    scale = math.sqrt(1.0 / n_rff)

    wx_in = x @ (p["w_rff_in"] / sigma)
    phi_in = scale * jnp.concatenate([jnp.cos(wx_in), jnp.sin(wx_in)], axis=-1)

    comb = jnp.concatenate([x, lat], axis=-1)
    wx_p = comb @ (p["w_rff_prod"] / sigma)
    phi_prod = scale * jnp.concatenate([jnp.cos(wx_p), jnp.sin(wx_p)], axis=-1)

    return jnp.concatenate(
        [jnp.sqrt(1.0 - eps_exp) * phi_prod, jnp.sqrt(eps_exp) * phi_in], axis=-1
    )


if __name__ == "__main__":
    # Small shapes; n_rff a multiple of 128 and d_in a multiple of 8 keep blocks lane-dense.
    N, d_in, H, d_latent, n_rff = 256, 8, 32, 16, 128

    key = jax.random.PRNGKey(0)
    kx, kp = jax.random.split(key)
    x = jax.random.normal(kx, (N, d_in), jnp.float32)
    params = init_params(kp, d_in, H, d_latent, n_rff, sigma_init=1.0)

    out = deep_fourier_features(x, params, tile_n=128)   # grid of 2 steps over the batch
    out = jax.block_until_ready(out)

    ref = reference_forward(x, params)
    assert out.shape == (N, 4 * n_rff), out.shape
    err = float(jnp.max(jnp.abs(out - ref)))
    assert err < 2e-5, err

    print("KERNEL_OK")
</pallas_src>

<mosaic_0001>
module attributes {stable_mosaic.version = 11 : i64} {
  func.func @dff_kernel(%arg0: i32, %arg1: memref<1x1xf32, #tpu.memory_space<smem>>, %arg2: memref<1x1xf32, #tpu.memory_space<smem>>, %arg3: memref<128x8xf32, #tpu.memory_space<vmem>>, %arg4: memref<8x32xf32, #tpu.memory_space<vmem>>, %arg5: memref<1x32xf32, #tpu.memory_space<vmem>>, %arg6: memref<32x32xf32, #tpu.memory_space<vmem>>, %arg7: memref<1x32xf32, #tpu.memory_space<vmem>>, %arg8: memref<32x32xf32, #tpu.memory_space<vmem>>, %arg9: memref<1x32xf32, #tpu.memory_space<vmem>>, %arg10: memref<32x16xf32, #tpu.memory_space<vmem>>, %arg11: memref<1x16xf32, #tpu.memory_space<vmem>>, %arg12: memref<8x256xf32, #tpu.memory_space<vmem>>, %arg13: memref<16x128xf32, #tpu.memory_space<vmem>>, %arg14: memref<128x512xf32, #tpu.memory_space<vmem>>) attributes {dimension_semantics = [#tpu.dimension_semantics<parallel>], iteration_bounds = array<i64: 2>, scalar_prefetch = 0 : i64, scratch_operands = 0 : i64, tpu.core_type = #tpu.core_type<tc>, window_params = [{transform_indices = @transform_0, window_bounds = array<i64: 1, 1>}, {transform_indices = @transform_1, window_bounds = array<i64: 1, 1>}, {transform_indices = @transform_2, window_bounds = array<i64: 128, 8>}, {pipeline_mode = #tpu.pipeline_mode<synchronous>, transform_indices = @transform_3, window_bounds = array<i64: 8, 32>}, {pipeline_mode = #tpu.pipeline_mode<synchronous>, transform_indices = @transform_4, window_bounds = array<i64: 1, 32>}, {pipeline_mode = #tpu.pipeline_mode<synchronous>, transform_indices = @transform_5, window_bounds = array<i64: 32, 32>}, {pipeline_mode = #tpu.pipeline_mode<synchronous>, transform_indices = @transform_6, window_bounds = array<i64: 1, 32>}, {pipeline_mode = #tpu.pipeline_mode<synchronous>, transform_indices = @transform_7, window_bounds = array<i64: 32, 32>}, {pipeline_mode = #tpu.pipeline_mode<synchronous>, transform_indices = @transform_8, window_bounds = array<i64: 1, 32>}, {pipeline_mode = #tpu.pipeline_mode<synchronous>, transform_indices = @transform_9, window_bounds = array<i64: 32, 16>}, {pipeline_mode = #tpu.pipeline_mode<synchronous>, transform_indices = @transform_10, window_bounds = array<i64: 1, 16>}, {pipeline_mode = #tpu.pipeline_mode<synchronous>, transform_indices = @transform_11, window_bounds = array<i64: 8, 256>}, {pipeline_mode = #tpu.pipeline_mode<synchronous>, transform_indices = @transform_12, window_bounds = array<i64: 16, 128>}, {transform_indices = @transform_13, window_bounds = array<i64: 128, 512>}]} {
    %c0 = arith.constant 0 : index
    %c0_0 = arith.constant 0 : index
    %0 = vector.load %arg3[%c0, %c0_0] : memref<128x8xf32, #tpu.memory_space<vmem>>, vector<128x8xf32>
    %c0_1 = arith.constant 0 : index
    %c0_2 = arith.constant 0 : index
    %1 = vector.load %arg4[%c0_1, %c0_2] : memref<8x32xf32, #tpu.memory_space<vmem>>, vector<8x32xf32>
    %cst = arith.constant dense<0.000000e+00> : vector<128x32xf32>
    %2 = tpu.matmul %0, %1, %cst {dimension_numbers = #tpu.dot_dimension_numbers<[1], [0], [0], [1], [0, 0, 1, 1], [], []>} : vector<128x8xf32>, vector<8x32xf32>, vector<128x32xf32> -> vector<128x32xf32>
    %c0_3 = arith.constant 0 : index
    %c0_4 = arith.constant 0 : index
    %3 = vector.load %arg5[%c0_3, %c0_4] : memref<1x32xf32, #tpu.memory_space<vmem>>, vector<1x32xf32>
    %4 = vector.broadcast %3 : vector<1x32xf32> to vector<128x32xf32>
    %5 = arith.addf %2, %4 : vector<128x32xf32>
    %cst_5 = arith.constant 0.000000e+00 : f32
    %6 = vector.broadcast %cst_5 : f32 to vector<128x32xf32>
    %7 = arith.maximumf %5, %6 : vector<128x32xf32>
    %8 = math.absf %5 : vector<128x32xf32>
    %cst_6 = arith.constant 0.000000e+00 : f32
    %9 = vector.broadcast %cst_6 : f32 to vector<128x32xf32>
    %10 = arith.subf %9, %8 : vector<128x32xf32>
    %11 = math.exp %10 : vector<128x32xf32>
    %cst_7 = arith.constant 1.000000e+00 : f32
    %12 = vector.broadcast %cst_7 : f32 to vector<128x32xf32>
    %13 = arith.addf %12, %11 : vector<128x32xf32>
    %14 = math.log %13 : vector<128x32xf32>
    %15 = arith.addf %7, %14 : vector<128x32xf32>
    %c0_8 = arith.constant 0 : index
    %c0_9 = arith.constant 0 : index
    %16 = vector.load %arg6[%c0_8, %c0_9] : memref<32x32xf32, #tpu.memory_space<vmem>>, vector<32x32xf32>
    %cst_10 = arith.constant dense<0.000000e+00> : vector<128x32xf32>
    %17 = tpu.matmul %15, %16, %cst_10 {dimension_numbers = #tpu.dot_dimension_numbers<[1], [0], [0], [1], [0, 0, 1, 1], [], []>} : vector<128x32xf32>, vector<32x32xf32>, vector<128x32xf32> -> vector<128x32xf32>
    %c0_11 = arith.constant 0 : index
    %c0_12 = arith.constant 0 : index
    %18 = vector.load %arg7[%c0_11, %c0_12] : memref<1x32xf32, #tpu.memory_space<vmem>>, vector<1x32xf32>
    %19 = vector.broadcast %18 : vector<1x32xf32> to vector<128x32xf32>
    %20 = arith.addf %17, %19 : vector<128x32xf32>
    %cst_13 = arith.constant 0.000000e+00 : f32
    %21 = vector.broadcast %cst_13 : f32 to vector<128x32xf32>
    %22 = arith.maximumf %20, %21 : vector<128x32xf32>
    %23 = math.absf %20 : vector<128x32xf32>
    %cst_14 = arith.constant 0.000000e+00 : f32
    %24 = vector.broadcast %cst_14 : f32 to vector<128x32xf32>
    %25 = arith.subf %24, %23 : vector<128x32xf32>
    %26 = math.exp %25 : vector<128x32xf32>
    %cst_15 = arith.constant 1.000000e+00 : f32
    %27 = vector.broadcast %cst_15 : f32 to vector<128x32xf32>
    %28 = arith.addf %27, %26 : vector<128x32xf32>
    %29 = math.log %28 : vector<128x32xf32>
    %30 = arith.addf %22, %29 : vector<128x32xf32>
    %c0_16 = arith.constant 0 : index
    %c0_17 = arith.constant 0 : index
    %31 = vector.load %arg8[%c0_16, %c0_17] : memref<32x32xf32, #tpu.memory_space<vmem>>, vector<32x32xf32>
    %cst_18 = arith.constant dense<0.000000e+00> : vector<128x32xf32>
    %32 = tpu.matmul %30, %31, %cst_18 {dimension_numbers = #tpu.dot_dimension_numbers<[1], [0], [0], [1], [0, 0, 1, 1], [], []>} : vector<128x32xf32>, vector<32x32xf32>, vector<128x32xf32> -> vector<128x32xf32>
    %c0_19 = arith.constant 0 : index
    %c0_20 = arith.constant 0 : index
    %33 = vector.load %arg9[%c0_19, %c0_20] : memref<1x32xf32, #tpu.memory_space<vmem>>, vector<1x32xf32>
    %34 = vector.broadcast %33 : vector<1x32xf32> to vector<128x32xf32>
    %35 = arith.addf %32, %34 : vector<128x32xf32>
    %cst_21 = arith.constant 0.000000e+00 : f32
    %36 = vector.broadcast %cst_21 : f32 to vector<128x32xf32>
    %37 = arith.maximumf %35, %36 : vector<128x32xf32>
    %38 = math.absf %35 : vector<128x32xf32>
    %cst_22 = arith.constant 0.000000e+00 : f32
    %39 = vector.broadcast %cst_22 : f32 to vector<128x32xf32>
    %40 = arith.subf %39, %38 : vector<128x32xf32>
    %41 = math.exp %40 : vector<128x32xf32>
    %cst_23 = arith.constant 1.000000e+00 : f32
    %42 = vector.broadcast %cst_23 : f32 to vector<128x32xf32>
    %43 = arith.addf %42, %41 : vector<128x32xf32>
    %44 = math.log %43 : vector<128x32xf32>
    %45 = arith.addf %37, %44 : vector<128x32xf32>
    %c0_24 = arith.constant 0 : index
    %c0_25 = arith.constant 0 : index
    %46 = vector.load %arg10[%c0_24, %c0_25] : memref<32x16xf32, #tpu.memory_space<vmem>>, vector<32x16xf32>
    %cst_26 = arith.constant dense<0.000000e+00> : vector<128x16xf32>
    %47 = tpu.matmul %45, %46, %cst_26 {dimension_numbers = #tpu.dot_dimension_numbers<[1], [0], [0], [1], [0, 0, 1, 1], [], []>} : vector<128x32xf32>, vector<32x16xf32>, vector<128x16xf32> -> vector<128x16xf32>
    %c0_27 = arith.constant 0 : index
    %c0_28 = arith.constant 0 : index
    %48 = vector.load %arg11[%c0_27, %c0_28] : memref<1x16xf32, #tpu.memory_space<vmem>>, vector<1x16xf32>
    %49 = vector.broadcast %48 : vector<1x16xf32> to vector<128x16xf32>
    %50 = arith.addf %47, %49 : vector<128x16xf32>
    %c0_29 = arith.constant 0 : index
    %c0_30 = arith.constant 0 : index
    %51 = memref.load %arg1[%c0_29, %c0_30] : memref<1x1xf32, #tpu.memory_space<smem>>
    %c0_31 = arith.constant 0 : index
    %c0_32 = arith.constant 0 : index
    %52 = memref.load %arg2[%c0_31, %c0_32] : memref<1x1xf32, #tpu.memory_space<smem>>
    %cst_33 = arith.constant 1.000000e+00 : f32
    %53 = arith.divf %cst_33, %51 : f32
    %cst_34 = arith.constant 0.000000e+00 : f32
    %54 = arith.maximumf %52, %cst_34 : f32
    %55 = arith.subf %52, %54 : f32
    %56 = math.exp %55 : f32
    %cst_35 = arith.constant 0.000000e+00 : f32
    %57 = arith.subf %cst_35, %54 : f32
    %58 = math.exp %57 : f32
    %59 = arith.addf %58, %56 : f32
    %60 = arith.divf %56, %59 : f32
    %cst_36 = arith.constant 1.000000e+00 : f32
    %61 = arith.subf %cst_36, %60 : f32
    %62 = math.sqrt %61 : f32
    %cst_37 = arith.constant 0.0883883461 : f32
    %63 = arith.mulf %cst_37, %62 : f32
    %64 = math.sqrt %60 : f32
    %cst_38 = arith.constant 0.0883883461 : f32
    %65 = arith.mulf %cst_38, %64 : f32
    %66 = vector.broadcast %53 : f32 to vector<128x8xf32>
    %67 = arith.mulf %0, %66 : vector<128x8xf32>
    %68 = vector.broadcast %53 : f32 to vector<128x16xf32>
    %69 = arith.mulf %50, %68 : vector<128x16xf32>
    %c0_39 = arith.constant 0 : index
    %c0_40 = arith.constant 0 : index
    %70 = vector.load %arg12[%c0_39, %c0_40] : memref<8x256xf32, #tpu.memory_space<vmem>>, vector<8x256xf32>
    %cst_41 = arith.constant dense<0.000000e+00> : vector<128x256xf32>
    %71 = tpu.matmul %67, %70, %cst_41 {dimension_numbers = #tpu.dot_dimension_numbers<[1], [0], [0], [1], [0, 0, 1, 1], [], []>} : vector<128x8xf32>, vector<8x256xf32>, vector<128x256xf32> -> vector<128x256xf32>
    %72 = vector.extract_strided_slice %71 {offsets = [0, 0], sizes = [128, 128], strides = [1, 1]} : vector<128x256xf32> to vector<128x128xf32>
    %c0_42 = arith.constant 0 : index
    %c0_43 = arith.constant 0 : index
    %73 = vector.load %arg13[%c0_42, %c0_43] : memref<16x128xf32, #tpu.memory_space<vmem>>, vector<16x128xf32>
    %cst_44 = arith.constant dense<0.000000e+00> : vector<128x128xf32>
    %74 = tpu.matmul %69, %73, %cst_44 {dimension_numbers = #tpu.dot_dimension_numbers<[1], [0], [0], [1], [0, 0, 1, 1], [], []>} : vector<128x16xf32>, vector<16x128xf32>, vector<128x128xf32> -> vector<128x128xf32>
    %75 = arith.addf %72, %74 : vector<128x128xf32>
    %76 = vector.extract_strided_slice %71 {offsets = [0, 128], sizes = [128, 128], strides = [1, 1]} : vector<128x256xf32> to vector<128x128xf32>
    %77 = math.cos %75 : vector<128x128xf32>
    %78 = vector.broadcast %63 : f32 to vector<128x128xf32>
    %79 = arith.mulf %78, %77 : vector<128x128xf32>
    %c0_45 = arith.constant 0 : index
    %c0_46 = arith.constant 0 : index
    %80 = vector.load %arg14[%c0_45, %c0_46] : memref<128x512xf32, #tpu.memory_space<vmem>>, vector<128x128xf32>
    tpu.vector_store %arg14[%c0_45, %c0_46], %79 {strides = array<i32>} : memref<128x512xf32, #tpu.memory_space<vmem>>, vector<128x128xf32>,
    %81 = math.sin %75 : vector<128x128xf32>
    %82 = vector.broadcast %63 : f32 to vector<128x128xf32>
    %83 = arith.mulf %82, %81 : vector<128x128xf32>
    %c0_47 = arith.constant 0 : index
    %c128 = arith.constant 128 : index
    %84 = vector.load %arg14[%c0_47, %c128] : memref<128x512xf32, #tpu.memory_space<vmem>>, vector<128x128xf32>
    tpu.vector_store %arg14[%c0_47, %c128], %83 {strides = array<i32>} : memref<128x512xf32, #tpu.memory_space<vmem>>, vector<128x128xf32>,
    %85 = math.cos %76 : vector<128x128xf32>
    %86 = vector.broadcast %65 : f32 to vector<128x128xf32>
    %87 = arith.mulf %86, %85 : vector<128x128xf32>
    %c0_48 = arith.constant 0 : index
    %c256 = arith.constant 256 : index
    %88 = vector.load %arg14[%c0_48, %c256] : memref<128x512xf32, #tpu.memory_space<vmem>>, vector<128x128xf32>
    tpu.vector_store %arg14[%c0_48, %c256], %87 {strides = array<i32>} : memref<128x512xf32, #tpu.memory_space<vmem>>, vector<128x128xf32>,
    %89 = math.sin %76 : vector<128x128xf32>
    %90 = vector.broadcast %65 : f32 to vector<128x128xf32>
    %91 = arith.mulf %90, %89 : vector<128x128xf32>
    %c0_49 = arith.constant 0 : index
    %c384 = arith.constant 384 : index
    %92 = vector.load %arg14[%c0_49, %c384] : memref<128x512xf32, #tpu.memory_space<vmem>>, vector<128x128xf32>
    tpu.vector_store %arg14[%c0_49, %c384], %91 {strides = array<i32>} : memref<128x512xf32, #tpu.memory_space<vmem>>, vector<128x128xf32>,
    return
  }
  func.func @transform_0(%arg0: i32) -> (i32, i32) {
    %c0_i32 = arith.constant 0 : i32
    %c0_i32_0 = arith.constant 0 : i32
    %c0_i32_1 = arith.constant 0 : i32
    return %c0_i32, %c0_i32_0 : i32, i32
  }
  func.func @transform_1(%arg0: i32) -> (i32, i32) {
    %c0_i32 = arith.constant 0 : i32
    %c0_i32_0 = arith.constant 0 : i32
    %c0_i32_1 = arith.constant 0 : i32
    return %c0_i32, %c0_i32_0 : i32, i32
  }
  func.func @transform_2(%arg0: i32) -> (i32, i32) {
    %c0_i32 = arith.constant 0 : i32
    %c0_i32_0 = arith.constant 0 : i32
    return %arg0, %c0_i32 : i32, i32
  }
  func.func @transform_3(%arg0: i32) -> (i32, i32) {
    %c0_i32 = arith.constant 0 : i32
    %c0_i32_0 = arith.constant 0 : i32
    %c0_i32_1 = arith.constant 0 : i32
    return %c0_i32, %c0_i32_0 : i32, i32
  }
  func.func @transform_4(%arg0: i32) -> (i32, i32) {
    %c0_i32 = arith.constant 0 : i32
    %c0_i32_0 = arith.constant 0 : i32
    %c0_i32_1 = arith.constant 0 : i32
    return %c0_i32, %c0_i32_0 : i32, i32
  }
  func.func @transform_5(%arg0: i32) -> (i32, i32) {
    %c0_i32 = arith.constant 0 : i32
    %c0_i32_0 = arith.constant 0 : i32
    %c0_i32_1 = arith.constant 0 : i32
    return %c0_i32, %c0_i32_0 : i32, i32
  }
  func.func @transform_6(%arg0: i32) -> (i32, i32) {
    %c0_i32 = arith.constant 0 : i32
    %c0_i32_0 = arith.constant 0 : i32
    %c0_i32_1 = arith.constant 0 : i32
    return %c0_i32, %c0_i32_0 : i32, i32
  }
  func.func @transform_7(%arg0: i32) -> (i32, i32) {
    %c0_i32 = arith.constant 0 : i32
    %c0_i32_0 = arith.constant 0 : i32
    %c0_i32_1 = arith.constant 0 : i32
    return %c0_i32, %c0_i32_0 : i32, i32
  }
  func.func @transform_8(%arg0: i32) -> (i32, i32) {
    %c0_i32 = arith.constant 0 : i32
    %c0_i32_0 = arith.constant 0 : i32
    %c0_i32_1 = arith.constant 0 : i32
    return %c0_i32, %c0_i32_0 : i32, i32
  }
  func.func @transform_9(%arg0: i32) -> (i32, i32) {
    %c0_i32 = arith.constant 0 : i32
    %c0_i32_0 = arith.constant 0 : i32
    %c0_i32_1 = arith.constant 0 : i32
    return %c0_i32, %c0_i32_0 : i32, i32
  }
  func.func @transform_10(%arg0: i32) -> (i32, i32) {
    %c0_i32 = arith.constant 0 : i32
    %c0_i32_0 = arith.constant 0 : i32
    %c0_i32_1 = arith.constant 0 : i32
    return %c0_i32, %c0_i32_0 : i32, i32
  }
  func.func @transform_11(%arg0: i32) -> (i32, i32) {
    %c0_i32 = arith.constant 0 : i32
    %c0_i32_0 = arith.constant 0 : i32
    %c0_i32_1 = arith.constant 0 : i32
    return %c0_i32, %c0_i32_0 : i32, i32
  }
  func.func @transform_12(%arg0: i32) -> (i32, i32) {
    %c0_i32 = arith.constant 0 : i32
    %c0_i32_0 = arith.constant 0 : i32
    %c0_i32_1 = arith.constant 0 : i32
    return %c0_i32, %c0_i32_0 : i32, i32
  }
  func.func @transform_13(%arg0: i32) -> (i32, i32) {
    %c0_i32 = arith.constant 0 : i32
    %c0_i32_0 = arith.constant 0 : i32
    return %arg0, %c0_i32 : i32, i32
  }
}

</mosaic_0001>

<llo_original>
// kernel: tpu_custom_call.1
$region0: #{tpu_custom_call.1}
  #allocation0 [shape = 'u32[]', space=smem, size = 0x4, offset = 0x4, fixed_abs, tag = 'smem constant byte address 0x4 - core index']
  #allocation1 [shape = 'u32[144,128]{1,0:T(1,128)}', space=vmem, size = 0x12000, scoped, tag = 'internal scratch']
  #allocation2 [shape = 'f32[1,1]{1,0:T(1,128)S(6)}', space=smem, size = 0x200, scoped, tag = 'scoped memory for tpu_custom_call.1']
  #allocation3 [shape = 'f32[1,1]{1,0:T(1,128)S(6)}', space=smem, size = 0x200, scoped, tag = 'scoped memory for tpu_custom_call.1']
  %s0 = inlined_call_operand.<no memory space> [shape: f32[1,1], index: 0, kind: input, shape index: {}]
  %s1 = inlined_call_operand.<no memory space> [shape: f32[1,1], index: 1, kind: input, shape index: {}]
  %s2 = inlined_call_operand.vmem [shape: f32[256,8], index: 2, kind: input, shape index: {}]
  %s3 = inlined_call_operand.vmem [shape: f32[8,32], index: 3, kind: input, shape index: {}]
  %s4 = inlined_call_operand.vmem [shape: f32[1,32], index: 4, kind: input, shape index: {}]
  %s5 = inlined_call_operand.vmem [shape: f32[32,32], index: 5, kind: input, shape index: {}]
  %s6 = inlined_call_operand.vmem [shape: f32[1,32], index: 6, kind: input, shape index: {}]
  %s7 = inlined_call_operand.vmem [shape: f32[32,32], index: 7, kind: input, shape index: {}]
  %s8 = inlined_call_operand.vmem [shape: f32[1,32], index: 8, kind: input, shape index: {}]
  %s9 = inlined_call_operand.vmem [shape: f32[32,16], index: 9, kind: input, shape index: {}]
  %s10 = inlined_call_operand.vmem [shape: f32[1,16], index: 10, kind: input, shape index: {}]
  %s11 = inlined_call_operand.vmem [shape: f32[8,256], index: 11, kind: input, shape index: {}]
  %s12 = inlined_call_operand.vmem [shape: f32[16,128], index: 12, kind: input, shape index: {}]
  %s13 = inlined_call_operand.hbm [shape: f32[256,512], index: 13, kind: output, shape index: {}]
  %s14 = sld [smem:[#allocation0]]
  $region85: #{tpu_custom_call.1} parent=0
    _
  %s16 = ssub.s32 1, %s14
  %s17 = scalar_select 0, %s16, %s14
  %18 = sst [smem:[#allocation2]] %s0
  %19 = sst [smem:[#allocation3]] %s1
  $region1: #{tpu_custom_call.1} parent=0
    #allocation4 [shape = 'u8[524288]{0}', space=vmem, size = 0x80000, scoped, tag = 'output window, operand 0']
    #allocation5 [shape = 's32[2]{0}', space=sflag, size = 0x8, scoped, tag = 'scoped memory for tpu_custom_call.1']
    %20 = vsyncpa [#allocation5], 0
    %s21 = scalar_lea.sflag [#allocation5], 1
    %22 = vsyncpa %s21, 0
    loop: start=0, step=1, limit=4
    $region2: #{tpu_custom_call.1} parent=1 // loop_pre_header
      _
    $region3: #{tpu_custom_call.1} parent=1 // loop_header
      %s24 = sphi 0, %s28
      %p25 = scmp.ge.s32.totalorder %s24, 4
      %s32 = sphi 0, %s32
      %s34 = sphi 0, %s32
      %s35 = sphi 0, %s34
      %s49 = sphi 0, %s35
      %s53 = sphi 0, %s53
      %s55 = sphi 0, %s53
      %s56 = sphi 0, %s55
      %s70 = sphi 0, %s56
      %s76 = sphi 0, %s78
      %s79 = sphi 0, %s76
      %s80 = sphi 0, %s79
      %s96 = sphi 0, %s80
      %s100 = sphi 0, %s100
      %s102 = sphi 0, %s100
      %s103 = sphi 0, %s102
      %s117 = sphi 0, %s103
      %s121 = sphi 0, %s121
      %s123 = sphi 0, %s121
      %s124 = sphi 0, %s123
      %s138 = sphi 0, %s124
      %s142 = sphi 0, %s142
      %s144 = sphi 0, %s142
      %s145 = sphi 0, %s144
      %s159 = sphi 0, %s145
      %s163 = sphi 0, %s163
      %s165 = sphi 0, %s163
      %s166 = sphi 0, %s165
      %s180 = sphi 0, %s166
      %s184 = sphi 0, %s184
      %s186 = sphi 0, %s184
      %s187 = sphi 0, %s186
      %s201 = sphi 0, %s187
      %s205 = sphi 0, %s205
      %s207 = sphi 0, %s205
      %s208 = sphi 0, %s207
      %s222 = sphi 0, %s208
      %s226 = sphi 0, %s226
      %s228 = sphi 0, %s226
      %s229 = sphi 0, %s228
      %s243 = sphi 0, %s229
      %s247 = sphi 0, %s247
      %s249 = sphi 0, %s247
      %s250 = sphi 0, %s249
      %s264 = sphi 0, %s250
      %s268 = sphi 0, %s268
      %s270 = sphi 0, %s268
      %s271 = sphi 0, %s270
      %s285 = sphi 0, %s271
      %s289 = sphi 0, %s289
      %s291 = sphi 0, %s289
      %s292 = sphi 0, %s291
      %s306 = sphi 0, %s292
      %s312 = sphi 0, %s314
      %s315 = sphi 0, %s312
      %s316 = sphi 0, %s315
      %s332 = sphi 0, %s316
    $region4: #{tpu_custom_call.1} parent=1 // loop_header_branch
      %27 = sbr.rel (%p25) target = $region8
    $region5: #{tpu_custom_call.1} parent=1 // loop_body
      %s29 = ssub.s32 %s24, 1
      %s30 = ssub.s32 %s24, 2
      %s31 = sadd.s32 %s24, 1
      %s33 = sadd.s32 %s32, 1
      %p36 = scmp.eq.s32.totalorder %s24, 1
      %p37 = scmp.ne.s32.totalorder %s32, %s34
      %p38 = scmp.eq.s32.totalorder %s24, 0
      %p39 = por %p37, %p38
      %p40 = scmp.ne.s32.totalorder %s32, %s34
      %p41 = scmp.eq.s32.totalorder %s29, 1
      %p42 = por %p40, %p41
      %p43 = scmp.ne.s32.totalorder %s34, %s35
      %p44 = scmp.eq.s32.totalorder %s29, 0
      %p45 = por %p43, %p44
      %p46 = scmp.ne.s32.totalorder %s34, %s35
      %p47 = scmp.eq.s32.totalorder %s30, 1
      %p48 = por %p46, %p47
      %p50 = scmp.ne.s32.totalorder %s35, %s49
      %p51 = scmp.eq.s32.totalorder %s30, 0
      %p52 = por %p50, %p51
      %s54 = sadd.s32 %s53, 1
      %p57 = scmp.eq.s32.totalorder %s24, 1
      %p58 = scmp.ne.s32.totalorder %s53, %s55
      %p59 = scmp.eq.s32.totalorder %s24, 0
      %p60 = por %p58, %p59
      %p61 = scmp.ne.s32.totalorder %s53, %s55
      %p62 = scmp.eq.s32.totalorder %s29, 1
      %p63 = por %p61, %p62
      %p64 = scmp.ne.s32.totalorder %s55, %s56
      %p65 = scmp.eq.s32.totalorder %s29, 0
      %p66 = por %p64, %p65
      %p67 = scmp.ne.s32.totalorder %s55, %s56
      %p68 = scmp.eq.s32.totalorder %s30, 1
      %p69 = por %p67, %p68
      %p71 = scmp.ne.s32.totalorder %s56, %s70
      %p72 = scmp.eq.s32.totalorder %s30, 0
      %p73 = por %p71, %p72
      %s74 = ssub.s32 %s24, %s31
      %p75 = scmp.eq.s32.totalorder %s74, 0
      %s77 = sadd.s32 %s76, 1
      %s78 = scalar_select %p75, %s76, %s77
      %p81 = pneg %p75
      %p82 = scmp.eq.s32.totalorder %s24, 1
      %p83 = por %p81, %p82
      %p84 = scmp.ne.s32.totalorder %s76, %s79
      %p85 = scmp.eq.s32.totalorder %s24, 0
      %p86 = por %p84, %p85
      %p87 = scmp.ne.s32.totalorder %s76, %s79
      %p88 = scmp.eq.s32.totalorder %s29, 1
      %p89 = por %p87, %p88
      %p90 = scmp.ne.s32.totalorder %s79, %s80
      %p91 = scmp.eq.s32.totalorder %s29, 0
      %p92 = por %p90, %p91
      %p93 = scmp.ne.s32.totalorder %s79, %s80
      %p94 = scmp.eq.s32.totalorder %s30, 1
      %p95 = por %p93, %p94
      %p97 = scmp.ne.s32.totalorder %s80, %s96
      %p98 = scmp.eq.s32.totalorder %s30, 0
      %p99 = por %p97, %p98
      %s101 = sadd.s32 %s100, 1
      %p104 = scmp.eq.s32.totalorder %s24, 1
      %p105 = scmp.ne.s32.totalorder %s100, %s102
      %p106 = scmp.eq.s32.totalorder %s24, 0
      %p107 = por %p105, %p106
      %p108 = scmp.ne.s32.totalorder %s100, %s102
      %p109 = scmp.eq.s32.totalorder %s29, 1
      %p110 = por %p108, %p109
      %p111 = scmp.ne.s32.totalorder %s102, %s103
      %p112 = scmp.eq.s32.totalorder %s29, 0
      %p113 = por %p111, %p112
      %p114 = scmp.ne.s32.totalorder %s102, %s103
      %p115 = scmp.eq.s32.totalorder %s30, 1
      %p116 = por %p114, %p115
      %p118 = scmp.ne.s32.totalorder %s103, %s117
      %p119 = scmp.eq.s32.totalorder %s30, 0
      %p120 = por %p118, %p119
      %s122 = sadd.s32 %s121, 1
      %p125 = scmp.eq.s32.totalorder %s24, 1
      %p126 = scmp.ne.s32.totalorder %s121, %s123
      %p127 = scmp.eq.s32.totalorder %s24, 0
      %p128 = por %p126, %p127
      %p129 = scmp.ne.s32.totalorder %s121, %s123
      %p130 = scmp.eq.s32.totalorder %s29, 1
      %p131 = por %p129, %p130
      %p132 = scmp.ne.s32.totalorder %s123, %s124
      %p133 = scmp.eq.s32.totalorder %s29, 0
      %p134 = por %p132, %p133
      %p135 = scmp.ne.s32.totalorder %s123, %s124
      %p136 = scmp.eq.s32.totalorder %s30, 1
      %p137 = por %p135, %p136
      %p139 = scmp.ne.s32.totalorder %s124, %s138
      %p140 = scmp.eq.s32.totalorder %s30, 0
      %p141 = por %p139, %p140
      %s143 = sadd.s32 %s142, 1
      %p146 = scmp.eq.s32.totalorder %s24, 1
      %p147 = scmp.ne.s32.totalorder %s142, %s144
      %p148 = scmp.eq.s32.totalorder %s24, 0
      %p149 = por %p147, %p148
      %p150 = scmp.ne.s32.totalorder %s142, %s144
      %p151 = scmp.eq.s32.totalorder %s29, 1
      %p152 = por %p150, %p151
      %p153 = scmp.ne.s32.totalorder %s144, %s145
      %p154 = scmp.eq.s32.totalorder %s29, 0
      %p155 = por %p153, %p154
      %p156 = scmp.ne.s32.totalorder %s144, %s145
      %p157 = scmp.eq.s32.totalorder %s30, 1
      %p158 = por %p156, %p157
      %p160 = scmp.ne.s32.totalorder %s145, %s159
      %p161 = scmp.eq.s32.totalorder %s30, 0
      %p162 = por %p160, %p161
      %s164 = sadd.s32 %s163, 1
      %p167 = scmp.eq.s32.totalorder %s24, 1
      %p168 = scmp.ne.s32.totalorder %s163, %s165
      %p169 = scmp.eq.s32.totalorder %s24, 0
      %p170 = por %p168, %p169
      %p171 = scmp.ne.s32.totalorder %s163, %s165
      %p172 = scmp.eq.s32.totalorder %s29, 1
      %p173 = por %p171, %p172
      %p174 = scmp.ne.s32.totalorder %s165, %s166
      %p175 = scmp.eq.s32.totalorder %s29, 0
      %p176 = por %p174, %p175
      %p177 = scmp.ne.s32.totalorder %s165, %s166
      %p178 = scmp.eq.s32.totalorder %s30, 1
      %p179 = por %p177, %p178
      %p181 = scmp.ne.s32.totalorder %s166, %s180
      %p182 = scmp.eq.s32.totalorder %s30, 0
      %p183 = por %p181, %p182
      %s185 = sadd.s32 %s184, 1
      %p188 = scmp.eq.s32.totalorder %s24, 1
      %p189 = scmp.ne.s32.totalorder %s184, %s186
      %p190 = scmp.eq.s32.totalorder %s24, 0
      %p191 = por %p189, %p190
      %p192 = scmp.ne.s32.totalorder %s184, %s186
      %p193 = scmp.eq.s32.totalorder %s29, 1
      %p194 = por %p192, %p193
      %p195 = scmp.ne.s32.totalorder %s186, %s187
      %p196 = scmp.eq.s32.totalorder %s29, 0
      %p197 = por %p195, %p196
      %p198 = scmp.ne.s32.totalorder %s186, %s187
      %p199 = scmp.eq.s32.totalorder %s30, 1
      %p200 = por %p198, %p199
      %p202 = scmp.ne.s32.totalorder %s187, %s201
      %p203 = scmp.eq.s32.totalorder %s30, 0
      %p204 = por %p202, %p203
      %s206 = sadd.s32 %s205, 1
      %p209 = scmp.eq.s32.totalorder %s24, 1
      %p210 = scmp.ne.s32.totalorder %s205, %s207
      %p211 = scmp.eq.s32.totalorder %s24, 0
      %p212 = por %p210, %p211
      %p213 = scmp.ne.s32.totalorder %s205, %s207
      %p214 = scmp.eq.s32.totalorder %s29, 1
      %p215 = por %p213, %p214
      %p216 = scmp.ne.s32.totalorder %s207, %s208
      %p217 = scmp.eq.s32.totalorder %s29, 0
      %p218 = por %p216, %p217
      %p219 = scmp.ne.s32.totalorder %s207, %s208
      %p220 = scmp.eq.s32.totalorder %s30, 1
      %p221 = por %p219, %p220
      %p223 = scmp.ne.s32.totalorder %s208, %s222
      %p224 = scmp.eq.s32.totalorder %s30, 0
      %p225 = por %p223, %p224
      %s227 = sadd.s32 %s226, 1
      %p230 = scmp.eq.s32.totalorder %s24, 1
      %p231 = scmp.ne.s32.totalorder %s226, %s228
      %p232 = scmp.eq.s32.totalorder %s24, 0
      %p233 = por %p231, %p232
      %p234 = scmp.ne.s32.totalorder %s226, %s228
      %p235 = scmp.eq.s32.totalorder %s29, 1
      %p236 = por %p234, %p235
      %p237 = scmp.ne.s32.totalorder %s228, %s229
      %p238 = scmp.eq.s32.totalorder %s29, 0
      %p239 = por %p237, %p238
      %p240 = scmp.ne.s32.totalorder %s228, %s229
      %p241 = scmp.eq.s32.totalorder %s30, 1
      %p242 = por %p240, %p241
      %p244 = scmp.ne.s32.totalorder %s229, %s243
      %p245 = scmp.eq.s32.totalorder %s30, 0
      %p246 = por %p244, %p245
      %s248 = sadd.s32 %s247, 1
      %p251 = scmp.eq.s32.totalorder %s24, 1
      %p252 = scmp.ne.s32.totalorder %s247, %s249
      %p253 = scmp.eq.s32.totalorder %s24, 0
      %p254 = por %p252, %p253
      %p255 = scmp.ne.s32.totalorder %s247, %s249
      %p256 = scmp.eq.s32.totalorder %s29, 1
      %p257 = por %p255, %p256
      %p258 = scmp.ne.s32.totalorder %s249, %s250
      %p259 = scmp.eq.s32.totalorder %s29, 0
      %p260 = por %p258, %p259
      %p261 = scmp.ne.s32.totalorder %s249, %s250
      %p262 = scmp.eq.s32.totalorder %s30, 1
      %p263 = por %p261, %p262
      %p265 = scmp.ne.s32.totalorder %s250, %s264
      %p266 = scmp.eq.s32.totalorder %s30, 0
      %p267 = por %p265, %p266
      %s269 = sadd.s32 %s268, 1
      %p272 = scmp.eq.s32.totalorder %s24, 1
      %p273 = scmp.ne.s32.totalorder %s268, %s270
      %p274 = scmp.eq.s32.totalorder %s24, 0
      %p275 = por %p273, %p274
      %p276 = scmp.ne.s32.totalorder %s268, %s270
      %p277 = scmp.eq.s32.totalorder %s29, 1
      %p278 = por %p276, %p277
      %p279 = scmp.ne.s32.totalorder %s270, %s271
      %p280 = scmp.eq.s32.totalorder %s29, 0
      %p281 = por %p279, %p280
      %p282 = scmp.ne.s32.totalorder %s270, %s271
      %p283 = scmp.eq.s32.totalorder %s30, 1
      %p284 = por %p282, %p283
      %p286 = scmp.ne.s32.totalorder %s271, %s285
      %p287 = scmp.eq.s32.totalorder %s30, 0
      %p288 = por %p286, %p287
      %s290 = sadd.s32 %s289, 1
      %p293 = scmp.eq.s32.totalorder %s24, 1
      %p294 = scmp.ne.s32.totalorder %s289, %s291
      %p295 = scmp.eq.s32.totalorder %s24, 0
      %p296 = por %p294, %p295
      %p297 = scmp.ne.s32.totalorder %s289, %s291
      %p298 = scmp.eq.s32.totalorder %s29, 1
      %p299 = por %p297, %p298
      %p300 = scmp.ne.s32.totalorder %s291, %s292
      %p301 = scmp.eq.s32.totalorder %s29, 0
      %p302 = por %p300, %p301
      %p303 = scmp.ne.s32.totalorder %s291, %s292
      %p304 = scmp.eq.s32.totalorder %s30, 1
      %p305 = por %p303, %p304
      %p307 = scmp.ne.s32.totalorder %s292, %s306
      %p308 = scmp.eq.s32.totalorder %s30, 0
      %p309 = por %p307, %p308
      %s310 = ssub.s32 %s24, %s31
      %p311 = scmp.eq.s32.totalorder %s310, 0
      %s313 = sadd.s32 %s312, 1
      %s314 = scalar_select %p311, %s312, %s313
      %p317 = pneg %p311
      %p318 = scmp.eq.s32.totalorder %s24, 1
      %p319 = por %p317, %p318
      %p320 = scmp.ne.s32.totalorder %s312, %s315
      %p321 = scmp.eq.s32.totalorder %s24, 0
      %p322 = por %p320, %p321
      %p323 = scmp.ne.s32.totalorder %s312, %s315
      %p324 = scmp.eq.s32.totalorder %s29, 1
      %p325 = por %p323, %p324
      %p326 = scmp.ne.s32.totalorder %s315, %s316
      %p327 = scmp.eq.s32.totalorder %s29, 0
      %p328 = por %p326, %p327
      %p329 = scmp.ne.s32.totalorder %s315, %s316
      %p330 = scmp.eq.s32.totalorder %s30, 1
      %p331 = por %p329, %p330
      %p333 = scmp.ne.s32.totalorder %s316, %s332
      %p334 = scmp.eq.s32.totalorder %s30, 0
      %p335 = por %p333, %p334
      %p336 = scmp.le.s32.totalorder 1, %s24
      %p337 = scmp.lt.s32.totalorder %s24, 3
      %p338 = pnand %p336, %p337
      %p339 = pneg %p338
      // Predicated region
      $region9: #{tpu_custom_call.1} parent=5 // pred_check
        _
      $region10: #{tpu_custom_call.1} parent=5 // pred_check_branch
        %341 = sbr.rel (%p338) target = $region12
      $region11: #{tpu_custom_call.1} parent=5 // pred_region
        %s342 = ssub.s32 %s24, 1
        // Predicated region
        $region13: #{tpu_custom_call.1} parent=11 // pred_check
          %p343 = pneg %p45
        $region14: #{tpu_custom_call.1} parent=11 // pred_check_branch
          %345 = sbr.rel (%p343) target = $region16
        $region15: #{tpu_custom_call.1} parent=11 // pred_region
          _
        $region16: #{tpu_custom_call.1} parent=11 // pred_fallthru
          _
        // Predicated region
        $region17: #{tpu_custom_call.1} parent=11 // pred_check
          %p346 = pneg %p66
        $region18: #{tpu_custom_call.1} parent=11 // pred_check_branch
          %348 = sbr.rel (%p346) target = $region20
        $region19: #{tpu_custom_call.1} parent=11 // pred_region
          _
        $region20: #{tpu_custom_call.1} parent=11 // pred_fallthru
          _
        // Predicated region
        $region21: #{tpu_custom_call.1} parent=11 // pred_check
          %p349 = pneg %p113
        $region22: #{tpu_custom_call.1} parent=11 // pred_check_branch
          %351 = sbr.rel (%p349) target = $region24
        $region23: #{tpu_custom_call.1} parent=11 // pred_region
          _
        $region24: #{tpu_custom_call.1} parent=11 // pred_fallthru
          _
        // Predicated region
        $region25: #{tpu_custom_call.1} parent=11 // pred_check
          %p352 = pneg %p134
        $region26: #{tpu_custom_call.1} parent=11 // pred_check_branch
          %354 = sbr.rel (%p352) target = $region28
        $region27: #{tpu_custom_call.1} parent=11 // pred_region
          _
        $region28: #{tpu_custom_call.1} parent=11 // pred_fallthru
          _
        // Predicated region
        $region29: #{tpu_custom_call.1} parent=11 // pred_check
          %p355 = pneg %p155
        $region30: #{tpu_custom_call.1} parent=11 // pred_check_branch
          %357 = sbr.rel (%p355) target = $region32
        $region31: #{tpu_custom_call.1} parent=11 // pred_region
          _
        $region32: #{tpu_custom_call.1} parent=11 // pred_fallthru
          _
        // Predicated region
        $region33: #{tpu_custom_call.1} parent=11 // pred_check
          %p358 = pneg %p176
        $region34: #{tpu_custom_call.1} parent=11 // pred_check_branch
          %360 = sbr.rel (%p358) target = $region36
        $region35: #{tpu_custom_call.1} parent=11 // pred_region
          _
        $region36: #{tpu_custom_call.1} parent=11 // pred_fallthru
          _
        // Predicated region
        $region37: #{tpu_custom_call.1} parent=11 // pred_check
          %p361 = pneg %p197
        $region38: #{tpu_custom_call.1} parent=11 // pred_check_branch
          %363 = sbr.rel (%p361) target = $region40
        $region39: #{tpu_custom_call.1} parent=11 // pred_region
          _
        $region40: #{tpu_custom_call.1} parent=11 // pred_fallthru
          _
        // Predicated region
        $region41: #{tpu_custom_call.1} parent=11 // pred_check
          %p364 = pneg %p218
        $region42: #{tpu_custom_call.1} parent=11 // pred_check_branch
          %366 = sbr.rel (%p364) target = $region44
        $region43: #{tpu_custom_call.1} parent=11 // pred_region
          _
        $region44: #{tpu_custom_call.1} parent=11 // pred_fallthru
          _
        // Predicated region
        $region45: #{tpu_custom_call.1} parent=11 // pred_check
          %p367 = pneg %p239
        $region46: #{tpu_custom_call.1} parent=11 // pred_check_branch
          %369 = sbr.rel (%p367) target = $region48
        $region47: #{tpu_custom_call.1} parent=11 // pred_region
          _
        $region48: #{tpu_custom_call.1} parent=11 // pred_fallthru
          _
        // Predicated region
        $region49: #{tpu_custom_call.1} parent=11 // pred_check
          %p370 = pneg %p260
        $region50: #{tpu_custom_call.1} parent=11 // pred_check_branch
          %372 = sbr.rel (%p370) target = $region52
        $region51: #{tpu_custom_call.1} parent=11 // pred_region
          _
        $region52: #{tpu_custom_call.1} parent=11 // pred_fallthru
          _
        // Predicated region
        $region53: #{tpu_custom_call.1} parent=11 // pred_check
          %p373 = pneg %p281
        $region54: #{tpu_custom_call.1} parent=11 // pred_check_branch
          %375 = sbr.rel (%p373) target = $region56
        $region55: #{tpu_custom_call.1} parent=11 // pred_region
          _
        $region56: #{tpu_custom_call.1} parent=11 // pred_fallthru
          _
        // Predicated region
        $region57: #{tpu_custom_call.1} parent=11 // pred_check
          %p376 = pneg %p302
        $region58: #{tpu_custom_call.1} parent=11 // pred_check_branch
          %378 = sbr.rel (%p376) target = $region60
        $region59: #{tpu_custom_call.1} parent=11 // pred_region
          _
        $region60: #{tpu_custom_call.1} parent=11 // pred_fallthru
          _
      $region12: #{tpu_custom_call.1} parent=5 // pred_fallthru
        _
      %p379 = scmp.lt.s32.totalorder %s24, 2
      // Predicated region
      $region61: #{tpu_custom_call.1} parent=5 // pred_check
        %p380 = pneg %p379
      $region62: #{tpu_custom_call.1} parent=5 // pred_check_branch
        %382 = sbr.rel (%p380) target = $region64
      $region63: #{tpu_custom_call.1} parent=5 // pred_region
        // Predicated region
        $region65: #{tpu_custom_call.1} parent=63 // pred_check
          %p383 = pneg %p86
        $region66: #{tpu_custom_call.1} parent=63 // pred_check_branch
          %385 = sbr.rel (%p383) target = $region68
        $region67: #{tpu_custom_call.1} parent=63 // pred_region
          %s386 = smul.u32 16, %s24
          %p387 = scmp.lt.s32.totalorder %s386, 31
          %s388 = scalar_select %p387, %s386, 31
          %s389 = smul.addr %s388, 8
          %s390 = scalar_lea.vmem %s2, %s389
          %s391 = smul.u32 16, %s24
        $region68: #{tpu_custom_call.1} parent=63 // pred_fallthru
          _
      $region64: #{tpu_custom_call.1} parent=5 // pred_fallthru
        _
      %p392 = scmp.le.s32.totalorder 1, %s24
      %p393 = scmp.lt.s32.totalorder %s24, 3
      %p394 = pnand %p392, %p393
      %p395 = pneg %p394
      // Predicated region
      $region69: #{tpu_custom_call.1} parent=5 // pred_check
        _
      $region70: #{tpu_custom_call.1} parent=5 // pred_check_branch
        %397 = sbr.rel (%p394) target = $region72
      $region71: #{tpu_custom_call.1} parent=5 // pred_region
        %s398 = ssub.s32 %s24, 1
        %p399 = pneg %p45
        %p400 = pneg %p42
        %p401 = pneg %p66
        %p402 = pneg %p63
        %s403 = smul.u32 16, %s29
        %p404 = scmp.lt.s32.totalorder %s403, 31
        %s405 = scalar_select %p404, %s403, 31
        %s406 = smul.addr %s405, 8
        %s407 = scalar_lea.vmem %s2, %s406
        %p408 = pneg %p92
        %p409 = pneg %p89
        %p410 = pneg %p113
        %p411 = pneg %p110
        %p412 = pneg %p134
        %p413 = pneg %p131
        %p414 = pneg %p155
        %p415 = pneg %p152
        %p416 = pneg %p176
        %p417 = pneg %p173
        %p418 = pneg %p197
        %p419 = pneg %p194
        %p420 = pneg %p218
        %p421 = pneg %p215
        %p422 = pneg %p239
        %p423 = pneg %p236
        %p424 = pneg %p260
        %p425 = pneg %p257
        %p426 = pneg %p281
        %p427 = pneg %p278
        %p428 = pneg %p302
        %p429 = pneg %p299
        %p430 = pneg %p328
        %p431 = pneg %p325
        %s432 = sand.u32 %s315, 1
        %s433 = scalar_lea.sflag [#allocation5], %s432
        %s434 = sand.u32 %s315, 1
        %s435 = smul.addr %s434, 512
        %s436 = scalar_lea.vmem [#allocation4], %s435
        %s437 = smul.u32 16, %s29
        %p438 = scmp.lt.s32.totalorder %s437, 31
        %s439 = scalar_select %p438, %s437, 31
        %s440 = smul.addr %s439, 8
        %s441 = scalar_lea.vmem %s2, %s440
        %s442 = smul.u32 16, %s29
        %s443 = smul.u32 16, %s29
        %v444 = vld [vmem:[%s441] sm:$0xff]
        %v445 = vld [vmem:[%s441 + $0x8] sm:$0xff]
        %v446 = vld [vmem:[%s441 + $0x10] sm:$0xff]
        %v447 = vld [vmem:[%s441 + $0x18] sm:$0xff]
        %v448 = vld [vmem:[%s441 + $0x20] sm:$0xff]
        %v449 = vld [vmem:[%s441 + $0x28] sm:$0xff]
        %v450 = vld [vmem:[%s441 + $0x30] sm:$0xff]
        %v451 = vld [vmem:[%s441 + $0x38] sm:$0xff]
        %v452 = vld [vmem:[%s441 + $0x40] sm:$0xff]
        %v453 = vld [vmem:[%s441 + $0x48] sm:$0xff]
        %v454 = vld [vmem:[%s441 + $0x50] sm:$0xff]
        %v455 = vld [vmem:[%s441 + $0x58] sm:$0xff]
        %v456 = vld [vmem:[%s441 + $0x60] sm:$0xff]
        %v457 = vld [vmem:[%s441 + $0x68] sm:$0xff]
        %v458 = vld [vmem:[%s441 + $0x70] sm:$0xff]
        %v459 = vld [vmem:[%s441 + $0x78] sm:$0xff]
        %v460 = vld [vmem:[%s3] sm:$0xff]
        %v461 = vld [vmem:[%s4] sm:$0x1]
        %v463 = vlaneseq
        %v464 = vshrl.u32 %v463, 7
        %v465 = vsub.s32 0, %v464
        %v466 = vrot.slane %v461, %v465
        %vm468 = vcmask 64512
        %v470 = vsel %vm468, %v444, 0
        %v473 = vsel %vm468, %v445, 0
        %v476 = vsel %vm468, %v446, 0
        %v479 = vsel %vm468, %v447, 0
        %v482 = vsel %vm468, %v448, 0
        %v485 = vsel %vm468, %v449, 0
        %v488 = vsel %vm468, %v450, 0
        %v491 = vsel %vm468, %v451, 0
        %v494 = vsel %vm468, %v452, 0
        %v497 = vsel %vm468, %v453, 0
        %v500 = vsel %vm468, %v454, 0
        %v503 = vsel %vm468, %v455, 0
        %v506 = vsel %vm468, %v456, 0
        %v509 = vsel %vm468, %v457, 0
        %v512 = vsel %vm468, %v458, 0
        %v515 = vsel %vm468, %v459, 0
        %517 = vmatprep.subr.mxu0 0.0
        %518 = vmatpush1.msra.mxu0 %v460
        %519 = vmatprep.subr.mxu0 0.0
        %520 = vmatpush1.msra.mxu0 0.0
        %521 = vmatprep.subr.mxu0 0.0
        %522 = vmatpush1.msra.mxu0 0.0
        %523 = vmatprep.subr.mxu0 0.0
        %524 = vmatpush1.msra.mxu0 0.0
        %525 = vmatprep.subr.mxu0 0.0
        %526 = vmatpush1.msra.mxu0 0.0
        %527 = vmatprep.subr.mxu0 0.0
        %528 = vmatpush1.msra.mxu0 0.0
        %529 = vmatprep.subr.mxu0 0.0
        %530 = vmatpush1.msra.mxu0 0.0
        %531 = vmatprep.subr.mxu0 0.0
        %532 = vmatpush1.msra.mxu0 0.0
        %533 = vmatprep.subr.mxu0 0.0
        %534 = vmatpush1.msra.mxu0 0.0
        %535 = vmatprep.subr.mxu0 0.0
        %536 = vmatpush1.msra.mxu0 0.0
        %537 = vmatprep.subr.mxu0 0.0
        %538 = vmatpush1.msra.mxu0 0.0
        %539 = vmatprep.subr.mxu0 0.0
        %540 = vmatpush1.msra.mxu0 0.0
        %541 = vmatprep.subr.mxu0 0.0
        %542 = vmatpush1.msra.mxu0 0.0
        %543 = vmatprep.subr.mxu0 0.0
        %544 = vmatpush1.msra.mxu0 0.0
        %545 = vmatprep.subr.mxu0 0.0
        %546 = vmatpush1.msra.mxu0 0.0
        %547 = vmatprep.subr.mxu0 0.0
        %548 = vmatpush1.msra.mxu0 0.0
        %549 = vmatprep.subr.mxu0 0.0
        %550 = vmatpush1.msra.mxu0 0.0
        %551 = vmatprep.subr.mxu0 0.0
        %552 = vmatpush1.msra.mxu0 0.0
        %553 = vmatprep.subr.mxu0 0.0
        %554 = vmatpush1.msra.mxu0 0.0
        %555 = vmatprep.subr.mxu0 0.0
        %556 = vmatpush1.msra.mxu0 0.0
        %557 = vmatprep.subr.mxu0 0.0
        %558 = vmatpush1.msra.mxu0 0.0
        %559 = vmatprep.subr.mxu0 0.0
        %560 = vmatpush1.msra.mxu0 0.0
        %561 = vmatprep.subr.mxu0 0.0
        %562 = vmatpush1.msra.mxu0 0.0
        %563 = vmatprep.subr.mxu0 0.0
        %564 = vmatpush1.msra.mxu0 0.0
        %565 = vmatprep.subr.mxu0 0.0
        %566 = vmatpush1.msra.mxu0 0.0
        %567 = vmatprep.subr.mxu0 0.0
        %568 = vmatpush1.msra.mxu0 0.0
        %569 = vmatprep.subr.mxu0 0.0
        %570 = vmatpush1.msra.mxu0 0.0
        %571 = vmatprep.subr.mxu0 0.0
        %572 = vmatpush1.msra.mxu0 0.0
        %573 = vmatprep.subr.mxu0 0.0
        %574 = vmatpush1.msra.mxu0 0.0
        %575 = vmatprep.subr.mxu0 0.0
        %576 = vmatpush1.msra.mxu0 0.0
        %577 = vmatprep.subr.mxu0 0.0
        %578 = vmatpush1.msra.mxu0 0.0
        %579 = vmatprep.subr.mxu0 0.0
        %580 = vmatpush1.msra.mxu0 0.0
        %581 = vmatprep.mubr.f32.mxu0 0.0
        %582 = vmatmul.mubr.f32.gmra.mrb[0].mxu0 %v470
        %v583 = vpop.f32.mrb[0].mxu0
        %v584 = vadd.f32 %v466, %v583
        %v585 = vpop.f32.mrb[0].mxu0
        %586 = vmatprep.mubr.f32.mxu0 0.0
        %587 = vmatmul.mubr.f32.gmra.mrb[0].mxu0 %v473
        %v588 = vpop.f32.mrb[0].mxu0
        %v589 = vadd.f32 %v466, %v588
        %v590 = vpop.f32.mrb[0].mxu0
        %591 = vmatprep.mubr.f32.mxu0 0.0
        %592 = vmatmul.mubr.f32.gmra.mrb[0].mxu0 %v476
        %v593 = vpop.f32.mrb[0].mxu0
        %v594 = vadd.f32 %v466, %v593
        %v595 = vpop.f32.mrb[0].mxu0
        %596 = vmatprep.mubr.f32.mxu0 0.0
        %597 = vmatmul.mubr.f32.gmra.mrb[0].mxu0 %v479
        %v598 = vpop.f32.mrb[0].mxu0
        %v599 = vadd.f32 %v466, %v598
        %v600 = vpop.f32.mrb[0].mxu0
        %601 = vmatprep.mubr.f32.mxu0 0.0
        %602 = vmatmul.mubr.f32.gmra.mrb[0].mxu0 %v482
        %v603 = vpop.f32.mrb[0].mxu0
        %v604 = vadd.f32 %v466, %v603
        %v605 = vpop.f32.mrb[0].mxu0
        %606 = vmatprep.mubr.f32.mxu0 0.0
        %607 = vmatmul.mubr.f32.gmra.mrb[0].mxu0 %v485
        %v608 = vpop.f32.mrb[0].mxu0
        %v609 = vadd.f32 %v466, %v608
        %v610 = vpop.f32.mrb[0].mxu0
        %611 = vmatprep.mubr.f32.mxu0 0.0
        %612 = vmatmul.mubr.f32.gmra.mrb[0].mxu0 %v488
        %v613 = vpop.f32.mrb[0].mxu0
        %v614 = vadd.f32 %v466, %v613
        %v615 = vpop.f32.mrb[0].mxu0
        %616 = vmatprep.mubr.f32.mxu0 0.0
        %617 = vmatmul.mubr.f32.gmra.mrb[0].mxu0 %v491
        %v618 = vpop.f32.mrb[0].mxu0
        %v619 = vadd.f32 %v466, %v618
        %v620 = vpop.f32.mrb[0].mxu0
        %621 = vmatprep.mubr.f32.mxu0 0.0
        %622 = vmatmul.mubr.f32.gmra.mrb[0].mxu0 %v494
        %v623 = vpop.f32.mrb[0].mxu0
        %v624 = vadd.f32 %v466, %v623
        %v625 = vpop.f32.mrb[0].mxu0
        %626 = vmatprep.mubr.f32.mxu0 0.0
        %627 = vmatmul.mubr.f32.gmra.mrb[0].mxu0 %v497
        %v628 = vpop.f32.mrb[0].mxu0
        %v629 = vadd.f32 %v466, %v628
        %v630 = vpop.f32.mrb[0].mxu0
        %631 = vmatprep.mubr.f32.mxu0 0.0
        %632 = vmatmul.mubr.f32.gmra.mrb[0].mxu0 %v500
        %v633 = vpop.f32.mrb[0].mxu0
        %v634 = vadd.f32 %v466, %v633
        %v635 = vpop.f32.mrb[0].mxu0
        %636 = vmatprep.mubr.f32.mxu0 0.0
        %637 = vmatmul.mubr.f32.gmra.mrb[0].mxu0 %v503
        %v638 = vpop.f32.mrb[0].mxu0
        %v639 = vadd.f32 %v466, %v638
        %v640 = vpop.f32.mrb[0].mxu0
        %641 = vmatprep.mubr.f32.mxu0 0.0
        %642 = vmatmul.mubr.f32.gmra.mrb[0].mxu0 %v506
        %v643 = vpop.f32.mrb[0].mxu0
        %v644 = vadd.f32 %v466, %v643
        %v645 = vpop.f32.mrb[0].mxu0
        %646 = vmatprep.mubr.f32.mxu0 0.0
        %647 = vmatmul.mubr.f32.gmra.mrb[0].mxu0 %v509
        %v648 = vpop.f32.mrb[0].mxu0
        %v649 = vadd.f32 %v466, %v648
        %v650 = vpop.f32.mrb[0].mxu0
        %651 = vmatprep.mubr.f32.mxu0 0.0
        %652 = vmatmul.mubr.f32.gmra.mrb[0].mxu0 %v512
        %v653 = vpop.f32.mrb[0].mxu0
        %v654 = vadd.f32 %v466, %v653
        %v655 = vpop.f32.mrb[0].mxu0
        %656 = vmatprep.mubr.f32.mxu0 0.0
        %657 = vmatmul.mubr.f32.gmra.mrb[0].mxu0 %v515
        %v658 = vpop.f32.mrb[0].mxu0
        %v659 = vadd.f32 %v466, %v658
        %v660 = vpop.f32.mrb[0].mxu0
        %661 = vdwg.mxu0
        %v662 = vmax.f32 %v584, 0.0
        %v663 = vmax.f32 %v589, 0.0
        %v664 = vmax.f32 %v594, 0.0
        %v665 = vmax.f32 %v599, 0.0
        %v666 = vmax.f32 %v604, 0.0
        %v667 = vmax.f32 %v609, 0.0
        %v668 = vmax.f32 %v614, 0.0
        %v669 = vmax.f32 %v619, 0.0
        %v670 = vmax.f32 %v624, 0.0
        %v671 = vmax.f32 %v629, 0.0
        %v672 = vmax.f32 %v634, 0.0
        %v673 = vmax.f32 %v639, 0.0
        %v674 = vmax.f32 %v644, 0.0
        %v675 = vmax.f32 %v649, 0.0
        %v676 = vmax.f32 %v654, 0.0
        %v677 = vmax.f32 %v659, 0.0
        %v678 = vand.u32 2147483647, %v584
        %v679 = vand.u32 2147483647, %v589
        %v680 = vand.u32 2147483647, %v594
        %v681 = vand.u32 2147483647, %v599
        %v682 = vand.u32 2147483647, %v604
        %v683 = vand.u32 2147483647, %v609
        %v684 = vand.u32 2147483647, %v614
        %v685 = vand.u32 2147483647, %v619
        %v686 = vand.u32 2147483647, %v624
        %v687 = vand.u32 2147483647, %v629
        %v688 = vand.u32 2147483647, %v634
        %v689 = vand.u32 2147483647, %v639
        %v690 = vand.u32 2147483647, %v644
        %v691 = vand.u32 2147483647, %v649
        %v692 = vand.u32 2147483647, %v654
        %v693 = vand.u32 2147483647, %v659
        %v694 = vsub.f32 0.0, %v678
        %v695 = vsub.f32 0.0, %v679
        %v696 = vsub.f32 0.0, %v680
        %v697 = vsub.f32 0.0, %v681
        %v698 = vsub.f32 0.0, %v682
        %v699 = vsub.f32 0.0, %v683
        %v700 = vsub.f32 0.0, %v684
        %v701 = vsub.f32 0.0, %v685
        %v702 = vsub.f32 0.0, %v686
        %v703 = vsub.f32 0.0, %v687
        %v704 = vsub.f32 0.0, %v688
        %v705 = vsub.f32 0.0, %v689
        %v706 = vsub.f32 0.0, %v690
        %v707 = vsub.f32 0.0, %v691
        %v708 = vsub.f32 0.0, %v692
        %v709 = vsub.f32 0.0, %v693
        %v710 = vmul.f32 %v694, 1.442695
        %v711 = vpow.pop %v710
        %v712 = vmul.f32 %v695, 1.442695
        %v713 = vpow.pop %v712
        %v714 = vmul.f32 %v696, 1.442695
        %v715 = vpow.pop %v714
        %v716 = vmul.f32 %v697, 1.442695
        %v717 = vpow.pop %v716
        %v718 = vmul.f32 %v698, 1.442695
        %v719 = vpow.pop %v718
        %v720 = vmul.f32 %v699, 1.442695
        %v721 = vpow.pop %v720
        %v722 = vmul.f32 %v700, 1.442695
        %v723 = vpow.pop %v722
        %v724 = vmul.f32 %v701, 1.442695
        %v725 = vpow.pop %v724
        %v726 = vmul.f32 %v702, 1.442695
        %v727 = vpow.pop %v726
        %v728 = vmul.f32 %v703, 1.442695
        %v729 = vpow.pop %v728
        %v730 = vmul.f32 %v704, 1.442695
        %v731 = vpow.pop %v730
        %v732 = vmul.f32 %v705, 1.442695
        %v733 = vpow.pop %v732
        %v734 = vmul.f32 %v706, 1.442695
        %v735 = vpow.pop %v734
        %v736 = vmul.f32 %v707, 1.442695
        %v737 = vpow.pop %v736
        %v738 = vmul.f32 %v708, 1.442695
        %v739 = vpow.pop %v738
        %v740 = vmul.f32 %v709, 1.442695
        %v741 = vpow.pop %v740
        %v742 = vadd.f32 %v711, 1.0
        %v743 = vadd.f32 %v713, 1.0
        %v744 = vadd.f32 %v715, 1.0
        %v745 = vadd.f32 %v717, 1.0
        %v746 = vadd.f32 %v719, 1.0
        %v747 = vadd.f32 %v721, 1.0
        %v748 = vadd.f32 %v723, 1.0
        %v749 = vadd.f32 %v725, 1.0
        %v750 = vadd.f32 %v727, 1.0
        %v751 = vadd.f32 %v729, 1.0
        %v752 = vadd.f32 %v731, 1.0
        %v753 = vadd.f32 %v733, 1.0
        %v754 = vadd.f32 %v735, 1.0
        %v755 = vadd.f32 %v737, 1.0
        %v756 = vadd.f32 %v739, 1.0
        %v757 = vadd.f32 %v741, 1.0
        %v758 = vlog2.pop %v742
        %v759 = vmul.f32 %v758, 0.6931472
        %v760 = vlog2.pop %v743
        %v761 = vmul.f32 %v760, 0.6931472
        %v762 = vlog2.pop %v744
        %v763 = vmul.f32 %v762, 0.6931472
        %v764 = vlog2.pop %v745
        %v765 = vmul.f32 %v764, 0.6931472
        %v766 = vlog2.pop %v746
        %v767 = vmul.f32 %v766, 0.6931472
        %v768 = vlog2.pop %v747
        %v769 = vmul.f32 %v768, 0.6931472
        %v770 = vlog2.pop %v748
        %v771 = vmul.f32 %v770, 0.6931472
        %v772 = vlog2.pop %v749
        %v773 = vmul.f32 %v772, 0.6931472
        %v774 = vlog2.pop %v750
        %v775 = vmul.f32 %v774, 0.6931472
        %v776 = vlog2.pop %v751
        %v777 = vmul.f32 %v776, 0.6931472
        %v778 = vlog2.pop %v752
        %v779 = vmul.f32 %v778, 0.6931472
        %v780 = vlog2.pop %v753
        %v781 = vmul.f32 %v780, 0.6931472
        %v782 = vlog2.pop %v754
        %v783 = vmul.f32 %v782, 0.6931472
        %v784 = vlog2.pop %v755
        %v785 = vmul.f32 %v784, 0.6931472
        %v786 = vlog2.pop %v756
        %v787 = vmul.f32 %v786, 0.6931472
        %v788 = vlog2.pop %v757
        %v789 = vmul.f32 %v788, 0.6931472
        %v790 = vadd.f32 %v662, %v759
        %v791 = vadd.f32 %v663, %v761
        %v792 = vadd.f32 %v664, %v763
        %v793 = vadd.f32 %v665, %v765
        %v794 = vadd.f32 %v666, %v767
        %v795 = vadd.f32 %v667, %v769
        %v796 = vadd.f32 %v668, %v771
        %v797 = vadd.f32 %v669, %v773
        %v798 = vadd.f32 %v670, %v775
        %v799 = vadd.f32 %v671, %v777
        %v800 = vadd.f32 %v672, %v779
        %v801 = vadd.f32 %v673, %v781
        %v802 = vadd.f32 %v674, %v783
        %v803 = vadd.f32 %v675, %v785
        %v804 = vadd.f32 %v676, %v787
        %v805 = vadd.f32 %v677, %v789
        %v806 = vld [vmem:[%s5] sm:$0xff]
        %v807 = vld [vmem:[%s5 + $0x8] sm:$0xff]
        %v808 = vld [vmem:[%s5 + $0x10] sm:$0xff]
        %v809 = vld [vmem:[%s5 + $0x18] sm:$0xff]
        %v810 = vld [vmem:[%s6] sm:$0x1]
        %v812 = vlaneseq
        %v813 = vshrl.u32 %v812, 7
        %v814 = vsub.s32 0, %v813
        %v815 = vrot.slane %v810, %v814
        %vm817 = vcmask 261120
        %v819 = vsel %vm817, %v790, 0
        %v822 = vsel %vm817, %v791, 0
        %v825 = vsel %vm817, %v792, 0
        %v828 = vsel %vm817, %v793, 0
        %v831 = vsel %vm817, %v794, 0
        %v834 = vsel %vm817, %v795, 0
        %v837 = vsel %vm817, %v796, 0
        %v840 = vsel %vm817, %v797, 0
        %v843 = vsel %vm817, %v798, 0
        %v846 = vsel %vm817, %v799, 0
        %v849 = vsel %vm817, %v800, 0
        %v852 = vsel %vm817, %v801, 0
        %v855 = vsel %vm817, %v802, 0
        %v858 = vsel %vm817, %v803, 0
        %v861 = vsel %vm817, %v804, 0
        %v864 = vsel %vm817, %v805, 0
        %866 = vmatprep.subr.mxu0 0.0
        %867 = vmatpush1.msra.mxu0 %v806
        %868 = vmatprep.subr.mxu0 0.0
        %869 = vmatpush1.msra.mxu0 %v807
        %870 = vmatprep.subr.mxu0 0.0
        %871 = vmatpush1.msra.mxu0 %v808
        %872 = vmatprep.subr.mxu0 0.0
        %873 = vmatpush1.msra.mxu0 %v809
        %874 = vmatprep.subr.mxu0 0.0
        %875 = vmatpush1.msra.mxu0 0.0
        %876 = vmatprep.subr.mxu0 0.0
        %877 = vmatpush1.msra.mxu0 0.0
        %878 = vmatprep.subr.mxu0 0.0
        %879 = vmatpush1.msra.mxu0 0.0
        %880 = vmatprep.subr.mxu0 0.0
        %881 = vmatpush1.msra.mxu0 0.0
        %882 = vmatprep.subr.mxu0 0.0
        %883 = vmatpush1.msra.mxu0 0.0
        %884 = vmatprep.subr.mxu0 0.0
        %885 = vmatpush1.msra.mxu0 0.0
        %886 = vmatprep.subr.mxu0 0.0
        %887 = vmatpush1.msra.mxu0 0.0
        %888 = vmatprep.subr.mxu0 0.0
        %889 = vmatpush1.msra.mxu0 0.0
        %890 = vmatprep.subr.mxu0 0.0
        %891 = vmatpush1.msra.mxu0 0.0
        %892 = vmatprep.subr.mxu0 0.0
        %893 = vmatpush1.msra.mxu0 0.0
        %894 = vmatprep.subr.mxu0 0.0
        %895 = vmatpush1.msra.mxu0 0.0
        %896 = vmatprep.subr.mxu0 0.0
        %897 = vmatpush1.msra.mxu0 0.0
        %898 = vmatprep.subr.mxu0 0.0
        %899 = vmatpush1.msra.mxu0 0.0
        %900 = vmatprep.subr.mxu0 0.0
        %901 = vmatpush1.msra.mxu0 0.0
        %902 = vmatprep.subr.mxu0 0.0
        %903 = vmatpush1.msra.mxu0 0.0
        %904 = vmatprep.subr.mxu0 0.0
        %905 = vmatpush1.msra.mxu0 0.0
        %906 = vmatprep.subr.mxu0 0.0
        %907 = vmatpush1.msra.mxu0 0.0
        %908 = vmatprep.subr.mxu0 0.0
        %909 = vmatpush1.msra.mxu0 0.0
        %910 = vmatprep.subr.mxu0 0.0
        %911 = vmatpush1.msra.mxu0 0.0
        %912 = vmatprep.subr.mxu0 0.0
        %913 = vmatpush1.msra.mxu0 0.0
        %914 = vmatprep.subr.mxu0 0.0
        %915 = vmatpush1.msra.mxu0 0.0
        %916 = vmatprep.subr.mxu0 0.0
        %917 = vmatpush1.msra.mxu0 0.0
        %918 = vmatprep.subr.mxu0 0.0
        %919 = vmatpush1.msra.mxu0 0.0
        %920 = vmatprep.subr.mxu0 0.0
        %921 = vmatpush1.msra.mxu0 0.0
        %922 = vmatprep.subr.mxu0 0.0
        %923 = vmatpush1.msra.mxu0 0.0
        %924 = vmatprep.subr.mxu0 0.0
        %925 = vmatpush1.msra.mxu0 0.0
        %926 = vmatprep.subr.mxu0 0.0
        %927 = vmatpush1.msra.mxu0 0.0
        %928 = vmatprep.subr.mxu0 0.0
        %929 = vmatpush1.msra.mxu0 0.0
        %930 = vmatprep.mubr.f32.mxu0 0.0
        %931 = vmatmul.mubr.f32.gmra.mrb[0].mxu0 %v819
        %v932 = vpop.f32.mrb[0].mxu0
        %v933 = vadd.f32 %v815, %v932
        %v934 = vpop.f32.mrb[0].mxu0
        %935 = vmatprep.mubr.f32.mxu0 0.0
        %936 = vmatmul.mubr.f32.gmra.mrb[0].mxu0 %v822
        %v937 = vpop.f32.mrb[0].mxu0
        %v938 = vadd.f32 %v815, %v937
        %v939 = vpop.f32.mrb[0].mxu0
        %940 = vmatprep.mubr.f32.mxu0 0.0
        %941 = vmatmul.mubr.f32.gmra.mrb[0].mxu0 %v825
        %v942 = vpop.f32.mrb[0].mxu0
        %v943 = vadd.f32 %v815, %v942
        %v944 = vpop.f32.mrb[0].mxu0
        %945 = vmatprep.mubr.f32.mxu0 0.0
        %946 = vmatmul.mubr.f32.gmra.mrb[0].mxu0 %v828
        %v947 = vpop.f32.mrb[0].mxu0
        %v948 = vadd.f32 %v815, %v947
        %v949 = vpop.f32.mrb[0].mxu0
        %950 = vmatprep.mubr.f32.mxu0 0.0
        %951 = vmatmul.mubr.f32.gmra.mrb[0].mxu0 %v831
        %v952 = vpop.f32.mrb[0].mxu0
        %v953 = vadd.f32 %v815, %v952
        %v954 = vpop.f32.mrb[0].mxu0
        %955 = vmatprep.mubr.f32.mxu0 0.0
        %956 = vmatmul.mubr.f32.gmra.mrb[0].mxu0 %v834
        %v957 = vpop.f32.mrb[0].mxu0
        %v958 = vadd.f32 %v815, %v957
        %v959 = vpop.f32.mrb[0].mxu0
        %960 = vmatprep.mubr.f32.mxu0 0.0
        %961 = vmatmul.mubr.f32.gmra.mrb[0].mxu0 %v837
        %v962 = vpop.f32.mrb[0].mxu0
        %v963 = vadd.f32 %v815, %v962
        %v964 = vpop.f32.mrb[0].mxu0
        %965 = vmatprep.mubr.f32.mxu0 0.0
        %966 = vmatmul.mubr.f32.gmra.mrb[0].mxu0 %v840
        %v967 = vpop.f32.mrb[0].mxu0
        %v968 = vadd.f32 %v815, %v967
        %v969 = vpop.f32.mrb[0].mxu0
        %970 = vmatprep.mubr.f32.mxu0 0.0
        %971 = vmatmul.mubr.f32.gmra.mrb[0].mxu0 %v843
        %v972 = vpop.f32.mrb[0].mxu0
        %v973 = vadd.f32 %v815, %v972
        %v974 = vpop.f32.mrb[0].mxu0
        %975 = vmatprep.mubr.f32.mxu0 0.0
        %976 = vmatmul.mubr.f32.gmra.mrb[0].mxu0 %v846
        %v977 = vpop.f32.mrb[0].mxu0
        %v978 = vadd.f32 %v815, %v977
        %v979 = vpop.f32.mrb[0].mxu0
        %980 = vmatprep.mubr.f32.mxu0 0.0
        %981 = vmatmul.mubr.f32.gmra.mrb[0].mxu0 %v849
        %v982 = vpop.f32.mrb[0].mxu0
        %v983 = vadd.f32 %v815, %v982
        %v984 = vpop.f32.mrb[0].mxu0
        %985 = vmatprep.mubr.f32.mxu0 0.0
        %986 = vmatmul.mubr.f32.gmra.mrb[0].mxu0 %v852
        %v987 = vpop.f32.mrb[0].mxu0
        %v988 = vadd.f32 %v815, %v987
        %v989 = vpop.f32.mrb[0].mxu0
        %990 = vmatprep.mubr.f32.mxu0 0.0
        %991 = vmatmul.mubr.f32.gmra.mrb[0].mxu0 %v855
        %v992 = vpop.f32.mrb[0].mxu0
        %v993 = vadd.f32 %v815, %v992
        %v994 = vpop.f32.mrb[0].mxu0
        %995 = vmatprep.mubr.f32.mxu0 0.0
        %996 = vmatmul.mubr.f32.gmra.mrb[0].mxu0 %v858
        %v997 = vpop.f32.mrb[0].mxu0
        %v998 = vadd.f32 %v815, %v997
        %v999 = vpop.f32.mrb[0].mxu0
        %1000 = vmatprep.mubr.f32.mxu0 0.0
        %1001 = vmatmul.mubr.f32.gmra.mrb[0].mxu0 %v861
        %v1002 = vpop.f32.mrb[0].mxu0
        %v1003 = vadd.f32 %v815, %v1002
        %v1004 = vpop.f32.mrb[0].mxu0
        %1005 = vmatprep.mubr.f32.mxu0 0.0
        %1006 = vmatmul.mubr.f32.gmra.mrb[0].mxu0 %v864
        %v1007 = vpop.f32.mrb[0].mxu0
        %v1008 = vadd.f32 %v815, %v1007
        %v1009 = vpop.f32.mrb[0].mxu0
        %1010 = vdwg.mxu0
        %v1011 = vmax.f32 %v933, 0.0
        %v1012 = vmax.f32 %v938, 0.0
        %v1013 = vmax.f32 %v943, 0.0
        %v1014 = vmax.f32 %v948, 0.0
        %v1015 = vmax.f32 %v953, 0.0
        %v1016 = vmax.f32 %v958, 0.0
        %v1017 = vmax.f32 %v963, 0.0
        %v1018 = vmax.f32 %v968, 0.0
        %v1019 = vmax.f32 %v973, 0.0
        %v1020 = vmax.f32 %v978, 0.0
        %v1021 = vmax.f32 %v983, 0.0
        %v1022 = vmax.f32 %v988, 0.0
        %v1023 = vmax.f32 %v993, 0.0
        %v1024 = vmax.f32 %v998, 0.0
        %v1025 = vmax.f32 %v1003, 0.0
        %v1026 = vmax.f32 %v1008, 0.0
        %v1027 = vand.u32 2147483647, %v933
        %v1028 = vand.u32 2147483647, %v938
        %v1029 = vand.u32 2147483647, %v943
        %v1030 = vand.u32 2147483647, %v948
        %v1031 = vand.u32 2147483647, %v953
        %v1032 = vand.u32 2147483647, %v958
        %v1033 = vand.u32 2147483647, %v963
        %v1034 = vand.u32 2147483647, %v968
        %v1035 = vand.u32 2147483647, %v973
        %v1036 = vand.u32 2147483647, %v978
        %v1037 = vand.u32 2147483647, %v983
        %v1038 = vand.u32 2147483647, %v988
        %v1039 = vand.u32 2147483647, %v993
        %v1040 = vand.u32 2147483647, %v998
        %v1041 = vand.u32 2147483647, %v1003
        %v1042 = vand.u32 2147483647, %v1008
        %v1043 = vsub.f32 0.0, %v1027
        %v1044 = vsub.f32 0.0, %v1028
        %v1045 = vsub.f32 0.0, %v1029
        %v1046 = vsub.f32 0.0, %v1030
        %v1047 = vsub.f32 0.0, %v1031
        %v1048 = vsub.f32 0.0, %v1032
        %v1049 = vsub.f32 0.0, %v1033
        %v1050 = vsub.f32 0.0, %v1034
        %v1051 = vsub.f32 0.0, %v1035
        %v1052 = vsub.f32 0.0, %v1036
        %v1053 = vsub.f32 0.0, %v1037
        %v1054 = vsub.f32 0.0, %v1038
        %v1055 = vsub.f32 0.0, %v1039
        %v1056 = vsub.f32 0.0, %v1040
        %v1057 = vsub.f32 0.0, %v1041
        %v1058 = vsub.f32 0.0, %v1042
        %v1059 = vmul.f32 %v1043, 1.442695
        %v1060 = vpow.pop %v1059
        %v1061 = vmul.f32 %v1044, 1.442695
        %v1062 = vpow.pop %v1061
        %v1063 = vmul.f32 %v1045, 1.442695
        %v1064 = vpow.pop %v1063
        %v1065 = vmul.f32 %v1046, 1.442695
        %v1066 = vpow.pop %v1065
        %v1067 = vmul.f32 %v1047, 1.442695
        %v1068 = vpow.pop %v1067
        %v1069 = vmul.f32 %v1048, 1.442695
        %v1070 = vpow.pop %v1069
        %v1071 = vmul.f32 %v1049, 1.442695
        %v1072 = vpow.pop %v1071
        %v1073 = vmul.f32 %v1050, 1.442695
        %v1074 = vpow.pop %v1073
        %v1075 = vmul.f32 %v1051, 1.442695
        %v1076 = vpow.pop %v1075
        %v1077 = vmul.f32 %v1052, 1.442695
        %v1078 = vpow.pop %v1077
        %v1079 = vmul.f32 %v1053, 1.442695
        %v1080 = vpow.pop %v1079
        %v1081 = vmul.f32 %v1054, 1.442695
        %v1082 = vpow.pop %v1081
        %v1083 = vmul.f32 %v1055, 1.442695
        %v1084 = vpow.pop %v1083
        %v1085 = vmul.f32 %v1056, 1.442695
        %v1086 = vpow.pop %v1085
        %v1087 = vmul.f32 %v1057, 1.442695
        %v1088 = vpow.pop %v1087
        %v1089 = vmul.f32 %v1058, 1.442695
        %v1090 = vpow.pop %v1089
        %v1091 = vadd.f32 %v1060, 1.0
        %v1092 = vadd.f32 %v1062, 1.0
        %v1093 = vadd.f32 %v1064, 1.0
        %v1094 = vadd.f32 %v1066, 1.0
        %v1095 = vadd.f32 %v1068, 1.0
        %v1096 = vadd.f32 %v1070, 1.0
        %v1097 = vadd.f32 %v1072, 1.0
        %v1098 = vadd.f32 %v1074, 1.0
        %v1099 = vadd.f32 %v1076, 1.0
        %v1100 = vadd.f32 %v1078, 1.0
        %v1101 = vadd.f32 %v1080, 1.0
        %v1102 = vadd.f32 %v1082, 1.0
        %v1103 = vadd.f32 %v1084, 1.0
        %v1104 = vadd.f32 %v1086, 1.0
        %v1105 = vadd.f32 %v1088, 1.0
        %v1106 = vadd.f32 %v1090, 1.0
        %v1107 = vlog2.pop %v1091
        %v1108 = vmul.f32 %v1107, 0.6931472
        %v1109 = vlog2.pop %v1092
        %v1110 = vmul.f32 %v1109, 0.6931472
        %v1111 = vlog2.pop %v1093
        %v1112 = vmul.f32 %v1111, 0.6931472
        %v1113 = vlog2.pop %v1094
        %v1114 = vmul.f32 %v1113, 0.6931472
        %v1115 = vlog2.pop %v1095
        %v1116 = vmul.f32 %v1115, 0.6931472
        %v1117 = vlog2.pop %v1096
        %v1118 = vmul.f32 %v1117, 0.6931472
        %v1119 = vlog2.pop %v1097
        %v1120 = vmul.f32 %v1119, 0.6931472
        %v1121 = vlog2.pop %v1098
        %v1122 = vmul.f32 %v1121, 0.6931472
        %v1123 = vlog2.pop %v1099
        %v1124 = vmul.f32 %v1123, 0.6931472
        %v1125 = vlog2.pop %v1100
        %v1126 = vmul.f32 %v1125, 0.6931472
        %v1127 = vlog2.pop %v1101
        %v1128 = vmul.f32 %v1127, 0.6931472
        %v1129 = vlog2.pop %v1102
        %v1130 = vmul.f32 %v1129, 0.6931472
        %v1131 = vlog2.pop %v1103
        %v1132 = vmul.f32 %v1131, 0.6931472
        %v1133 = vlog2.pop %v1104
        %v1134 = vmul.f32 %v1133, 0.6931472
        %v1135 = vlog2.pop %v1105
        %v1136 = vmul.f32 %v1135, 0.6931472
        %v1137 = vlog2.pop %v1106
        %v1138 = vmul.f32 %v1137, 0.6931472
        %v1139 = vadd.f32 %v1011, %v1108
        %v1140 = vadd.f32 %v1012, %v1110
        %v1141 = vadd.f32 %v1013, %v1112
        %v1142 = vadd.f32 %v1014, %v1114
        %v1143 = vadd.f32 %v1015, %v1116
        %v1144 = vadd.f32 %v1016, %v1118
        %v1145 = vadd.f32 %v1017, %v1120
        %v1146 = vadd.f32 %v1018, %v1122
        %v1147 = vadd.f32 %v1019, %v1124
        %v1148 = vadd.f32 %v1020, %v1126
        %v1149 = vadd.f32 %v1021, %v1128
        %v1150 = vadd.f32 %v1022, %v1130
        %v1151 = vadd.f32 %v1023, %v1132
        %v1152 = vadd.f32 %v1024, %v1134
        %v1153 = vadd.f32 %v1025, %v1136
        %v1154 = vadd.f32 %v1026, %v1138
        %v1155 = vld [vmem:[%s7] sm:$0xff]
        %v1156 = vld [vmem:[%s7 + $0x8] sm:$0xff]
        %v1157 = vld [vmem:[%s7 + $0x10] sm:$0xff]
        %v1158 = vld [vmem:[%s7 + $0x18] sm:$0xff]
        %v1159 = vld [vmem:[%s8] sm:$0x1]
        %v1161 = vlaneseq
        %v1162 = vshrl.u32 %v1161, 7
        %v1163 = vsub.s32 0, %v1162
        %v1164 = vrot.slane %v1159, %v1163
        %v1167 = vsel %vm817, %v1139, 0
        %v1170 = vsel %vm817, %v1140, 0
        %v1173 = vsel %vm817, %v1141, 0
        %v1176 = vsel %vm817, %v1142, 0
        %v1179 = vsel %vm817, %v1143, 0
        %v1182 = vsel %vm817, %v1144, 0
        %v1185 = vsel %vm817, %v1145, 0
        %v1188 = vsel %vm817, %v1146, 0
        %v1191 = vsel %vm817, %v1147, 0
        %v1194 = vsel %vm817, %v1148, 0
        %v1197 = vsel %vm817, %v1149, 0
        %v1200 = vsel %vm817, %v1150, 0
        %v1203 = vsel %vm817, %v1151, 0
        %v1206 = vsel %vm817, %v1152, 0
        %v1209 = vsel %vm817, %v1153, 0
        %v1212 = vsel %vm817, %v1154, 0
        %1214 = vmatprep.subr.mxu0 0.0
        %1215 = vmatpush1.msra.mxu0 %v1155
        %1216 = vmatprep.subr.mxu0 0.0
        %1217 = vmatpush1.msra.mxu0 %v1156
        %1218 = vmatprep.subr.mxu0 0.0
        %1219 = vmatpush1.msra.mxu0 %v1157
        %1220 = vmatprep.subr.mxu0 0.0
        %1221 = vmatpush1.msra.mxu0 %v1158
        %1222 = vmatprep.subr.mxu0 0.0
        %1223 = vmatpush1.msra.mxu0 0.0
        %1224 = vmatprep.subr.mxu0 0.0
        %1225 = vmatpush1.msra.mxu0 0.0
        %1226 = vmatprep.subr.mxu0 0.0
        %1227 = vmatpush1.msra.mxu0 0.0
        %1228 = vmatprep.subr.mxu0 0.0
        %1229 = vmatpush1.msra.mxu0 0.0
        %1230 = vmatprep.subr.mxu0 0.0
        %1231 = vmatpush1.msra.mxu0 0.0
        %1232 = vmatprep.subr.mxu0 0.0
        %1233 = vmatpush1.msra.mxu0 0.0
        %1234 = vmatprep.subr.mxu0 0.0
        %1235 = vmatpush1.msra.mxu0 0.0
        %1236 = vmatprep.subr.mxu0 0.0
        %1237 = vmatpush1.msra.mxu0 0.0
        %1238 = vmatprep.subr.mxu0 0.0
        %1239 = vmatpush1.msra.mxu0 0.0
        %1240 = vmatprep.subr.mxu0 0.0
        %1241 = vmatpush1.msra.mxu0 0.0
        %1242 = vmatprep.subr.mxu0 0.0
        %1243 = vmatpush1.msra.mxu0 0.0
        %1244 = vmatprep.subr.mxu0 0.0
        %1245 = vmatpush1.msra.mxu0 0.0
        %1246 = vmatprep.subr.mxu0 0.0
        %1247 = vmatpush1.msra.mxu0 0.0
        %1248 = vmatprep.subr.mxu0 0.0
        %1249 = vmatpush1.msra.mxu0 0.0
        %1250 = vmatprep.subr.mxu0 0.0
        %1251 = vmatpush1.msra.mxu0 0.0
        %1252 = vmatprep.subr.mxu0 0.0
        %1253 = vmatpush1.msra.mxu0 0.0
        %1254 = vmatprep.subr.mxu0 0.0
        %1255 = vmatpush1.msra.mxu0 0.0
        %1256 = vmatprep.subr.mxu0 0.0
        %1257 = vmatpush1.msra.mxu0 0.0
        %1258 = vmatprep.subr.mxu0 0.0
        %1259 = vmatpush1.msra.mxu0 0.0
        %1260 = vmatprep.subr.mxu0 0.0
        %1261 = vmatpush1.msra.mxu0 0.0
        %1262 = vmatprep.subr.mxu0 0.0
        %1263 = vmatpush1.msra.mxu0 0.0
        %1264 = vmatprep.subr.mxu0 0.0
        %1265 = vmatpush1.msra.mxu0 0.0
        %1266 = vmatprep.subr.mxu0 0.0
        %1267 = vmatpush1.msra.mxu0 0.0
        %1268 = vmatprep.subr.mxu0 0.0
        %1269 = vmatpush1.msra.mxu0 0.0
        %1270 = vmatprep.subr.mxu0 0.0
        %1271 = vmatpush1.msra.mxu0 0.0
        %1272 = vmatprep.subr.mxu0 0.0
        %1273 = vmatpush1.msra.mxu0 0.0
        %1274 = vmatprep.subr.mxu0 0.0
        %1275 = vmatpush1.msra.mxu0 0.0
        %1276 = vmatprep.subr.mxu0 0.0
        %1277 = vmatpush1.msra.mxu0 0.0
        %1278 = vmatprep.mubr.f32.mxu0 0.0
        %1279 = vmatmul.mubr.f32.gmra.mrb[0].mxu0 %v1167
        %v1280 = vpop.f32.mrb[0].mxu0
        %v1281 = vadd.f32 %v1164, %v1280
        %v1282 = vpop.f32.mrb[0].mxu0
        %1283 = vmatprep.mubr.f32.mxu0 0.0
        %1284 = vmatmul.mubr.f32.gmra.mrb[0].mxu0 %v1170
        %v1285 = vpop.f32.mrb[0].mxu0
        %v1286 = vadd.f32 %v1164, %v1285
        %v1287 = vpop.f32.mrb[0].mxu0
        %1288 = vmatprep.mubr.f32.mxu0 0.0
        %1289 = vmatmul.mubr.f32.gmra.mrb[0].mxu0 %v1173
        %v1290 = vpop.f32.mrb[0].mxu0
        %v1291 = vadd.f32 %v1164, %v1290
        %v1292 = vpop.f32.mrb[0].mxu0
        %1293 = vmatprep.mubr.f32.mxu0 0.0
        %1294 = vmatmul.mubr.f32.gmra.mrb[0].mxu0 %v1176
        %v1295 = vpop.f32.mrb[0].mxu0
        %v1296 = vadd.f32 %v1164, %v1295
        %v1297 = vpop.f32.mrb[0].mxu0
        %1298 = vmatprep.mubr.f32.mxu0 0.0
        %1299 = vmatmul.mubr.f32.gmra.mrb[0].mxu0 %v1179
        %v1300 = vpop.f32.mrb[0].mxu0
        %v1301 = vadd.f32 %v1164, %v1300
        %v1302 = vpop.f32.mrb[0].mxu0
        %1303 = vmatprep.mubr.f32.mxu0 0.0
        %1304 = vmatmul.mubr.f32.gmra.mrb[0].mxu0 %v1182
        %v1305 = vpop.f32.mrb[0].mxu0
        %v1306 = vadd.f32 %v1164, %v1305
        %v1307 = vpop.f32.mrb[0].mxu0
        %1308 = vmatprep.mubr.f32.mxu0 0.0
        %1309 = vmatmul.mubr.f32.gmra.mrb[0].mxu0 %v1185
        %v1310 = vpop.f32.mrb[0].mxu0
        %v1311 = vadd.f32 %v1164, %v1310
        %v1312 = vpop.f32.mrb[0].mxu0
        %1313 = vmatprep.mubr.f32.mxu0 0.0
        %1314 = vmatmul.mubr.f32.gmra.mrb[0].mxu0 %v1188
        %v1315 = vpop.f32.mrb[0].mxu0
        %v1316 = vadd.f32 %v1164, %v1315
        %v1317 = vpop.f32.mrb[0].mxu0
        %1318 = vmatprep.mubr.f32.mxu0 0.0
        %1319 = vmatmul.mubr.f32.gmra.mrb[0].mxu0 %v1191
        %v1320 = vpop.f32.mrb[0].mxu0
        %v1321 = vadd.f32 %v1164, %v1320
        %v1322 = vpop.f32.mrb[0].mxu0
        %1323 = vmatprep.mubr.f32.mxu0 0.0
        %1324 = vmatmul.mubr.f32.gmra.mrb[0].mxu0 %v1194
        %v1325 = vpop.f32.mrb[0].mxu0
        %v1326 = vadd.f32 %v1164, %v1325
        %v1327 = vpop.f32.mrb[0].mxu0
        %1328 = vmatprep.mubr.f32.mxu0 0.0
        %1329 = vmatmul.mubr.f32.gmra.mrb[0].mxu0 %v1197
        %v1330 = vpop.f32.mrb[0].mxu0
        %v1331 = vadd.f32 %v1164, %v1330
        %v1332 = vpop.f32.mrb[0].mxu0
        %1333 = vmatprep.mubr.f32.mxu0 0.0
        %1334 = vmatmul.mubr.f32.gmra.mrb[0].mxu0 %v1200
        %v1335 = vpop.f32.mrb[0].mxu0
        %v1336 = vadd.f32 %v1164, %v1335
        %v1337 = vpop.f32.mrb[0].mxu0
        %1338 = vmatprep.mubr.f32.mxu0 0.0
        %1339 = vmatmul.mubr.f32.gmra.mrb[0].mxu0 %v1203
        %v1340 = vpop.f32.mrb[0].mxu0
        %v1341 = vadd.f32 %v1164, %v1340
        %v1342 = vpop.f32.mrb[0].mxu0
        %1343 = vmatprep.mubr.f32.mxu0 0.0
        %1344 = vmatmul.mubr.f32.gmra.mrb[0].mxu0 %v1206
        %v1345 = vpop.f32.mrb[0].mxu0
        %v1346 = vadd.f32 %v1164, %v1345
        %v1347 = vpop.f32.mrb[0].mxu0
        %1348 = vmatprep.mubr.f32.mxu0 0.0
        %1349 = vmatmul.mubr.f32.gmra.mrb[0].mxu0 %v1209
        %v1350 = vpop.f32.mrb[0].mxu0
        %v1351 = vadd.f32 %v1164, %v1350
        %v1352 = vpop.f32.mrb[0].mxu0
        %1353 = vmatprep.mubr.f32.mxu0 0.0
        %1354 = vmatmul.mubr.f32.gmra.mrb[0].mxu0 %v1212
        %v1355 = vpop.f32.mrb[0].mxu0
        %v1356 = vadd.f32 %v1164, %v1355
        %v1357 = vpop.f32.mrb[0].mxu0
        %1358 = vdwg.mxu0
        %v1359 = vmax.f32 %v1281, 0.0
        %v1360 = vmax.f32 %v1286, 0.0
        %v1361 = vmax.f32 %v1291, 0.0
        %v1362 = vmax.f32 %v1296, 0.0
        %v1363 = vmax.f32 %v1301, 0.0
        %v1364 = vmax.f32 %v1306, 0.0
        %v1365 = vmax.f32 %v1311, 0.0
        %v1366 = vmax.f32 %v1316, 0.0
        %v1367 = vmax.f32 %v1321, 0.0
        %v1368 = vmax.f32 %v1326, 0.0
        %v1369 = vmax.f32 %v1331, 0.0
        %v1370 = vmax.f32 %v1336, 0.0
        %v1371 = vmax.f32 %v1341, 0.0
        %v1372 = vmax.f32 %v1346, 0.0
        %v1373 = vmax.f32 %v1351, 0.0
        %v1374 = vmax.f32 %v1356, 0.0
        %v1375 = vand.u32 2147483647, %v1281
        %v1376 = vand.u32 2147483647, %v1286
        %v1377 = vand.u32 2147483647, %v1291
        %v1378 = vand.u32 2147483647, %v1296
        %v1379 = vand.u32 2147483647, %v1301
        %v1380 = vand.u32 2147483647, %v1306
        %v1381 = vand.u32 2147483647, %v1311
        %v1382 = vand.u32 2147483647, %v1316
        %v1383 = vand.u32 2147483647, %v1321
        %v1384 = vand.u32 2147483647, %v1326
        %v1385 = vand.u32 2147483647, %v1331
        %v1386 = vand.u32 2147483647, %v1336
        %v1387 = vand.u32 2147483647, %v1341
        %v1388 = vand.u32 2147483647, %v1346
        %v1389 = vand.u32 2147483647, %v1351
        %v1390 = vand.u32 2147483647, %v1356
        %v1391 = vsub.f32 0.0, %v1375
        %v1392 = vsub.f32 0.0, %v1376
        %v1393 = vsub.f32 0.0, %v1377
        %v1394 = vsub.f32 0.0, %v1378
        %v1395 = vsub.f32 0.0, %v1379
        %v1396 = vsub.f32 0.0, %v1380
        %v1397 = vsub.f32 0.0, %v1381
        %v1398 = vsub.f32 0.0, %v1382
        %v1399 = vsub.f32 0.0, %v1383
        %v1400 = vsub.f32 0.0, %v1384
        %v1401 = vsub.f32 0.0, %v1385
        %v1402 = vsub.f32 0.0, %v1386
        %v1403 = vsub.f32 0.0, %v1387
        %v1404 = vsub.f32 0.0, %v1388
        %v1405 = vsub.f32 0.0, %v1389
        %v1406 = vsub.f32 0.0, %v1390
        %v1407 = vmul.f32 %v1391, 1.442695
        %v1408 = vpow.pop %v1407
        %v1409 = vmul.f32 %v1392, 1.442695
        %v1410 = vpow.pop %v1409
        %v1411 = vmul.f32 %v1393, 1.442695
        %v1412 = vpow.pop %v1411
        %v1413 = vmul.f32 %v1394, 1.442695
        %v1414 = vpow.pop %v1413
        %v1415 = vmul.f32 %v1395, 1.442695
        %v1416 = vpow.pop %v1415
        %v1417 = vmul.f32 %v1396, 1.442695
        %v1418 = vpow.pop %v1417
        %v1419 = vmul.f32 %v1397, 1.442695
        %v1420 = vpow.pop %v1419
        %v1421 = vmul.f32 %v1398, 1.442695
        %v1422 = vpow.pop %v1421
        %v1423 = vmul.f32 %v1399, 1.442695
        %v1424 = vpow.pop %v1423
        %v1425 = vmul.f32 %v1400, 1.442695
        %v1426 = vpow.pop %v1425
        %v1427 = vmul.f32 %v1401, 1.442695
        %v1428 = vpow.pop %v1427
        %v1429 = vmul.f32 %v1402, 1.442695
        %v1430 = vpow.pop %v1429
        %v1431 = vmul.f32 %v1403, 1.442695
        %v1432 = vpow.pop %v1431
        %v1433 = vmul.f32 %v1404, 1.442695
        %v1434 = vpow.pop %v1433
        %v1435 = vmul.f32 %v1405, 1.442695
        %v1436 = vpow.pop %v1435
        %v1437 = vmul.f32 %v1406, 1.442695
        %v1438 = vpow.pop %v1437
        %v1439 = vadd.f32 %v1408, 1.0
        %v1440 = vadd.f32 %v1410, 1.0
        %v1441 = vadd.f32 %v1412, 1.0
        %v1442 = vadd.f32 %v1414, 1.0
        %v1443 = vadd.f32 %v1416, 1.0
        %v1444 = vadd.f32 %v1418, 1.0
        %v1445 = vadd.f32 %v1420, 1.0
        %v1446 = vadd.f32 %v1422, 1.0
        %v1447 = vadd.f32 %v1424, 1.0
        %v1448 = vadd.f32 %v1426, 1.0
        %v1449 = vadd.f32 %v1428, 1.0
        %v1450 = vadd.f32 %v1430, 1.0
        %v1451 = vadd.f32 %v1432, 1.0
        %v1452 = vadd.f32 %v1434, 1.0
        %v1453 = vadd.f32 %v1436, 1.0
        %v1454 = vadd.f32 %v1438, 1.0
        %v1455 = vlog2.pop %v1439
        %v1456 = vmul.f32 %v1455, 0.6931472
        %v1457 = vlog2.pop %v1440
        %v1458 = vmul.f32 %v1457, 0.6931472
        %v1459 = vlog2.pop %v1441
        %v1460 = vmul.f32 %v1459, 0.6931472
        %v1461 = vlog2.pop %v1442
        %v1462 = vmul.f32 %v1461, 0.6931472
        %v1463 = vlog2.pop %v1443
        %v1464 = vmul.f32 %v1463, 0.6931472
        %v1465 = vlog2.pop %v1444
        %v1466 = vmul.f32 %v1465, 0.6931472
        %v1467 = vlog2.pop %v1445
        %v1468 = vmul.f32 %v1467, 0.6931472
        %v1469 = vlog2.pop %v1446
        %v1470 = vmul.f32 %v1469, 0.6931472
        %v1471 = vlog2.pop %v1447
        %v1472 = vmul.f32 %v1471, 0.6931472
        %v1473 = vlog2.pop %v1448
        %v1474 = vmul.f32 %v1473, 0.6931472
        %v1475 = vlog2.pop %v1449
        %v1476 = vmul.f32 %v1475, 0.6931472
        %v1477 = vlog2.pop %v1450
        %v1478 = vmul.f32 %v1477, 0.6931472
        %v1479 = vlog2.pop %v1451
        %v1480 = vmul.f32 %v1479, 0.6931472
        %v1481 = vlog2.pop %v1452
        %v1482 = vmul.f32 %v1481, 0.6931472
        %v1483 = vlog2.pop %v1453
        %v1484 = vmul.f32 %v1483, 0.6931472
        %v1485 = vlog2.pop %v1454
        %v1486 = vmul.f32 %v1485, 0.6931472
        %v1487 = vadd.f32 %v1359, %v1456
        %v1488 = vadd.f32 %v1360, %v1458
        %v1489 = vadd.f32 %v1361, %v1460
        %v1490 = vadd.f32 %v1362, %v1462
        %v1491 = vadd.f32 %v1363, %v1464
        %v1492 = vadd.f32 %v1364, %v1466
        %v1493 = vadd.f32 %v1365, %v1468
        %v1494 = vadd.f32 %v1366, %v1470
        %v1495 = vadd.f32 %v1367, %v1472
        %v1496 = vadd.f32 %v1368, %v1474
        %v1497 = vadd.f32 %v1369, %v1476
        %v1498 = vadd.f32 %v1370, %v1478
        %v1499 = vadd.f32 %v1371, %v1480
        %v1500 = vadd.f32 %v1372, %v1482
        %v1501 = vadd.f32 %v1373, %v1484
        %v1502 = vadd.f32 %v1374, %v1486
        %v1503 = vld [vmem:[%s9] sm:$0xff]
        %v1504 = vld [vmem:[%s9 + $0x8] sm:$0xff]
        %v1505 = vld [vmem:[%s9 + $0x10] sm:$0xff]
        %v1506 = vld [vmem:[%s9 + $0x18] sm:$0xff]
        %v1507 = vld [vmem:[%s10] sm:$0x1]
        %v1509 = vlaneseq
        %v1510 = vshrl.u32 %v1509, 7
        %v1511 = vsub.s32 0, %v1510
        %v1512 = vrot.slane %v1507, %v1511
        %v1515 = vsel %vm817, %v1487, 0
        %v1518 = vsel %vm817, %v1488, 0
        %v1521 = vsel %vm817, %v1489, 0
        %v1524 = vsel %vm817, %v1490, 0
        %v1527 = vsel %vm817, %v1491, 0
        %v1530 = vsel %vm817, %v1492, 0
        %v1533 = vsel %vm817, %v1493, 0
        %v1536 = vsel %vm817, %v1494, 0
        %v1539 = vsel %vm817, %v1495, 0
        %v1542 = vsel %vm817, %v1496, 0
        %v1545 = vsel %vm817, %v1497, 0
        %v1548 = vsel %vm817, %v1498, 0
        %v1551 = vsel %vm817, %v1499, 0
        %v1554 = vsel %vm817, %v1500, 0
        %v1557 = vsel %vm817, %v1501, 0
        %v1560 = vsel %vm817, %v1502, 0
        %1562 = vmatprep.subr.mxu0 0.0
        %1563 = vmatpush1.msra.mxu0 %v1503
        %1564 = vmatprep.subr.mxu0 0.0
        %1565 = vmatpush1.msra.mxu0 %v1504
        %1566 = vmatprep.subr.mxu0 0.0
        %1567 = vmatpush1.msra.mxu0 %v1505
        %1568 = vmatprep.subr.mxu0 0.0
        %1569 = vmatpush1.msra.mxu0 %v1506
        %1570 = vmatprep.subr.mxu0 0.0
        %1571 = vmatpush1.msra.mxu0 0.0
        %1572 = vmatprep.subr.mxu0 0.0
        %1573 = vmatpush1.msra.mxu0 0.0
        %1574 = vmatprep.subr.mxu0 0.0
        %1575 = vmatpush1.msra.mxu0 0.0
        %1576 = vmatprep.subr.mxu0 0.0
        %1577 = vmatpush1.msra.mxu0 0.0
        %1578 = vmatprep.subr.mxu0 0.0
        %1579 = vmatpush1.msra.mxu0 0.0
        %1580 = vmatprep.subr.mxu0 0.0
        %1581 = vmatpush1.msra.mxu0 0.0
        %1582 = vmatprep.subr.mxu0 0.0
        %1583 = vmatpush1.msra.mxu0 0.0
        %1584 = vmatprep.subr.mxu0 0.0
        %1585 = vmatpush1.msra.mxu0 0.0
        %1586 = vmatprep.subr.mxu0 0.0
        %1587 = vmatpush1.msra.mxu0 0.0
        %1588 = vmatprep.subr.mxu0 0.0
        %1589 = vmatpush1.msra.mxu0 0.0
        %1590 = vmatprep.subr.mxu0 0.0
        %1591 = vmatpush1.msra.mxu0 0.0
        %1592 = vmatprep.subr.mxu0 0.0
        %1593 = vmatpush1.msra.mxu0 0.0
        %1594 = vmatprep.subr.mxu0 0.0
        %1595 = vmatpush1.msra.mxu0 0.0
        %1596 = vmatprep.subr.mxu0 0.0
        %1597 = vmatpush1.msra.mxu0 0.0
        %1598 = vmatprep.subr.mxu0 0.0
        %1599 = vmatpush1.msra.mxu0 0.0
        %1600 = vmatprep.subr.mxu0 0.0
        %1601 = vmatpush1.msra.mxu0 0.0
        %1602 = vmatprep.subr.mxu0 0.0
        %1603 = vmatpush1.msra.mxu0 0.0
        %1604 = vmatprep.subr.mxu0 0.0
        %1605 = vmatpush1.msra.mxu0 0.0
        %1606 = vmatprep.subr.mxu0 0.0
        %1607 = vmatpush1.msra.mxu0 0.0
        %1608 = vmatprep.subr.mxu0 0.0
        %1609 = vmatpush1.msra.mxu0 0.0
        %1610 = vmatprep.subr.mxu0 0.0
        %1611 = vmatpush1.msra.mxu0 0.0
        %1612 = vmatprep.subr.mxu0 0.0
        %1613 = vmatpush1.msra.mxu0 0.0
        %1614 = vmatprep.subr.mxu0 0.0
        %1615 = vmatpush1.msra.mxu0 0.0
        %1616 = vmatprep.subr.mxu0 0.0
        %1617 = vmatpush1.msra.mxu0 0.0
        %1618 = vmatprep.subr.mxu0 0.0
        %1619 = vmatpush1.msra.mxu0 0.0
        %1620 = vmatprep.subr.mxu0 0.0
        %1621 = vmatpush1.msra.mxu0 0.0
        %1622 = vmatprep.subr.mxu0 0.0
        %1623 = vmatpush1.msra.mxu0 0.0
        %1624 = vmatprep.subr.mxu0 0.0
        %1625 = vmatpush1.msra.mxu0 0.0
        %1626 = vmatprep.mubr.f32.mxu0 0.0
        %1627 = vmatmul.mubr.f32.gmra.mrb[0].mxu0 %v1515
        %v1628 = vpop.f32.mrb[0].mxu0
        %v1629 = vadd.f32 %v1512, %v1628
        %v1630 = vpop.f32.mrb[0].mxu0
        %1631 = vmatprep.mubr.f32.mxu0 0.0
        %1632 = vmatmul.mubr.f32.gmra.mrb[0].mxu0 %v1518
        %v1633 = vpop.f32.mrb[0].mxu0
        %v1634 = vadd.f32 %v1512, %v1633
        %v1635 = vpop.f32.mrb[0].mxu0
        %1636 = vmatprep.mubr.f32.mxu0 0.0
        %1637 = vmatmul.mubr.f32.gmra.mrb[0].mxu0 %v1521
        %v1638 = vpop.f32.mrb[0].mxu0
        %v1639 = vadd.f32 %v1512, %v1638
        %v1640 = vpop.f32.mrb[0].mxu0
        %1641 = vmatprep.mubr.f32.mxu0 0.0
        %1642 = vmatmul.mubr.f32.gmra.mrb[0].mxu0 %v1524
        %v1643 = vpop.f32.mrb[0].mxu0
        %v1644 = vadd.f32 %v1512, %v1643
        %v1645 = vpop.f32.mrb[0].mxu0
        %1646 = vmatprep.mubr.f32.mxu0 0.0
        %1647 = vmatmul.mubr.f32.gmra.mrb[0].mxu0 %v1527
        %v1648 = vpop.f32.mrb[0].mxu0
        %v1649 = vadd.f32 %v1512, %v1648
        %v1650 = vpop.f32.mrb[0].mxu0
        %1651 = vmatprep.mubr.f32.mxu0 0.0
        %1652 = vmatmul.mubr.f32.gmra.mrb[0].mxu0 %v1530
        %v1653 = vpop.f32.mrb[0].mxu0
        %v1654 = vadd.f32 %v1512, %v1653
        %v1655 = vpop.f32.mrb[0].mxu0
        %1656 = vmatprep.mubr.f32.mxu0 0.0
        %1657 = vmatmul.mubr.f32.gmra.mrb[0].mxu0 %v1533
        %v1658 = vpop.f32.mrb[0].mxu0
        %v1659 = vadd.f32 %v1512, %v1658
        %v1660 = vpop.f32.mrb[0].mxu0
        %1661 = vmatprep.mubr.f32.mxu0 0.0
        %1662 = vmatmul.mubr.f32.gmra.mrb[0].mxu0 %v1536
        %v1663 = vpop.f32.mrb[0].mxu0
        %v1664 = vadd.f32 %v1512, %v1663
        %v1665 = vpop.f32.mrb[0].mxu0
        %1666 = vmatprep.mubr.f32.mxu0 0.0
        %1667 = vmatmul.mubr.f32.gmra.mrb[0].mxu0 %v1539
        %v1668 = vpop.f32.mrb[0].mxu0
        %v1669 = vadd.f32 %v1512, %v1668
        %v1670 = vpop.f32.mrb[0].mxu0
        %1671 = vmatprep.mubr.f32.mxu0 0.0
        %1672 = vmatmul.mubr.f32.gmra.mrb[0].mxu0 %v1542
        %v1673 = vpop.f32.mrb[0].mxu0
        %v1674 = vadd.f32 %v1512, %v1673
        %v1675 = vpop.f32.mrb[0].mxu0
        %1676 = vmatprep.mubr.f32.mxu0 0.0
        %1677 = vmatmul.mubr.f32.gmra.mrb[0].mxu0 %v1545
        %v1678 = vpop.f32.mrb[0].mxu0
        %v1679 = vadd.f32 %v1512, %v1678
        %v1680 = vpop.f32.mrb[0].mxu0
        %1681 = vmatprep.mubr.f32.mxu0 0.0
        %1682 = vmatmul.mubr.f32.gmra.mrb[0].mxu0 %v1548
        %v1683 = vpop.f32.mrb[0].mxu0
        %v1684 = vadd.f32 %v1512, %v1683
        %v1685 = vpop.f32.mrb[0].mxu0
        %1686 = vmatprep.mubr.f32.mxu0 0.0
        %1687 = vmatmul.mubr.f32.gmra.mrb[0].mxu0 %v1551
        %v1688 = vpop.f32.mrb[0].mxu0
        %v1689 = vadd.f32 %v1512, %v1688
        %v1690 = vpop.f32.mrb[0].mxu0
        %1691 = vmatprep.mubr.f32.mxu0 0.0
        %1692 = vmatmul.mubr.f32.gmra.mrb[0].mxu0 %v1554
        %v1693 = vpop.f32.mrb[0].mxu0
        %v1694 = vadd.f32 %v1512, %v1693
        %v1695 = vpop.f32.mrb[0].mxu0
        %1696 = vmatprep.mubr.f32.mxu0 0.0
        %1697 = vmatmul.mubr.f32.gmra.mrb[0].mxu0 %v1557
        %v1698 = vpop.f32.mrb[0].mxu0
        %v1699 = vadd.f32 %v1512, %v1698
        %v1700 = vpop.f32.mrb[0].mxu0
        %1701 = vmatprep.mubr.f32.mxu0 0.0
        %1702 = vmatmul.mubr.f32.gmra.mrb[0].mxu0 %v1560
        %v1703 = vpop.f32.mrb[0].mxu0
        %v1704 = vadd.f32 %v1512, %v1703
        %v1705 = vpop.f32.mrb[0].mxu0
        %1706 = vdwg.mxu0
        %s1707 = sld [smem:[#allocation2]]
        %s1708 = sld [smem:[#allocation3]]
        %v1709 = vstv %s1707
        %v1710 = vrcp.pop %v1709
        %s1711 = vtos %v1710
        %s1712 = smax.f32 %s1708, 0.0
        %s1713 = ssub.f32 %s1708, %s1712
        %v1714 = vstv %s1713
        %v1715 = vmul.f32 %v1714, 1.442695
        %v1716 = vpow.pop %v1715
        %s1717 = vtos %v1716
        %s1718 = ssub.f32 0.0, %s1712
        %v1719 = vstv %s1718
        %v1720 = vmul.f32 %v1719, 1.442695
        %v1721 = vpow.pop %v1720
        %s1722 = vtos %v1721
        %s1723 = sadd.f32 %s1722, %s1717
        %v1724 = vstv %s1723
        %v1725 = vrcp.pop %v1724
        %s1726 = vtos %v1725
        %s1727 = smul.f32 %s1717, %s1726
        %s1728 = ssub.f32 1.0, %s1727
        %v1729 = vstv %s1728
        %v1730 = vrsqrt.pop %v1729
        %v1731 = vmul.f32 %v1729, %v1730
        %vm1732 = vcmp.eq.f32.partialorder %v1729, inf
        %v1733 = vsel %vm1732, %v1729, %v1731
        %vm1734 = vcmp.eq.f32.partialorder %v1729, 0.0
        %v1735 = vand.u32 %v1729, 2147483648
        %v1736 = vsel %vm1734, %v1735, %v1733
        %s1737 = vtos %v1736
        %s1738 = smul.f32 %s1737, 0.088388346
        %v1739 = vstv %s1727
        %v1740 = vrsqrt.pop %v1739
        %v1741 = vmul.f32 %v1739, %v1740
        %vm1742 = vcmp.eq.f32.partialorder %v1739, inf
        %v1743 = vsel %vm1742, %v1739, %v1741
        %vm1744 = vcmp.eq.f32.partialorder %v1739, 0.0
        %v1745 = vand.u32 %v1739, 2147483648
        %v1746 = vsel %vm1744, %v1745, %v1743
        %s1747 = vtos %v1746
        %s1748 = smul.f32 %s1747, 0.088388346
        %v1749 = vstv %s1711
        %v1750 = vmul.f32 %v444, %v1749
        %v1751 = vmul.f32 %v445, %v1749
        %v1752 = vmul.f32 %v446, %v1749
        %v1753 = vmul.f32 %v447, %v1749
        %v1754 = vmul.f32 %v448, %v1749
        %v1755 = vmul.f32 %v449, %v1749
        %v1756 = vmul.f32 %v450, %v1749
        %v1757 = vmul.f32 %v451, %v1749
        %v1758 = vmul.f32 %v452, %v1749
        %v1759 = vmul.f32 %v453, %v1749
        %v1760 = vmul.f32 %v454, %v1749
        %v1761 = vmul.f32 %v455, %v1749
        %v1762 = vmul.f32 %v456, %v1749
        %v1763 = vmul.f32 %v457, %v1749
        %v1764 = vmul.f32 %v458, %v1749
        %v1765 = vmul.f32 %v459, %v1749
        %v1766 = vmul.f32 %v1629, %v1749
        %v1767 = vmul.f32 %v1634, %v1749
        %v1768 = vmul.f32 %v1639, %v1749
        %v1769 = vmul.f32 %v1644, %v1749
        %v1770 = vmul.f32 %v1649, %v1749
        %v1771 = vmul.f32 %v1654, %v1749
        %v1772 = vmul.f32 %v1659, %v1749
        %v1773 = vmul.f32 %v1664, %v1749
        %v1774 = vmul.f32 %v1669, %v1749
        %v1775 = vmul.f32 %v1674, %v1749
        %v1776 = vmul.f32 %v1679, %v1749
        %v1777 = vmul.f32 %v1684, %v1749
        %v1778 = vmul.f32 %v1689, %v1749
        %v1779 = vmul.f32 %v1694, %v1749
        %v1780 = vmul.f32 %v1699, %v1749
        %v1781 = vmul.f32 %v1704, %v1749
        %v1782 = vld [vmem:[%s11] sm:$0xff]
        %v1783 = vld [vmem:[%s11 + $0x8] sm:$0xff]
        %v1785 = vsel %vm468, %v1750, 0
        %v1788 = vsel %vm468, %v1751, 0
        %v1791 = vsel %vm468, %v1752, 0
        %v1794 = vsel %vm468, %v1753, 0
        %v1797 = vsel %vm468, %v1754, 0
        %v1800 = vsel %vm468, %v1755, 0
        %v1803 = vsel %vm468, %v1756, 0
        %v1806 = vsel %vm468, %v1757, 0
        %v1809 = vsel %vm468, %v1758, 0
        %v1812 = vsel %vm468, %v1759, 0
        %v1815 = vsel %vm468, %v1760, 0
        %v1818 = vsel %vm468, %v1761, 0
        %v1821 = vsel %vm468, %v1762, 0
        %v1824 = vsel %vm468, %v1763, 0
        %v1827 = vsel %vm468, %v1764, 0
        %v1830 = vsel %vm468, %v1765, 0
        %1832 = vmatprep.subr.mxu0 %v1783
        %1833 = vmatpush1.msra.mxu0 %v1782
        %1834 = vmatprep.subr.mxu0 0.0
        %1835 = vmatpush1.msra.mxu0 0.0
        %1836 = vmatprep.subr.mxu0 0.0
        %1837 = vmatpush1.msra.mxu0 0.0
        %1838 = vmatprep.subr.mxu0 0.0
        %1839 = vmatpush1.msra.mxu0 0.0
        %1840 = vmatprep.subr.mxu0 0.0
        %1841 = vmatpush1.msra.mxu0 0.0
        %1842 = vmatprep.subr.mxu0 0.0
        %1843 = vmatpush1.msra.mxu0 0.0
        %1844 = vmatprep.subr.mxu0 0.0
        %1845 = vmatpush1.msra.mxu0 0.0
        %1846 = vmatprep.subr.mxu0 0.0
        %1847 = vmatpush1.msra.mxu0 0.0
        %1848 = vmatprep.subr.mxu0 0.0
        %1849 = vmatpush1.msra.mxu0 0.0
        %1850 = vmatprep.subr.mxu0 0.0
        %1851 = vmatpush1.msra.mxu0 0.0
        %1852 = vmatprep.subr.mxu0 0.0
        %1853 = vmatpush1.msra.mxu0 0.0
        %1854 = vmatprep.subr.mxu0 0.0
        %1855 = vmatpush1.msra.mxu0 0.0
        %1856 = vmatprep.subr.mxu0 0.0
        %1857 = vmatpush1.msra.mxu0 0.0
        %1858 = vmatprep.subr.mxu0 0.0
        %1859 = vmatpush1.msra.mxu0 0.0
        %1860 = vmatprep.subr.mxu0 0.0
        %1861 = vmatpush1.msra.mxu0 0.0
        %1862 = vmatprep.subr.mxu0 0.0
        %1863 = vmatpush1.msra.mxu0 0.0
        %1864 = vmatprep.subr.mxu0 0.0
        %1865 = vmatpush1.msra.mxu0 0.0
        %1866 = vmatprep.subr.mxu0 0.0
        %1867 = vmatpush1.msra.mxu0 0.0
        %1868 = vmatprep.subr.mxu0 0.0
        %1869 = vmatpush1.msra.mxu0 0.0
        %1870 = vmatprep.subr.mxu0 0.0
        %1871 = vmatpush1.msra.mxu0 0.0
        %1872 = vmatprep.subr.mxu0 0.0
        %1873 = vmatpush1.msra.mxu0 0.0
        %1874 = vmatprep.subr.mxu0 0.0
        %1875 = vmatpush1.msra.mxu0 0.0
        %1876 = vmatprep.subr.mxu0 0.0
        %1877 = vmatpush1.msra.mxu0 0.0
        %1878 = vmatprep.subr.mxu0 0.0
        %1879 = vmatpush1.msra.mxu0 0.0
        %1880 = vmatprep.subr.mxu0 0.0
        %1881 = vmatpush1.msra.mxu0 0.0
        %1882 = vmatprep.subr.mxu0 0.0
        %1883 = vmatpush1.msra.mxu0 0.0
        %1884 = vmatprep.subr.mxu0 0.0
        %1885 = vmatpush1.msra.mxu0 0.0
        %1886 = vmatprep.subr.mxu0 0.0
        %1887 = vmatpush1.msra.mxu0 0.0
        %1888 = vmatprep.subr.mxu0 0.0
        %1889 = vmatpush1.msra.mxu0 0.0
        %1890 = vmatprep.subr.mxu0 0.0
        %1891 = vmatpush1.msra.mxu0 0.0
        %1892 = vmatprep.subr.mxu0 0.0
        %1893 = vmatpush1.msra.mxu0 0.0
        %1894 = vmatprep.subr.mxu0 0.0
        %1895 = vmatpush1.msra.mxu0 0.0
        %1896 = vmatprep.mubr.f32.mxu0 0.0
        %1897 = vmatmul.mubr.f32.gmra.mrb[0].mxu0 %v1785
        %v1898 = vpop.f32.mrb[0].mxu0
        %v1899 = vadd.f32 0.0, %v1898
        %v1900 = vpop.f32.mrb[0].mxu0
        %v1901 = vadd.f32 0.0, %v1900
        %1902 = vmatprep.mubr.f32.mxu0 0.0
        %1903 = vmatmul.mubr.f32.gmra.mrb[0].mxu0 %v1788
        %v1904 = vpop.f32.mrb[0].mxu0
        %v1905 = vadd.f32 0.0, %v1904
        %v1906 = vpop.f32.mrb[0].mxu0
        %v1907 = vadd.f32 0.0, %v1906
        %1908 = vmatprep.mubr.f32.mxu0 0.0
        %1909 = vmatmul.mubr.f32.gmra.mrb[0].mxu0 %v1791
        %v1910 = vpop.f32.mrb[0].mxu0
        %v1911 = vadd.f32 0.0, %v1910
        %v1912 = vpop.f32.mrb[0].mxu0
        %v1913 = vadd.f32 0.0, %v1912
        %1914 = vmatprep.mubr.f32.mxu0 0.0
        %1915 = vmatmul.mubr.f32.gmra.mrb[0].mxu0 %v1794
        %v1916 = vpop.f32.mrb[0].mxu0
        %v1917 = vadd.f32 0.0, %v1916
        %v1918 = vpop.f32.mrb[0].mxu0
        %v1919 = vadd.f32 0.0, %v1918
        %1920 = vmatprep.mubr.f32.mxu0 0.0
        %1921 = vmatmul.mubr.f32.gmra.mrb[0].mxu0 %v1797
        %v1922 = vpop.f32.mrb[0].mxu0
        %v1923 = vadd.f32 0.0, %v1922
        %v1924 = vpop.f32.mrb[0].mxu0
        %v1925 = vadd.f32 0.0, %v1924
        %1926 = vmatprep.mubr.f32.mxu0 0.0
        %1927 = vmatmul.mubr.f32.gmra.mrb[0].mxu0 %v1800
        %v1928 = vpop.f32.mrb[0].mxu0
        %v1929 = vadd.f32 0.0, %v1928
        %v1930 = vpop.f32.mrb[0].mxu0
        %v1931 = vadd.f32 0.0, %v1930
        %1932 = vmatprep.mubr.f32.mxu0 0.0
        %1933 = vmatmul.mubr.f32.gmra.mrb[0].mxu0 %v1803
        %v1934 = vpop.f32.mrb[0].mxu0
        %v1935 = vadd.f32 0.0, %v1934
        %v1936 = vpop.f32.mrb[0].mxu0
        %v1937 = vadd.f32 0.0, %v1936
        %1938 = vmatprep.mubr.f32.mxu0 0.0
        %1939 = vmatmul.mubr.f32.gmra.mrb[0].mxu0 %v1806
        %v1940 = vpop.f32.mrb[0].mxu0
        %v1941 = vadd.f32 0.0, %v1940
        %v1942 = vpop.f32.mrb[0].mxu0
        %v1943 = vadd.f32 0.0, %v1942
        %1944 = vmatprep.mubr.f32.mxu0 0.0
        %1945 = vmatmul.mubr.f32.gmra.mrb[0].mxu0 %v1809
        %v1946 = vpop.f32.mrb[0].mxu0
        %v1947 = vadd.f32 0.0, %v1946
        %v1948 = vpop.f32.mrb[0].mxu0
        %v1949 = vadd.f32 0.0, %v1948
        %1950 = vmatprep.mubr.f32.mxu0 0.0
        %1951 = vmatmul.mubr.f32.gmra.mrb[0].mxu0 %v1812
        %v1952 = vpop.f32.mrb[0].mxu0
        %v1953 = vadd.f32 0.0, %v1952
        %v1954 = vpop.f32.mrb[0].mxu0
        %v1955 = vadd.f32 0.0, %v1954
        %1956 = vmatprep.mubr.f32.mxu0 0.0
        %1957 = vmatmul.mubr.f32.gmra.mrb[0].mxu0 %v1815
        %v1958 = vpop.f32.mrb[0].mxu0
        %v1959 = vadd.f32 0.0, %v1958
        %v1960 = vpop.f32.mrb[0].mxu0
        %v1961 = vadd.f32 0.0, %v1960
        %1962 = vmatprep.mubr.f32.mxu0 0.0
        %1963 = vmatmul.mubr.f32.gmra.mrb[0].mxu0 %v1818
        %v1964 = vpop.f32.mrb[0].mxu0
        %v1965 = vadd.f32 0.0, %v1964
        %v1966 = vpop.f32.mrb[0].mxu0
        %v1967 = vadd.f32 0.0, %v1966
        %1968 = vmatprep.mubr.f32.mxu0 0.0
        %1969 = vmatmul.mubr.f32.gmra.mrb[0].mxu0 %v1821
        %v1970 = vpop.f32.mrb[0].mxu0
        %v1971 = vadd.f32 0.0, %v1970
        %v1972 = vpop.f32.mrb[0].mxu0
        %v1973 = vadd.f32 0.0, %v1972
        %1974 = vmatprep.mubr.f32.mxu0 0.0
        %1975 = vmatmul.mubr.f32.gmra.mrb[0].mxu0 %v1824
        %v1976 = vpop.f32.mrb[0].mxu0
        %v1977 = vadd.f32 0.0, %v1976
        %v1978 = vpop.f32.mrb[0].mxu0
        %v1979 = vadd.f32 0.0, %v1978
        %1980 = vmatprep.mubr.f32.mxu0 0.0
        %1981 = vmatmul.mubr.f32.gmra.mrb[0].mxu0 %v1827
        %v1982 = vpop.f32.mrb[0].mxu0
        %v1983 = vadd.f32 0.0, %v1982
        %v1984 = vpop.f32.mrb[0].mxu0
        %v1985 = vadd.f32 0.0, %v1984
        %1986 = vmatprep.mubr.f32.mxu0 0.0
        %1987 = vmatmul.mubr.f32.gmra.mrb[0].mxu0 %v1830
        %v1988 = vpop.f32.mrb[0].mxu0
        %v1989 = vadd.f32 0.0, %v1988
        %v1990 = vpop.f32.mrb[0].mxu0
        %v1991 = vadd.f32 0.0, %v1990
        %1992 = vdwg.mxu0
        %v1993 = vld [vmem:[%s12] sm:$0xff]
        %v1994 = vld [vmem:[%s12 + $0x8] sm:$0xff]
        %vm1995 = vcmask 130048
        %v1997 = vsel %vm1995, %v1766, 0
        %v2000 = vsel %vm1995, %v1767, 0
        %v2003 = vsel %vm1995, %v1768, 0
        %v2006 = vsel %vm1995, %v1769, 0
        %v2009 = vsel %vm1995, %v1770, 0
        %v2012 = vsel %vm1995, %v1771, 0
        %v2015 = vsel %vm1995, %v1772, 0
        %v2018 = vsel %vm1995, %v1773, 0
        %v2021 = vsel %vm1995, %v1774, 0
        %v2024 = vsel %vm1995, %v1775, 0
        %v2027 = vsel %vm1995, %v1776, 0
        %v2030 = vsel %vm1995, %v1777, 0
        %v2033 = vsel %vm1995, %v1778, 0
        %v2036 = vsel %vm1995, %v1779, 0
        %v2039 = vsel %vm1995, %v1780, 0
        %v2042 = vsel %vm1995, %v1781, 0
        %2044 = vmatprep.subr.mxu0 0.0
        %2045 = vmatpush1.msra.mxu0 %v1993
        %2046 = vmatprep.subr.mxu0 0.0
        %2047 = vmatpush1.msra.mxu0 %v1994
        %2048 = vmatprep.subr.mxu0 0.0
        %2049 = vmatpush1.msra.mxu0 0.0
        %2050 = vmatprep.subr.mxu0 0.0
        %2051 = vmatpush1.msra.mxu0 0.0
        %2052 = vmatprep.subr.mxu0 0.0
        %2053 = vmatpush1.msra.mxu0 0.0
        %2054 = vmatprep.subr.mxu0 0.0
        %2055 = vmatpush1.msra.mxu0 0.0
        %2056 = vmatprep.subr.mxu0 0.0
        %2057 = vmatpush1.msra.mxu0 0.0
        %2058 = vmatprep.subr.mxu0 0.0
        %2059 = vmatpush1.msra.mxu0 0.0
        %2060 = vmatprep.subr.mxu0 0.0
        %2061 = vmatpush1.msra.mxu0 0.0
        %2062 = vmatprep.subr.mxu0 0.0
        %2063 = vmatpush1.msra.mxu0 0.0
        %2064 = vmatprep.subr.mxu0 0.0
        %2065 = vmatpush1.msra.mxu0 0.0
        %2066 = vmatprep.subr.mxu0 0.0
        %2067 = vmatpush1.msra.mxu0 0.0
        %2068 = vmatprep.subr.mxu0 0.0
        %2069 = vmatpush1.msra.mxu0 0.0
        %2070 = vmatprep.subr.mxu0 0.0
        %2071 = vmatpush1.msra.mxu0 0.0
        %2072 = vmatprep.subr.mxu0 0.0
        %2073 = vmatpush1.msra.mxu0 0.0
        %2074 = vmatprep.subr.mxu0 0.0
        %2075 = vmatpush1.msra.mxu0 0.0
        %2076 = vmatprep.subr.mxu0 0.0
        %2077 = vmatpush1.msra.mxu0 0.0
        %2078 = vmatprep.subr.mxu0 0.0
        %2079 = vmatpush1.msra.mxu0 0.0
        %2080 = vmatprep.subr.mxu0 0.0
        %2081 = vmatpush1.msra.mxu0 0.0
        %2082 = vmatprep.subr.mxu0 0.0
        %2083 = vmatpush1.msra.mxu0 0.0
        %2084 = vmatprep.subr.mxu0 0.0
        %2085 = vmatpush1.msra.mxu0 0.0
        %2086 = vmatprep.subr.mxu0 0.0
        %2087 = vmatpush1.msra.mxu0 0.0
        %2088 = vmatprep.subr.mxu0 0.0
        %2089 = vmatpush1.msra.mxu0 0.0
        %2090 = vmatprep.subr.mxu0 0.0
        %2091 = vmatpush1.msra.mxu0 0.0
        %2092 = vmatprep.subr.mxu0 0.0
        %2093 = vmatpush1.msra.mxu0 0.0
        %2094 = vmatprep.subr.mxu0 0.0
        %2095 = vmatpush1.msra.mxu0 0.0
        %2096 = vmatprep.subr.mxu0 0.0
        %2097 = vmatpush1.msra.mxu0 0.0
        %2098 = vmatprep.subr.mxu0 0.0
        %2099 = vmatpush1.msra.mxu0 0.0
        %2100 = vmatprep.subr.mxu0 0.0
        %2101 = vmatpush1.msra.mxu0 0.0
        %2102 = vmatprep.subr.mxu0 0.0
        %2103 = vmatpush1.msra.mxu0 0.0
        %2104 = vmatprep.subr.mxu0 0.0
        %2105 = vmatpush1.msra.mxu0 0.0
        %2106 = vmatprep.subr.mxu0 0.0
        %2107 = vmatpush1.msra.mxu0 0.0
        %2108 = vmatprep.mubr.f32.mxu0 0.0
        %2109 = vmatmul.mubr.f32.gmra.mrb[0].mxu0 %v1997
        %v2110 = vpop.f32.mrb[0].mxu0
        %v2111 = vadd.f32 0.0, %v2110
        %v2112 = vpop.f32.mrb[0].mxu0
        %2113 = vmatprep.mubr.f32.mxu0 0.0
        %2114 = vmatmul.mubr.f32.gmra.mrb[0].mxu0 %v2000
        %v2115 = vpop.f32.mrb[0].mxu0
        %v2116 = vadd.f32 0.0, %v2115
        %v2117 = vpop.f32.mrb[0].mxu0
        %2118 = vmatprep.mubr.f32.mxu0 0.0
        %2119 = vmatmul.mubr.f32.gmra.mrb[0].mxu0 %v2003
        %v2120 = vpop.f32.mrb[0].mxu0
        %v2121 = vadd.f32 0.0, %v2120
        %v2122 = vpop.f32.mrb[0].mxu0
        %2123 = vmatprep.mubr.f32.mxu0 0.0
        %2124 = vmatmul.mubr.f32.gmra.mrb[0].mxu0 %v2006
        %v2125 = vpop.f32.mrb[0].mxu0
        %v2126 = vadd.f32 0.0, %v2125
        %v2127 = vpop.f32.mrb[0].mxu0
        %2128 = vmatprep.mubr.f32.mxu0 0.0
        %2129 = vmatmul.mubr.f32.gmra.mrb[0].mxu0 %v2009
        %v2130 = vpop.f32.mrb[0].mxu0
        %v2131 = vadd.f32 0.0, %v2130
        %v2132 = vpop.f32.mrb[0].mxu0
        %2133 = vmatprep.mubr.f32.mxu0 0.0
        %2134 = vmatmul.mubr.f32.gmra.mrb[0].mxu0 %v2012
        %v2135 = vpop.f32.mrb[0].mxu0
        %v2136 = vadd.f32 0.0, %v2135
        %v2137 = vpop.f32.mrb[0].mxu0
        %2138 = vmatprep.mubr.f32.mxu0 0.0
        %2139 = vmatmul.mubr.f32.gmra.mrb[0].mxu0 %v2015
        %v2140 = vpop.f32.mrb[0].mxu0
        %v2141 = vadd.f32 0.0, %v2140
        %v2142 = vpop.f32.mrb[0].mxu0
        %2143 = vmatprep.mubr.f32.mxu0 0.0
        %2144 = vmatmul.mubr.f32.gmra.mrb[0].mxu0 %v2018
        %v2145 = vpop.f32.mrb[0].mxu0
        %v2146 = vadd.f32 0.0, %v2145
        %v2147 = vpop.f32.mrb[0].mxu0
        %2148 = vmatprep.mubr.f32.mxu0 0.0
        %2149 = vmatmul.mubr.f32.gmra.mrb[0].mxu0 %v2021
        %v2150 = vpop.f32.mrb[0].mxu0
        %v2151 = vadd.f32 0.0, %v2150
        %v2152 = vpop.f32.mrb[0].mxu0
        %2153 = vmatprep.mubr.f32.mxu0 0.0
        %2154 = vmatmul.mubr.f32.gmra.mrb[0].mxu0 %v2024
        %v2155 = vpop.f32.mrb[0].mxu0
        %v2156 = vadd.f32 0.0, %v2155
        %v2157 = vpop.f32.mrb[0].mxu0
        %2158 = vmatprep.mubr.f32.mxu0 0.0
        %2159 = vmatmul.mubr.f32.gmra.mrb[0].mxu0 %v2027
        %v2160 = vpop.f32.mrb[0].mxu0
        %v2161 = vadd.f32 0.0, %v2160
        %v2162 = vpop.f32.mrb[0].mxu0
        %2163 = vmatprep.mubr.f32.mxu0 0.0
        %2164 = vmatmul.mubr.f32.gmra.mrb[0].mxu0 %v2030
        %v2165 = vpop.f32.mrb[0].mxu0
        %v2166 = vadd.f32 0.0, %v2165
        %v2167 = vpop.f32.mrb[0].mxu0
        %2168 = vmatprep.mubr.f32.mxu0 0.0
        %2169 = vmatmul.mubr.f32.gmra.mrb[0].mxu0 %v2033
        %v2170 = vpop.f32.mrb[0].mxu0
        %v2171 = vadd.f32 0.0, %v2170
        %v2172 = vpop.f32.mrb[0].mxu0
        %2173 = vmatprep.mubr.f32.mxu0 0.0
        %2174 = vmatmul.mubr.f32.gmra.mrb[0].mxu0 %v2036
        %v2175 = vpop.f32.mrb[0].mxu0
        %v2176 = vadd.f32 0.0, %v2175
        %v2177 = vpop.f32.mrb[0].mxu0
        %2178 = vmatprep.mubr.f32.mxu0 0.0
        %2179 = vmatmul.mubr.f32.gmra.mrb[0].mxu0 %v2039
        %v2180 = vpop.f32.mrb[0].mxu0
        %v2181 = vadd.f32 0.0, %v2180
        %v2182 = vpop.f32.mrb[0].mxu0
        %2183 = vmatprep.mubr.f32.mxu0 0.0
        %2184 = vmatmul.mubr.f32.gmra.mrb[0].mxu0 %v2042
        %v2185 = vpop.f32.mrb[0].mxu0
        %v2186 = vadd.f32 0.0, %v2185
        %v2187 = vpop.f32.mrb[0].mxu0
        %2188 = vdwg.mxu0
        %v2189 = vadd.f32 %v1899, %v2111
        %v2190 = vadd.f32 %v1905, %v2116
        %v2191 = vadd.f32 %v1911, %v2121
        %v2192 = vadd.f32 %v1917, %v2126
        %v2193 = vadd.f32 %v1923, %v2131
        %v2194 = vadd.f32 %v1929, %v2136
        %v2195 = vadd.f32 %v1935, %v2141
        %v2196 = vadd.f32 %v1941, %v2146
        %v2197 = vadd.f32 %v1947, %v2151
        %v2198 = vadd.f32 %v1953, %v2156
        %v2199 = vadd.f32 %v1959, %v2161
        %v2200 = vadd.f32 %v1965, %v2166
        %v2201 = vadd.f32 %v1971, %v2171
        %v2202 = vadd.f32 %v1977, %v2176
        %v2203 = vadd.f32 %v1983, %v2181
        %v2204 = vadd.f32 %v1989, %v2186
        %v2205 = vand.u32 2147483647, %v2189
        %vm2206 = vcmp.le.f32.partialorder %v2205, 0.7853982
        %vm2207 = vcmp.lt.s32.totalorder %v2189, 0
        %v2208 = vand.u32 %v2189, 2139095040
        %v2209 = vshrl.u32 %v2208, 23
        %v2210 = vsub.s32 %v2209, 127
        %v2211 = vand.u32 2147483647, %v2189
        %v2212 = vand.u32 %v2211, 8388607
        %v2213 = vor.u32 %v2212, 8388608
        %v2214 = vsub.s32 0, %v2213
        %v2215 = vadd.s32 %v2210, 1
        %vm2216 = vcmp.gt.s32.totalorder %v2215, 0
        %v2217 = vsel %vm2216, %v2215, 0
        %v2218 = vshrl.u32 %v2217, 5
        %v2219 = vand.u32 %v2217, 31
        %v2220 = vsub.s32 32, %v2219
        %v2221 = vshrl.u32 683565275, %v2220
        %v2222 = vshll.u32 683565275, %v2219
        %v2223 = vshrl.u32 2475754826, %v2220
        %v2224 = vor.u32 %v2222, %v2223
        %v2225 = vshll.u32 2475754826, %v2219
        %v2226 = vshrl.u32 2131351028, %v2220
        %v2227 = vor.u32 %v2225, %v2226
        %v2228 = vshll.u32 2131351028, %v2219
        %v2229 = vshrl.u32 2102212464, %v2220
        %v2230 = vor.u32 %v2228, %v2229
        %v2231 = vshll.u32 2102212464, %v2219
        %v2232 = vshrl.u32 920167782, %v2220
        %v2233 = vor.u32 %v2231, %v2232
        %v2234 = vshll.u32 920167782, %v2219
        %v2235 = vshrl.u32 1326507024, %v2220
        %v2236 = vor.u32 %v2234, %v2235
        %vm2237 = vcmp.lt.s32.totalorder %v2218, 1
        %vm2238 = vcmp.lt.s32.totalorder %v2218, 2
        %vm2239 = vcmp.lt.s32.totalorder %v2218, 3
        %vm2240 = vcmp.lt.s32.totalorder %v2218, 4
        %v2241 = vsel %vm2237, %v2221, %v2224
        %v2242 = vsel %vm2240, %v2230, 2102212464
        %v2243 = vsel %vm2239, %v2227, %v2242
        %v2244 = vsel %vm2238, %v2241, %v2243
        %v2245 = vsel %vm2237, %v2224, %v2227
        %v2246 = vsel %vm2240, %v2233, 920167782
        %v2247 = vsel %vm2239, %v2230, %v2246
        %v2248 = vsel %vm2238, %v2245, %v2247
        %v2249 = vsel %vm2237, %v2227, %v2230
        %v2250 = vsel %vm2240, %v2236, 1326507024
        %v2251 = vsel %vm2239, %v2233, %v2250
        %v2252 = vsel %vm2238, %v2249, %v2251
        %v2253 = vshll.u32 %v2213, 8
        %v2254 = vmul.u32.u64.compose %v2253, %v2252
        %v2255 = vextract.low.u32 %v2254
        %v2256 = vextract.high.u32 %v2254
        %v2257 = vmul.u32.u64.compose %v2253, %v2248
        %v2258 = vextract.low.u32 %v2257
        %v2259 = vextract.high.u32 %v2257
        %v2260 = vmul.u32 %v2253, %v2244
        %v2261 = vadd.s32 %v2256, %v2258
        %vm2262 = vc.u32 %v2256, %v2258
        %v2263 = vadd.s32 %v2259, 1
        %v2264 = vsel %vm2262, %v2263, %v2259
        %v2265 = vadd.s32 %v2260, %v2264
        %v2266 = vadd.s32 %v2265, 536870912
        %v2267 = vshrl.u32 %v2266, 30
        %v2268 = vshll.u32 %v2267, 30
        %v2269 = vsub.s32 %v2265, %v2268
        %vm2270 = vcmp.lt.s32.totalorder %v2269, 0
        %v2271 = vsub.s32 0, %v2269
        %v2272 = vsel %vm2270, %v2271, %v2269
        %v2273 = vclz %v2272
        %v2274 = vsub.s32 %v2273, 2
        %vm2275 = vcmp.gt.s32.totalorder 0, %v2274
        %v2276 = vsel %vm2275, 0, %v2274
        %v2277 = vsub.s32 32, %v2276
        %v2278 = vshll.u32 %v2269, %v2276
        %v2279 = vshrl.u32 %v2261, %v2277
        %v2280 = vor.u32 %v2278, %v2279
        %v2281 = vsub.s32 4294967266, %v2276
        %v2282 = vadd.s32 %v2281, 127
        %v2283 = vshll.u32 %v2282, 23
        %v2284 = vor.u32 4788187, %v2283
        %v2285 = vand.u32 2147483647, %v2284
        %v2287 = vcvt.s32.f32 %v2280
        %v2288 = vmul.f32 %v2287, %v2285
        %v2289 = vxor.u32 %v2288, 2147483648
        %v2290 = vsel %vm2207, %v2289, %v2288
        %v2291 = vsub.s32 4, %v2267
        %v2292 = vsel %vm2207, %v2291, %v2267
        %v2293 = vsel %vm2206, %v2189, %v2290
        %v2294 = vsel %vm2206, 0, %v2292
        %v2295 = vcosq.f32.pop %v2293
        %v2296 = vsinq.f32.pop %v2293
        %vm2297 = vweird.f32 %v2189
        %v2298 = vand.u32 %v2294, 3
        %vm2299 = vcmp.lt.s32.totalorder %v2298, 2
        %vm2300 = vcmp.eq.s32.totalorder %v2298, 0
        %v2301 = vxor.u32 %v2296, 2147483648
        %v2302 = vsel %vm2300, %v2295, %v2301
        %vm2303 = vcmp.eq.s32.totalorder %v2298, 2
        %v2304 = vxor.u32 %v2295, 2147483648
        %v2305 = vsel %vm2303, %v2304, %v2296
        %v2306 = vsel %vm2299, %v2302, %v2305
        %v2307 = vsel %vm2297, nan, %v2306
        %v2308 = vand.u32 2147483647, %v2190
        %vm2309 = vcmp.le.f32.partialorder %v2308, 0.7853982
        %vm2310 = vcmp.lt.s32.totalorder %v2190, 0
        %v2311 = vand.u32 %v2190, 2139095040
        %v2312 = vshrl.u32 %v2311, 23
        %v2313 = vsub.s32 %v2312, 127
        %v2314 = vand.u32 2147483647, %v2190
        %v2315 = vand.u32 %v2314, 8388607
        %v2316 = vor.u32 %v2315, 8388608
        %v2317 = vsub.s32 0, %v2316
        %v2318 = vadd.s32 %v2313, 1
        %vm2319 = vcmp.gt.s32.totalorder %v2318, 0
        %v2320 = vsel %vm2319, %v2318, 0
        %v2321 = vshrl.u32 %v2320, 5
        %v2322 = vand.u32 %v2320, 31
        %v2323 = vsub.s32 32, %v2322
        %v2324 = vshrl.u32 683565275, %v2323
        %v2325 = vshll.u32 683565275, %v2322
        %v2326 = vshrl.u32 2475754826, %v2323
        %v2327 = vor.u32 %v2325, %v2326
        %v2328 = vshll.u32 2475754826, %v2322
        %v2329 = vshrl.u32 2131351028, %v2323
        %v2330 = vor.u32 %v2328, %v2329
        %v2331 = vshll.u32 2131351028, %v2322
        %v2332 = vshrl.u32 2102212464, %v2323
        %v2333 = vor.u32 %v2331, %v2332
        %v2334 = vshll.u32 2102212464, %v2322
        %v2335 = vshrl.u32 920167782, %v2323
        %v2336 = vor.u32 %v2334, %v2335
        %v2337 = vshll.u32 920167782, %v2322
        %v2338 = vshrl.u32 1326507024, %v2323
        %v2339 = vor.u32 %v2337, %v2338
        %vm2340 = vcmp.lt.s32.totalorder %v2321, 1
        %vm2341 = vcmp.lt.s32.totalorder %v2321, 2
        %vm2342 = vcmp.lt.s32.totalorder %v2321, 3
        %vm2343 = vcmp.lt.s32.totalorder %v2321, 4
        %v2344 = vsel %vm2340, %v2324, %v2327
        %v2345 = vsel %vm2343, %v2333, 2102212464
        %v2346 = vsel %vm2342, %v2330, %v2345
        %v2347 = vsel %vm2341, %v2344, %v2346
        %v2348 = vsel %vm2340, %v2327, %v2330
        %v2349 = vsel %vm2343, %v2336, 920167782
        %v2350 = vsel %vm2342, %v2333, %v2349
        %v2351 = vsel %vm2341, %v2348, %v2350
        %v2352 = vsel %vm2340, %v2330, %v2333
        %v2353 = vsel %vm2343, %v2339, 1326507024
        %v2354 = vsel %vm2342, %v2336, %v2353
        %v2355 = vsel %vm2341, %v2352, %v2354
        %v2356 = vshll.u32 %v2316, 8
        %v2357 = vmul.u32.u64.compose %v2356, %v2355
        %v2358 = vextract.low.u32 %v2357
        %v2359 = vextract.high.u32 %v2357
        %v2360 = vmul.u32.u64.compose %v2356, %v2351
        %v2361 = vextract.low.u32 %v2360
        %v2362 = vextract.high.u32 %v2360
        %v2363 = vmul.u32 %v2356, %v2347
        %v2364 = vadd.s32 %v2359, %v2361
        %vm2365 = vc.u32 %v2359, %v2361
        %v2366 = vadd.s32 %v2362, 1
        %v2367 = vsel %vm2365, %v2366, %v2362
        %v2368 = vadd.s32 %v2363, %v2367
        %v2369 = vadd.s32 %v2368, 536870912
        %v2370 = vshrl.u32 %v2369, 30
        %v2371 = vshll.u32 %v2370, 30
        %v2372 = vsub.s32 %v2368, %v2371
        %vm2373 = vcmp.lt.s32.totalorder %v2372, 0
        %v2374 = vsub.s32 0, %v2372
        %v2375 = vsel %vm2373, %v2374, %v2372
        %v2376 = vclz %v2375
        %v2377 = vsub.s32 %v2376, 2
        %vm2378 = vcmp.gt.s32.totalorder 0, %v2377
        %v2379 = vsel %vm2378, 0, %v2377
        %v2380 = vsub.s32 32, %v2379
        %v2381 = vshll.u32 %v2372, %v2379
        %v2382 = vshrl.u32 %v2364, %v2380
        %v2383 = vor.u32 %v2381, %v2382
        %v2384 = vsub.s32 4294967266, %v2379
        %v2385 = vadd.s32 %v2384, 127
        %v2386 = vshll.u32 %v2385, 23
        %v2387 = vor.u32 4788187, %v2386
        %v2388 = vand.u32 2147483647, %v2387
        %v2390 = vcvt.s32.f32 %v2383
        %v2391 = vmul.f32 %v2390, %v2388
        %v2392 = vxor.u32 %v2391, 2147483648
        %v2393 = vsel %vm2310, %v2392, %v2391
        %v2394 = vsub.s32 4, %v2370
        %v2395 = vsel %vm2310, %v2394, %v2370
        %v2396 = vsel %vm2309, %v2190, %v2393
        %v2397 = vsel %vm2309, 0, %v2395
        %v2398 = vcosq.f32.pop %v2396
        %v2399 = vsinq.f32.pop %v2396
        %vm2400 = vweird.f32 %v2190
        %v2401 = vand.u32 %v2397, 3
        %vm2402 = vcmp.lt.s32.totalorder %v2401, 2
        %vm2403 = vcmp.eq.s32.totalorder %v2401, 0
        %v2404 = vxor.u32 %v2399, 2147483648
        %v2405 = vsel %vm2403, %v2398, %v2404
        %vm2406 = vcmp.eq.s32.totalorder %v2401, 2
        %v2407 = vxor.u32 %v2398, 2147483648
        %v2408 = vsel %vm2406, %v2407, %v2399
        %v2409 = vsel %vm2402, %v2405, %v2408
        %v2410 = vsel %vm2400, nan, %v2409
        %v2411 = vand.u32 2147483647, %v2191
        %vm2412 = vcmp.le.f32.partialorder %v2411, 0.7853982
        %vm2413 = vcmp.lt.s32.totalorder %v2191, 0
        %v2414 = vand.u32 %v2191, 2139095040
        %v2415 = vshrl.u32 %v2414, 23
        %v2416 = vsub.s32 %v2415, 127
        %v2417 = vand.u32 2147483647, %v2191
        %v2418 = vand.u32 %v2417, 8388607
        %v2419 = vor.u32 %v2418, 8388608
        %v2420 = vsub.s32 0, %v2419
        %v2421 = vadd.s32 %v2416, 1
        %vm2422 = vcmp.gt.s32.totalorder %v2421, 0
        %v2423 = vsel %vm2422, %v2421, 0
        %v2424 = vshrl.u32 %v2423, 5
        %v2425 = vand.u32 %v2423, 31
        %v2426 = vsub.s32 32, %v2425
        %v2427 = vshrl.u32 683565275, %v2426
        %v2428 = vshll.u32 683565275, %v2425
        %v2429 = vshrl.u32 2475754826, %v2426
        %v2430 = vor.u32 %v2428, %v2429
        %v2431 = vshll.u32 2475754826, %v2425
        %v2432 = vshrl.u32 2131351028, %v2426
        %v2433 = vor.u32 %v2431, %v2432
        %v2434 = vshll.u32 2131351028, %v2425
        %v2435 = vshrl.u32 2102212464, %v2426
        %v2436 = vor.u32 %v2434, %v2435
        %v2437 = vshll.u32 2102212464, %v2425
        %v2438 = vshrl.u32 920167782, %v2426
        %v2439 = vor.u32 %v2437, %v2438
        %v2440 = vshll.u32 920167782, %v2425
        %v2441 = vshrl.u32 1326507024, %v2426
        %v2442 = vor.u32 %v2440, %v2441
        %vm2443 = vcmp.lt.s32.totalorder %v2424, 1
        %vm2444 = vcmp.lt.s32.totalorder %v2424, 2
        %vm2445 = vcmp.lt.s32.totalorder %v2424, 3
        %vm2446 = vcmp.lt.s32.totalorder %v2424, 4
        %v2447 = vsel %vm2443, %v2427, %v2430
        %v2448 = vsel %vm2446, %v2436, 2102212464
        %v2449 = vsel %vm2445, %v2433, %v2448
        %v2450 = vsel %vm2444, %v2447, %v2449
        %v2451 = vsel %vm2443, %v2430, %v2433
        %v2452 = vsel %vm2446, %v2439, 920167782
        %v2453 = vsel %vm2445, %v2436, %v2452
        %v2454 = vsel %vm2444, %v2451, %v2453
        %v2455 = vsel %vm2443, %v2433, %v2436
        %v2456 = vsel %vm2446, %v2442, 1326507024
        %v2457 = vsel %vm2445, %v2439, %v2456
        %v2458 = vsel %vm2444, %v2455, %v2457
        %v2459 = vshll.u32 %v2419, 8
        %v2460 = vmul.u32.u64.compose %v2459, %v2458
        %v2461 = vextract.low.u32 %v2460
        %v2462 = vextract.high.u32 %v2460
        %v2463 = vmul.u32.u64.compose %v2459, %v2454
        %v2464 = vextract.low.u32 %v2463
        %v2465 = vextract.high.u32 %v2463
        %v2466 = vmul.u32 %v2459, %v2450
        %v2467 = vadd.s32 %v2462, %v2464
        %vm2468 = vc.u32 %v2462, %v2464
        %v2469 = vadd.s32 %v2465, 1
        %v2470 = vsel %vm2468, %v2469, %v2465
        %v2471 = vadd.s32 %v2466, %v2470
        %v2472 = vadd.s32 %v2471, 536870912
        %v2473 = vshrl.u32 %v2472, 30
        %v2474 = vshll.u32 %v2473, 30
        %v2475 = vsub.s32 %v2471, %v2474
        %vm2476 = vcmp.lt.s32.totalorder %v2475, 0
        %v2477 = vsub.s32 0, %v2475
        %v2478 = vsel %vm2476, %v2477, %v2475
        %v2479 = vclz %v2478
        %v2480 = vsub.s32 %v2479, 2
        %vm2481 = vcmp.gt.s32.totalorder 0, %v2480
        %v2482 = vsel %vm2481, 0, %v2480
        %v2483 = vsub.s32 32, %v2482
        %v2484 = vshll.u32 %v2475, %v2482
        %v2485 = vshrl.u32 %v2467, %v2483
        %v2486 = vor.u32 %v2484, %v2485
        %v2487 = vsub.s32 4294967266, %v2482
        %v2488 = vadd.s32 %v2487, 127
        %v2489 = vshll.u32 %v2488, 23
        %v2490 = vor.u32 4788187, %v2489
        %v2491 = vand.u32 2147483647, %v2490
        %v2493 = vcvt.s32.f32 %v2486
        %v2494 = vmul.f32 %v2493, %v2491
        %v2495 = vxor.u32 %v2494, 2147483648
        %v2496 = vsel %vm2413, %v2495, %v2494
        %v2497 = vsub.s32 4, %v2473
        %v2498 = vsel %vm2413, %v2497, %v2473
        %v2499 = vsel %vm2412, %v2191, %v2496
        %v2500 = vsel %vm2412, 0, %v2498
        %v2501 = vcosq.f32.pop %v2499
        %v2502 = vsinq.f32.pop %v2499
        %vm2503 = vweird.f32 %v2191
        %v2504 = vand.u32 %v2500, 3
        %vm2505 = vcmp.lt.s32.totalorder %v2504, 2
        %vm2506 = vcmp.eq.s32.totalorder %v2504, 0
        %v2507 = vxor.u32 %v2502, 2147483648
        %v2508 = vsel %vm2506, %v2501, %v2507
        %vm2509 = vcmp.eq.s32.totalorder %v2504, 2
        %v2510 = vxor.u32 %v2501, 2147483648
        %v2511 = vsel %vm2509, %v2510, %v2502
        %v2512 = vsel %vm2505, %v2508, %v2511
        %v2513 = vsel %vm2503, nan, %v2512
        %v2514 = vand.u32 2147483647, %v2192
        %vm2515 = vcmp.le.f32.partialorder %v2514, 0.7853982
        %vm2516 = vcmp.lt.s32.totalorder %v2192, 0
        %v2517 = vand.u32 %v2192, 2139095040
        %v2518 = vshrl.u32 %v2517, 23
        %v2519 = vsub.s32 %v2518, 127
        %v2520 = vand.u32 2147483647, %v2192
        %v2521 = vand.u32 %v2520, 8388607
        %v2522 = vor.u32 %v2521, 8388608
        %v2523 = vsub.s32 0, %v2522
        %v2524 = vadd.s32 %v2519, 1
        %vm2525 = vcmp.gt.s32.totalorder %v2524, 0
        %v2526 = vsel %vm2525, %v2524, 0
        %v2527 = vshrl.u32 %v2526, 5
        %v2528 = vand.u32 %v2526, 31
        %v2529 = vsub.s32 32, %v2528
        %v2530 = vshrl.u32 683565275, %v2529
        %v2531 = vshll.u32 683565275, %v2528
        %v2532 = vshrl.u32 2475754826, %v2529
        %v2533 = vor.u32 %v2531, %v2532
        %v2534 = vshll.u32 2475754826, %v2528
        %v2535 = vshrl.u32 2131351028, %v2529
        %v2536 = vor.u32 %v2534, %v2535
        %v2537 = vshll.u32 2131351028, %v2528
        %v2538 = vshrl.u32 2102212464, %v2529
        %v2539 = vor.u32 %v2537, %v2538
        %v2540 = vshll.u32 2102212464, %v2528
        %v2541 = vshrl.u32 920167782, %v2529
        %v2542 = vor.u32 %v2540, %v2541
        %v2543 = vshll.u32 920167782, %v2528
        %v2544 = vshrl.u32 1326507024, %v2529
        %v2545 = vor.u32 %v2543, %v2544
        %vm2546 = vcmp.lt.s32.totalorder %v2527, 1
        %vm2547 = vcmp.lt.s32.totalorder %v2527, 2
        %vm2548 = vcmp.lt.s32.totalorder %v2527, 3
        %vm2549 = vcmp.lt.s32.totalorder %v2527, 4
        %v2550 = vsel %vm2546, %v2530, %v2533
        %v2551 = vsel %vm2549, %v2539, 2102212464
        %v2552 = vsel %vm2548, %v2536, %v2551
        %v2553 = vsel %vm2547, %v2550, %v2552
        %v2554 = vsel %vm2546, %v2533, %v2536
        %v2555 = vsel %vm2549, %v2542, 920167782
        %v2556 = vsel %vm2548, %v2539, %v2555
        %v2557 = vsel %vm2547, %v2554, %v2556
        %v2558 = vsel %vm2546, %v2536, %v2539
        %v2559 = vsel %vm2549, %v2545, 1326507024
        %v2560 = vsel %vm2548, %v2542, %v2559
        %v2561 = vsel %vm2547, %v2558, %v2560
        %v2562 = vshll.u32 %v2522, 8
        %v2563 = vmul.u32.u64.compose %v2562, %v2561
        %v2564 = vextract.low.u32 %v2563
        %v2565 = vextract.high.u32 %v2563
        %v2566 = vmul.u32.u64.compose %v2562, %v2557
        %v2567 = vextract.low.u32 %v2566
        %v2568 = vextract.high.u32 %v2566
        %v2569 = vmul.u32 %v2562, %v2553
        %v2570 = vadd.s32 %v2565, %v2567
        %vm2571 = vc.u32 %v2565, %v2567
        %v2572 = vadd.s32 %v2568, 1
        %v2573 = vsel %vm2571, %v2572, %v2568
        %v2574 = vadd.s32 %v2569, %v2573
        %v2575 = vadd.s32 %v2574, 536870912
        %v2576 = vshrl.u32 %v2575, 30
        %v2577 = vshll.u32 %v2576, 30
        %v2578 = vsub.s32 %v2574, %v2577
        %vm2579 = vcmp.lt.s32.totalorder %v2578, 0
        %v2580 = vsub.s32 0, %v2578
        %v2581 = vsel %vm2579, %v2580, %v2578
        %v2582 = vclz %v2581
        %v2583 = vsub.s32 %v2582, 2
        %vm2584 = vcmp.gt.s32.totalorder 0, %v2583
        %v2585 = vsel %vm2584, 0, %v2583
        %v2586 = vsub.s32 32, %v2585
        %v2587 = vshll.u32 %v2578, %v2585
        %v2588 = vshrl.u32 %v2570, %v2586
        %v2589 = vor.u32 %v2587, %v2588
        %v2590 = vsub.s32 4294967266, %v2585
        %v2591 = vadd.s32 %v2590, 127
        %v2592 = vshll.u32 %v2591, 23
        %v2593 = vor.u32 4788187, %v2592
        %v2594 = vand.u32 2147483647, %v2593
        %v2596 = vcvt.s32.f32 %v2589
        %v2597 = vmul.f32 %v2596, %v2594
        %v2598 = vxor.u32 %v2597, 2147483648
        %v2599 = vsel %vm2516, %v2598, %v2597
        %v2600 = vsub.s32 4, %v2576
        %v2601 = vsel %vm2516, %v2600, %v2576
        %v2602 = vsel %vm2515, %v2192, %v2599
        %v2603 = vsel %vm2515, 0, %v2601
        %v2604 = vcosq.f32.pop %v2602
        %v2605 = vsinq.f32.pop %v2602
        %vm2606 = vweird.f32 %v2192
        %v2607 = vand.u32 %v2603, 3
        %vm2608 = vcmp.lt.s32.totalorder %v2607, 2
        %vm2609 = vcmp.eq.s32.totalorder %v2607, 0
        %v2610 = vxor.u32 %v2605, 2147483648
        %v2611 = vsel %vm2609, %v2604, %v2610
        %vm2612 = vcmp.eq.s32.totalorder %v2607, 2
        %v2613 = vxor.u32 %v2604, 2147483648
        %v2614 = vsel %vm2612, %v2613, %v2605
        %v2615 = vsel %vm2608, %v2611, %v2614
        %v2616 = vsel %vm2606, nan, %v2615
        %v2617 = vand.u32 2147483647, %v2193
        %vm2618 = vcmp.le.f32.partialorder %v2617, 0.7853982
        %vm2619 = vcmp.lt.s32.totalorder %v2193, 0
        %v2620 = vand.u32 %v2193, 2139095040
        %v2621 = vshrl.u32 %v2620, 23
        %v2622 = vsub.s32 %v2621, 127
        %v2623 = vand.u32 2147483647, %v2193
        %v2624 = vand.u32 %v2623, 8388607
        %v2625 = vor.u32 %v2624, 8388608
        %v2626 = vsub.s32 0, %v2625
        %v2627 = vadd.s32 %v2622, 1
        %vm2628 = vcmp.gt.s32.totalorder %v2627, 0
        %v2629 = vsel %vm2628, %v2627, 0
        %v2630 = vshrl.u32 %v2629, 5
        %v2631 = vand.u32 %v2629, 31
        %v2632 = vsub.s32 32, %v2631
        %v2633 = vshrl.u32 683565275, %v2632
        %v2634 = vshll.u32 683565275, %v2631
        %v2635 = vshrl.u32 2475754826, %v2632
        %v2636 = vor.u32 %v2634, %v2635
        %v2637 = vshll.u32 2475754826, %v2631
        %v2638 = vshrl.u32 2131351028, %v2632
        %v2639 = vor.u32 %v2637, %v2638
        %v2640 = vshll.u32 2131351028, %v2631
        %v2641 = vshrl.u32 2102212464, %v2632
        %v2642 = vor.u32 %v2640, %v2641
        %v2643 = vshll.u32 2102212464, %v2631
        %v2644 = vshrl.u32 920167782, %v2632
        %v2645 = vor.u32 %v2643, %v2644
        %v2646 = vshll.u32 920167782, %v2631
        %v2647 = vshrl.u32 1326507024, %v2632
        %v2648 = vor.u32 %v2646, %v2647
        %vm2649 = vcmp.lt.s32.totalorder %v2630, 1
        %vm2650 = vcmp.lt.s32.totalorder %v2630, 2
        %vm2651 = vcmp.lt.s32.totalorder %v2630, 3
        %vm2652 = vcmp.lt.s32.totalorder %v2630, 4
        %v2653 = vsel %vm2649, %v2633, %v2636
        %v2654 = vsel %vm2652, %v2642, 2102212464
        %v2655 = vsel %vm2651, %v2639, %v2654
        %v2656 = vsel %vm2650, %v2653, %v2655
        %v2657 = vsel %vm2649, %v2636, %v2639
        %v2658 = vsel %vm2652, %v2645, 920167782
        %v2659 = vsel %vm2651, %v2642, %v2658
        %v2660 = vsel %vm2650, %v2657, %v2659
        %v2661 = vsel %vm2649, %v2639, %v2642
        %v2662 = vsel %vm2652, %v2648, 1326507024
        %v2663 = vsel %vm2651, %v2645, %v2662
        %v2664 = vsel %vm2650, %v2661, %v2663
        %v2665 = vshll.u32 %v2625, 8
        %v2666 = vmul.u32.u64.compose %v2665, %v2664
        %v2667 = vextract.low.u32 %v2666
        %v2668 = vextract.high.u32 %v2666
        %v2669 = vmul.u32.u64.compose %v2665, %v2660
        %v2670 = vextract.low.u32 %v2669
        %v2671 = vextract.high.u32 %v2669
        %v2672 = vmul.u32 %v2665, %v2656
        %v2673 = vadd.s32 %v2668, %v2670
        %vm2674 = vc.u32 %v2668, %v2670
        %v2675 = vadd.s32 %v2671, 1
        %v2676 = vsel %vm2674, %v2675, %v2671
        %v2677 = vadd.s32 %v2672, %v2676
        %v2678 = vadd.s32 %v2677, 536870912
        %v2679 = vshrl.u32 %v2678, 30
        %v2680 = vshll.u32 %v2679, 30
        %v2681 = vsub.s32 %v2677, %v2680
        %vm2682 = vcmp.lt.s32.totalorder %v2681, 0
        %v2683 = vsub.s32 0, %v2681
        %v2684 = vsel %vm2682, %v2683, %v2681
        %v2685 = vclz %v2684
        %v2686 = vsub.s32 %v2685, 2
        %vm2687 = vcmp.gt.s32.totalorder 0, %v2686
        %v2688 = vsel %vm2687, 0, %v2686
        %v2689 = vsub.s32 32, %v2688
        %v2690 = vshll.u32 %v2681, %v2688
        %v2691 = vshrl.u32 %v2673, %v2689
        %v2692 = vor.u32 %v2690, %v2691
        %v2693 = vsub.s32 4294967266, %v2688
        %v2694 = vadd.s32 %v2693, 127
        %v2695 = vshll.u32 %v2694, 23
        %v2696 = vor.u32 4788187, %v2695
        %v2697 = vand.u32 2147483647, %v2696
        %v2699 = vcvt.s32.f32 %v2692
        %v2700 = vmul.f32 %v2699, %v2697
        %v2701 = vxor.u32 %v2700, 2147483648
        %v2702 = vsel %vm2619, %v2701, %v2700
        %v2703 = vsub.s32 4, %v2679
        %v2704 = vsel %vm2619, %v2703, %v2679
        %v2705 = vsel %vm2618, %v2193, %v2702
        %v2706 = vsel %vm2618, 0, %v2704
        %v2707 = vcosq.f32.pop %v2705
        %v2708 = vsinq.f32.pop %v2705
        %vm2709 = vweird.f32 %v2193
        %v2710 = vand.u32 %v2706, 3
        %vm2711 = vcmp.lt.s32.totalorder %v2710, 2
        %vm2712 = vcmp.eq.s32.totalorder %v2710, 0
        %v2713 = vxor.u32 %v2708, 2147483648
        %v2714 = vsel %vm2712, %v2707, %v2713
        %vm2715 = vcmp.eq.s32.totalorder %v2710, 2
        %v2716 = vxor.u32 %v2707, 2147483648
        %v2717 = vsel %vm2715, %v2716, %v2708
        %v2718 = vsel %vm2711, %v2714, %v2717
        %v2719 = vsel %vm2709, nan, %v2718
        %v2720 = vand.u32 2147483647, %v2194
        %vm2721 = vcmp.le.f32.partialorder %v2720, 0.7853982
        %vm2722 = vcmp.lt.s32.totalorder %v2194, 0
        %v2723 = vand.u32 %v2194, 2139095040
        %v2724 = vshrl.u32 %v2723, 23
        %v2725 = vsub.s32 %v2724, 127
        %v2726 = vand.u32 2147483647, %v2194
        %v2727 = vand.u32 %v2726, 8388607
        %v2728 = vor.u32 %v2727, 8388608
        %v2729 = vsub.s32 0, %v2728
        %v2730 = vadd.s32 %v2725, 1
        %vm2731 = vcmp.gt.s32.totalorder %v2730, 0
        %v2732 = vsel %vm2731, %v2730, 0
        %v2733 = vshrl.u32 %v2732, 5
        %v2734 = vand.u32 %v2732, 31
        %v2735 = vsub.s32 32, %v2734
        %v2736 = vshrl.u32 683565275, %v2735
        %v2737 = vshll.u32 683565275, %v2734
        %v2738 = vshrl.u32 2475754826, %v2735
        %v2739 = vor.u32 %v2737, %v2738
        %v2740 = vshll.u32 2475754826, %v2734
        %v2741 = vshrl.u32 2131351028, %v2735
        %v2742 = vor.u32 %v2740, %v2741
        %v2743 = vshll.u32 2131351028, %v2734
        %v2744 = vshrl.u32 2102212464, %v2735
        %v2745 = vor.u32 %v2743, %v2744
        %v2746 = vshll.u32 2102212464, %v2734
        %v2747 = vshrl.u32 920167782, %v2735
        %v2748 = vor.u32 %v2746, %v2747
        %v2749 = vshll.u32 920167782, %v2734
        %v2750 = vshrl.u32 1326507024, %v2735
        %v2751 = vor.u32 %v2749, %v2750
        %vm2752 = vcmp.lt.s32.totalorder %v2733, 1
        %vm2753 = vcmp.lt.s32.totalorder %v2733, 2
        %vm2754 = vcmp.lt.s32.totalorder %v2733, 3
        %vm2755 = vcmp.lt.s32.totalorder %v2733, 4
        %v2756 = vsel %vm2752, %v2736, %v2739
        %v2757 = vsel %vm2755, %v2745, 2102212464
        %v2758 = vsel %vm2754, %v2742, %v2757
        %v2759 = vsel %vm2753, %v2756, %v2758
        %v2760 = vsel %vm2752, %v2739, %v2742
        %v2761 = vsel %vm2755, %v2748, 920167782
        %v2762 = vsel %vm2754, %v2745, %v2761
        %v2763 = vsel %vm2753, %v2760, %v2762
        %v2764 = vsel %vm2752, %v2742, %v2745
        %v2765 = vsel %vm2755, %v2751, 1326507024
        %v2766 = vsel %vm2754, %v2748, %v2765
        %v2767 = vsel %vm2753, %v2764, %v2766
        %v2768 = vshll.u32 %v2728, 8
        %v2769 = vmul.u32.u64.compose %v2768, %v2767
        %v2770 = vextract.low.u32 %v2769
        %v2771 = vextract.high.u32 %v2769
        %v2772 = vmul.u32.u64.compose %v2768, %v2763
        %v2773 = vextract.low.u32 %v2772
        %v2774 = vextract.high.u32 %v2772
        %v2775 = vmul.u32 %v2768, %v2759
        %v2776 = vadd.s32 %v2771, %v2773
        %vm2777 = vc.u32 %v2771, %v2773
        %v2778 = vadd.s32 %v2774, 1
        %v2779 = vsel %vm2777, %v2778, %v2774
        %v2780 = vadd.s32 %v2775, %v2779
        %v2781 = vadd.s32 %v2780, 536870912
        %v2782 = vshrl.u32 %v2781, 30
        %v2783 = vshll.u32 %v2782, 30
        %v2784 = vsub.s32 %v2780, %v2783
        %vm2785 = vcmp.lt.s32.totalorder %v2784, 0
        %v2786 = vsub.s32 0, %v2784
        %v2787 = vsel %vm2785, %v2786, %v2784
        %v2788 = vclz %v2787
        %v2789 = vsub.s32 %v2788, 2
        %vm2790 = vcmp.gt.s32.totalorder 0, %v2789
        %v2791 = vsel %vm2790, 0, %v2789
        %v2792 = vsub.s32 32, %v2791
        %v2793 = vshll.u32 %v2784, %v2791
        %v2794 = vshrl.u32 %v2776, %v2792
        %v2795 = vor.u32 %v2793, %v2794
        %v2796 = vsub.s32 4294967266, %v2791
        %v2797 = vadd.s32 %v2796, 127
        %v2798 = vshll.u32 %v2797, 23
        %v2799 = vor.u32 4788187, %v2798
        %v2800 = vand.u32 2147483647, %v2799
        %v2802 = vcvt.s32.f32 %v2795
        %v2803 = vmul.f32 %v2802, %v2800
        %v2804 = vxor.u32 %v2803, 2147483648
        %v2805 = vsel %vm2722, %v2804, %v2803
        %v2806 = vsub.s32 4, %v2782
        %v2807 = vsel %vm2722, %v2806, %v2782
        %v2808 = vsel %vm2721, %v2194, %v2805
        %v2809 = vsel %vm2721, 0, %v2807
        %v2810 = vcosq.f32.pop %v2808
        %v2811 = vsinq.f32.pop %v2808
        %vm2812 = vweird.f32 %v2194
        %v2813 = vand.u32 %v2809, 3
        %vm2814 = vcmp.lt.s32.totalorder %v2813, 2
        %vm2815 = vcmp.eq.s32.totalorder %v2813, 0
        %v2816 = vxor.u32 %v2811, 2147483648
        %v2817 = vsel %vm2815, %v2810, %v2816
        %vm2818 = vcmp.eq.s32.totalorder %v2813, 2
        %v2819 = vxor.u32 %v2810, 2147483648
        %v2820 = vsel %vm2818, %v2819, %v2811
        %v2821 = vsel %vm2814, %v2817, %v2820
        %v2822 = vsel %vm2812, nan, %v2821
        %v2823 = vand.u32 2147483647, %v2195
        %vm2824 = vcmp.le.f32.partialorder %v2823, 0.7853982
        %vm2825 = vcmp.lt.s32.totalorder %v2195, 0
        %v2826 = vand.u32 %v2195, 2139095040
        %v2827 = vshrl.u32 %v2826, 23
        %v2828 = vsub.s32 %v2827, 127
        %v2829 = vand.u32 2147483647, %v2195
        %v2830 = vand.u32 %v2829, 8388607
        %v2831 = vor.u32 %v2830, 8388608
        %v2832 = vsub.s32 0, %v2831
        %v2833 = vadd.s32 %v2828, 1
        %vm2834 = vcmp.gt.s32.totalorder %v2833, 0
        %v2835 = vsel %vm2834, %v2833, 0
        %v2836 = vshrl.u32 %v2835, 5
        %v2837 = vand.u32 %v2835, 31
        %v2838 = vsub.s32 32, %v2837
        %v2839 = vshrl.u32 683565275, %v2838
        %v2840 = vshll.u32 683565275, %v2837
        %v2841 = vshrl.u32 2475754826, %v2838
        %v2842 = vor.u32 %v2840, %v2841
        %v2843 = vshll.u32 2475754826, %v2837
        %v2844 = vshrl.u32 2131351028, %v2838
        %v2845 = vor.u32 %v2843, %v2844
        %v2846 = vshll.u32 2131351028, %v2837
        %v2847 = vshrl.u32 2102212464, %v2838
        %v2848 = vor.u32 %v2846, %v2847
        %v2849 = vshll.u32 2102212464, %v2837
        %v2850 = vshrl.u32 920167782, %v2838
        %v2851 = vor.u32 %v2849, %v2850
        %v2852 = vshll.u32 920167782, %v2837
        %v2853 = vshrl.u32 1326507024, %v2838
        %v2854 = vor.u32 %v2852, %v2853
        %vm2855 = vcmp.lt.s32.totalorder %v2836, 1
        %vm2856 = vcmp.lt.s32.totalorder %v2836, 2
        %vm2857 = vcmp.lt.s32.totalorder %v2836, 3
        %vm2858 = vcmp.lt.s32.totalorder %v2836, 4
        %v2859 = vsel %vm2855, %v2839, %v2842
        %v2860 = vsel %vm2858, %v2848, 2102212464
        %v2861 = vsel %vm2857, %v2845, %v2860
        %v2862 = vsel %vm2856, %v2859, %v2861
        %v2863 = vsel %vm2855, %v2842, %v2845
        %v2864 = vsel %vm2858, %v2851, 920167782
        %v2865 = vsel %vm2857, %v2848, %v2864
        %v2866 = vsel %vm2856, %v2863, %v2865
        %v2867 = vsel %vm2855, %v2845, %v2848
        %v2868 = vsel %vm2858, %v2854, 1326507024
        %v2869 = vsel %vm2857, %v2851, %v2868
        %v2870 = vsel %vm2856, %v2867, %v2869
        %v2871 = vshll.u32 %v2831, 8
        %v2872 = vmul.u32.u64.compose %v2871, %v2870
        %v2873 = vextract.low.u32 %v2872
        %v2874 = vextract.high.u32 %v2872
        %v2875 = vmul.u32.u64.compose %v2871, %v2866
        %v2876 = vextract.low.u32 %v2875
        %v2877 = vextract.high.u32 %v2875
        %v2878 = vmul.u32 %v2871, %v2862
        %v2879 = vadd.s32 %v2874, %v2876
        %vm2880 = vc.u32 %v2874, %v2876
        %v2881 = vadd.s32 %v2877, 1
        %v2882 = vsel %vm2880, %v2881, %v2877
        %v2883 = vadd.s32 %v2878, %v2882
        %v2884 = vadd.s32 %v2883, 536870912
        %v2885 = vshrl.u32 %v2884, 30
        %v2886 = vshll.u32 %v2885, 30
        %v2887 = vsub.s32 %v2883, %v2886
        %vm2888 = vcmp.lt.s32.totalorder %v2887, 0
        %v2889 = vsub.s32 0, %v2887
        %v2890 = vsel %vm2888, %v2889, %v2887
        %v2891 = vclz %v2890
        %v2892 = vsub.s32 %v2891, 2
        %vm2893 = vcmp.gt.s32.totalorder 0, %v2892
        %v2894 = vsel %vm2893, 0, %v2892
        %v2895 = vsub.s32 32, %v2894
        %v2896 = vshll.u32 %v2887, %v2894
        %v2897 = vshrl.u32 %v2879, %v2895
        %v2898 = vor.u32 %v2896, %v2897
        %v2899 = vsub.s32 4294967266, %v2894
        %v2900 = vadd.s32 %v2899, 127
        %v2901 = vshll.u32 %v2900, 23
        %v2902 = vor.u32 4788187, %v2901
        %v2903 = vand.u32 2147483647, %v2902
        %v2905 = vcvt.s32.f32 %v2898
        %v2906 = vmul.f32 %v2905, %v2903
        %v2907 = vxor.u32 %v2906, 2147483648
        %v2908 = vsel %vm2825, %v2907, %v2906
        %v2909 = vsub.s32 4, %v2885
        %v2910 = vsel %vm2825, %v2909, %v2885
        %v2911 = vsel %vm2824, %v2195, %v2908
        %v2912 = vsel %vm2824, 0, %v2910
        %v2913 = vcosq.f32.pop %v2911
        %v2914 = vsinq.f32.pop %v2911
        %vm2915 = vweird.f32 %v2195
        %v2916 = vand.u32 %v2912, 3
        %vm2917 = vcmp.lt.s32.totalorder %v2916, 2
        %vm2918 = vcmp.eq.s32.totalorder %v2916, 0
        %v2919 = vxor.u32 %v2914, 2147483648
        %v2920 = vsel %vm2918, %v2913, %v2919
        %vm2921 = vcmp.eq.s32.totalorder %v2916, 2
        %v2922 = vxor.u32 %v2913, 2147483648
        %v2923 = vsel %vm2921, %v2922, %v2914
        %v2924 = vsel %vm2917, %v2920, %v2923
        %v2925 = vsel %vm2915, nan, %v2924
        %v2926 = vand.u32 2147483647, %v2196
        %vm2927 = vcmp.le.f32.partialorder %v2926, 0.7853982
        %vm2928 = vcmp.lt.s32.totalorder %v2196, 0
        %v2929 = vand.u32 %v2196, 2139095040
        %v2930 = vshrl.u32 %v2929, 23
        %v2931 = vsub.s32 %v2930, 127
        %v2932 = vand.u32 2147483647, %v2196
        %v2933 = vand.u32 %v2932, 8388607
        %v2934 = vor.u32 %v2933, 8388608
        %v2935 = vsub.s32 0, %v2934
        %v2936 = vadd.s32 %v2931, 1
        %vm2937 = vcmp.gt.s32.totalorder %v2936, 0
        %v2938 = vsel %vm2937, %v2936, 0
        %v2939 = vshrl.u32 %v2938, 5
        %v2940 = vand.u32 %v2938, 31
        %v2941 = vsub.s32 32, %v2940
        %v2942 = vshrl.u32 683565275, %v2941
        %v2943 = vshll.u32 683565275, %v2940
        %v2944 = vshrl.u32 2475754826, %v2941
        %v2945 = vor.u32 %v2943, %v2944
        %v2946 = vshll.u32 2475754826, %v2940
        %v2947 = vshrl.u32 2131351028, %v2941
        %v2948 = vor.u32 %v2946, %v2947
        %v2949 = vshll.u32 2131351028, %v2940
        %v2950 = vshrl.u32 2102212464, %v2941
        %v2951 = vor.u32 %v2949, %v2950
        %v2952 = vshll.u32 2102212464, %v2940
        %v2953 = vshrl.u32 920167782, %v2941
        %v2954 = vor.u32 %v2952, %v2953
        %v2955 = vshll.u32 920167782, %v2940
        %v2956 = vshrl.u32 1326507024, %v2941
        %v2957 = vor.u32 %v2955, %v2956
        %vm2958 = vcmp.lt.s32.totalorder %v2939, 1
        %vm2959 = vcmp.lt.s32.totalorder %v2939, 2
        %vm2960 = vcmp.lt.s32.totalorder %v2939, 3
        %vm2961 = vcmp.lt.s32.totalorder %v2939, 4
        %v2962 = vsel %vm2958, %v2942, %v2945
        %v2963 = vsel %vm2961, %v2951, 2102212464
        %v2964 = vsel %vm2960, %v2948, %v2963
        %v2965 = vsel %vm2959, %v2962, %v2964
        %v2966 = vsel %vm2958, %v2945, %v2948
        %v2967 = vsel %vm2961, %v2954, 920167782
        %v2968 = vsel %vm2960, %v2951, %v2967
        %v2969 = vsel %vm2959, %v2966, %v2968
        %v2970 = vsel %vm2958, %v2948, %v2951
        %v2971 = vsel %vm2961, %v2957, 1326507024
        %v2972 = vsel %vm2960, %v2954, %v2971
        %v2973 = vsel %vm2959, %v2970, %v2972
        %v2974 = vshll.u32 %v2934, 8
        %v2975 = vmul.u32.u64.compose %v2974, %v2973
        %v2976 = vextract.low.u32 %v2975
        %v2977 = vextract.high.u32 %v2975
        %v2978 = vmul.u32.u64.compose %v2974, %v2969
        %v2979 = vextract.low.u32 %v2978
        %v2980 = vextract.high.u32 %v2978
        %v2981 = vmul.u32 %v2974, %v2965
        %v2982 = vadd.s32 %v2977, %v2979
        %vm2983 = vc.u32 %v2977, %v2979
        %v2984 = vadd.s32 %v2980, 1
        %v2985 = vsel %vm2983, %v2984, %v2980
        %v2986 = vadd.s32 %v2981, %v2985
        %v2987 = vadd.s32 %v2986, 536870912
        %v2988 = vshrl.u32 %v2987, 30
        %v2989 = vshll.u32 %v2988, 30
        %v2990 = vsub.s32 %v2986, %v2989
        %vm2991 = vcmp.lt.s32.totalorder %v2990, 0
        %v2992 = vsub.s32 0, %v2990
        %v2993 = vsel %vm2991, %v2992, %v2990
        %v2994 = vclz %v2993
        %v2995 = vsub.s32 %v2994, 2
        %vm2996 = vcmp.gt.s32.totalorder 0, %v2995
        %v2997 = vsel %vm2996, 0, %v2995
        %v2998 = vsub.s32 32, %v2997
        %v2999 = vshll.u32 %v2990, %v2997
        %v3000 = vshrl.u32 %v2982, %v2998
        %v3001 = vor.u32 %v2999, %v3000
        %v3002 = vsub.s32 4294967266, %v2997
        %v3003 = vadd.s32 %v3002, 127
        %v3004 = vshll.u32 %v3003, 23
        %v3005 = vor.u32 4788187, %v3004
        %v3006 = vand.u32 2147483647, %v3005
        %v3008 = vcvt.s32.f32 %v3001
        %v3009 = vmul.f32 %v3008, %v3006
        %v3010 = vxor.u32 %v3009, 2147483648
        %v3011 = vsel %vm2928, %v3010, %v3009
        %v3012 = vsub.s32 4, %v2988
        %v3013 = vsel %vm2928, %v3012, %v2988
        %v3014 = vsel %vm2927, %v2196, %v3011
        %v3015 = vsel %vm2927, 0, %v3013
        %v3016 = vcosq.f32.pop %v3014
        %v3017 = vsinq.f32.pop %v3014
        %vm3018 = vweird.f32 %v2196
        %v3019 = vand.u32 %v3015, 3
        %vm3020 = vcmp.lt.s32.totalorder %v3019, 2
        %vm3021 = vcmp.eq.s32.totalorder %v3019, 0
        %v3022 = vxor.u32 %v3017, 2147483648
        %v3023 = vsel %vm3021, %v3016, %v3022
        %vm3024 = vcmp.eq.s32.totalorder %v3019, 2
        %v3025 = vxor.u32 %v3016, 2147483648
        %v3026 = vsel %vm3024, %v3025, %v3017
        %v3027 = vsel %vm3020, %v3023, %v3026
        %v3028 = vsel %vm3018, nan, %v3027
        %v3029 = vand.u32 2147483647, %v2197
        %vm3030 = vcmp.le.f32.partialorder %v3029, 0.7853982
        %vm3031 = vcmp.lt.s32.totalorder %v2197, 0
        %v3032 = vand.u32 %v2197, 2139095040
        %v3033 = vshrl.u32 %v3032, 23
        %v3034 = vsub.s32 %v3033, 127
        %v3035 = vand.u32 2147483647, %v2197
        %v3036 = vand.u32 %v3035, 8388607
        %v3037 = vor.u32 %v3036, 8388608
        %v3038 = vsub.s32 0, %v3037
        %v3039 = vadd.s32 %v3034, 1
        %vm3040 = vcmp.gt.s32.totalorder %v3039, 0
        %v3041 = vsel %vm3040, %v3039, 0
        %v3042 = vshrl.u32 %v3041, 5
        %v3043 = vand.u32 %v3041, 31
        %v3044 = vsub.s32 32, %v3043
        %v3045 = vshrl.u32 683565275, %v3044
        %v3046 = vshll.u32 683565275, %v3043
        %v3047 = vshrl.u32 2475754826, %v3044
        %v3048 = vor.u32 %v3046, %v3047
        %v3049 = vshll.u32 2475754826, %v3043
        %v3050 = vshrl.u32 2131351028, %v3044
        %v3051 = vor.u32 %v3049, %v3050
        %v3052 = vshll.u32 2131351028, %v3043
        %v3053 = vshrl.u32 2102212464, %v3044
        %v3054 = vor.u32 %v3052, %v3053
        %v3055 = vshll.u32 2102212464, %v3043
        %v3056 = vshrl.u32 920167782, %v3044
        %v3057 = vor.u32 %v3055, %v3056
        %v3058 = vshll.u32 920167782, %v3043
        %v3059 = vshrl.u32 1326507024, %v3044
        %v3060 = vor.u32 %v3058, %v3059
        %vm3061 = vcmp.lt.s32.totalorder %v3042, 1
        %vm3062 = vcmp.lt.s32.totalorder %v3042, 2
        %vm3063 = vcmp.lt.s32.totalorder %v3042, 3
        %vm3064 = vcmp.lt.s32.totalorder %v3042, 4
        %v3065 = vsel %vm3061, %v3045, %v3048
        %v3066 = vsel %vm3064, %v3054, 2102212464
        %v3067 = vsel %vm3063, %v3051, %v3066
        %v3068 = vsel %vm3062, %v3065, %v3067
        %v3069 = vsel %vm3061, %v3048, %v3051
        %v3070 = vsel %vm3064, %v3057, 920167782
        %v3071 = vsel %vm3063, %v3054, %v3070
        %v3072 = vsel %vm3062, %v3069, %v3071
        %v3073 = vsel %vm3061, %v3051, %v3054
        %v3074 = vsel %vm3064, %v3060, 1326507024
        %v3075 = vsel %vm3063, %v3057, %v3074
        %v3076 = vsel %vm3062, %v3073, %v3075
        %v3077 = vshll.u32 %v3037, 8
        %v3078 = vmul.u32.u64.compose %v3077, %v3076
        %v3079 = vextract.low.u32 %v3078
        %v3080 = vextract.high.u32 %v3078
        %v3081 = vmul.u32.u64.compose %v3077, %v3072
        %v3082 = vextract.low.u32 %v3081
        %v3083 = vextract.high.u32 %v3081
        %v3084 = vmul.u32 %v3077, %v3068
        %v3085 = vadd.s32 %v3080, %v3082
        %vm3086 = vc.u32 %v3080, %v3082
        %v3087 = vadd.s32 %v3083, 1
        %v3088 = vsel %vm3086, %v3087, %v3083
        %v3089 = vadd.s32 %v3084, %v3088
        %v3090 = vadd.s32 %v3089, 536870912
        %v3091 = vshrl.u32 %v3090, 30
        %v3092 = vshll.u32 %v3091, 30
        %v3093 = vsub.s32 %v3089, %v3092
        %vm3094 = vcmp.lt.s32.totalorder %v3093, 0
        %v3095 = vsub.s32 0, %v3093
        %v3096 = vsel %vm3094, %v3095, %v3093
        %v3097 = vclz %v3096
        %v3098 = vsub.s32 %v3097, 2
        %vm3099 = vcmp.gt.s32.totalorder 0, %v3098
        %v3100 = vsel %vm3099, 0, %v3098
        %v3101 = vsub.s32 32, %v3100
        %v3102 = vshll.u32 %v3093, %v3100
        %v3103 = vshrl.u32 %v3085, %v3101
        %v3104 = vor.u32 %v3102, %v3103
        %v3105 = vsub.s32 4294967266, %v3100
        %v3106 = vadd.s32 %v3105, 127
        %v3107 = vshll.u32 %v3106, 23
        %v3108 = vor.u32 4788187, %v3107
        %v3109 = vand.u32 2147483647, %v3108
        %v3111 = vcvt.s32.f32 %v3104
        %v3112 = vmul.f32 %v3111, %v3109
        %v3113 = vxor.u32 %v3112, 2147483648
        %v3114 = vsel %vm3031, %v3113, %v3112
        %v3115 = vsub.s32 4, %v3091
        %v3116 = vsel %vm3031, %v3115, %v3091
        %v3117 = vsel %vm3030, %v2197, %v3114
        %v3118 = vsel %vm3030, 0, %v3116
        %v3119 = vcosq.f32.pop %v3117
        %v3120 = vsinq.f32.pop %v3117
        %vm3121 = vweird.f32 %v2197
        %v3122 = vand.u32 %v3118, 3
        %vm3123 = vcmp.lt.s32.totalorder %v3122, 2
        %vm3124 = vcmp.eq.s32.totalorder %v3122, 0
        %v3125 = vxor.u32 %v3120, 2147483648
        %v3126 = vsel %vm3124, %v3119, %v3125
        %vm3127 = vcmp.eq.s32.totalorder %v3122, 2
        %v3128 = vxor.u32 %v3119, 2147483648
        %v3129 = vsel %vm3127, %v3128, %v3120
        %v3130 = vsel %vm3123, %v3126, %v3129
        %v3131 = vsel %vm3121, nan, %v3130
        %v3132 = vand.u32 2147483647, %v2198
        %vm3133 = vcmp.le.f32.partialorder %v3132, 0.7853982
        %vm3134 = vcmp.lt.s32.totalorder %v2198, 0
        %v3135 = vand.u32 %v2198, 2139095040
        %v3136 = vshrl.u32 %v3135, 23
        %v3137 = vsub.s32 %v3136, 127
        %v3138 = vand.u32 2147483647, %v2198
        %v3139 = vand.u32 %v3138, 8388607
        %v3140 = vor.u32 %v3139, 8388608
        %v3141 = vsub.s32 0, %v3140
        %v3142 = vadd.s32 %v3137, 1
        %vm3143 = vcmp.gt.s32.totalorder %v3142, 0
        %v3144 = vsel %vm3143, %v3142, 0
        %v3145 = vshrl.u32 %v3144, 5
        %v3146 = vand.u32 %v3144, 31
        %v3147 = vsub.s32 32, %v3146
        %v3148 = vshrl.u32 683565275, %v3147
        %v3149 = vshll.u32 683565275, %v3146
        %v3150 = vshrl.u32 2475754826, %v3147
        %v3151 = vor.u32 %v3149, %v3150
        %v3152 = vshll.u32 2475754826, %v3146
        %v3153 = vshrl.u32 2131351028, %v3147
        %v3154 = vor.u32 %v3152, %v3153
        %v3155 = vshll.u32 2131351028, %v3146
        %v3156 = vshrl.u32 2102212464, %v3147
        %v3157 = vor.u32 %v3155, %v3156
        %v3158 = vshll.u32 2102212464, %v3146
        %v3159 = vshrl.u32 920167782, %v3147
        %v3160 = vor.u32 %v3158, %v3159
        %v3161 = vshll.u32 920167782, %v3146
        %v3162 = vshrl.u32 1326507024, %v3147
        %v3163 = vor.u32 %v3161, %v3162
        %vm3164 = vcmp.lt.s32.totalorder %v3145, 1
        %vm3165 = vcmp.lt.s32.totalorder %v3145, 2
        %vm3166 = vcmp.lt.s32.totalorder %v3145, 3
        %vm3167 = vcmp.lt.s32.totalorder %v3145, 4
        %v3168 = vsel %vm3164, %v3148, %v3151
        %v3169 = vsel %vm3167, %v3157, 2102212464
        %v3170 = vsel %vm3166, %v3154, %v3169
        %v3171 = vsel %vm3165, %v3168, %v3170
        %v3172 = vsel %vm3164, %v3151, %v3154
        %v3173 = vsel %vm3167, %v3160, 920167782
        %v3174 = vsel %vm3166, %v3157, %v3173
        %v3175 = vsel %vm3165, %v3172, %v3174
        %v3176 = vsel %vm3164, %v3154, %v3157
        %v3177 = vsel %vm3167, %v3163, 1326507024
        %v3178 = vsel %vm3166, %v3160, %v3177
        %v3179 = vsel %vm3165, %v3176, %v3178
        %v3180 = vshll.u32 %v3140, 8
        %v3181 = vmul.u32.u64.compose %v3180, %v3179
        %v3182 = vextract.low.u32 %v3181
        %v3183 = vextract.high.u32 %v3181
        %v3184 = vmul.u32.u64.compose %v3180, %v3175
        %v3185 = vextract.low.u32 %v3184
        %v3186 = vextract.high.u32 %v3184
        %v3187 = vmul.u32 %v3180, %v3171
        %v3188 = vadd.s32 %v3183, %v3185
        %vm3189 = vc.u32 %v3183, %v3185
        %v3190 = vadd.s32 %v3186, 1
        %v3191 = vsel %vm3189, %v3190, %v3186
        %v3192 = vadd.s32 %v3187, %v3191
        %v3193 = vadd.s32 %v3192, 536870912
        %v3194 = vshrl.u32 %v3193, 30
        %v3195 = vshll.u32 %v3194, 30
        %v3196 = vsub.s32 %v3192, %v3195
        %vm3197 = vcmp.lt.s32.totalorder %v3196, 0
        %v3198 = vsub.s32 0, %v3196
        %v3199 = vsel %vm3197, %v3198, %v3196
        %v3200 = vclz %v3199
        %v3201 = vsub.s32 %v3200, 2
        %vm3202 = vcmp.gt.s32.totalorder 0, %v3201
        %v3203 = vsel %vm3202, 0, %v3201
        %v3204 = vsub.s32 32, %v3203
        %v3205 = vshll.u32 %v3196, %v3203
        %v3206 = vshrl.u32 %v3188, %v3204
        %v3207 = vor.u32 %v3205, %v3206
        %v3208 = vsub.s32 4294967266, %v3203
        %v3209 = vadd.s32 %v3208, 127
        %v3210 = vshll.u32 %v3209, 23
        %v3211 = vor.u32 4788187, %v3210
        %v3212 = vand.u32 2147483647, %v3211
        %v3214 = vcvt.s32.f32 %v3207
        %v3215 = vmul.f32 %v3214, %v3212
        %v3216 = vxor.u32 %v3215, 2147483648
        %v3217 = vsel %vm3134, %v3216, %v3215
        %v3218 = vsub.s32 4, %v3194
        %v3219 = vsel %vm3134, %v3218, %v3194
        %v3220 = vsel %vm3133, %v2198, %v3217
        %v3221 = vsel %vm3133, 0, %v3219
        %v3222 = vcosq.f32.pop %v3220
        %v3223 = vsinq.f32.pop %v3220
        %vm3224 = vweird.f32 %v2198
        %v3225 = vand.u32 %v3221, 3
        %vm3226 = vcmp.lt.s32.totalorder %v3225, 2
        %vm3227 = vcmp.eq.s32.totalorder %v3225, 0
        %v3228 = vxor.u32 %v3223, 2147483648
        %v3229 = vsel %vm3227, %v3222, %v3228
        %vm3230 = vcmp.eq.s32.totalorder %v3225, 2
        %v3231 = vxor.u32 %v3222, 2147483648
        %v3232 = vsel %vm3230, %v3231, %v3223
        %v3233 = vsel %vm3226, %v3229, %v3232
        %v3234 = vsel %vm3224, nan, %v3233
        %v3235 = vand.u32 2147483647, %v2199
        %vm3236 = vcmp.le.f32.partialorder %v3235, 0.7853982
        %vm3237 = vcmp.lt.s32.totalorder %v2199, 0
        %v3238 = vand.u32 %v2199, 2139095040
        %v3239 = vshrl.u32 %v3238, 23
        %v3240 = vsub.s32 %v3239, 127
        %v3241 = vand.u32 2147483647, %v2199
        %v3242 = vand.u32 %v3241, 8388607
        %v3243 = vor.u32 %v3242, 8388608
        %v3244 = vsub.s32 0, %v3243
        %v3245 = vadd.s32 %v3240, 1
        %vm3246 = vcmp.gt.s32.totalorder %v3245, 0
        %v3247 = vsel %vm3246, %v3245, 0
        %v3248 = vshrl.u32 %v3247, 5
        %v3249 = vand.u32 %v3247, 31
        %v3250 = vsub.s32 32, %v3249
        %v3251 = vshrl.u32 683565275, %v3250
        %v3252 = vshll.u32 683565275, %v3249
        %v3253 = vshrl.u32 2475754826, %v3250
        %v3254 = vor.u32 %v3252, %v3253
        %v3255 = vshll.u32 2475754826, %v3249
        %v3256 = vshrl.u32 2131351028, %v3250
        %v3257 = vor.u32 %v3255, %v3256
        %v3258 = vshll.u32 2131351028, %v3249
        %v3259 = vshrl.u32 2102212464, %v3250
        %v3260 = vor.u32 %v3258, %v3259
        %v3261 = vshll.u32 2102212464, %v3249
        %v3262 = vshrl.u32 920167782, %v3250
        %v3263 = vor.u32 %v3261, %v3262
        %v3264 = vshll.u32 920167782, %v3249
        %v3265 = vshrl.u32 1326507024, %v3250
        %v3266 = vor.u32 %v3264, %v3265
        %vm3267 = vcmp.lt.s32.totalorder %v3248, 1
        %vm3268 = vcmp.lt.s32.totalorder %v3248, 2
        %vm3269 = vcmp.lt.s32.totalorder %v3248, 3
        %vm3270 = vcmp.lt.s32.totalorder %v3248, 4
        %v3271 = vsel %vm3267, %v3251, %v3254
        %v3272 = vsel %vm3270, %v3260, 2102212464
        %v3273 = vsel %vm3269, %v3257, %v3272
        %v3274 = vsel %vm3268, %v3271, %v3273
        %v3275 = vsel %vm3267, %v3254, %v3257
        %v3276 = vsel %vm3270, %v3263, 920167782
        %v3277 = vsel %vm3269, %v3260, %v3276
        %v3278 = vsel %vm3268, %v3275, %v3277
        %v3279 = vsel %vm3267, %v3257, %v3260
        %v3280 = vsel %vm3270, %v3266, 1326507024
        %v3281 = vsel %vm3269, %v3263, %v3280
        %v3282 = vsel %vm3268, %v3279, %v3281
        %v3283 = vshll.u32 %v3243, 8
        %v3284 = vmul.u32.u64.compose %v3283, %v3282
        %v3285 = vextract.low.u32 %v3284
        %v3286 = vextract.high.u32 %v3284
        %v3287 = vmul.u32.u64.compose %v3283, %v3278
        %v3288 = vextract.low.u32 %v3287
        %v3289 = vextract.high.u32 %v3287
        %v3290 = vmul.u32 %v3283, %v3274
        %v3291 = vadd.s32 %v3286, %v3288
        %vm3292 = vc.u32 %v3286, %v3288
        %v3293 = vadd.s32 %v3289, 1
        %v3294 = vsel %vm3292, %v3293, %v3289
        %v3295 = vadd.s32 %v3290, %v3294
        %v3296 = vadd.s32 %v3295, 536870912
        %v3297 = vshrl.u32 %v3296, 30
        %v3298 = vshll.u32 %v3297, 30
        %v3299 = vsub.s32 %v3295, %v3298
        %vm3300 = vcmp.lt.s32.totalorder %v3299, 0
        %v3301 = vsub.s32 0, %v3299
        %v3302 = vsel %vm3300, %v3301, %v3299
        %v3303 = vclz %v3302
        %v3304 = vsub.s32 %v3303, 2
        %vm3305 = vcmp.gt.s32.totalorder 0, %v3304
        %v3306 = vsel %vm3305, 0, %v3304
        %v3307 = vsub.s32 32, %v3306
        %v3308 = vshll.u32 %v3299, %v3306
        %v3309 = vshrl.u32 %v3291, %v3307
        %v3310 = vor.u32 %v3308, %v3309
        %v3311 = vsub.s32 4294967266, %v3306
        %v3312 = vadd.s32 %v3311, 127
        %v3313 = vshll.u32 %v3312, 23
        %v3314 = vor.u32 4788187, %v3313
        %v3315 = vand.u32 2147483647, %v3314
        %v3317 = vcvt.s32.f32 %v3310
        %v3318 = vmul.f32 %v3317, %v3315
        %v3319 = vxor.u32 %v3318, 2147483648
        %v3320 = vsel %vm3237, %v3319, %v3318
        %v3321 = vsub.s32 4, %v3297
        %v3322 = vsel %vm3237, %v3321, %v3297
        %v3323 = vsel %vm3236, %v2199, %v3320
        %v3324 = vsel %vm3236, 0, %v3322
        %v3325 = vcosq.f32.pop %v3323
        %v3326 = vsinq.f32.pop %v3323
        %vm3327 = vweird.f32 %v2199
        %v3328 = vand.u32 %v3324, 3
        %vm3329 = vcmp.lt.s32.totalorder %v3328, 2
        %vm3330 = vcmp.eq.s32.totalorder %v3328, 0
        %v3331 = vxor.u32 %v3326, 2147483648
        %v3332 = vsel %vm3330, %v3325, %v3331
        %vm3333 = vcmp.eq.s32.totalorder %v3328, 2
        %v3334 = vxor.u32 %v3325, 2147483648
        %v3335 = vsel %vm3333, %v3334, %v3326
        %v3336 = vsel %vm3329, %v3332, %v3335
        %v3337 = vsel %vm3327, nan, %v3336
        %v3338 = vand.u32 2147483647, %v2200
        %vm3339 = vcmp.le.f32.partialorder %v3338, 0.7853982
        %vm3340 = vcmp.lt.s32.totalorder %v2200, 0
        %v3341 = vand.u32 %v2200, 2139095040
        %v3342 = vshrl.u32 %v3341, 23
        %v3343 = vsub.s32 %v3342, 127
        %v3344 = vand.u32 2147483647, %v2200
        %v3345 = vand.u32 %v3344, 8388607
        %v3346 = vor.u32 %v3345, 8388608
        %v3347 = vsub.s32 0, %v3346
        %v3348 = vadd.s32 %v3343, 1
        %vm3349 = vcmp.gt.s32.totalorder %v3348, 0
        %v3350 = vsel %vm3349, %v3348, 0
        %v3351 = vshrl.u32 %v3350, 5
        %v3352 = vand.u32 %v3350, 31
        %v3353 = vsub.s32 32, %v3352
        %v3354 = vshrl.u32 683565275, %v3353
        %v3355 = vshll.u32 683565275, %v3352
        %v3356 = vshrl.u32 2475754826, %v3353
        %v3357 = vor.u32 %v3355, %v3356
        %v3358 = vshll.u32 2475754826, %v3352
        %v3359 = vshrl.u32 2131351028, %v3353
        %v3360 = vor.u32 %v3358, %v3359
        %v3361 = vshll.u32 2131351028, %v3352
        %v3362 = vshrl.u32 2102212464, %v3353
        %v3363 = vor.u32 %v3361, %v3362
        %v3364 = vshll.u32 2102212464, %v3352
        %v3365 = vshrl.u32 920167782, %v3353
        %v3366 = vor.u32 %v3364, %v3365
        %v3367 = vshll.u32 920167782, %v3352
        %v3368 = vshrl.u32 1326507024, %v3353
        %v3369 = vor.u32 %v3367, %v3368
        %vm3370 = vcmp.lt.s32.totalorder %v3351, 1
        %vm3371 = vcmp.lt.s32.totalorder %v3351, 2
        %vm3372 = vcmp.lt.s32.totalorder %v3351, 3
        %vm3373 = vcmp.lt.s32.totalorder %v3351, 4
        %v3374 = vsel %vm3370, %v3354, %v3357
        %v3375 = vsel %vm3373, %v3363, 2102212464
        %v3376 = vsel %vm3372, %v3360, %v3375
        %v3377 = vsel %vm3371, %v3374, %v3376
        %v3378 = vsel %vm3370, %v3357, %v3360
        %v3379 = vsel %vm3373, %v3366, 920167782
        %v3380 = vsel %vm3372, %v3363, %v3379
        %v3381 = vsel %vm3371, %v3378, %v3380
        %v3382 = vsel %vm3370, %v3360, %v3363
        %v3383 = vsel %vm3373, %v3369, 1326507024
        %v3384 = vsel %vm3372, %v3366, %v3383
        %v3385 = vsel %vm3371, %v3382, %v3384
        %v3386 = vshll.u32 %v3346, 8
        %v3387 = vmul.u32.u64.compose %v3386, %v3385
        %v3388 = vextract.low.u32 %v3387
        %v3389 = vextract.high.u32 %v3387
        %v3390 = vmul.u32.u64.compose %v3386, %v3381
        %v3391 = vextract.low.u32 %v3390
        %v3392 = vextract.high.u32 %v3390
        %v3393 = vmul.u32 %v3386, %v3377
        %v3394 = vadd.s32 %v3389, %v3391
        %vm3395 = vc.u32 %v3389, %v3391
        %v3396 = vadd.s32 %v3392, 1
        %v3397 = vsel %vm3395, %v3396, %v3392
        %v3398 = vadd.s32 %v3393, %v3397
        %v3399 = vadd.s32 %v3398, 536870912
        %v3400 = vshrl.u32 %v3399, 30
        %v3401 = vshll.u32 %v3400, 30
        %v3402 = vsub.s32 %v3398, %v3401
        %vm3403 = vcmp.lt.s32.totalorder %v3402, 0
        %v3404 = vsub.s32 0, %v3402
        %v3405 = vsel %vm3403, %v3404, %v3402
        %v3406 = vclz %v3405
        %v3407 = vsub.s32 %v3406, 2
        %vm3408 = vcmp.gt.s32.totalorder 0, %v3407
        %v3409 = vsel %vm3408, 0, %v3407
        %v3410 = vsub.s32 32, %v3409
        %v3411 = vshll.u32 %v3402, %v3409
        %v3412 = vshrl.u32 %v3394, %v3410
        %v3413 = vor.u32 %v3411, %v3412
        %v3414 = vsub.s32 4294967266, %v3409
        %v3415 = vadd.s32 %v3414, 127
        %v3416 = vshll.u32 %v3415, 23
        %v3417 = vor.u32 4788187, %v3416
        %v3418 = vand.u32 2147483647, %v3417
        %v3420 = vcvt.s32.f32 %v3413
        %v3421 = vmul.f32 %v3420, %v3418
        %v3422 = vxor.u32 %v3421, 2147483648
        %v3423 = vsel %vm3340, %v3422, %v3421
        %v3424 = vsub.s32 4, %v3400
        %v3425 = vsel %vm3340, %v3424, %v3400
        %v3426 = vsel %vm3339, %v2200, %v3423
        %v3427 = vsel %vm3339, 0, %v3425
        %v3428 = vcosq.f32.pop %v3426
        %v3429 = vsinq.f32.pop %v3426
        %vm3430 = vweird.f32 %v2200
        %v3431 = vand.u32 %v3427, 3
        %vm3432 = vcmp.lt.s32.totalorder %v3431, 2
        %vm3433 = vcmp.eq.s32.totalorder %v3431, 0
        %v3434 = vxor.u32 %v3429, 2147483648
        %v3435 = vsel %vm3433, %v3428, %v3434
        %vm3436 = vcmp.eq.s32.totalorder %v3431, 2
        %v3437 = vxor.u32 %v3428, 2147483648
        %v3438 = vsel %vm3436, %v3437, %v3429
        %v3439 = vsel %vm3432, %v3435, %v3438
        %v3440 = vsel %vm3430, nan, %v3439
        %v3441 = vand.u32 2147483647, %v2201
        %vm3442 = vcmp.le.f32.partialorder %v3441, 0.7853982
        %vm3443 = vcmp.lt.s32.totalorder %v2201, 0
        %v3444 = vand.u32 %v2201, 2139095040
        %v3445 = vshrl.u32 %v3444, 23
        %v3446 = vsub.s32 %v3445, 127
        %v3447 = vand.u32 2147483647, %v2201
        %v3448 = vand.u32 %v3447, 8388607
        %v3449 = vor.u32 %v3448, 8388608
        %v3450 = vsub.s32 0, %v3449
        %v3451 = vadd.s32 %v3446, 1
        %vm3452 = vcmp.gt.s32.totalorder %v3451, 0
        %v3453 = vsel %vm3452, %v3451, 0
        %v3454 = vshrl.u32 %v3453, 5
        %v3455 = vand.u32 %v3453, 31
        %v3456 = vsub.s32 32, %v3455
        %v3457 = vshrl.u32 683565275, %v3456
        %v3458 = vshll.u32 683565275, %v3455
        %v3459 = vshrl.u32 2475754826, %v3456
        %v3460 = vor.u32 %v3458, %v3459
        %v3461 = vshll.u32 2475754826, %v3455
        %v3462 = vshrl.u32 2131351028, %v3456
        %v3463 = vor.u32 %v3461, %v3462
        %v3464 = vshll.u32 2131351028, %v3455
        %v3465 = vshrl.u32 2102212464, %v3456
        %v3466 = vor.u32 %v3464, %v3465
        %v3467 = vshll.u32 2102212464, %v3455
        %v3468 = vshrl.u32 920167782, %v3456
        %v3469 = vor.u32 %v3467, %v3468
        %v3470 = vshll.u32 920167782, %v3455
        %v3471 = vshrl.u32 1326507024, %v3456
        %v3472 = vor.u32 %v3470, %v3471
        %vm3473 = vcmp.lt.s32.totalorder %v3454, 1
        %vm3474 = vcmp.lt.s32.totalorder %v3454, 2
        %vm3475 = vcmp.lt.s32.totalorder %v3454, 3
        %vm3476 = vcmp.lt.s32.totalorder %v3454, 4
        %v3477 = vsel %vm3473, %v3457, %v3460
        %v3478 = vsel %vm3476, %v3466, 2102212464
        %v3479 = vsel %vm3475, %v3463, %v3478
        %v3480 = vsel %vm3474, %v3477, %v3479
        %v3481 = vsel %vm3473, %v3460, %v3463
        %v3482 = vsel %vm3476, %v3469, 920167782
        %v3483 = vsel %vm3475, %v3466, %v3482
        %v3484 = vsel %vm3474, %v3481, %v3483
        %v3485 = vsel %vm3473, %v3463, %v3466
        %v3486 = vsel %vm3476, %v3472, 1326507024
        %v3487 = vsel %vm3475, %v3469, %v3486
        %v3488 = vsel %vm3474, %v3485, %v3487
        %v3489 = vshll.u32 %v3449, 8
        %v3490 = vmul.u32.u64.compose %v3489, %v3488
        %v3491 = vextract.low.u32 %v3490
        %v3492 = vextract.high.u32 %v3490
        %v3493 = vmul.u32.u64.compose %v3489, %v3484
        %v3494 = vextract.low.u32 %v3493
        %v3495 = vextract.high.u32 %v3493
        %v3496 = vmul.u32 %v3489, %v3480
        %v3497 = vadd.s32 %v3492, %v3494
        %vm3498 = vc.u32 %v3492, %v3494
        %v3499 = vadd.s32 %v3495, 1
        %v3500 = vsel %vm3498, %v3499, %v3495
        %v3501 = vadd.s32 %v3496, %v3500
        %v3502 = vadd.s32 %v3501, 536870912
        %v3503 = vshrl.u32 %v3502, 30
        %v3504 = vshll.u32 %v3503, 30
        %v3505 = vsub.s32 %v3501, %v3504
        %vm3506 = vcmp.lt.s32.totalorder %v3505, 0
        %v3507 = vsub.s32 0, %v3505
        %v3508 = vsel %vm3506, %v3507, %v3505
        %v3509 = vclz %v3508
        %v3510 = vsub.s32 %v3509, 2
        %vm3511 = vcmp.gt.s32.totalorder 0, %v3510
        %v3512 = vsel %vm3511, 0, %v3510
        %v3513 = vsub.s32 32, %v3512
        %v3514 = vshll.u32 %v3505, %v3512
        %v3515 = vshrl.u32 %v3497, %v3513
        %v3516 = vor.u32 %v3514, %v3515
        %v3517 = vsub.s32 4294967266, %v3512
        %v3518 = vadd.s32 %v3517, 127
        %v3519 = vshll.u32 %v3518, 23
        %v3520 = vor.u32 4788187, %v3519
        %v3521 = vand.u32 2147483647, %v3520
        %v3523 = vcvt.s32.f32 %v3516
        %v3524 = vmul.f32 %v3523, %v3521
        %v3525 = vxor.u32 %v3524, 2147483648
        %v3526 = vsel %vm3443, %v3525, %v3524
        %v3527 = vsub.s32 4, %v3503
        %v3528 = vsel %vm3443, %v3527, %v3503
        %v3529 = vsel %vm3442, %v2201, %v3526
        %v3530 = vsel %vm3442, 0, %v3528
        %v3531 = vcosq.f32.pop %v3529
        %v3532 = vsinq.f32.pop %v3529
        %vm3533 = vweird.f32 %v2201
        %v3534 = vand.u32 %v3530, 3
        %vm3535 = vcmp.lt.s32.totalorder %v3534, 2
        %vm3536 = vcmp.eq.s32.totalorder %v3534, 0
        %v3537 = vxor.u32 %v3532, 2147483648
        %v3538 = vsel %vm3536, %v3531, %v3537
        %vm3539 = vcmp.eq.s32.totalorder %v3534, 2
        %v3540 = vxor.u32 %v3531, 2147483648
        %v3541 = vsel %vm3539, %v3540, %v3532
        %v3542 = vsel %vm3535, %v3538, %v3541
        %v3543 = vsel %vm3533, nan, %v3542
        %v3544 = vand.u32 2147483647, %v2202
        %vm3545 = vcmp.le.f32.partialorder %v3544, 0.7853982
        %vm3546 = vcmp.lt.s32.totalorder %v2202, 0
        %v3547 = vand.u32 %v2202, 2139095040
        %v3548 = vshrl.u32 %v3547, 23
        %v3549 = vsub.s32 %v3548, 127
        %v3550 = vand.u32 2147483647, %v2202
        %v3551 = vand.u32 %v3550, 8388607
        %v3552 = vor.u32 %v3551, 8388608
        %v3553 = vsub.s32 0, %v3552
        %v3554 = vadd.s32 %v3549, 1
        %vm3555 = vcmp.gt.s32.totalorder %v3554, 0
        %v3556 = vsel %vm3555, %v3554, 0
        %v3557 = vshrl.u32 %v3556, 5
        %v3558 = vand.u32 %v3556, 31
        %v3559 = vsub.s32 32, %v3558
        %v3560 = vshrl.u32 683565275, %v3559
        %v3561 = vshll.u32 683565275, %v3558
        %v3562 = vshrl.u32 2475754826, %v3559
        %v3563 = vor.u32 %v3561, %v3562
        %v3564 = vshll.u32 2475754826, %v3558
        %v3565 = vshrl.u32 2131351028, %v3559
        %v3566 = vor.u32 %v3564, %v3565
        %v3567 = vshll.u32 2131351028, %v3558
        %v3568 = vshrl.u32 2102212464, %v3559
        %v3569 = vor.u32 %v3567, %v3568
        %v3570 = vshll.u32 2102212464, %v3558
        %v3571 = vshrl.u32 920167782, %v3559
        %v3572 = vor.u32 %v3570, %v3571
        %v3573 = vshll.u32 920167782, %v3558
        %v3574 = vshrl.u32 1326507024, %v3559
        %v3575 = vor.u32 %v3573, %v3574
        %vm3576 = vcmp.lt.s32.totalorder %v3557, 1
        %vm3577 = vcmp.lt.s32.totalorder %v3557, 2
        %vm3578 = vcmp.lt.s32.totalorder %v3557, 3
        %vm3579 = vcmp.lt.s32.totalorder %v3557, 4
        %v3580 = vsel %vm3576, %v3560, %v3563
        %v3581 = vsel %vm3579, %v3569, 2102212464
        %v3582 = vsel %vm3578, %v3566, %v3581
        %v3583 = vsel %vm3577, %v3580, %v3582
        %v3584 = vsel %vm3576, %v3563, %v3566
        %v3585 = vsel %vm3579, %v3572, 920167782
        %v3586 = vsel %vm3578, %v3569, %v3585
        %v3587 = vsel %vm3577, %v3584, %v3586
        %v3588 = vsel %vm3576, %v3566, %v3569
        %v3589 = vsel %vm3579, %v3575, 1326507024
        %v3590 = vsel %vm3578, %v3572, %v3589
        %v3591 = vsel %vm3577, %v3588, %v3590
        %v3592 = vshll.u32 %v3552, 8
        %v3593 = vmul.u32.u64.compose %v3592, %v3591
        %v3594 = vextract.low.u32 %v3593
        %v3595 = vextract.high.u32 %v3593
        %v3596 = vmul.u32.u64.compose %v3592, %v3587
        %v3597 = vextract.low.u32 %v3596
        %v3598 = vextract.high.u32 %v3596
        %v3599 = vmul.u32 %v3592, %v3583
        %v3600 = vadd.s32 %v3595, %v3597
        %vm3601 = vc.u32 %v3595, %v3597
        %v3602 = vadd.s32 %v3598, 1
        %v3603 = vsel %vm3601, %v3602, %v3598
        %v3604 = vadd.s32 %v3599, %v3603
        %v3605 = vadd.s32 %v3604, 536870912
        %v3606 = vshrl.u32 %v3605, 30
        %v3607 = vshll.u32 %v3606, 30
        %v3608 = vsub.s32 %v3604, %v3607
        %vm3609 = vcmp.lt.s32.totalorder %v3608, 0
        %v3610 = vsub.s32 0, %v3608
        %v3611 = vsel %vm3609, %v3610, %v3608
        %v3612 = vclz %v3611
        %v3613 = vsub.s32 %v3612, 2
        %vm3614 = vcmp.gt.s32.totalorder 0, %v3613
        %v3615 = vsel %vm3614, 0, %v3613
        %v3616 = vsub.s32 32, %v3615
        %v3617 = vshll.u32 %v3608, %v3615
        %v3618 = vshrl.u32 %v3600, %v3616
        %v3619 = vor.u32 %v3617, %v3618
        %v3620 = vsub.s32 4294967266, %v3615
        %v3621 = vadd.s32 %v3620, 127
        %v3622 = vshll.u32 %v3621, 23
        %v3623 = vor.u32 4788187, %v3622
        %v3624 = vand.u32 2147483647, %v3623
        %v3626 = vcvt.s32.f32 %v3619
        %v3627 = vmul.f32 %v3626, %v3624
        %v3628 = vxor.u32 %v3627, 2147483648
        %v3629 = vsel %vm3546, %v3628, %v3627
        %v3630 = vsub.s32 4, %v3606
        %v3631 = vsel %vm3546, %v3630, %v3606
        %v3632 = vsel %vm3545, %v2202, %v3629
        %v3633 = vsel %vm3545, 0, %v3631
        %v3634 = vcosq.f32.pop %v3632
        %v3635 = vsinq.f32.pop %v3632
        %vm3636 = vweird.f32 %v2202
        %v3637 = vand.u32 %v3633, 3
        %vm3638 = vcmp.lt.s32.totalorder %v3637, 2
        %vm3639 = vcmp.eq.s32.totalorder %v3637, 0
        %v3640 = vxor.u32 %v3635, 2147483648
        %v3641 = vsel %vm3639, %v3634, %v3640
        %vm3642 = vcmp.eq.s32.totalorder %v3637, 2
        %v3643 = vxor.u32 %v3634, 2147483648
        %v3644 = vsel %vm3642, %v3643, %v3635
        %v3645 = vsel %vm3638, %v3641, %v3644
        %v3646 = vsel %vm3636, nan, %v3645
        %v3647 = vand.u32 2147483647, %v2203
        %vm3648 = vcmp.le.f32.partialorder %v3647, 0.7853982
        %vm3649 = vcmp.lt.s32.totalorder %v2203, 0
        %v3650 = vand.u32 %v2203, 2139095040
        %v3651 = vshrl.u32 %v3650, 23
        %v3652 = vsub.s32 %v3651, 127
        %v3653 = vand.u32 2147483647, %v2203
        %v3654 = vand.u32 %v3653, 8388607
        %v3655 = vor.u32 %v3654, 8388608
        %v3656 = vsub.s32 0, %v3655
        %v3657 = vadd.s32 %v3652, 1
        %vm3658 = vcmp.gt.s32.totalorder %v3657, 0
        %v3659 = vsel %vm3658, %v3657, 0
        %v3660 = vshrl.u32 %v3659, 5
        %v3661 = vand.u32 %v3659, 31
        %v3662 = vsub.s32 32, %v3661
        %v3663 = vshrl.u32 683565275, %v3662
        %v3664 = vshll.u32 683565275, %v3661
        %v3665 = vshrl.u32 2475754826, %v3662
        %v3666 = vor.u32 %v3664, %v3665
        %v3667 = vshll.u32 2475754826, %v3661
        %v3668 = vshrl.u32 2131351028, %v3662
        %v3669 = vor.u32 %v3667, %v3668
        %v3670 = vshll.u32 2131351028, %v3661
        %v3671 = vshrl.u32 2102212464, %v3662
        %v3672 = vor.u32 %v3670, %v3671
        %v3673 = vshll.u32 2102212464, %v3661
        %v3674 = vshrl.u32 920167782, %v3662
        %v3675 = vor.u32 %v3673, %v3674
        %v3676 = vshll.u32 920167782, %v3661
        %v3677 = vshrl.u32 1326507024, %v3662
        %v3678 = vor.u32 %v3676, %v3677
        %vm3679 = vcmp.lt.s32.totalorder %v3660, 1
        %vm3680 = vcmp.lt.s32.totalorder %v3660, 2
        %vm3681 = vcmp.lt.s32.totalorder %v3660, 3
        %vm3682 = vcmp.lt.s32.totalorder %v3660, 4
        %v3683 = vsel %vm3679, %v3663, %v3666
        %v3684 = vsel %vm3682, %v3672, 2102212464
        %v3685 = vsel %vm3681, %v3669, %v3684
        %v3686 = vsel %vm3680, %v3683, %v3685
        %v3687 = vsel %vm3679, %v3666, %v3669
        %v3688 = vsel %vm3682, %v3675, 920167782
        %v3689 = vsel %vm3681, %v3672, %v3688
        %v3690 = vsel %vm3680, %v3687, %v3689
        %v3691 = vsel %vm3679, %v3669, %v3672
        %v3692 = vsel %vm3682, %v3678, 1326507024
        %v3693 = vsel %vm3681, %v3675, %v3692
        %v3694 = vsel %vm3680, %v3691, %v3693
        %v3695 = vshll.u32 %v3655, 8
        %v3696 = vmul.u32.u64.compose %v3695, %v3694
        %v3697 = vextract.low.u32 %v3696
        %v3698 = vextract.high.u32 %v3696
        %v3699 = vmul.u32.u64.compose %v3695, %v3690
        %v3700 = vextract.low.u32 %v3699
        %v3701 = vextract.high.u32 %v3699
        %v3702 = vmul.u32 %v3695, %v3686
        %v3703 = vadd.s32 %v3698, %v3700
        %vm3704 = vc.u32 %v3698, %v3700
        %v3705 = vadd.s32 %v3701, 1
        %v3706 = vsel %vm3704, %v3705, %v3701
        %v3707 = vadd.s32 %v3702, %v3706
        %v3708 = vadd.s32 %v3707, 536870912
        %v3709 = vshrl.u32 %v3708, 30
        %v3710 = vshll.u32 %v3709, 30
        %v3711 = vsub.s32 %v3707, %v3710
        %vm3712 = vcmp.lt.s32.totalorder %v3711, 0
        %v3713 = vsub.s32 0, %v3711
        %v3714 = vsel %vm3712, %v3713, %v3711
        %v3715 = vclz %v3714
        %v3716 = vsub.s32 %v3715, 2
        %vm3717 = vcmp.gt.s32.totalorder 0, %v3716
        %v3718 = vsel %vm3717, 0, %v3716
        %v3719 = vsub.s32 32, %v3718
        %v3720 = vshll.u32 %v3711, %v3718
        %v3721 = vshrl.u32 %v3703, %v3719
        %v3722 = vor.u32 %v3720, %v3721
        %v3723 = vsub.s32 4294967266, %v3718
        %v3724 = vadd.s32 %v3723, 127
        %v3725 = vshll.u32 %v3724, 23
        %v3726 = vor.u32 4788187, %v3725
        %v3727 = vand.u32 2147483647, %v3726
        %v3729 = vcvt.s32.f32 %v3722
        %v3730 = vmul.f32 %v3729, %v3727
        %v3731 = vxor.u32 %v3730, 2147483648
        %v3732 = vsel %vm3649, %v3731, %v3730
        %v3733 = vsub.s32 4, %v3709
        %v3734 = vsel %vm3649, %v3733, %v3709
        %v3735 = vsel %vm3648, %v2203, %v3732
        %v3736 = vsel %vm3648, 0, %v3734
        %v3737 = vcosq.f32.pop %v3735
        %v3738 = vsinq.f32.pop %v3735
        %vm3739 = vweird.f32 %v2203
        %v3740 = vand.u32 %v3736, 3
        %vm3741 = vcmp.lt.s32.totalorder %v3740, 2
        %vm3742 = vcmp.eq.s32.totalorder %v3740, 0
        %v3743 = vxor.u32 %v3738, 2147483648
        %v3744 = vsel %vm3742, %v3737, %v3743
        %vm3745 = vcmp.eq.s32.totalorder %v3740, 2
        %v3746 = vxor.u32 %v3737, 2147483648
        %v3747 = vsel %vm3745, %v3746, %v3738
        %v3748 = vsel %vm3741, %v3744, %v3747
        %v3749 = vsel %vm3739, nan, %v3748
        %v3750 = vand.u32 2147483647, %v2204
        %vm3751 = vcmp.le.f32.partialorder %v3750, 0.7853982
        %vm3752 = vcmp.lt.s32.totalorder %v2204, 0
        %v3753 = vand.u32 %v2204, 2139095040
        %v3754 = vshrl.u32 %v3753, 23
        %v3755 = vsub.s32 %v3754, 127
        %v3756 = vand.u32 2147483647, %v2204
        %v3757 = vand.u32 %v3756, 8388607
        %v3758 = vor.u32 %v3757, 8388608
        %v3759 = vsub.s32 0, %v3758
        %v3760 = vadd.s32 %v3755, 1
        %vm3761 = vcmp.gt.s32.totalorder %v3760, 0
        %v3762 = vsel %vm3761, %v3760, 0
        %v3763 = vshrl.u32 %v3762, 5
        %v3764 = vand.u32 %v3762, 31
        %v3765 = vsub.s32 32, %v3764
        %v3766 = vshrl.u32 683565275, %v3765
        %v3767 = vshll.u32 683565275, %v3764
        %v3768 = vshrl.u32 2475754826, %v3765
        %v3769 = vor.u32 %v3767, %v3768
        %v3770 = vshll.u32 2475754826, %v3764
        %v3771 = vshrl.u32 2131351028, %v3765
        %v3772 = vor.u32 %v3770, %v3771
        %v3773 = vshll.u32 2131351028, %v3764
        %v3774 = vshrl.u32 2102212464, %v3765
        %v3775 = vor.u32 %v3773, %v3774
        %v3776 = vshll.u32 2102212464, %v3764
        %v3777 = vshrl.u32 920167782, %v3765
        %v3778 = vor.u32 %v3776, %v3777
        %v3779 = vshll.u32 920167782, %v3764
        %v3780 = vshrl.u32 1326507024, %v3765
        %v3781 = vor.u32 %v3779, %v3780
        %vm3782 = vcmp.lt.s32.totalorder %v3763, 1
        %vm3783 = vcmp.lt.s32.totalorder %v3763, 2
        %vm3784 = vcmp.lt.s32.totalorder %v3763, 3
        %vm3785 = vcmp.lt.s32.totalorder %v3763, 4
        %v3786 = vsel %vm3782, %v3766, %v3769
        %v3787 = vsel %vm3785, %v3775, 2102212464
        %v3788 = vsel %vm3784, %v3772, %v3787
        %v3789 = vsel %vm3783, %v3786, %v3788
        %v3790 = vsel %vm3782, %v3769, %v3772
        %v3791 = vsel %vm3785, %v3778, 920167782
        %v3792 = vsel %vm3784, %v3775, %v3791
        %v3793 = vsel %vm3783, %v3790, %v3792
        %v3794 = vsel %vm3782, %v3772, %v3775
        %v3795 = vsel %vm3785, %v3781, 1326507024
        %v3796 = vsel %vm3784, %v3778, %v3795
        %v3797 = vsel %vm3783, %v3794, %v3796
        %v3798 = vshll.u32 %v3758, 8
        %v3799 = vmul.u32.u64.compose %v3798, %v3797
        %v3800 = vextract.low.u32 %v3799
        %v3801 = vextract.high.u32 %v3799
        %v3802 = vmul.u32.u64.compose %v3798, %v3793
        %v3803 = vextract.low.u32 %v3802
        %v3804 = vextract.high.u32 %v3802
        %v3805 = vmul.u32 %v3798, %v3789
        %v3806 = vadd.s32 %v3801, %v3803
        %vm3807 = vc.u32 %v3801, %v3803
        %v3808 = vadd.s32 %v3804, 1
        %v3809 = vsel %vm3807, %v3808, %v3804
        %v3810 = vadd.s32 %v3805, %v3809
        %v3811 = vadd.s32 %v3810, 536870912
        %v3812 = vshrl.u32 %v3811, 30
        %v3813 = vshll.u32 %v3812, 30
        %v3814 = vsub.s32 %v3810, %v3813
        %vm3815 = vcmp.lt.s32.totalorder %v3814, 0
        %v3816 = vsub.s32 0, %v3814
        %v3817 = vsel %vm3815, %v3816, %v3814
        %v3818 = vclz %v3817
        %v3819 = vsub.s32 %v3818, 2
        %vm3820 = vcmp.gt.s32.totalorder 0, %v3819
        %v3821 = vsel %vm3820, 0, %v3819
        %v3822 = vsub.s32 32, %v3821
        %v3823 = vshll.u32 %v3814, %v3821
        %v3824 = vshrl.u32 %v3806, %v3822
        %v3825 = vor.u32 %v3823, %v3824
        %v3826 = vsub.s32 4294967266, %v3821
        %v3827 = vadd.s32 %v3826, 127
        %v3828 = vshll.u32 %v3827, 23
        %v3829 = vor.u32 4788187, %v3828
        %v3830 = vand.u32 2147483647, %v3829
        %v3832 = vcvt.s32.f32 %v3825
        %v3833 = vmul.f32 %v3832, %v3830
        %v3834 = vxor.u32 %v3833, 2147483648
        %v3835 = vsel %vm3752, %v3834, %v3833
        %v3836 = vsub.s32 4, %v3812
        %v3837 = vsel %vm3752, %v3836, %v3812
        %v3838 = vsel %vm3751, %v2204, %v3835
        %v3839 = vsel %vm3751, 0, %v3837
        %v3840 = vcosq.f32.pop %v3838
        %v3841 = vsinq.f32.pop %v3838
        %vm3842 = vweird.f32 %v2204
        %v3843 = vand.u32 %v3839, 3
        %vm3844 = vcmp.lt.s32.totalorder %v3843, 2
        %vm3845 = vcmp.eq.s32.totalorder %v3843, 0
        %v3846 = vxor.u32 %v3841, 2147483648
        %v3847 = vsel %vm3845, %v3840, %v3846
        %vm3848 = vcmp.eq.s32.totalorder %v3843, 2
        %v3849 = vxor.u32 %v3840, 2147483648
        %v3850 = vsel %vm3848, %v3849, %v3841
        %v3851 = vsel %vm3844, %v3847, %v3850
        %v3852 = vsel %vm3842, nan, %v3851
        %v3853 = vstv %s1738
        %v3854 = vmul.f32 %v3853, %v2307
        %v3855 = vmul.f32 %v3853, %v2410
        %v3856 = vmul.f32 %v3853, %v2513
        %v3857 = vmul.f32 %v3853, %v2616
        %v3858 = vmul.f32 %v3853, %v2719
        %v3859 = vmul.f32 %v3853, %v2822
        %v3860 = vmul.f32 %v3853, %v2925
        %v3861 = vmul.f32 %v3853, %v3028
        %v3862 = vmul.f32 %v3853, %v3131
        %v3863 = vmul.f32 %v3853, %v3234
        %v3864 = vmul.f32 %v3853, %v3337
        %v3865 = vmul.f32 %v3853, %v3440
        %v3866 = vmul.f32 %v3853, %v3543
        %v3867 = vmul.f32 %v3853, %v3646
        %v3868 = vmul.f32 %v3853, %v3749
        %v3869 = vmul.f32 %v3853, %v3852
        %3870 = vst [vmem:[%s436] sm:$0xff] %v3854
        %3871 = vst [vmem:[%s436 + $0x20] sm:$0xff] %v3855
        %3872 = vst [vmem:[%s436 + $0x40] sm:$0xff] %v3856
        %3873 = vst [vmem:[%s436 + $0x60] sm:$0xff] %v3857
        %3874 = vst [vmem:[%s436 + $0x80] sm:$0xff] %v3858
        %3875 = vst [vmem:[%s436 + $0xa0] sm:$0xff] %v3859
        %3876 = vst [vmem:[%s436 + $0xc0] sm:$0xff] %v3860
        %3877 = vst [vmem:[%s436 + $0xe0] sm:$0xff] %v3861
        %3878 = vst [vmem:[%s436 + $0x100] sm:$0xff] %v3862
        %3879 = vst [vmem:[%s436 + $0x120] sm:$0xff] %v3863
        %3880 = vst [vmem:[%s436 + $0x140] sm:$0xff] %v3864
        %3881 = vst [vmem:[%s436 + $0x160] sm:$0xff] %v3865
        %3882 = vst [vmem:[%s436 + $0x180] sm:$0xff] %v3866
        %3883 = vst [vmem:[%s436 + $0x1a0] sm:$0xff] %v3867
        %3884 = vst [vmem:[%s436 + $0x1c0] sm:$0xff] %v3868
        %3885 = vst [vmem:[%s436 + $0x1e0] sm:$0xff] %v3869
        %v3886 = vand.u32 2147483647, %v2189
        %vm3887 = vcmp.le.f32.partialorder %v3886, 0.7853982
        %vm3888 = vcmp.lt.s32.totalorder %v2189, 0
        %v3889 = vand.u32 %v2189, 2139095040
        %v3890 = vshrl.u32 %v3889, 23
        %v3891 = vsub.s32 %v3890, 127
        %v3892 = vand.u32 2147483647, %v2189
        %v3893 = vand.u32 %v3892, 8388607
        %v3894 = vor.u32 %v3893, 8388608
        %v3895 = vsub.s32 0, %v3894
        %v3896 = vadd.s32 %v3891, 1
        %vm3897 = vcmp.gt.s32.totalorder %v3896, 0
        %v3898 = vsel %vm3897, %v3896, 0
        %v3899 = vshrl.u32 %v3898, 5
        %v3900 = vand.u32 %v3898, 31
        %v3901 = vsub.s32 32, %v3900
        %v3902 = vshrl.u32 683565275, %v3901
        %v3903 = vshll.u32 683565275, %v3900
        %v3904 = vshrl.u32 2475754826, %v3901
        %v3905 = vor.u32 %v3903, %v3904
        %v3906 = vshll.u32 2475754826, %v3900
        %v3907 = vshrl.u32 2131351028, %v3901
        %v3908 = vor.u32 %v3906, %v3907
        %v3909 = vshll.u32 2131351028, %v3900
        %v3910 = vshrl.u32 2102212464, %v3901
        %v3911 = vor.u32 %v3909, %v3910
        %v3912 = vshll.u32 2102212464, %v3900
        %v3913 = vshrl.u32 920167782, %v3901
        %v3914 = vor.u32 %v3912, %v3913
        %v3915 = vshll.u32 920167782, %v3900
        %v3916 = vshrl.u32 1326507024, %v3901
        %v3917 = vor.u32 %v3915, %v3916
        %vm3918 = vcmp.lt.s32.totalorder %v3899, 1
        %vm3919 = vcmp.lt.s32.totalorder %v3899, 2
        %vm3920 = vcmp.lt.s32.totalorder %v3899, 3
        %vm3921 = vcmp.lt.s32.totalorder %v3899, 4
        %v3922 = vsel %vm3918, %v3902, %v3905
        %v3923 = vsel %vm3921, %v3911, 2102212464
        %v3924 = vsel %vm3920, %v3908, %v3923
        %v3925 = vsel %vm3919, %v3922, %v3924
        %v3926 = vsel %vm3918, %v3905, %v3908
        %v3927 = vsel %vm3921, %v3914, 920167782
        %v3928 = vsel %vm3920, %v3911, %v3927
        %v3929 = vsel %vm3919, %v3926, %v3928
        %v3930 = vsel %vm3918, %v3908, %v3911
        %v3931 = vsel %vm3921, %v3917, 1326507024
        %v3932 = vsel %vm3920, %v3914, %v3931
        %v3933 = vsel %vm3919, %v3930, %v3932
        %v3934 = vshll.u32 %v3894, 8
        %v3935 = vmul.u32.u64.compose %v3934, %v3933
        %v3936 = vextract.low.u32 %v3935
        %v3937 = vextract.high.u32 %v3935
        %v3938 = vmul.u32.u64.compose %v3934, %v3929
        %v3939 = vextract.low.u32 %v3938
        %v3940 = vextract.high.u32 %v3938
        %v3941 = vmul.u32 %v3934, %v3925
        %v3942 = vadd.s32 %v3937, %v3939
        %vm3943 = vc.u32 %v3937, %v3939
        %v3944 = vadd.s32 %v3940, 1
        %v3945 = vsel %vm3943, %v3944, %v3940
        %v3946 = vadd.s32 %v3941, %v3945
        %v3947 = vadd.s32 %v3946, 536870912
        %v3948 = vshrl.u32 %v3947, 30
        %v3949 = vshll.u32 %v3948, 30
        %v3950 = vsub.s32 %v3946, %v3949
        %vm3951 = vcmp.lt.s32.totalorder %v3950, 0
        %v3952 = vsub.s32 0, %v3950
        %v3953 = vsel %vm3951, %v3952, %v3950
        %v3954 = vclz %v3953
        %v3955 = vsub.s32 %v3954, 2
        %vm3956 = vcmp.gt.s32.totalorder 0, %v3955
        %v3957 = vsel %vm3956, 0, %v3955
        %v3958 = vsub.s32 32, %v3957
        %v3959 = vshll.u32 %v3950, %v3957
        %v3960 = vshrl.u32 %v3942, %v3958
        %v3961 = vor.u32 %v3959, %v3960
        %v3962 = vsub.s32 4294967266, %v3957
        %v3963 = vadd.s32 %v3962, 127
        %v3964 = vshll.u32 %v3963, 23
        %v3965 = vor.u32 4788187, %v3964
        %v3966 = vand.u32 2147483647, %v3965
        %v3968 = vcvt.s32.f32 %v3961
        %v3969 = vmul.f32 %v3968, %v3966
        %v3970 = vxor.u32 %v3969, 2147483648
        %v3971 = vsel %vm3888, %v3970, %v3969
        %v3972 = vsub.s32 4, %v3948
        %v3973 = vsel %vm3888, %v3972, %v3948
        %v3974 = vsel %vm3887, %v2189, %v3971
        %v3975 = vsel %vm3887, 0, %v3973
        %v3976 = vcosq.f32.pop %v3974
        %v3977 = vsinq.f32.pop %v3974
        %vm3978 = vweird.f32 %v2189
        %v3979 = vadd.s32 %v3975, 3
        %v3980 = vand.u32 %v3979, 3
        %vm3981 = vcmp.lt.s32.totalorder %v3980, 2
        %vm3982 = vcmp.eq.s32.totalorder %v3980, 0
        %v3983 = vxor.u32 %v3977, 2147483648
        %v3984 = vsel %vm3982, %v3976, %v3983
        %vm3985 = vcmp.eq.s32.totalorder %v3980, 2
        %v3986 = vxor.u32 %v3976, 2147483648
        %v3987 = vsel %vm3985, %v3986, %v3977
        %v3988 = vsel %vm3981, %v3984, %v3987
        %v3989 = vsel %vm3978, nan, %v3988
        %v3990 = vand.u32 2147483647, %v2190
        %vm3991 = vcmp.le.f32.partialorder %v3990, 0.7853982
        %vm3992 = vcmp.lt.s32.totalorder %v2190, 0
        %v3993 = vand.u32 %v2190, 2139095040
        %v3994 = vshrl.u32 %v3993, 23
        %v3995 = vsub.s32 %v3994, 127
        %v3996 = vand.u32 2147483647, %v2190
        %v3997 = vand.u32 %v3996, 8388607
        %v3998 = vor.u32 %v3997, 8388608
        %v3999 = vsub.s32 0, %v3998
        %v4000 = vadd.s32 %v3995, 1
        %vm4001 = vcmp.gt.s32.totalorder %v4000, 0
        %v4002 = vsel %vm4001, %v4000, 0
        %v4003 = vshrl.u32 %v4002, 5
        %v4004 = vand.u32 %v4002, 31
        %v4005 = vsub.s32 32, %v4004
        %v4006 = vshrl.u32 683565275, %v4005
        %v4007 = vshll.u32 683565275, %v4004
        %v4008 = vshrl.u32 2475754826, %v4005
        %v4009 = vor.u32 %v4007, %v4008
        %v4010 = vshll.u32 2475754826, %v4004
        %v4011 = vshrl.u32 2131351028, %v4005
        %v4012 = vor.u32 %v4010, %v4011
        %v4013 = vshll.u32 2131351028, %v4004
        %v4014 = vshrl.u32 2102212464, %v4005
        %v4015 = vor.u32 %v4013, %v4014
        %v4016 = vshll.u32 2102212464, %v4004
        %v4017 = vshrl.u32 920167782, %v4005
        %v4018 = vor.u32 %v4016, %v4017
        %v4019 = vshll.u32 920167782, %v4004
        %v4020 = vshrl.u32 1326507024, %v4005
        %v4021 = vor.u32 %v4019, %v4020
        %vm4022 = vcmp.lt.s32.totalorder %v4003, 1
        %vm4023 = vcmp.lt.s32.totalorder %v4003, 2
        %vm4024 = vcmp.lt.s32.totalorder %v4003, 3
        %vm4025 = vcmp.lt.s32.totalorder %v4003, 4
        %v4026 = vsel %vm4022, %v4006, %v4009
        %v4027 = vsel %vm4025, %v4015, 2102212464
        %v4028 = vsel %vm4024, %v4012, %v4027
        %v4029 = vsel %vm4023, %v4026, %v4028
        %v4030 = vsel %vm4022, %v4009, %v4012
        %v4031 = vsel %vm4025, %v4018, 920167782
        %v4032 = vsel %vm4024, %v4015, %v4031
        %v4033 = vsel %vm4023, %v4030, %v4032
        %v4034 = vsel %vm4022, %v4012, %v4015
        %v4035 = vsel %vm4025, %v4021, 1326507024
        %v4036 = vsel %vm4024, %v4018, %v4035
        %v4037 = vsel %vm4023, %v4034, %v4036
        %v4038 = vshll.u32 %v3998, 8
        %v4039 = vmul.u32.u64.compose %v4038, %v4037
        %v4040 = vextract.low.u32 %v4039
        %v4041 = vextract.high.u32 %v4039
        %v4042 = vmul.u32.u64.compose %v4038, %v4033
        %v4043 = vextract.low.u32 %v4042
        %v4044 = vextract.high.u32 %v4042
        %v4045 = vmul.u32 %v4038, %v4029
        %v4046 = vadd.s32 %v4041, %v4043
        %vm4047 = vc.u32 %v4041, %v4043
        %v4048 = vadd.s32 %v4044, 1
        %v4049 = vsel %vm4047, %v4048, %v4044
        %v4050 = vadd.s32 %v4045, %v4049
        %v4051 = vadd.s32 %v4050, 536870912
        %v4052 = vshrl.u32 %v4051, 30
        %v4053 = vshll.u32 %v4052, 30
        %v4054 = vsub.s32 %v4050, %v4053
        %vm4055 = vcmp.lt.s32.totalorder %v4054, 0
        %v4056 = vsub.s32 0, %v4054
        %v4057 = vsel %vm4055, %v4056, %v4054
        %v4058 = vclz %v4057
        %v4059 = vsub.s32 %v4058, 2
        %vm4060 = vcmp.gt.s32.totalorder 0, %v4059
        %v4061 = vsel %vm4060, 0, %v4059
        %v4062 = vsub.s32 32, %v4061
        %v4063 = vshll.u32 %v4054, %v4061
        %v4064 = vshrl.u32 %v4046, %v4062
        %v4065 = vor.u32 %v4063, %v4064
        %v4066 = vsub.s32 4294967266, %v4061
        %v4067 = vadd.s32 %v4066, 127
        %v4068 = vshll.u32 %v4067, 23
        %v4069 = vor.u32 4788187, %v4068
        %v4070 = vand.u32 2147483647, %v4069
        %v4072 = vcvt.s32.f32 %v4065
        %v4073 = vmul.f32 %v4072, %v4070
        %v4074 = vxor.u32 %v4073, 2147483648
        %v4075 = vsel %vm3992, %v4074, %v4073
        %v4076 = vsub.s32 4, %v4052
        %v4077 = vsel %vm3992, %v4076, %v4052
        %v4078 = vsel %vm3991, %v2190, %v4075
        %v4079 = vsel %vm3991, 0, %v4077
        %v4080 = vcosq.f32.pop %v4078
        %v4081 = vsinq.f32.pop %v4078
        %vm4082 = vweird.f32 %v2190
        %v4083 = vadd.s32 %v4079, 3
        %v4084 = vand.u32 %v4083, 3
        %vm4085 = vcmp.lt.s32.totalorder %v4084, 2
        %vm4086 = vcmp.eq.s32.totalorder %v4084, 0
        %v4087 = vxor.u32 %v4081, 2147483648
        %v4088 = vsel %vm4086, %v4080, %v4087
        %vm4089 = vcmp.eq.s32.totalorder %v4084, 2
        %v4090 = vxor.u32 %v4080, 2147483648
        %v4091 = vsel %vm4089, %v4090, %v4081
        %v4092 = vsel %vm4085, %v4088, %v4091
        %v4093 = vsel %vm4082, nan, %v4092
        %v4094 = vand.u32 2147483647, %v2191
        %vm4095 = vcmp.le.f32.partialorder %v4094, 0.7853982
        %vm4096 = vcmp.lt.s32.totalorder %v2191, 0
        %v4097 = vand.u32 %v2191, 2139095040
        %v4098 = vshrl.u32 %v4097, 23
        %v4099 = vsub.s32 %v4098, 127
        %v4100 = vand.u32 2147483647, %v2191
        %v4101 = vand.u32 %v4100, 8388607
        %v4102 = vor.u32 %v4101, 8388608
        %v4103 = vsub.s32 0, %v4102
        %v4104 = vadd.s32 %v4099, 1
        %vm4105 = vcmp.gt.s32.totalorder %v4104, 0
        %v4106 = vsel %vm4105, %v4104, 0
        %v4107 = vshrl.u32 %v4106, 5
        %v4108 = vand.u32 %v4106, 31
        %v4109 = vsub.s32 32, %v4108
        %v4110 = vshrl.u32 683565275, %v4109
        %v4111 = vshll.u32 683565275, %v4108
        %v4112 = vshrl.u32 2475754826, %v4109
        %v4113 = vor.u32 %v4111, %v4112
        %v4114 = vshll.u32 2475754826, %v4108
        %v4115 = vshrl.u32 2131351028, %v4109
        %v4116 = vor.u32 %v4114, %v4115
        %v4117 = vshll.u32 2131351028, %v4108
        %v4118 = vshrl.u32 2102212464, %v4109
        %v4119 = vor.u32 %v4117, %v4118
        %v4120 = vshll.u32 2102212464, %v4108
        %v4121 = vshrl.u32 920167782, %v4109
        %v4122 = vor.u32 %v4120, %v4121
        %v4123 = vshll.u32 920167782, %v4108
        %v4124 = vshrl.u32 1326507024, %v4109
        %v4125 = vor.u32 %v4123, %v4124
        %vm4126 = vcmp.lt.s32.totalorder %v4107, 1
        %vm4127 = vcmp.lt.s32.totalorder %v4107, 2
        %vm4128 = vcmp.lt.s32.totalorder %v4107, 3
        %vm4129 = vcmp.lt.s32.totalorder %v4107, 4
        %v4130 = vsel %vm4126, %v4110, %v4113
        %v4131 = vsel %vm4129, %v4119, 2102212464
        %v4132 = vsel %vm4128, %v4116, %v4131
        %v4133 = vsel %vm4127, %v4130, %v4132
        %v4134 = vsel %vm4126, %v4113, %v4116
        %v4135 = vsel %vm4129, %v4122, 920167782
        %v4136 = vsel %vm4128, %v4119, %v4135
        %v4137 = vsel %vm4127, %v4134, %v4136
        %v4138 = vsel %vm4126, %v4116, %v4119
        %v4139 = vsel %vm4129, %v4125, 1326507024
        %v4140 = vsel %vm4128, %v4122, %v4139
        %v4141 = vsel %vm4127, %v4138, %v4140
        %v4142 = vshll.u32 %v4102, 8
        %v4143 = vmul.u32.u64.compose %v4142, %v4141
        %v4144 = vextract.low.u32 %v4143
        %v4145 = vextract.high.u32 %v4143
        %v4146 = vmul.u32.u64.compose %v4142, %v4137
        %v4147 = vextract.low.u32 %v4146
        %v4148 = vextract.high.u32 %v4146
        %v4149 = vmul.u32 %v4142, %v4133
        %v4150 = vadd.s32 %v4145, %v4147
        %vm4151 = vc.u32 %v4145, %v4147
        %v4152 = vadd.s32 %v4148, 1
        %v4153 = vsel %vm4151, %v4152, %v4148
        %v4154 = vadd.s32 %v4149, %v4153
        %v4155 = vadd.s32 %v4154, 536870912
        %v4156 = vshrl.u32 %v4155, 30
        %v4157 = vshll.u32 %v4156, 30
        %v4158 = vsub.s32 %v4154, %v4157
        %vm4159 = vcmp.lt.s32.totalorder %v4158, 0
        %v4160 = vsub.s32 0, %v4158
        %v4161 = vsel %vm4159, %v4160, %v4158
        %v4162 = vclz %v4161
        %v4163 = vsub.s32 %v4162, 2
        %vm4164 = vcmp.gt.s32.totalorder 0, %v4163
        %v4165 = vsel %vm4164, 0, %v4163
        %v4166 = vsub.s32 32, %v4165
        %v4167 = vshll.u32 %v4158, %v4165
        %v4168 = vshrl.u32 %v4150, %v4166
        %v4169 = vor.u32 %v4167, %v4168
        %v4170 = vsub.s32 4294967266, %v4165
        %v4171 = vadd.s32 %v4170, 127
        %v4172 = vshll.u32 %v4171, 23
        %v4173 = vor.u32 4788187, %v4172
        %v4174 = vand.u32 2147483647, %v4173
        %v4176 = vcvt.s32.f32 %v4169
        %v4177 = vmul.f32 %v4176, %v4174
        %v4178 = vxor.u32 %v4177, 2147483648
        %v4179 = vsel %vm4096, %v4178, %v4177
        %v4180 = vsub.s32 4, %v4156
        %v4181 = vsel %vm4096, %v4180, %v4156
        %v4182 = vsel %vm4095, %v2191, %v4179
        %v4183 = vsel %vm4095, 0, %v4181
        %v4184 = vcosq.f32.pop %v4182
        %v4185 = vsinq.f32.pop %v4182
        %vm4186 = vweird.f32 %v2191
        %v4187 = vadd.s32 %v4183, 3
        %v4188 = vand.u32 %v4187, 3
        %vm4189 = vcmp.lt.s32.totalorder %v4188, 2
        %vm4190 = vcmp.eq.s32.totalorder %v4188, 0
        %v4191 = vxor.u32 %v4185, 2147483648
        %v4192 = vsel %vm4190, %v4184, %v4191
        %vm4193 = vcmp.eq.s32.totalorder %v4188, 2
        %v4194 = vxor.u32 %v4184, 2147483648
        %v4195 = vsel %vm4193, %v4194, %v4185
        %v4196 = vsel %vm4189, %v4192, %v4195
        %v4197 = vsel %vm4186, nan, %v4196
        %v4198 = vand.u32 2147483647, %v2192
        %vm4199 = vcmp.le.f32.partialorder %v4198, 0.7853982
        %vm4200 = vcmp.lt.s32.totalorder %v2192, 0
        %v4201 = vand.u32 %v2192, 2139095040
        %v4202 = vshrl.u32 %v4201, 23
        %v4203 = vsub.s32 %v4202, 127
        %v4204 = vand.u32 2147483647, %v2192
        %v4205 = vand.u32 %v4204, 8388607
        %v4206 = vor.u32 %v4205, 8388608
        %v4207 = vsub.s32 0, %v4206
        %v4208 = vadd.s32 %v4203, 1
        %vm4209 = vcmp.gt.s32.totalorder %v4208, 0
        %v4210 = vsel %vm4209, %v4208, 0
        %v4211 = vshrl.u32 %v4210, 5
        %v4212 = vand.u32 %v4210, 31
        %v4213 = vsub.s32 32, %v4212
        %v4214 = vshrl.u32 683565275, %v4213
        %v4215 = vshll.u32 683565275, %v4212
        %v4216 = vshrl.u32 2475754826, %v4213
        %v4217 = vor.u32 %v4215, %v4216
        %v4218 = vshll.u32 2475754826, %v4212
        %v4219 = vshrl.u32 2131351028, %v4213
        %v4220 = vor.u32 %v4218, %v4219
        %v4221 = vshll.u32 2131351028, %v4212
        %v4222 = vshrl.u32 2102212464, %v4213
        %v4223 = vor.u32 %v4221, %v4222
        %v4224 = vshll.u32 2102212464, %v4212
        %v4225 = vshrl.u32 920167782, %v4213
        %v4226 = vor.u32 %v4224, %v4225
        %v4227 = vshll.u32 920167782, %v4212
        %v4228 = vshrl.u32 1326507024, %v4213
        %v4229 = vor.u32 %v4227, %v4228
        %vm4230 = vcmp.lt.s32.totalorder %v4211, 1
        %vm4231 = vcmp.lt.s32.totalorder %v4211, 2
        %vm4232 = vcmp.lt.s32.totalorder %v4211, 3
        %vm4233 = vcmp.lt.s32.totalorder %v4211, 4
        %v4234 = vsel %vm4230, %v4214, %v4217
        %v4235 = vsel %vm4233, %v4223, 2102212464
        %v4236 = vsel %vm4232, %v4220, %v4235
        %v4237 = vsel %vm4231, %v4234, %v4236
        %v4238 = vsel %vm4230, %v4217, %v4220
        %v4239 = vsel %vm4233, %v4226, 920167782
        %v4240 = vsel %vm4232, %v4223, %v4239
        %v4241 = vsel %vm4231, %v4238, %v4240
        %v4242 = vsel %vm4230, %v4220, %v4223
        %v4243 = vsel %vm4233, %v4229, 1326507024
        %v4244 = vsel %vm4232, %v4226, %v4243
        %v4245 = vsel %vm4231, %v4242, %v4244
        %v4246 = vshll.u32 %v4206, 8
        %v4247 = vmul.u32.u64.compose %v4246, %v4245
        %v4248 = vextract.low.u32 %v4247
        %v4249 = vextract.high.u32 %v4247
        %v4250 = vmul.u32.u64.compose %v4246, %v4241
        %v4251 = vextract.low.u32 %v4250
        %v4252 = vextract.high.u32 %v4250
        %v4253 = vmul.u32 %v4246, %v4237
        %v4254 = vadd.s32 %v4249, %v4251
        %vm4255 = vc.u32 %v4249, %v4251
        %v4256 = vadd.s32 %v4252, 1
        %v4257 = vsel %vm4255, %v4256, %v4252
        %v4258 = vadd.s32 %v4253, %v4257
        %v4259 = vadd.s32 %v4258, 536870912
        %v4260 = vshrl.u32 %v4259, 30
        %v4261 = vshll.u32 %v4260, 30
        %v4262 = vsub.s32 %v4258, %v4261
        %vm4263 = vcmp.lt.s32.totalorder %v4262, 0
        %v4264 = vsub.s32 0, %v4262
        %v4265 = vsel %vm4263, %v4264, %v4262
        %v4266 = vclz %v4265
        %v4267 = vsub.s32 %v4266, 2
        %vm4268 = vcmp.gt.s32.totalorder 0, %v4267
        %v4269 = vsel %vm4268, 0, %v4267
        %v4270 = vsub.s32 32, %v4269
        %v4271 = vshll.u32 %v4262, %v4269
        %v4272 = vshrl.u32 %v4254, %v4270
        %v4273 = vor.u32 %v4271, %v4272
        %v4274 = vsub.s32 4294967266, %v4269
        %v4275 = vadd.s32 %v4274, 127
        %v4276 = vshll.u32 %v4275, 23
        %v4277 = vor.u32 4788187, %v4276
        %v4278 = vand.u32 2147483647, %v4277
        %v4280 = vcvt.s32.f32 %v4273
        %v4281 = vmul.f32 %v4280, %v4278
        %v4282 = vxor.u32 %v4281, 2147483648
        %v4283 = vsel %vm4200, %v4282, %v4281
        %v4284 = vsub.s32 4, %v4260
        %v4285 = vsel %vm4200, %v4284, %v4260
        %v4286 = vsel %vm4199, %v2192, %v4283
        %v4287 = vsel %vm4199, 0, %v4285
        %v4288 = vcosq.f32.pop %v4286
        %v4289 = vsinq.f32.pop %v4286
        %vm4290 = vweird.f32 %v2192
        %v4291 = vadd.s32 %v4287, 3
        %v4292 = vand.u32 %v4291, 3
        %vm4293 = vcmp.lt.s32.totalorder %v4292, 2
        %vm4294 = vcmp.eq.s32.totalorder %v4292, 0
        %v4295 = vxor.u32 %v4289, 2147483648
        %v4296 = vsel %vm4294, %v4288, %v4295
        %vm4297 = vcmp.eq.s32.totalorder %v4292, 2
        %v4298 = vxor.u32 %v4288, 2147483648
        %v4299 = vsel %vm4297, %v4298, %v4289
        %v4300 = vsel %vm4293, %v4296, %v4299
        %v4301 = vsel %vm4290, nan, %v4300
        %v4302 = vand.u32 2147483647, %v2193
        %vm4303 = vcmp.le.f32.partialorder %v4302, 0.7853982
        %vm4304 = vcmp.lt.s32.totalorder %v2193, 0
        %v4305 = vand.u32 %v2193, 2139095040
        %v4306 = vshrl.u32 %v4305, 23
        %v4307 = vsub.s32 %v4306, 127
        %v4308 = vand.u32 2147483647, %v2193
        %v4309 = vand.u32 %v4308, 8388607
        %v4310 = vor.u32 %v4309, 8388608
        %v4311 = vsub.s32 0, %v4310
        %v4312 = vadd.s32 %v4307, 1
        %vm4313 = vcmp.gt.s32.totalorder %v4312, 0
        %v4314 = vsel %vm4313, %v4312, 0
        %v4315 = vshrl.u32 %v4314, 5
        %v4316 = vand.u32 %v4314, 31
        %v4317 = vsub.s32 32, %v4316
        %v4318 = vshrl.u32 683565275, %v4317
        %v4319 = vshll.u32 683565275, %v4316
        %v4320 = vshrl.u32 2475754826, %v4317
        %v4321 = vor.u32 %v4319, %v4320
        %v4322 = vshll.u32 2475754826, %v4316
        %v4323 = vshrl.u32 2131351028, %v4317
        %v4324 = vor.u32 %v4322, %v4323
        %v4325 = vshll.u32 2131351028, %v4316
        %v4326 = vshrl.u32 2102212464, %v4317
        %v4327 = vor.u32 %v4325, %v4326
        %v4328 = vshll.u32 2102212464, %v4316
        %v4329 = vshrl.u32 920167782, %v4317
        %v4330 = vor.u32 %v4328, %v4329
        %v4331 = vshll.u32 920167782, %v4316
        %v4332 = vshrl.u32 1326507024, %v4317
        %v4333 = vor.u32 %v4331, %v4332
        %vm4334 = vcmp.lt.s32.totalorder %v4315, 1
        %vm4335 = vcmp.lt.s32.totalorder %v4315, 2
        %vm4336 = vcmp.lt.s32.totalorder %v4315, 3
        %vm4337 = vcmp.lt.s32.totalorder %v4315, 4
        %v4338 = vsel %vm4334, %v4318, %v4321
        %v4339 = vsel %vm4337, %v4327, 2102212464
        %v4340 = vsel %vm4336, %v4324, %v4339
        %v4341 = vsel %vm4335, %v4338, %v4340
        %v4342 = vsel %vm4334, %v4321, %v4324
        %v4343 = vsel %vm4337, %v4330, 920167782
        %v4344 = vsel %vm4336, %v4327, %v4343
        %v4345 = vsel %vm4335, %v4342, %v4344
        %v4346 = vsel %vm4334, %v4324, %v4327
        %v4347 = vsel %vm4337, %v4333, 1326507024
        %v4348 = vsel %vm4336, %v4330, %v4347
        %v4349 = vsel %vm4335, %v4346, %v4348
        %v4350 = vshll.u32 %v4310, 8
        %v4351 = vmul.u32.u64.compose %v4350, %v4349
        %v4352 = vextract.low.u32 %v4351
        %v4353 = vextract.high.u32 %v4351
        %v4354 = vmul.u32.u64.compose %v4350, %v4345
        %v4355 = vextract.low.u32 %v4354
        %v4356 = vextract.high.u32 %v4354
        %v4357 = vmul.u32 %v4350, %v4341
        %v4358 = vadd.s32 %v4353, %v4355
        %vm4359 = vc.u32 %v4353, %v4355
        %v4360 = vadd.s32 %v4356, 1
        %v4361 = vsel %vm4359, %v4360, %v4356
        %v4362 = vadd.s32 %v4357, %v4361
        %v4363 = vadd.s32 %v4362, 536870912
        %v4364 = vshrl.u32 %v4363, 30
        %v4365 = vshll.u32 %v4364, 30
        %v4366 = vsub.s32 %v4362, %v4365
        %vm4367 = vcmp.lt.s32.totalorder %v4366, 0
        %v4368 = vsub.s32 0, %v4366
        %v4369 = vsel %vm4367, %v4368, %v4366
        %v4370 = vclz %v4369
        %v4371 = vsub.s32 %v4370, 2
        %vm4372 = vcmp.gt.s32.totalorder 0, %v4371
        %v4373 = vsel %vm4372, 0, %v4371
        %v4374 = vsub.s32 32, %v4373
        %v4375 = vshll.u32 %v4366, %v4373
        %v4376 = vshrl.u32 %v4358, %v4374
        %v4377 = vor.u32 %v4375, %v4376
        %v4378 = vsub.s32 4294967266, %v4373
        %v4379 = vadd.s32 %v4378, 127
        %v4380 = vshll.u32 %v4379, 23
        %v4381 = vor.u32 4788187, %v4380
        %v4382 = vand.u32 2147483647, %v4381
        %v4384 = vcvt.s32.f32 %v4377
        %v4385 = vmul.f32 %v4384, %v4382
        %v4386 = vxor.u32 %v4385, 2147483648
        %v4387 = vsel %vm4304, %v4386, %v4385
        %v4388 = vsub.s32 4, %v4364
        %v4389 = vsel %vm4304, %v4388, %v4364
        %v4390 = vsel %vm4303, %v2193, %v4387
        %v4391 = vsel %vm4303, 0, %v4389
        %v4392 = vcosq.f32.pop %v4390
        %v4393 = vsinq.f32.pop %v4390
        %vm4394 = vweird.f32 %v2193
        %v4395 = vadd.s32 %v4391, 3
        %v4396 = vand.u32 %v4395, 3
        %vm4397 = vcmp.lt.s32.totalorder %v4396, 2
        %vm4398 = vcmp.eq.s32.totalorder %v4396, 0
        %v4399 = vxor.u32 %v4393, 2147483648
        %v4400 = vsel %vm4398, %v4392, %v4399
        %vm4401 = vcmp.eq.s32.totalorder %v4396, 2
        %v4402 = vxor.u32 %v4392, 2147483648
        %v4403 = vsel %vm4401, %v4402, %v4393
        %v4404 = vsel %vm4397, %v4400, %v4403
        %v4405 = vsel %vm4394, nan, %v4404
        %v4406 = vand.u32 2147483647, %v2194
        %vm4407 = vcmp.le.f32.partialorder %v4406, 0.7853982
        %vm4408 = vcmp.lt.s32.totalorder %v2194, 0
        %v4409 = vand.u32 %v2194, 2139095040
        %v4410 = vshrl.u32 %v4409, 23
        %v4411 = vsub.s32 %v4410, 127
        %v4412 = vand.u32 2147483647, %v2194
        %v4413 = vand.u32 %v4412, 8388607
        %v4414 = vor.u32 %v4413, 8388608
        %v4415 = vsub.s32 0, %v4414
        %v4416 = vadd.s32 %v4411, 1
        %vm4417 = vcmp.gt.s32.totalorder %v4416, 0
        %v4418 = vsel %vm4417, %v4416, 0
        %v4419 = vshrl.u32 %v4418, 5
        %v4420 = vand.u32 %v4418, 31
        %v4421 = vsub.s32 32, %v4420
        %v4422 = vshrl.u32 683565275, %v4421
        %v4423 = vshll.u32 683565275, %v4420
        %v4424 = vshrl.u32 2475754826, %v4421
        %v4425 = vor.u32 %v4423, %v4424
        %v4426 = vshll.u32 2475754826, %v4420
        %v4427 = vshrl.u32 2131351028, %v4421
        %v4428 = vor.u32 %v4426, %v4427
        %v4429 = vshll.u32 2131351028, %v4420
        %v4430 = vshrl.u32 2102212464, %v4421
        %v4431 = vor.u32 %v4429, %v4430
        %v4432 = vshll.u32 2102212464, %v4420
        %v4433 = vshrl.u32 920167782, %v4421
        %v4434 = vor.u32 %v4432, %v4433
        %v4435 = vshll.u32 920167782, %v4420
        %v4436 = vshrl.u32 1326507024, %v4421
        %v4437 = vor.u32 %v4435, %v4436
        %vm4438 = vcmp.lt.s32.totalorder %v4419, 1
        %vm4439 = vcmp.lt.s32.totalorder %v4419, 2
        %vm4440 = vcmp.lt.s32.totalorder %v4419, 3
        %vm4441 = vcmp.lt.s32.totalorder %v4419, 4
        %v4442 = vsel %vm4438, %v4422, %v4425
        %v4443 = vsel %vm4441, %v4431, 2102212464
        %v4444 = vsel %vm4440, %v4428, %v4443
        %v4445 = vsel %vm4439, %v4442, %v4444
        %v4446 = vsel %vm4438, %v4425, %v4428
        %v4447 = vsel %vm4441, %v4434, 920167782
        %v4448 = vsel %vm4440, %v4431, %v4447
        %v4449 = vsel %vm4439, %v4446, %v4448
        %v4450 = vsel %vm4438, %v4428, %v4431
        %v4451 = vsel %vm4441, %v4437, 1326507024
        %v4452 = vsel %vm4440, %v4434, %v4451
        %v4453 = vsel %vm4439, %v4450, %v4452
        %v4454 = vshll.u32 %v4414, 8
        %v4455 = vmul.u32.u64.compose %v4454, %v4453
        %v4456 = vextract.low.u32 %v4455
        %v4457 = vextract.high.u32 %v4455
        %v4458 = vmul.u32.u64.compose %v4454, %v4449
        %v4459 = vextract.low.u32 %v4458
        %v4460 = vextract.high.u32 %v4458
        %v4461 = vmul.u32 %v4454, %v4445
        %v4462 = vadd.s32 %v4457, %v4459
        %vm4463 = vc.u32 %v4457, %v4459
        %v4464 = vadd.s32 %v4460, 1
        %v4465 = vsel %vm4463, %v4464, %v4460
        %v4466 = vadd.s32 %v4461, %v4465
        %v4467 = vadd.s32 %v4466, 536870912
        %v4468 = vshrl.u32 %v4467, 30
        %v4469 = vshll.u32 %v4468, 30
        %v4470 = vsub.s32 %v4466, %v4469
        %vm4471 = vcmp.lt.s32.totalorder %v4470, 0
        %v4472 = vsub.s32 0, %v4470
        %v4473 = vsel %vm4471, %v4472, %v4470
        %v4474 = vclz %v4473
        %v4475 = vsub.s32 %v4474, 2
        %vm4476 = vcmp.gt.s32.totalorder 0, %v4475
        %v4477 = vsel %vm4476, 0, %v4475
        %v4478 = vsub.s32 32, %v4477
        %v4479 = vshll.u32 %v4470, %v4477
        %v4480 = vshrl.u32 %v4462, %v4478
        %v4481 = vor.u32 %v4479, %v4480
        %v4482 = vsub.s32 4294967266, %v4477
        %v4483 = vadd.s32 %v4482, 127
        %v4484 = vshll.u32 %v4483, 23
        %v4485 = vor.u32 4788187, %v4484
        %v4486 = vand.u32 2147483647, %v4485
        %v4488 = vcvt.s32.f32 %v4481
        %v4489 = vmul.f32 %v4488, %v4486
        %v4490 = vxor.u32 %v4489, 2147483648
        %v4491 = vsel %vm4408, %v4490, %v4489
        %v4492 = vsub.s32 4, %v4468
        %v4493 = vsel %vm4408, %v4492, %v4468
        %v4494 = vsel %vm4407, %v2194, %v4491
        %v4495 = vsel %vm4407, 0, %v4493
        %v4496 = vcosq.f32.pop %v4494
        %v4497 = vsinq.f32.pop %v4494
        %vm4498 = vweird.f32 %v2194
        %v4499 = vadd.s32 %v4495, 3
        %v4500 = vand.u32 %v4499, 3
        %vm4501 = vcmp.lt.s32.totalorder %v4500, 2
        %vm4502 = vcmp.eq.s32.totalorder %v4500, 0
        %v4503 = vxor.u32 %v4497, 2147483648
        %v4504 = vsel %vm4502, %v4496, %v4503
        %vm4505 = vcmp.eq.s32.totalorder %v4500, 2
        %v4506 = vxor.u32 %v4496, 2147483648
        %v4507 = vsel %vm4505, %v4506, %v4497
        %v4508 = vsel %vm4501, %v4504, %v4507
        %v4509 = vsel %vm4498, nan, %v4508
        %v4510 = vand.u32 2147483647, %v2195
        %vm4511 = vcmp.le.f32.partialorder %v4510, 0.7853982
        %vm4512 = vcmp.lt.s32.totalorder %v2195, 0
        %v4513 = vand.u32 %v2195, 2139095040
        %v4514 = vshrl.u32 %v4513, 23
        %v4515 = vsub.s32 %v4514, 127
        %v4516 = vand.u32 2147483647, %v2195
        %v4517 = vand.u32 %v4516, 8388607
        %v4518 = vor.u32 %v4517, 8388608
        %v4519 = vsub.s32 0, %v4518
        %v4520 = vadd.s32 %v4515, 1
        %vm4521 = vcmp.gt.s32.totalorder %v4520, 0
        %v4522 = vsel %vm4521, %v4520, 0
        %v4523 = vshrl.u32 %v4522, 5
        %v4524 = vand.u32 %v4522, 31
        %v4525 = vsub.s32 32, %v4524
        %v4526 = vshrl.u32 683565275, %v4525
        %v4527 = vshll.u32 683565275, %v4524
        %v4528 = vshrl.u32 2475754826, %v4525
        %v4529 = vor.u32 %v4527, %v4528
        %v4530 = vshll.u32 2475754826, %v4524
        %v4531 = vshrl.u32 2131351028, %v4525
        %v4532 = vor.u32 %v4530, %v4531
        %v4533 = vshll.u32 2131351028, %v4524
        %v4534 = vshrl.u32 2102212464, %v4525
        %v4535 = vor.u32 %v4533, %v4534
        %v4536 = vshll.u32 2102212464, %v4524
        %v4537 = vshrl.u32 920167782, %v4525
        %v4538 = vor.u32 %v4536, %v4537
        %v4539 = vshll.u32 920167782, %v4524
        %v4540 = vshrl.u32 1326507024, %v4525
        %v4541 = vor.u32 %v4539, %v4540
        %vm4542 = vcmp.lt.s32.totalorder %v4523, 1
        %vm4543 = vcmp.lt.s32.totalorder %v4523, 2
        %vm4544 = vcmp.lt.s32.totalorder %v4523, 3
        %vm4545 = vcmp.lt.s32.totalorder %v4523, 4
        %v4546 = vsel %vm4542, %v4526, %v4529
        %v4547 = vsel %vm4545, %v4535, 2102212464
        %v4548 = vsel %vm4544, %v4532, %v4547
        %v4549 = vsel %vm4543, %v4546, %v4548
        %v4550 = vsel %vm4542, %v4529, %v4532
        %v4551 = vsel %vm4545, %v4538, 920167782
        %v4552 = vsel %vm4544, %v4535, %v4551
        %v4553 = vsel %vm4543, %v4550, %v4552
        %v4554 = vsel %vm4542, %v4532, %v4535
        %v4555 = vsel %vm4545, %v4541, 1326507024
        %v4556 = vsel %vm4544, %v4538, %v4555
        %v4557 = vsel %vm4543, %v4554, %v4556
        %v4558 = vshll.u32 %v4518, 8
        %v4559 = vmul.u32.u64.compose %v4558, %v4557
        %v4560 = vextract.low.u32 %v4559
        %v4561 = vextract.high.u32 %v4559
        %v4562 = vmul.u32.u64.compose %v4558, %v4553
        %v4563 = vextract.low.u32 %v4562
        %v4564 = vextract.high.u32 %v4562
        %v4565 = vmul.u32 %v4558, %v4549
        %v4566 = vadd.s32 %v4561, %v4563
        %vm4567 = vc.u32 %v4561, %v4563
        %v4568 = vadd.s32 %v4564, 1
        %v4569 = vsel %vm4567, %v4568, %v4564
        %v4570 = vadd.s32 %v4565, %v4569
        %v4571 = vadd.s32 %v4570, 536870912
        %v4572 = vshrl.u32 %v4571, 30
        %v4573 = vshll.u32 %v4572, 30
        %v4574 = vsub.s32 %v4570, %v4573
        %vm4575 = vcmp.lt.s32.totalorder %v4574, 0
        %v4576 = vsub.s32 0, %v4574
        %v4577 = vsel %vm4575, %v4576, %v4574
        %v4578 = vclz %v4577
        %v4579 = vsub.s32 %v4578, 2
        %vm4580 = vcmp.gt.s32.totalorder 0, %v4579
        %v4581 = vsel %vm4580, 0, %v4579
        %v4582 = vsub.s32 32, %v4581
        %v4583 = vshll.u32 %v4574, %v4581
        %v4584 = vshrl.u32 %v4566, %v4582
        %v4585 = vor.u32 %v4583, %v4584
        %v4586 = vsub.s32 4294967266, %v4581
        %v4587 = vadd.s32 %v4586, 127
        %v4588 = vshll.u32 %v4587, 23
        %v4589 = vor.u32 4788187, %v4588
        %v4590 = vand.u32 2147483647, %v4589
        %v4592 = vcvt.s32.f32 %v4585
        %v4593 = vmul.f32 %v4592, %v4590
        %v4594 = vxor.u32 %v4593, 2147483648
        %v4595 = vsel %vm4512, %v4594, %v4593
        %v4596 = vsub.s32 4, %v4572
        %v4597 = vsel %vm4512, %v4596, %v4572
        %v4598 = vsel %vm4511, %v2195, %v4595
        %v4599 = vsel %vm4511, 0, %v4597
        %v4600 = vcosq.f32.pop %v4598
        %v4601 = vsinq.f32.pop %v4598
        %vm4602 = vweird.f32 %v2195
        %v4603 = vadd.s32 %v4599, 3
        %v4604 = vand.u32 %v4603, 3
        %vm4605 = vcmp.lt.s32.totalorder %v4604, 2
        %vm4606 = vcmp.eq.s32.totalorder %v4604, 0
        %v4607 = vxor.u32 %v4601, 2147483648
        %v4608 = vsel %vm4606, %v4600, %v4607
        %vm4609 = vcmp.eq.s32.totalorder %v4604, 2
        %v4610 = vxor.u32 %v4600, 2147483648
        %v4611 = vsel %vm4609, %v4610, %v4601
        %v4612 = vsel %vm4605, %v4608, %v4611
        %v4613 = vsel %vm4602, nan, %v4612
        %v4614 = vand.u32 2147483647, %v2196
        %vm4615 = vcmp.le.f32.partialorder %v4614, 0.7853982
        %vm4616 = vcmp.lt.s32.totalorder %v2196, 0
        %v4617 = vand.u32 %v2196, 2139095040
        %v4618 = vshrl.u32 %v4617, 23
        %v4619 = vsub.s32 %v4618, 127
        %v4620 = vand.u32 2147483647, %v2196
        %v4621 = vand.u32 %v4620, 8388607
        %v4622 = vor.u32 %v4621, 8388608
        %v4623 = vsub.s32 0, %v4622
        %v4624 = vadd.s32 %v4619, 1
        %vm4625 = vcmp.gt.s32.totalorder %v4624, 0
        %v4626 = vsel %vm4625, %v4624, 0
        %v4627 = vshrl.u32 %v4626, 5
        %v4628 = vand.u32 %v4626, 31
        %v4629 = vsub.s32 32, %v4628
        %v4630 = vshrl.u32 683565275, %v4629
        %v4631 = vshll.u32 683565275, %v4628
        %v4632 = vshrl.u32 2475754826, %v4629
        %v4633 = vor.u32 %v4631, %v4632
        %v4634 = vshll.u32 2475754826, %v4628
        %v4635 = vshrl.u32 2131351028, %v4629
        %v4636 = vor.u32 %v4634, %v4635
        %v4637 = vshll.u32 2131351028, %v4628
        %v4638 = vshrl.u32 2102212464, %v4629
        %v4639 = vor.u32 %v4637, %v4638
        %v4640 = vshll.u32 2102212464, %v4628
        %v4641 = vshrl.u32 920167782, %v4629
        %v4642 = vor.u32 %v4640, %v4641
        %v4643 = vshll.u32 920167782, %v4628
        %v4644 = vshrl.u32 1326507024, %v4629
        %v4645 = vor.u32 %v4643, %v4644
        %vm4646 = vcmp.lt.s32.totalorder %v4627, 1
        %vm4647 = vcmp.lt.s32.totalorder %v4627, 2
        %vm4648 = vcmp.lt.s32.totalorder %v4627, 3
        %vm4649 = vcmp.lt.s32.totalorder %v4627, 4
        %v4650 = vsel %vm4646, %v4630, %v4633
        %v4651 = vsel %vm4649, %v4639, 2102212464
        %v4652 = vsel %vm4648, %v4636, %v4651
        %v4653 = vsel %vm4647, %v4650, %v4652
        %v4654 = vsel %vm4646, %v4633, %v4636
        %v4655 = vsel %vm4649, %v4642, 920167782
        %v4656 = vsel %vm4648, %v4639, %v4655
        %v4657 = vsel %vm4647, %v4654, %v4656
        %v4658 = vsel %vm4646, %v4636, %v4639
        %v4659 = vsel %vm4649, %v4645, 1326507024
        %v4660 = vsel %vm4648, %v4642, %v4659
        %v4661 = vsel %vm4647, %v4658, %v4660
        %v4662 = vshll.u32 %v4622, 8
        %v4663 = vmul.u32.u64.compose %v4662, %v4661
        %v4664 = vextract.low.u32 %v4663
        %v4665 = vextract.high.u32 %v4663
        %v4666 = vmul.u32.u64.compose %v4662, %v4657
        %v4667 = vextract.low.u32 %v4666
        %v4668 = vextract.high.u32 %v4666
        %v4669 = vmul.u32 %v4662, %v4653
        %v4670 = vadd.s32 %v4665, %v4667
        %vm4671 = vc.u32 %v4665, %v4667
        %v4672 = vadd.s32 %v4668, 1
        %v4673 = vsel %vm4671, %v4672, %v4668
        %v4674 = vadd.s32 %v4669, %v4673
        %v4675 = vadd.s32 %v4674, 536870912
        %v4676 = vshrl.u32 %v4675, 30
        %v4677 = vshll.u32 %v4676, 30
        %v4678 = vsub.s32 %v4674, %v4677
        %vm4679 = vcmp.lt.s32.totalorder %v4678, 0
        %v4680 = vsub.s32 0, %v4678
        %v4681 = vsel %vm4679, %v4680, %v4678
        %v4682 = vclz %v4681
        %v4683 = vsub.s32 %v4682, 2
        %vm4684 = vcmp.gt.s32.totalorder 0, %v4683
        %v4685 = vsel %vm4684, 0, %v4683
        %v4686 = vsub.s32 32, %v4685
        %v4687 = vshll.u32 %v4678, %v4685
        %v4688 = vshrl.u32 %v4670, %v4686
        %v4689 = vor.u32 %v4687, %v4688
        %v4690 = vsub.s32 4294967266, %v4685
        %v4691 = vadd.s32 %v4690, 127
        %v4692 = vshll.u32 %v4691, 23
        %v4693 = vor.u32 4788187, %v4692
        %v4694 = vand.u32 2147483647, %v4693
        %v4696 = vcvt.s32.f32 %v4689
        %v4697 = vmul.f32 %v4696, %v4694
        %v4698 = vxor.u32 %v4697, 2147483648
        %v4699 = vsel %vm4616, %v4698, %v4697
        %v4700 = vsub.s32 4, %v4676
        %v4701 = vsel %vm4616, %v4700, %v4676
        %v4702 = vsel %vm4615, %v2196, %v4699
        %v4703 = vsel %vm4615, 0, %v4701
        %v4704 = vcosq.f32.pop %v4702
        %v4705 = vsinq.f32.pop %v4702
        %vm4706 = vweird.f32 %v2196
        %v4707 = vadd.s32 %v4703, 3
        %v4708 = vand.u32 %v4707, 3
        %vm4709 = vcmp.lt.s32.totalorder %v4708, 2
        %vm4710 = vcmp.eq.s32.totalorder %v4708, 0
        %v4711 = vxor.u32 %v4705, 2147483648
        %v4712 = vsel %vm4710, %v4704, %v4711
        %vm4713 = vcmp.eq.s32.totalorder %v4708, 2
        %v4714 = vxor.u32 %v4704, 2147483648
        %v4715 = vsel %vm4713, %v4714, %v4705
        %v4716 = vsel %vm4709, %v4712, %v4715
        %v4717 = vsel %vm4706, nan, %v4716
        %v4718 = vand.u32 2147483647, %v2197
        %vm4719 = vcmp.le.f32.partialorder %v4718, 0.7853982
        %vm4720 = vcmp.lt.s32.totalorder %v2197, 0
        %v4721 = vand.u32 %v2197, 2139095040
        %v4722 = vshrl.u32 %v4721, 23
        %v4723 = vsub.s32 %v4722, 127
        %v4724 = vand.u32 2147483647, %v2197
        %v4725 = vand.u32 %v4724, 8388607
        %v4726 = vor.u32 %v4725, 8388608
        %v4727 = vsub.s32 0, %v4726
        %v4728 = vadd.s32 %v4723, 1
        %vm4729 = vcmp.gt.s32.totalorder %v4728, 0
        %v4730 = vsel %vm4729, %v4728, 0
        %v4731 = vshrl.u32 %v4730, 5
        %v4732 = vand.u32 %v4730, 31
        %v4733 = vsub.s32 32, %v4732
        %v4734 = vshrl.u32 683565275, %v4733
        %v4735 = vshll.u32 683565275, %v4732
        %v4736 = vshrl.u32 2475754826, %v4733
        %v4737 = vor.u32 %v4735, %v4736
        %v4738 = vshll.u32 2475754826, %v4732
        %v4739 = vshrl.u32 2131351028, %v4733
        %v4740 = vor.u32 %v4738, %v4739
        %v4741 = vshll.u32 2131351028, %v4732
        %v4742 = vshrl.u32 2102212464, %v4733
        %v4743 = vor.u32 %v4741, %v4742
        %v4744 = vshll.u32 2102212464, %v4732
        %v4745 = vshrl.u32 920167782, %v4733
        %v4746 = vor.u32 %v4744, %v4745
        %v4747 = vshll.u32 920167782, %v4732
        %v4748 = vshrl.u32 1326507024, %v4733
        %v4749 = vor.u32 %v4747, %v4748
        %vm4750 = vcmp.lt.s32.totalorder %v4731, 1
        %vm4751 = vcmp.lt.s32.totalorder %v4731, 2
        %vm4752 = vcmp.lt.s32.totalorder %v4731, 3
        %vm4753 = vcmp.lt.s32.totalorder %v4731, 4
        %v4754 = vsel %vm4750, %v4734, %v4737
        %v4755 = vsel %vm4753, %v4743, 2102212464
        %v4756 = vsel %vm4752, %v4740, %v4755
        %v4757 = vsel %vm4751, %v4754, %v4756
        %v4758 = vsel %vm4750, %v4737, %v4740
        %v4759 = vsel %vm4753, %v4746, 920167782
        %v4760 = vsel %vm4752, %v4743, %v4759
        %v4761 = vsel %vm4751, %v4758, %v4760
        %v4762 = vsel %vm4750, %v4740, %v4743
        %v4763 = vsel %vm4753, %v4749, 1326507024
        %v4764 = vsel %vm4752, %v4746, %v4763
        %v4765 = vsel %vm4751, %v4762, %v4764
        %v4766 = vshll.u32 %v4726, 8
        %v4767 = vmul.u32.u64.compose %v4766, %v4765
        %v4768 = vextract.low.u32 %v4767
        %v4769 = vextract.high.u32 %v4767
        %v4770 = vmul.u32.u64.compose %v4766, %v4761
        %v4771 = vextract.low.u32 %v4770
        %v4772 = vextract.high.u32 %v4770
        %v4773 = vmul.u32 %v4766, %v4757
        %v4774 = vadd.s32 %v4769, %v4771
        %vm4775 = vc.u32 %v4769, %v4771
        %v4776 = vadd.s32 %v4772, 1
        %v4777 = vsel %vm4775, %v4776, %v4772
        %v4778 = vadd.s32 %v4773, %v4777
        %v4779 = vadd.s32 %v4778, 536870912
        %v4780 = vshrl.u32 %v4779, 30
        %v4781 = vshll.u32 %v4780, 30
        %v4782 = vsub.s32 %v4778, %v4781
        %vm4783 = vcmp.lt.s32.totalorder %v4782, 0
        %v4784 = vsub.s32 0, %v4782
        %v4785 = vsel %vm4783, %v4784, %v4782
        %v4786 = vclz %v4785
        %v4787 = vsub.s32 %v4786, 2
        %vm4788 = vcmp.gt.s32.totalorder 0, %v4787
        %v4789 = vsel %vm4788, 0, %v4787
        %v4790 = vsub.s32 32, %v4789
        %v4791 = vshll.u32 %v4782, %v4789
        %v4792 = vshrl.u32 %v4774, %v4790
        %v4793 = vor.u32 %v4791, %v4792
        %v4794 = vsub.s32 4294967266, %v4789
        %v4795 = vadd.s32 %v4794, 127
        %v4796 = vshll.u32 %v4795, 23
        %v4797 = vor.u32 4788187, %v4796
        %v4798 = vand.u32 2147483647, %v4797
        %v4800 = vcvt.s32.f32 %v4793
        %v4801 = vmul.f32 %v4800, %v4798
        %v4802 = vxor.u32 %v4801, 2147483648
        %v4803 = vsel %vm4720, %v4802, %v4801
        %v4804 = vsub.s32 4, %v4780
        %v4805 = vsel %vm4720, %v4804, %v4780
        %v4806 = vsel %vm4719, %v2197, %v4803
        %v4807 = vsel %vm4719, 0, %v4805
        %v4808 = vcosq.f32.pop %v4806
        %v4809 = vsinq.f32.pop %v4806
        %vm4810 = vweird.f32 %v2197
        %v4811 = vadd.s32 %v4807, 3
        %v4812 = vand.u32 %v4811, 3
        %vm4813 = vcmp.lt.s32.totalorder %v4812, 2
        %vm4814 = vcmp.eq.s32.totalorder %v4812, 0
        %v4815 = vxor.u32 %v4809, 2147483648
        %v4816 = vsel %vm4814, %v4808, %v4815
        %vm4817 = vcmp.eq.s32.totalorder %v4812, 2
        %v4818 = vxor.u32 %v4808, 2147483648
        %v4819 = vsel %vm4817, %v4818, %v4809
        %v4820 = vsel %vm4813, %v4816, %v4819
        %v4821 = vsel %vm4810, nan, %v4820
        %v4822 = vand.u32 2147483647, %v2198
        %vm4823 = vcmp.le.f32.partialorder %v4822, 0.7853982
        %vm4824 = vcmp.lt.s32.totalorder %v2198, 0
        %v4825 = vand.u32 %v2198, 2139095040
        %v4826 = vshrl.u32 %v4825, 23
        %v4827 = vsub.s32 %v4826, 127
        %v4828 = vand.u32 2147483647, %v2198
        %v4829 = vand.u32 %v4828, 8388607
        %v4830 = vor.u32 %v4829, 8388608
        %v4831 = vsub.s32 0, %v4830
        %v4832 = vadd.s32 %v4827, 1
        %vm4833 = vcmp.gt.s32.totalorder %v4832, 0
        %v4834 = vsel %vm4833, %v4832, 0
        %v4835 = vshrl.u32 %v4834, 5
        %v4836 = vand.u32 %v4834, 31
        %v4837 = vsub.s32 32, %v4836
        %v4838 = vshrl.u32 683565275, %v4837
        %v4839 = vshll.u32 683565275, %v4836
        %v4840 = vshrl.u32 2475754826, %v4837
        %v4841 = vor.u32 %v4839, %v4840
        %v4842 = vshll.u32 2475754826, %v4836
        %v4843 = vshrl.u32 2131351028, %v4837
        %v4844 = vor.u32 %v4842, %v4843
        %v4845 = vshll.u32 2131351028, %v4836
        %v4846 = vshrl.u32 2102212464, %v4837
        %v4847 = vor.u32 %v4845, %v4846
        %v4848 = vshll.u32 2102212464, %v4836
        %v4849 = vshrl.u32 920167782, %v4837
        %v4850 = vor.u32 %v4848, %v4849
        %v4851 = vshll.u32 920167782, %v4836
        %v4852 = vshrl.u32 1326507024, %v4837
        %v4853 = vor.u32 %v4851, %v4852
        %vm4854 = vcmp.lt.s32.totalorder %v4835, 1
        %vm4855 = vcmp.lt.s32.totalorder %v4835, 2
        %vm4856 = vcmp.lt.s32.totalorder %v4835, 3
        %vm4857 = vcmp.lt.s32.totalorder %v4835, 4
        %v4858 = vsel %vm4854, %v4838, %v4841
        %v4859 = vsel %vm4857, %v4847, 2102212464
        %v4860 = vsel %vm4856, %v4844, %v4859
        %v4861 = vsel %vm4855, %v4858, %v4860
        %v4862 = vsel %vm4854, %v4841, %v4844
        %v4863 = vsel %vm4857, %v4850, 920167782
        %v4864 = vsel %vm4856, %v4847, %v4863
        %v4865 = vsel %vm4855, %v4862, %v4864
        %v4866 = vsel %vm4854, %v4844, %v4847
        %v4867 = vsel %vm4857, %v4853, 1326507024
        %v4868 = vsel %vm4856, %v4850, %v4867
        %v4869 = vsel %vm4855, %v4866, %v4868
        %v4870 = vshll.u32 %v4830, 8
        %v4871 = vmul.u32.u64.compose %v4870, %v4869
        %v4872 = vextract.low.u32 %v4871
        %v4873 = vextract.high.u32 %v4871
        %v4874 = vmul.u32.u64.compose %v4870, %v4865
        %v4875 = vextract.low.u32 %v4874
        %v4876 = vextract.high.u32 %v4874
        %v4877 = vmul.u32 %v4870, %v4861
        %v4878 = vadd.s32 %v4873, %v4875
        %vm4879 = vc.u32 %v4873, %v4875
        %v4880 = vadd.s32 %v4876, 1
        %v4881 = vsel %vm4879, %v4880, %v4876
        %v4882 = vadd.s32 %v4877, %v4881
        %v4883 = vadd.s32 %v4882, 536870912
        %v4884 = vshrl.u32 %v4883, 30
        %v4885 = vshll.u32 %v4884, 30
        %v4886 = vsub.s32 %v4882, %v4885
        %vm4887 = vcmp.lt.s32.totalorder %v4886, 0
        %v4888 = vsub.s32 0, %v4886
        %v4889 = vsel %vm4887, %v4888, %v4886
        %v4890 = vclz %v4889
        %v4891 = vsub.s32 %v4890, 2
        %vm4892 = vcmp.gt.s32.totalorder 0, %v4891
        %v4893 = vsel %vm4892, 0, %v4891
        %v4894 = vsub.s32 32, %v4893
        %v4895 = vshll.u32 %v4886, %v4893
        %v4896 = vshrl.u32 %v4878, %v4894
        %v4897 = vor.u32 %v4895, %v4896
        %v4898 = vsub.s32 4294967266, %v4893
        %v4899 = vadd.s32 %v4898, 127
        %v4900 = vshll.u32 %v4899, 23
        %v4901 = vor.u32 4788187, %v4900
        %v4902 = vand.u32 2147483647, %v4901
        %v4904 = vcvt.s32.f32 %v4897
        %v4905 = vmul.f32 %v4904, %v4902
        %v4906 = vxor.u32 %v4905, 2147483648
        %v4907 = vsel %vm4824, %v4906, %v4905
        %v4908 = vsub.s32 4, %v4884
        %v4909 = vsel %vm4824, %v4908, %v4884
        %v4910 = vsel %vm4823, %v2198, %v4907
        %v4911 = vsel %vm4823, 0, %v4909
        %v4912 = vcosq.f32.pop %v4910
        %v4913 = vsinq.f32.pop %v4910
        %vm4914 = vweird.f32 %v2198
        %v4915 = vadd.s32 %v4911, 3
        %v4916 = vand.u32 %v4915, 3
        %vm4917 = vcmp.lt.s32.totalorder %v4916, 2
        %vm4918 = vcmp.eq.s32.totalorder %v4916, 0
        %v4919 = vxor.u32 %v4913, 2147483648
        %v4920 = vsel %vm4918, %v4912, %v4919
        %vm4921 = vcmp.eq.s32.totalorder %v4916, 2
        %v4922 = vxor.u32 %v4912, 2147483648
        %v4923 = vsel %vm4921, %v4922, %v4913
        %v4924 = vsel %vm4917, %v4920, %v4923
        %v4925 = vsel %vm4914, nan, %v4924
        %v4926 = vand.u32 2147483647, %v2199
        %vm4927 = vcmp.le.f32.partialorder %v4926, 0.7853982
        %vm4928 = vcmp.lt.s32.totalorder %v2199, 0
        %v4929 = vand.u32 %v2199, 2139095040
        %v4930 = vshrl.u32 %v4929, 23
        %v4931 = vsub.s32 %v4930, 127
        %v4932 = vand.u32 2147483647, %v2199
        %v4933 = vand.u32 %v4932, 8388607
        %v4934 = vor.u32 %v4933, 8388608
        %v4935 = vsub.s32 0, %v4934
        %v4936 = vadd.s32 %v4931, 1
        %vm4937 = vcmp.gt.s32.totalorder %v4936, 0
        %v4938 = vsel %vm4937, %v4936, 0
        %v4939 = vshrl.u32 %v4938, 5
        %v4940 = vand.u32 %v4938, 31
        %v4941 = vsub.s32 32, %v4940
        %v4942 = vshrl.u32 683565275, %v4941
        %v4943 = vshll.u32 683565275, %v4940
        %v4944 = vshrl.u32 2475754826, %v4941
        %v4945 = vor.u32 %v4943, %v4944
        %v4946 = vshll.u32 2475754826, %v4940
        %v4947 = vshrl.u32 2131351028, %v4941
        %v4948 = vor.u32 %v4946, %v4947
        %v4949 = vshll.u32 2131351028, %v4940
        %v4950 = vshrl.u32 2102212464, %v4941
        %v4951 = vor.u32 %v4949, %v4950
        %v4952 = vshll.u32 2102212464, %v4940
        %v4953 = vshrl.u32 920167782, %v4941
        %v4954 = vor.u32 %v4952, %v4953
        %v4955 = vshll.u32 920167782, %v4940
        %v4956 = vshrl.u32 1326507024, %v4941
        %v4957 = vor.u32 %v4955, %v4956
        %vm4958 = vcmp.lt.s32.totalorder %v4939, 1
        %vm4959 = vcmp.lt.s32.totalorder %v4939, 2
        %vm4960 = vcmp.lt.s32.totalorder %v4939, 3
        %vm4961 = vcmp.lt.s32.totalorder %v4939, 4
        %v4962 = vsel %vm4958, %v4942, %v4945
        %v4963 = vsel %vm4961, %v4951, 2102212464
        %v4964 = vsel %vm4960, %v4948, %v4963
        %v4965 = vsel %vm4959, %v4962, %v4964
        %v4966 = vsel %vm4958, %v4945, %v4948
        %v4967 = vsel %vm4961, %v4954, 920167782
        %v4968 = vsel %vm4960, %v4951, %v4967
        %v4969 = vsel %vm4959, %v4966, %v4968
        %v4970 = vsel %vm4958, %v4948, %v4951
        %v4971 = vsel %vm4961, %v4957, 1326507024
        %v4972 = vsel %vm4960, %v4954, %v4971
        %v4973 = vsel %vm4959, %v4970, %v4972
        %v4974 = vshll.u32 %v4934, 8
        %v4975 = vmul.u32.u64.compose %v4974, %v4973
        %v4976 = vextract.low.u32 %v4975
        %v4977 = vextract.high.u32 %v4975
        %v4978 = vmul.u32.u64.compose %v4974, %v4969
        %v4979 = vextract.low.u32 %v4978
        %v4980 = vextract.high.u32 %v4978
        %v4981 = vmul.u32 %v4974, %v4965
        %v4982 = vadd.s32 %v4977, %v4979
        %vm4983 = vc.u32 %v4977, %v4979
        %v4984 = vadd.s32 %v4980, 1
        %v4985 = vsel %vm4983, %v4984, %v4980
        %v4986 = vadd.s32 %v4981, %v4985
        %v4987 = vadd.s32 %v4986, 536870912
        %v4988 = vshrl.u32 %v4987, 30
        %v4989 = vshll.u32 %v4988, 30
        %v4990 = vsub.s32 %v4986, %v4989
        %vm4991 = vcmp.lt.s32.totalorder %v4990, 0
        %v4992 = vsub.s32 0, %v4990
        %v4993 = vsel %vm4991, %v4992, %v4990
        %v4994 = vclz %v4993
        %v4995 = vsub.s32 %v4994, 2
        %vm4996 = vcmp.gt.s32.totalorder 0, %v4995
        %v4997 = vsel %vm4996, 0, %v4995
        %v4998 = vsub.s32 32, %v4997
        %v4999 = vshll.u32 %v4990, %v4997
        %v5000 = vshrl.u32 %v4982, %v4998
        %v5001 = vor.u32 %v4999, %v5000
        %v5002 = vsub.s32 4294967266, %v4997
        %v5003 = vadd.s32 %v5002, 127
        %v5004 = vshll.u32 %v5003, 23
        %v5005 = vor.u32 4788187, %v5004
        %v5006 = vand.u32 2147483647, %v5005
        %v5008 = vcvt.s32.f32 %v5001
        %v5009 = vmul.f32 %v5008, %v5006
        %v5010 = vxor.u32 %v5009, 2147483648
        %v5011 = vsel %vm4928, %v5010, %v5009
        %v5012 = vsub.s32 4, %v4988
        %v5013 = vsel %vm4928, %v5012, %v4988
        %v5014 = vsel %vm4927, %v2199, %v5011
        %v5015 = vsel %vm4927, 0, %v5013
        %v5016 = vcosq.f32.pop %v5014
        %v5017 = vsinq.f32.pop %v5014
        %vm5018 = vweird.f32 %v2199
        %v5019 = vadd.s32 %v5015, 3
        %v5020 = vand.u32 %v5019, 3
        %vm5021 = vcmp.lt.s32.totalorder %v5020, 2
        %vm5022 = vcmp.eq.s32.totalorder %v5020, 0
        %v5023 = vxor.u32 %v5017, 2147483648
        %v5024 = vsel %vm5022, %v5016, %v5023
        %vm5025 = vcmp.eq.s32.totalorder %v5020, 2
        %v5026 = vxor.u32 %v5016, 2147483648
        %v5027 = vsel %vm5025, %v5026, %v5017
        %v5028 = vsel %vm5021, %v5024, %v5027
        %v5029 = vsel %vm5018, nan, %v5028
        %v5030 = vand.u32 2147483647, %v2200
        %vm5031 = vcmp.le.f32.partialorder %v5030, 0.7853982
        %vm5032 = vcmp.lt.s32.totalorder %v2200, 0
        %v5033 = vand.u32 %v2200, 2139095040
        %v5034 = vshrl.u32 %v5033, 23
        %v5035 = vsub.s32 %v5034, 127
        %v5036 = vand.u32 2147483647, %v2200
        %v5037 = vand.u32 %v5036, 8388607
        %v5038 = vor.u32 %v5037, 8388608
        %v5039 = vsub.s32 0, %v5038
        %v5040 = vadd.s32 %v5035, 1
        %vm5041 = vcmp.gt.s32.totalorder %v5040, 0
        %v5042 = vsel %vm5041, %v5040, 0
        %v5043 = vshrl.u32 %v5042, 5
        %v5044 = vand.u32 %v5042, 31
        %v5045 = vsub.s32 32, %v5044
        %v5046 = vshrl.u32 683565275, %v5045
        %v5047 = vshll.u32 683565275, %v5044
        %v5048 = vshrl.u32 2475754826, %v5045
        %v5049 = vor.u32 %v5047, %v5048
        %v5050 = vshll.u32 2475754826, %v5044
        %v5051 = vshrl.u32 2131351028, %v5045
        %v5052 = vor.u32 %v5050, %v5051
        %v5053 = vshll.u32 2131351028, %v5044
        %v5054 = vshrl.u32 2102212464, %v5045
        %v5055 = vor.u32 %v5053, %v5054
        %v5056 = vshll.u32 2102212464, %v5044
        %v5057 = vshrl.u32 920167782, %v5045
        %v5058 = vor.u32 %v5056, %v5057
        %v5059 = vshll.u32 920167782, %v5044
        %v5060 = vshrl.u32 1326507024, %v5045
        %v5061 = vor.u32 %v5059, %v5060
        %vm5062 = vcmp.lt.s32.totalorder %v5043, 1
        %vm5063 = vcmp.lt.s32.totalorder %v5043, 2
        %vm5064 = vcmp.lt.s32.totalorder %v5043, 3
        %vm5065 = vcmp.lt.s32.totalorder %v5043, 4
        %v5066 = vsel %vm5062, %v5046, %v5049
        %v5067 = vsel %vm5065, %v5055, 2102212464
        %v5068 = vsel %vm5064, %v5052, %v5067
        %v5069 = vsel %vm5063, %v5066, %v5068
        %v5070 = vsel %vm5062, %v5049, %v5052
        %v5071 = vsel %vm5065, %v5058, 920167782
        %v5072 = vsel %vm5064, %v5055, %v5071
        %v5073 = vsel %vm5063, %v5070, %v5072
        %v5074 = vsel %vm5062, %v5052, %v5055
        %v5075 = vsel %vm5065, %v5061, 1326507024
        %v5076 = vsel %vm5064, %v5058, %v5075
        %v5077 = vsel %vm5063, %v5074, %v5076
        %v5078 = vshll.u32 %v5038, 8
        %v5079 = vmul.u32.u64.compose %v5078, %v5077
        %v5080 = vextract.low.u32 %v5079
        %v5081 = vextract.high.u32 %v5079
        %v5082 = vmul.u32.u64.compose %v5078, %v5073
        %v5083 = vextract.low.u32 %v5082
        %v5084 = vextract.high.u32 %v5082
        %v5085 = vmul.u32 %v5078, %v5069
        %v5086 = vadd.s32 %v5081, %v5083
        %vm5087 = vc.u32 %v5081, %v5083
        %v5088 = vadd.s32 %v5084, 1
        %v5089 = vsel %vm5087, %v5088, %v5084
        %v5090 = vadd.s32 %v5085, %v5089
        %v5091 = vadd.s32 %v5090, 536870912
        %v5092 = vshrl.u32 %v5091, 30
        %v5093 = vshll.u32 %v5092, 30
        %v5094 = vsub.s32 %v5090, %v5093
        %vm5095 = vcmp.lt.s32.totalorder %v5094, 0
        %v5096 = vsub.s32 0, %v5094
        %v5097 = vsel %vm5095, %v5096, %v5094
        %v5098 = vclz %v5097
        %v5099 = vsub.s32 %v5098, 2
        %vm5100 = vcmp.gt.s32.totalorder 0, %v5099
        %v5101 = vsel %vm5100, 0, %v5099
        %v5102 = vsub.s32 32, %v5101
        %v5103 = vshll.u32 %v5094, %v5101
        %v5104 = vshrl.u32 %v5086, %v5102
        %v5105 = vor.u32 %v5103, %v5104
        %v5106 = vsub.s32 4294967266, %v5101
        %v5107 = vadd.s32 %v5106, 127
        %v5108 = vshll.u32 %v5107, 23
        %v5109 = vor.u32 4788187, %v5108
        %v5110 = vand.u32 2147483647, %v5109
        %v5112 = vcvt.s32.f32 %v5105
        %v5113 = vmul.f32 %v5112, %v5110
        %v5114 = vxor.u32 %v5113, 2147483648
        %v5115 = vsel %vm5032, %v5114, %v5113
        %v5116 = vsub.s32 4, %v5092
        %v5117 = vsel %vm5032, %v5116, %v5092
        %v5118 = vsel %vm5031, %v2200, %v5115
        %v5119 = vsel %vm5031, 0, %v5117
        %v5120 = vcosq.f32.pop %v5118
        %v5121 = vsinq.f32.pop %v5118
        %vm5122 = vweird.f32 %v2200
        %v5123 = vadd.s32 %v5119, 3
        %v5124 = vand.u32 %v5123, 3
        %vm5125 = vcmp.lt.s32.totalorder %v5124, 2
        %vm5126 = vcmp.eq.s32.totalorder %v5124, 0
        %v5127 = vxor.u32 %v5121, 2147483648
        %v5128 = vsel %vm5126, %v5120, %v5127
        %vm5129 = vcmp.eq.s32.totalorder %v5124, 2
        %v5130 = vxor.u32 %v5120, 2147483648
        %v5131 = vsel %vm5129, %v5130, %v5121
        %v5132 = vsel %vm5125, %v5128, %v5131
        %v5133 = vsel %vm5122, nan, %v5132
        %v5134 = vand.u32 2147483647, %v2201
        %vm5135 = vcmp.le.f32.partialorder %v5134, 0.7853982
        %vm5136 = vcmp.lt.s32.totalorder %v2201, 0
        %v5137 = vand.u32 %v2201, 2139095040
        %v5138 = vshrl.u32 %v5137, 23
        %v5139 = vsub.s32 %v5138, 127
        %v5140 = vand.u32 2147483647, %v2201
        %v5141 = vand.u32 %v5140, 8388607
        %v5142 = vor.u32 %v5141, 8388608
        %v5143 = vsub.s32 0, %v5142
        %v5144 = vadd.s32 %v5139, 1
        %vm5145 = vcmp.gt.s32.totalorder %v5144, 0
        %v5146 = vsel %vm5145, %v5144, 0
        %v5147 = vshrl.u32 %v5146, 5
        %v5148 = vand.u32 %v5146, 31
        %v5149 = vsub.s32 32, %v5148
        %v5150 = vshrl.u32 683565275, %v5149
        %v5151 = vshll.u32 683565275, %v5148
        %v5152 = vshrl.u32 2475754826, %v5149
        %v5153 = vor.u32 %v5151, %v5152
        %v5154 = vshll.u32 2475754826, %v5148
        %v5155 = vshrl.u32 2131351028, %v5149
        %v5156 = vor.u32 %v5154, %v5155
        %v5157 = vshll.u32 2131351028, %v5148
        %v5158 = vshrl.u32 2102212464, %v5149
        %v5159 = vor.u32 %v5157, %v5158
        %v5160 = vshll.u32 2102212464, %v5148
        %v5161 = vshrl.u32 920167782, %v5149
        %v5162 = vor.u32 %v5160, %v5161
        %v5163 = vshll.u32 920167782, %v5148
        %v5164 = vshrl.u32 1326507024, %v5149
        %v5165 = vor.u32 %v5163, %v5164
        %vm5166 = vcmp.lt.s32.totalorder %v5147, 1
        %vm5167 = vcmp.lt.s32.totalorder %v5147, 2
        %vm5168 = vcmp.lt.s32.totalorder %v5147, 3
        %vm5169 = vcmp.lt.s32.totalorder %v5147, 4
        %v5170 = vsel %vm5166, %v5150, %v5153
        %v5171 = vsel %vm5169, %v5159, 2102212464
        %v5172 = vsel %vm5168, %v5156, %v5171
        %v5173 = vsel %vm5167, %v5170, %v5172
        %v5174 = vsel %vm5166, %v5153, %v5156
        %v5175 = vsel %vm5169, %v5162, 920167782
        %v5176 = vsel %vm5168, %v5159, %v5175
        %v5177 = vsel %vm5167, %v5174, %v5176
        %v5178 = vsel %vm5166, %v5156, %v5159
        %v5179 = vsel %vm5169, %v5165, 1326507024
        %v5180 = vsel %vm5168, %v5162, %v5179
        %v5181 = vsel %vm5167, %v5178, %v5180
        %v5182 = vshll.u32 %v5142, 8
        %v5183 = vmul.u32.u64.compose %v5182, %v5181
        %v5184 = vextract.low.u32 %v5183
        %v5185 = vextract.high.u32 %v5183
        %v5186 = vmul.u32.u64.compose %v5182, %v5177
        %v5187 = vextract.low.u32 %v5186
        %v5188 = vextract.high.u32 %v5186
        %v5189 = vmul.u32 %v5182, %v5173
        %v5190 = vadd.s32 %v5185, %v5187
        %vm5191 = vc.u32 %v5185, %v5187
        %v5192 = vadd.s32 %v5188, 1
        %v5193 = vsel %vm5191, %v5192, %v5188
        %v5194 = vadd.s32 %v5189, %v5193
        %v5195 = vadd.s32 %v5194, 536870912
        %v5196 = vshrl.u32 %v5195, 30
        %v5197 = vshll.u32 %v5196, 30
        %v5198 = vsub.s32 %v5194, %v5197
        %vm5199 = vcmp.lt.s32.totalorder %v5198, 0
        %v5200 = vsub.s32 0, %v5198
        %v5201 = vsel %vm5199, %v5200, %v5198
        %v5202 = vclz %v5201
        %v5203 = vsub.s32 %v5202, 2
        %vm5204 = vcmp.gt.s32.totalorder 0, %v5203
        %v5205 = vsel %vm5204, 0, %v5203
        %v5206 = vsub.s32 32, %v5205
        %v5207 = vshll.u32 %v5198, %v5205
        %v5208 = vshrl.u32 %v5190, %v5206
        %v5209 = vor.u32 %v5207, %v5208
        %v5210 = vsub.s32 4294967266, %v5205
        %v5211 = vadd.s32 %v5210, 127
        %v5212 = vshll.u32 %v5211, 23
        %v5213 = vor.u32 4788187, %v5212
        %v5214 = vand.u32 2147483647, %v5213
        %v5216 = vcvt.s32.f32 %v5209
        %v5217 = vmul.f32 %v5216, %v5214
        %v5218 = vxor.u32 %v5217, 2147483648
        %v5219 = vsel %vm5136, %v5218, %v5217
        %v5220 = vsub.s32 4, %v5196
        %v5221 = vsel %vm5136, %v5220, %v5196
        %v5222 = vsel %vm5135, %v2201, %v5219
        %v5223 = vsel %vm5135, 0, %v5221
        %v5224 = vcosq.f32.pop %v5222
        %v5225 = vsinq.f32.pop %v5222
        %vm5226 = vweird.f32 %v2201
        %v5227 = vadd.s32 %v5223, 3
        %v5228 = vand.u32 %v5227, 3
        %vm5229 = vcmp.lt.s32.totalorder %v5228, 2
        %vm5230 = vcmp.eq.s32.totalorder %v5228, 0
        %v5231 = vxor.u32 %v5225, 2147483648
        %v5232 = vsel %vm5230, %v5224, %v5231
        %vm5233 = vcmp.eq.s32.totalorder %v5228, 2
        %v5234 = vxor.u32 %v5224, 2147483648
        %v5235 = vsel %vm5233, %v5234, %v5225
        %v5236 = vsel %vm5229, %v5232, %v5235
        %v5237 = vsel %vm5226, nan, %v5236
        %v5238 = vand.u32 2147483647, %v2202
        %vm5239 = vcmp.le.f32.partialorder %v5238, 0.7853982
        %vm5240 = vcmp.lt.s32.totalorder %v2202, 0
        %v5241 = vand.u32 %v2202, 2139095040
        %v5242 = vshrl.u32 %v5241, 23
        %v5243 = vsub.s32 %v5242, 127
        %v5244 = vand.u32 2147483647, %v2202
        %v5245 = vand.u32 %v5244, 8388607
        %v5246 = vor.u32 %v5245, 8388608
        %v5247 = vsub.s32 0, %v5246
        %v5248 = vadd.s32 %v5243, 1
        %vm5249 = vcmp.gt.s32.totalorder %v5248, 0
        %v5250 = vsel %vm5249, %v5248, 0
        %v5251 = vshrl.u32 %v5250, 5
        %v5252 = vand.u32 %v5250, 31
        %v5253 = vsub.s32 32, %v5252
        %v5254 = vshrl.u32 683565275, %v5253
        %v5255 = vshll.u32 683565275, %v5252
        %v5256 = vshrl.u32 2475754826, %v5253
        %v5257 = vor.u32 %v5255, %v5256
        %v5258 = vshll.u32 2475754826, %v5252
        %v5259 = vshrl.u32 2131351028, %v5253
        %v5260 = vor.u32 %v5258, %v5259
        %v5261 = vshll.u32 2131351028, %v5252
        %v5262 = vshrl.u32 2102212464, %v5253
        %v5263 = vor.u32 %v5261, %v5262
        %v5264 = vshll.u32 2102212464, %v5252
        %v5265 = vshrl.u32 920167782, %v5253
        %v5266 = vor.u32 %v5264, %v5265
        %v5267 = vshll.u32 920167782, %v5252
        %v5268 = vshrl.u32 1326507024, %v5253
        %v5269 = vor.u32 %v5267, %v5268
        %vm5270 = vcmp.lt.s32.totalorder %v5251, 1
        %vm5271 = vcmp.lt.s32.totalorder %v5251, 2
        %vm5272 = vcmp.lt.s32.totalorder %v5251, 3
        %vm5273 = vcmp.lt.s32.totalorder %v5251, 4
        %v5274 = vsel %vm5270, %v5254, %v5257
        %v5275 = vsel %vm5273, %v5263, 2102212464
        %v5276 = vsel %vm5272, %v5260, %v5275
        %v5277 = vsel %vm5271, %v5274, %v5276
        %v5278 = vsel %vm5270, %v5257, %v5260
        %v5279 = vsel %vm5273, %v5266, 920167782
        %v5280 = vsel %vm5272, %v5263, %v5279
        %v5281 = vsel %vm5271, %v5278, %v5280
        %v5282 = vsel %vm5270, %v5260, %v5263
        %v5283 = vsel %vm5273, %v5269, 1326507024
        %v5284 = vsel %vm5272, %v5266, %v5283
        %v5285 = vsel %vm5271, %v5282, %v5284
        %v5286 = vshll.u32 %v5246, 8
        %v5287 = vmul.u32.u64.compose %v5286, %v5285
        %v5288 = vextract.low.u32 %v5287
        %v5289 = vextract.high.u32 %v5287
        %v5290 = vmul.u32.u64.compose %v5286, %v5281
        %v5291 = vextract.low.u32 %v5290
        %v5292 = vextract.high.u32 %v5290
        %v5293 = vmul.u32 %v5286, %v5277
        %v5294 = vadd.s32 %v5289, %v5291
        %vm5295 = vc.u32 %v5289, %v5291
        %v5296 = vadd.s32 %v5292, 1
        %v5297 = vsel %vm5295, %v5296, %v5292
        %v5298 = vadd.s32 %v5293, %v5297
        %v5299 = vadd.s32 %v5298, 536870912
        %v5300 = vshrl.u32 %v5299, 30
        %v5301 = vshll.u32 %v5300, 30
        %v5302 = vsub.s32 %v5298, %v5301
        %vm5303 = vcmp.lt.s32.totalorder %v5302, 0
        %v5304 = vsub.s32 0, %v5302
        %v5305 = vsel %vm5303, %v5304, %v5302
        %v5306 = vclz %v5305
        %v5307 = vsub.s32 %v5306, 2
        %vm5308 = vcmp.gt.s32.totalorder 0, %v5307
        %v5309 = vsel %vm5308, 0, %v5307
        %v5310 = vsub.s32 32, %v5309
        %v5311 = vshll.u32 %v5302, %v5309
        %v5312 = vshrl.u32 %v5294, %v5310
        %v5313 = vor.u32 %v5311, %v5312
        %v5314 = vsub.s32 4294967266, %v5309
        %v5315 = vadd.s32 %v5314, 127
        %v5316 = vshll.u32 %v5315, 23
        %v5317 = vor.u32 4788187, %v5316
        %v5318 = vand.u32 2147483647, %v5317
        %v5320 = vcvt.s32.f32 %v5313
        %v5321 = vmul.f32 %v5320, %v5318
        %v5322 = vxor.u32 %v5321, 2147483648
        %v5323 = vsel %vm5240, %v5322, %v5321
        %v5324 = vsub.s32 4, %v5300
        %v5325 = vsel %vm5240, %v5324, %v5300
        %v5326 = vsel %vm5239, %v2202, %v5323
        %v5327 = vsel %vm5239, 0, %v5325
        %v5328 = vcosq.f32.pop %v5326
        %v5329 = vsinq.f32.pop %v5326
        %vm5330 = vweird.f32 %v2202
        %v5331 = vadd.s32 %v5327, 3
        %v5332 = vand.u32 %v5331, 3
        %vm5333 = vcmp.lt.s32.totalorder %v5332, 2
        %vm5334 = vcmp.eq.s32.totalorder %v5332, 0
        %v5335 = vxor.u32 %v5329, 2147483648
        %v5336 = vsel %vm5334, %v5328, %v5335
        %vm5337 = vcmp.eq.s32.totalorder %v5332, 2
        %v5338 = vxor.u32 %v5328, 2147483648
        %v5339 = vsel %vm5337, %v5338, %v5329
        %v5340 = vsel %vm5333, %v5336, %v5339
        %v5341 = vsel %vm5330, nan, %v5340
        %v5342 = vand.u32 2147483647, %v2203
        %vm5343 = vcmp.le.f32.partialorder %v5342, 0.7853982
        %vm5344 = vcmp.lt.s32.totalorder %v2203, 0
        %v5345 = vand.u32 %v2203, 2139095040
        %v5346 = vshrl.u32 %v5345, 23
        %v5347 = vsub.s32 %v5346, 127
        %v5348 = vand.u32 2147483647, %v2203
        %v5349 = vand.u32 %v5348, 8388607
        %v5350 = vor.u32 %v5349, 8388608
        %v5351 = vsub.s32 0, %v5350
        %v5352 = vadd.s32 %v5347, 1
        %vm5353 = vcmp.gt.s32.totalorder %v5352, 0
        %v5354 = vsel %vm5353, %v5352, 0
        %v5355 = vshrl.u32 %v5354, 5
        %v5356 = vand.u32 %v5354, 31
        %v5357 = vsub.s32 32, %v5356
        %v5358 = vshrl.u32 683565275, %v5357
        %v5359 = vshll.u32 683565275, %v5356
        %v5360 = vshrl.u32 2475754826, %v5357
        %v5361 = vor.u32 %v5359, %v5360
        %v5362 = vshll.u32 2475754826, %v5356
        %v5363 = vshrl.u32 2131351028, %v5357
        %v5364 = vor.u32 %v5362, %v5363
        %v5365 = vshll.u32 2131351028, %v5356
        %v5366 = vshrl.u32 2102212464, %v5357
        %v5367 = vor.u32 %v5365, %v5366
        %v5368 = vshll.u32 2102212464, %v5356
        %v5369 = vshrl.u32 920167782, %v5357
        %v5370 = vor.u32 %v5368, %v5369
        %v5371 = vshll.u32 920167782, %v5356
        %v5372 = vshrl.u32 1326507024, %v5357
        %v5373 = vor.u32 %v5371, %v5372
        %vm5374 = vcmp.lt.s32.totalorder %v5355, 1
        %vm5375 = vcmp.lt.s32.totalorder %v5355, 2
        %vm5376 = vcmp.lt.s32.totalorder %v5355, 3
        %vm5377 = vcmp.lt.s32.totalorder %v5355, 4
        %v5378 = vsel %vm5374, %v5358, %v5361
        %v5379 = vsel %vm5377, %v5367, 2102212464
        %v5380 = vsel %vm5376, %v5364, %v5379
        %v5381 = vsel %vm5375, %v5378, %v5380
        %v5382 = vsel %vm5374, %v5361, %v5364
        %v5383 = vsel %vm5377, %v5370, 920167782
        %v5384 = vsel %vm5376, %v5367, %v5383
        %v5385 = vsel %vm5375, %v5382, %v5384
        %v5386 = vsel %vm5374, %v5364, %v5367
        %v5387 = vsel %vm5377, %v5373, 1326507024
        %v5388 = vsel %vm5376, %v5370, %v5387
        %v5389 = vsel %vm5375, %v5386, %v5388
        %v5390 = vshll.u32 %v5350, 8
        %v5391 = vmul.u32.u64.compose %v5390, %v5389
        %v5392 = vextract.low.u32 %v5391
        %v5393 = vextract.high.u32 %v5391
        %v5394 = vmul.u32.u64.compose %v5390, %v5385
        %v5395 = vextract.low.u32 %v5394
        %v5396 = vextract.high.u32 %v5394
        %v5397 = vmul.u32 %v5390, %v5381
        %v5398 = vadd.s32 %v5393, %v5395
        %vm5399 = vc.u32 %v5393, %v5395
        %v5400 = vadd.s32 %v5396, 1
        %v5401 = vsel %vm5399, %v5400, %v5396
        %v5402 = vadd.s32 %v5397, %v5401
        %v5403 = vadd.s32 %v5402, 536870912
        %v5404 = vshrl.u32 %v5403, 30
        %v5405 = vshll.u32 %v5404, 30
        %v5406 = vsub.s32 %v5402, %v5405
        %vm5407 = vcmp.lt.s32.totalorder %v5406, 0
        %v5408 = vsub.s32 0, %v5406
        %v5409 = vsel %vm5407, %v5408, %v5406
        %v5410 = vclz %v5409
        %v5411 = vsub.s32 %v5410, 2
        %vm5412 = vcmp.gt.s32.totalorder 0, %v5411
        %v5413 = vsel %vm5412, 0, %v5411
        %v5414 = vsub.s32 32, %v5413
        %v5415 = vshll.u32 %v5406, %v5413
        %v5416 = vshrl.u32 %v5398, %v5414
        %v5417 = vor.u32 %v5415, %v5416
        %v5418 = vsub.s32 4294967266, %v5413
        %v5419 = vadd.s32 %v5418, 127
        %v5420 = vshll.u32 %v5419, 23
        %v5421 = vor.u32 4788187, %v5420
        %v5422 = vand.u32 2147483647, %v5421
        %v5424 = vcvt.s32.f32 %v5417
        %v5425 = vmul.f32 %v5424, %v5422
        %v5426 = vxor.u32 %v5425, 2147483648
        %v5427 = vsel %vm5344, %v5426, %v5425
        %v5428 = vsub.s32 4, %v5404
        %v5429 = vsel %vm5344, %v5428, %v5404
        %v5430 = vsel %vm5343, %v2203, %v5427
        %v5431 = vsel %vm5343, 0, %v5429
        %v5432 = vcosq.f32.pop %v5430
        %v5433 = vsinq.f32.pop %v5430
        %vm5434 = vweird.f32 %v2203
        %v5435 = vadd.s32 %v5431, 3
        %v5436 = vand.u32 %v5435, 3
        %vm5437 = vcmp.lt.s32.totalorder %v5436, 2
        %vm5438 = vcmp.eq.s32.totalorder %v5436, 0
        %v5439 = vxor.u32 %v5433, 2147483648
        %v5440 = vsel %vm5438, %v5432, %v5439
        %vm5441 = vcmp.eq.s32.totalorder %v5436, 2
        %v5442 = vxor.u32 %v5432, 2147483648
        %v5443 = vsel %vm5441, %v5442, %v5433
        %v5444 = vsel %vm5437, %v5440, %v5443
        %v5445 = vsel %vm5434, nan, %v5444
        %v5446 = vand.u32 2147483647, %v2204
        %vm5447 = vcmp.le.f32.partialorder %v5446, 0.7853982
        %vm5448 = vcmp.lt.s32.totalorder %v2204, 0
        %v5449 = vand.u32 %v2204, 2139095040
        %v5450 = vshrl.u32 %v5449, 23
        %v5451 = vsub.s32 %v5450, 127
        %v5452 = vand.u32 2147483647, %v2204
        %v5453 = vand.u32 %v5452, 8388607
        %v5454 = vor.u32 %v5453, 8388608
        %v5455 = vsub.s32 0, %v5454
        %v5456 = vadd.s32 %v5451, 1
        %vm5457 = vcmp.gt.s32.totalorder %v5456, 0
        %v5458 = vsel %vm5457, %v5456, 0
        %v5459 = vshrl.u32 %v5458, 5
        %v5460 = vand.u32 %v5458, 31
        %v5461 = vsub.s32 32, %v5460
        %v5462 = vshrl.u32 683565275, %v5461
        %v5463 = vshll.u32 683565275, %v5460
        %v5464 = vshrl.u32 2475754826, %v5461
        %v5465 = vor.u32 %v5463, %v5464
        %v5466 = vshll.u32 2475754826, %v5460
        %v5467 = vshrl.u32 2131351028, %v5461
        %v5468 = vor.u32 %v5466, %v5467
        %v5469 = vshll.u32 2131351028, %v5460
        %v5470 = vshrl.u32 2102212464, %v5461
        %v5471 = vor.u32 %v5469, %v5470
        %v5472 = vshll.u32 2102212464, %v5460
        %v5473 = vshrl.u32 920167782, %v5461
        %v5474 = vor.u32 %v5472, %v5473
        %v5475 = vshll.u32 920167782, %v5460
        %v5476 = vshrl.u32 1326507024, %v5461
        %v5477 = vor.u32 %v5475, %v5476
        %vm5478 = vcmp.lt.s32.totalorder %v5459, 1
        %vm5479 = vcmp.lt.s32.totalorder %v5459, 2
        %vm5480 = vcmp.lt.s32.totalorder %v5459, 3
        %vm5481 = vcmp.lt.s32.totalorder %v5459, 4
        %v5482 = vsel %vm5478, %v5462, %v5465
        %v5483 = vsel %vm5481, %v5471, 2102212464
        %v5484 = vsel %vm5480, %v5468, %v5483
        %v5485 = vsel %vm5479, %v5482, %v5484
        %v5486 = vsel %vm5478, %v5465, %v5468
        %v5487 = vsel %vm5481, %v5474, 920167782
        %v5488 = vsel %vm5480, %v5471, %v5487
        %v5489 = vsel %vm5479, %v5486, %v5488
        %v5490 = vsel %vm5478, %v5468, %v5471
        %v5491 = vsel %vm5481, %v5477, 1326507024
        %v5492 = vsel %vm5480, %v5474, %v5491
        %v5493 = vsel %vm5479, %v5490, %v5492
        %v5494 = vshll.u32 %v5454, 8
        %v5495 = vmul.u32.u64.compose %v5494, %v5493
        %v5496 = vextract.low.u32 %v5495
        %v5497 = vextract.high.u32 %v5495
        %v5498 = vmul.u32.u64.compose %v5494, %v5489
        %v5499 = vextract.low.u32 %v5498
        %v5500 = vextract.high.u32 %v5498
        %v5501 = vmul.u32 %v5494, %v5485
        %v5502 = vadd.s32 %v5497, %v5499
        %vm5503 = vc.u32 %v5497, %v5499
        %v5504 = vadd.s32 %v5500, 1
        %v5505 = vsel %vm5503, %v5504, %v5500
        %v5506 = vadd.s32 %v5501, %v5505
        %v5507 = vadd.s32 %v5506, 536870912
        %v5508 = vshrl.u32 %v5507, 30
        %v5509 = vshll.u32 %v5508, 30
        %v5510 = vsub.s32 %v5506, %v5509
        %vm5511 = vcmp.lt.s32.totalorder %v5510, 0
        %v5512 = vsub.s32 0, %v5510
        %v5513 = vsel %vm5511, %v5512, %v5510
        %v5514 = vclz %v5513
        %v5515 = vsub.s32 %v5514, 2
        %vm5516 = vcmp.gt.s32.totalorder 0, %v5515
        %v5517 = vsel %vm5516, 0, %v5515
        %v5518 = vsub.s32 32, %v5517
        %v5519 = vshll.u32 %v5510, %v5517
        %v5520 = vshrl.u32 %v5502, %v5518
        %v5521 = vor.u32 %v5519, %v5520
        %v5522 = vsub.s32 4294967266, %v5517
        %v5523 = vadd.s32 %v5522, 127
        %v5524 = vshll.u32 %v5523, 23
        %v5525 = vor.u32 4788187, %v5524
        %v5526 = vand.u32 2147483647, %v5525
        %v5528 = vcvt.s32.f32 %v5521
        %v5529 = vmul.f32 %v5528, %v5526
        %v5530 = vxor.u32 %v5529, 2147483648
        %v5531 = vsel %vm5448, %v5530, %v5529
        %v5532 = vsub.s32 4, %v5508
        %v5533 = vsel %vm5448, %v5532, %v5508
        %v5534 = vsel %vm5447, %v2204, %v5531
        %v5535 = vsel %vm5447, 0, %v5533
        %v5536 = vcosq.f32.pop %v5534
        %v5537 = vsinq.f32.pop %v5534
        %vm5538 = vweird.f32 %v2204
        %v5539 = vadd.s32 %v5535, 3
        %v5540 = vand.u32 %v5539, 3
        %vm5541 = vcmp.lt.s32.totalorder %v5540, 2
        %vm5542 = vcmp.eq.s32.totalorder %v5540, 0
        %v5543 = vxor.u32 %v5537, 2147483648
        %v5544 = vsel %vm5542, %v5536, %v5543
        %vm5545 = vcmp.eq.s32.totalorder %v5540, 2
        %v5546 = vxor.u32 %v5536, 2147483648
        %v5547 = vsel %vm5545, %v5546, %v5537
        %v5548 = vsel %vm5541, %v5544, %v5547
        %v5549 = vsel %vm5538, nan, %v5548
        %v5550 = vmul.f32 %v3853, %v3989
        %v5551 = vmul.f32 %v3853, %v4093
        %v5552 = vmul.f32 %v3853, %v4197
        %v5553 = vmul.f32 %v3853, %v4301
        %v5554 = vmul.f32 %v3853, %v4405
        %v5555 = vmul.f32 %v3853, %v4509
        %v5556 = vmul.f32 %v3853, %v4613
        %v5557 = vmul.f32 %v3853, %v4717
        %v5558 = vmul.f32 %v3853, %v4821
        %v5559 = vmul.f32 %v3853, %v4925
        %v5560 = vmul.f32 %v3853, %v5029
        %v5561 = vmul.f32 %v3853, %v5133
        %v5562 = vmul.f32 %v3853, %v5237
        %v5563 = vmul.f32 %v3853, %v5341
        %v5564 = vmul.f32 %v3853, %v5445
        %v5565 = vmul.f32 %v3853, %v5549
        %5566 = vst [vmem:[%s436 + $0x8] sm:$0xff] %v5550
        %5567 = vst [vmem:[%s436 + $0x28] sm:$0xff] %v5551
        %5568 = vst [vmem:[%s436 + $0x48] sm:$0xff] %v5552
        %5569 = vst [vmem:[%s436 + $0x68] sm:$0xff] %v5553
        %5570 = vst [vmem:[%s436 + $0x88] sm:$0xff] %v5554
        %5571 = vst [vmem:[%s436 + $0xa8] sm:$0xff] %v5555
        %5572 = vst [vmem:[%s436 + $0xc8] sm:$0xff] %v5556
        %5573 = vst [vmem:[%s436 + $0xe8] sm:$0xff] %v5557
        %5574 = vst [vmem:[%s436 + $0x108] sm:$0xff] %v5558
        %5575 = vst [vmem:[%s436 + $0x128] sm:$0xff] %v5559
        %5576 = vst [vmem:[%s436 + $0x148] sm:$0xff] %v5560
        %5577 = vst [vmem:[%s436 + $0x168] sm:$0xff] %v5561
        %5578 = vst [vmem:[%s436 + $0x188] sm:$0xff] %v5562
        %5579 = vst [vmem:[%s436 + $0x1a8] sm:$0xff] %v5563
        %5580 = vst [vmem:[%s436 + $0x1c8] sm:$0xff] %v5564
        %5581 = vst [vmem:[%s436 + $0x1e8] sm:$0xff] %v5565
        %v5582 = vand.u32 2147483647, %v1901
        %vm5583 = vcmp.le.f32.partialorder %v5582, 0.7853982
        %vm5584 = vcmp.lt.s32.totalorder %v1901, 0
        %v5585 = vand.u32 %v1901, 2139095040
        %v5586 = vshrl.u32 %v5585, 23
        %v5587 = vsub.s32 %v5586, 127
        %v5588 = vand.u32 2147483647, %v1901
        %v5589 = vand.u32 %v5588, 8388607
        %v5590 = vor.u32 %v5589, 8388608
        %v5591 = vsub.s32 0, %v5590
        %v5592 = vadd.s32 %v5587, 1
        %vm5593 = vcmp.gt.s32.totalorder %v5592, 0
        %v5594 = vsel %vm5593, %v5592, 0
        %v5595 = vshrl.u32 %v5594, 5
        %v5596 = vand.u32 %v5594, 31
        %v5597 = vsub.s32 32, %v5596
        %v5598 = vshrl.u32 683565275, %v5597
        %v5599 = vshll.u32 683565275, %v5596
        %v5600 = vshrl.u32 2475754826, %v5597
        %v5601 = vor.u32 %v5599, %v5600
        %v5602 = vshll.u32 2475754826, %v5596
        %v5603 = vshrl.u32 2131351028, %v5597
        %v5604 = vor.u32 %v5602, %v5603
        %v5605 = vshll.u32 2131351028, %v5596
        %v5606 = vshrl.u32 2102212464, %v5597
        %v5607 = vor.u32 %v5605, %v5606
        %v5608 = vshll.u32 2102212464, %v5596
        %v5609 = vshrl.u32 920167782, %v5597
        %v5610 = vor.u32 %v5608, %v5609
        %v5611 = vshll.u32 920167782, %v5596
        %v5612 = vshrl.u32 1326507024, %v5597
        %v5613 = vor.u32 %v5611, %v5612
        %vm5614 = vcmp.lt.s32.totalorder %v5595, 1
        %vm5615 = vcmp.lt.s32.totalorder %v5595, 2
        %vm5616 = vcmp.lt.s32.totalorder %v5595, 3
        %vm5617 = vcmp.lt.s32.totalorder %v5595, 4
        %v5618 = vsel %vm5614, %v5598, %v5601
        %v5619 = vsel %vm5617, %v5607, 2102212464
        %v5620 = vsel %vm5616, %v5604, %v5619
        %v5621 = vsel %vm5615, %v5618, %v5620
        %v5622 = vsel %vm5614, %v5601, %v5604
        %v5623 = vsel %vm5617, %v5610, 920167782
        %v5624 = vsel %vm5616, %v5607, %v5623
        %v5625 = vsel %vm5615, %v5622, %v5624
        %v5626 = vsel %vm5614, %v5604, %v5607
        %v5627 = vsel %vm5617, %v5613, 1326507024
        %v5628 = vsel %vm5616, %v5610, %v5627
        %v5629 = vsel %vm5615, %v5626, %v5628
        %v5630 = vshll.u32 %v5590, 8
        %v5631 = vmul.u32.u64.compose %v5630, %v5629
        %v5632 = vextract.low.u32 %v5631
        %v5633 = vextract.high.u32 %v5631
        %v5634 = vmul.u32.u64.compose %v5630, %v5625
        %v5635 = vextract.low.u32 %v5634
        %v5636 = vextract.high.u32 %v5634
        %v5637 = vmul.u32 %v5630, %v5621
        %v5638 = vadd.s32 %v5633, %v5635
        %vm5639 = vc.u32 %v5633, %v5635
        %v5640 = vadd.s32 %v5636, 1
        %v5641 = vsel %vm5639, %v5640, %v5636
        %v5642 = vadd.s32 %v5637, %v5641
        %v5643 = vadd.s32 %v5642, 536870912
        %v5644 = vshrl.u32 %v5643, 30
        %v5645 = vshll.u32 %v5644, 30
        %v5646 = vsub.s32 %v5642, %v5645
        %vm5647 = vcmp.lt.s32.totalorder %v5646, 0
        %v5648 = vsub.s32 0, %v5646
        %v5649 = vsel %vm5647, %v5648, %v5646
        %v5650 = vclz %v5649
        %v5651 = vsub.s32 %v5650, 2
        %vm5652 = vcmp.gt.s32.totalorder 0, %v5651
        %v5653 = vsel %vm5652, 0, %v5651
        %v5654 = vsub.s32 32, %v5653
        %v5655 = vshll.u32 %v5646, %v5653
        %v5656 = vshrl.u32 %v5638, %v5654
        %v5657 = vor.u32 %v5655, %v5656
        %v5658 = vsub.s32 4294967266, %v5653
        %v5659 = vadd.s32 %v5658, 127
        %v5660 = vshll.u32 %v5659, 23
        %v5661 = vor.u32 4788187, %v5660
        %v5662 = vand.u32 2147483647, %v5661
        %v5664 = vcvt.s32.f32 %v5657
        %v5665 = vmul.f32 %v5664, %v5662
        %v5666 = vxor.u32 %v5665, 2147483648
        %v5667 = vsel %vm5584, %v5666, %v5665
        %v5668 = vsub.s32 4, %v5644
        %v5669 = vsel %vm5584, %v5668, %v5644
        %v5670 = vsel %vm5583, %v1901, %v5667
        %v5671 = vsel %vm5583, 0, %v5669
        %v5672 = vcosq.f32.pop %v5670
        %v5673 = vsinq.f32.pop %v5670
        %vm5674 = vweird.f32 %v1901
        %v5675 = vand.u32 %v5671, 3
        %vm5676 = vcmp.lt.s32.totalorder %v5675, 2
        %vm5677 = vcmp.eq.s32.totalorder %v5675, 0
        %v5678 = vxor.u32 %v5673, 2147483648
        %v5679 = vsel %vm5677, %v5672, %v5678
        %vm5680 = vcmp.eq.s32.totalorder %v5675, 2
        %v5681 = vxor.u32 %v5672, 2147483648
        %v5682 = vsel %vm5680, %v5681, %v5673
        %v5683 = vsel %vm5676, %v5679, %v5682
        %v5684 = vsel %vm5674, nan, %v5683
        %v5685 = vand.u32 2147483647, %v1907
        %vm5686 = vcmp.le.f32.partialorder %v5685, 0.7853982
        %vm5687 = vcmp.lt.s32.totalorder %v1907, 0
        %v5688 = vand.u32 %v1907, 2139095040
        %v5689 = vshrl.u32 %v5688, 23
        %v5690 = vsub.s32 %v5689, 127
        %v5691 = vand.u32 2147483647, %v1907
        %v5692 = vand.u32 %v5691, 8388607
        %v5693 = vor.u32 %v5692, 8388608
        %v5694 = vsub.s32 0, %v5693
        %v5695 = vadd.s32 %v5690, 1
        %vm5696 = vcmp.gt.s32.totalorder %v5695, 0
        %v5697 = vsel %vm5696, %v5695, 0
        %v5698 = vshrl.u32 %v5697, 5
        %v5699 = vand.u32 %v5697, 31
        %v5700 = vsub.s32 32, %v5699
        %v5701 = vshrl.u32 683565275, %v5700
        %v5702 = vshll.u32 683565275, %v5699
        %v5703 = vshrl.u32 2475754826, %v5700
        %v5704 = vor.u32 %v5702, %v5703
        %v5705 = vshll.u32 2475754826, %v5699
        %v5706 = vshrl.u32 2131351028, %v5700
        %v5707 = vor.u32 %v5705, %v5706
        %v5708 = vshll.u32 2131351028, %v5699
        %v5709 = vshrl.u32 2102212464, %v5700
        %v5710 = vor.u32 %v5708, %v5709
        %v5711 = vshll.u32 2102212464, %v5699
        %v5712 = vshrl.u32 920167782, %v5700
        %v5713 = vor.u32 %v5711, %v5712
        %v5714 = vshll.u32 920167782, %v5699
        %v5715 = vshrl.u32 1326507024, %v5700
        %v5716 = vor.u32 %v5714, %v5715
        %vm5717 = vcmp.lt.s32.totalorder %v5698, 1
        %vm5718 = vcmp.lt.s32.totalorder %v5698, 2
        %vm5719 = vcmp.lt.s32.totalorder %v5698, 3
        %vm5720 = vcmp.lt.s32.totalorder %v5698, 4
        %v5721 = vsel %vm5717, %v5701, %v5704
        %v5722 = vsel %vm5720, %v5710, 2102212464
        %v5723 = vsel %vm5719, %v5707, %v5722
        %v5724 = vsel %vm5718, %v5721, %v5723
        %v5725 = vsel %vm5717, %v5704, %v5707
        %v5726 = vsel %vm5720, %v5713, 920167782
        %v5727 = vsel %vm5719, %v5710, %v5726
        %v5728 = vsel %vm5718, %v5725, %v5727
        %v5729 = vsel %vm5717, %v5707, %v5710
        %v5730 = vsel %vm5720, %v5716, 1326507024
        %v5731 = vsel %vm5719, %v5713, %v5730
        %v5732 = vsel %vm5718, %v5729, %v5731
        %v5733 = vshll.u32 %v5693, 8
        %v5734 = vmul.u32.u64.compose %v5733, %v5732
        %v5735 = vextract.low.u32 %v5734
        %v5736 = vextract.high.u32 %v5734
        %v5737 = vmul.u32.u64.compose %v5733, %v5728
        %v5738 = vextract.low.u32 %v5737
        %v5739 = vextract.high.u32 %v5737
        %v5740 = vmul.u32 %v5733, %v5724
        %v5741 = vadd.s32 %v5736, %v5738
        %vm5742 = vc.u32 %v5736, %v5738
        %v5743 = vadd.s32 %v5739, 1
        %v5744 = vsel %vm5742, %v5743, %v5739
        %v5745 = vadd.s32 %v5740, %v5744
        %v5746 = vadd.s32 %v5745, 536870912
        %v5747 = vshrl.u32 %v5746, 30
        %v5748 = vshll.u32 %v5747, 30
        %v5749 = vsub.s32 %v5745, %v5748
        %vm5750 = vcmp.lt.s32.totalorder %v5749, 0
        %v5751 = vsub.s32 0, %v5749
        %v5752 = vsel %vm5750, %v5751, %v5749
        %v5753 = vclz %v5752
        %v5754 = vsub.s32 %v5753, 2
        %vm5755 = vcmp.gt.s32.totalorder 0, %v5754
        %v5756 = vsel %vm5755, 0, %v5754
        %v5757 = vsub.s32 32, %v5756
        %v5758 = vshll.u32 %v5749, %v5756
        %v5759 = vshrl.u32 %v5741, %v5757
        %v5760 = vor.u32 %v5758, %v5759
        %v5761 = vsub.s32 4294967266, %v5756
        %v5762 = vadd.s32 %v5761, 127
        %v5763 = vshll.u32 %v5762, 23
        %v5764 = vor.u32 4788187, %v5763
        %v5765 = vand.u32 2147483647, %v5764
        %v5767 = vcvt.s32.f32 %v5760
        %v5768 = vmul.f32 %v5767, %v5765
        %v5769 = vxor.u32 %v5768, 2147483648
        %v5770 = vsel %vm5687, %v5769, %v5768
        %v5771 = vsub.s32 4, %v5747
        %v5772 = vsel %vm5687, %v5771, %v5747
        %v5773 = vsel %vm5686, %v1907, %v5770
        %v5774 = vsel %vm5686, 0, %v5772
        %v5775 = vcosq.f32.pop %v5773
        %v5776 = vsinq.f32.pop %v5773
        %vm5777 = vweird.f32 %v1907
        %v5778 = vand.u32 %v5774, 3
        %vm5779 = vcmp.lt.s32.totalorder %v5778, 2
        %vm5780 = vcmp.eq.s32.totalorder %v5778, 0
        %v5781 = vxor.u32 %v5776, 2147483648
        %v5782 = vsel %vm5780, %v5775, %v5781
        %vm5783 = vcmp.eq.s32.totalorder %v5778, 2
        %v5784 = vxor.u32 %v5775, 2147483648
        %v5785 = vsel %vm5783, %v5784, %v5776
        %v5786 = vsel %vm5779, %v5782, %v5785
        %v5787 = vsel %vm5777, nan, %v5786
        %v5788 = vand.u32 2147483647, %v1913
        %vm5789 = vcmp.le.f32.partialorder %v5788, 0.7853982
        %vm5790 = vcmp.lt.s32.totalorder %v1913, 0
        %v5791 = vand.u32 %v1913, 2139095040
        %v5792 = vshrl.u32 %v5791, 23
        %v5793 = vsub.s32 %v5792, 127
        %v5794 = vand.u32 2147483647, %v1913
        %v5795 = vand.u32 %v5794, 8388607
        %v5796 = vor.u32 %v5795, 8388608
        %v5797 = vsub.s32 0, %v5796
        %v5798 = vadd.s32 %v5793, 1
        %vm5799 = vcmp.gt.s32.totalorder %v5798, 0
        %v5800 = vsel %vm5799, %v5798, 0
        %v5801 = vshrl.u32 %v5800, 5
        %v5802 = vand.u32 %v5800, 31
        %v5803 = vsub.s32 32, %v5802
        %v5804 = vshrl.u32 683565275, %v5803
        %v5805 = vshll.u32 683565275, %v5802
        %v5806 = vshrl.u32 2475754826, %v5803
        %v5807 = vor.u32 %v5805, %v5806
        %v5808 = vshll.u32 2475754826, %v5802
        %v5809 = vshrl.u32 2131351028, %v5803
        %v5810 = vor.u32 %v5808, %v5809
        %v5811 = vshll.u32 2131351028, %v5802
        %v5812 = vshrl.u32 2102212464, %v5803
        %v5813 = vor.u32 %v5811, %v5812
        %v5814 = vshll.u32 2102212464, %v5802
        %v5815 = vshrl.u32 920167782, %v5803
        %v5816 = vor.u32 %v5814, %v5815
        %v5817 = vshll.u32 920167782, %v5802
        %v5818 = vshrl.u32 1326507024, %v5803
        %v5819 = vor.u32 %v5817, %v5818
        %vm5820 = vcmp.lt.s32.totalorder %v5801, 1
        %vm5821 = vcmp.lt.s32.totalorder %v5801, 2
        %vm5822 = vcmp.lt.s32.totalorder %v5801, 3
        %vm5823 = vcmp.lt.s32.totalorder %v5801, 4
        %v5824 = vsel %vm5820, %v5804, %v5807
        %v5825 = vsel %vm5823, %v5813, 2102212464
        %v5826 = vsel %vm5822, %v5810, %v5825
        %v5827 = vsel %vm5821, %v5824, %v5826
        %v5828 = vsel %vm5820, %v5807, %v5810
        %v5829 = vsel %vm5823, %v5816, 920167782
        %v5830 = vsel %vm5822, %v5813, %v5829
        %v5831 = vsel %vm5821, %v5828, %v5830
        %v5832 = vsel %vm5820, %v5810, %v5813
        %v5833 = vsel %vm5823, %v5819, 1326507024
        %v5834 = vsel %vm5822, %v5816, %v5833
        %v5835 = vsel %vm5821, %v5832, %v5834
        %v5836 = vshll.u32 %v5796, 8
        %v5837 = vmul.u32.u64.compose %v5836, %v5835
        %v5838 = vextract.low.u32 %v5837
        %v5839 = vextract.high.u32 %v5837
        %v5840 = vmul.u32.u64.compose %v5836, %v5831
        %v5841 = vextract.low.u32 %v5840
        %v5842 = vextract.high.u32 %v5840
        %v5843 = vmul.u32 %v5836, %v5827
        %v5844 = vadd.s32 %v5839, %v5841
        %vm5845 = vc.u32 %v5839, %v5841
        %v5846 = vadd.s32 %v5842, 1
        %v5847 = vsel %vm5845, %v5846, %v5842
        %v5848 = vadd.s32 %v5843, %v5847
        %v5849 = vadd.s32 %v5848, 536870912
        %v5850 = vshrl.u32 %v5849, 30
        %v5851 = vshll.u32 %v5850, 30
        %v5852 = vsub.s32 %v5848, %v5851
        %vm5853 = vcmp.lt.s32.totalorder %v5852, 0
        %v5854 = vsub.s32 0, %v5852
        %v5855 = vsel %vm5853, %v5854, %v5852
        %v5856 = vclz %v5855
        %v5857 = vsub.s32 %v5856, 2
        %vm5858 = vcmp.gt.s32.totalorder 0, %v5857
        %v5859 = vsel %vm5858, 0, %v5857
        %v5860 = vsub.s32 32, %v5859
        %v5861 = vshll.u32 %v5852, %v5859
        %v5862 = vshrl.u32 %v5844, %v5860
        %v5863 = vor.u32 %v5861, %v5862
        %v5864 = vsub.s32 4294967266, %v5859
        %v5865 = vadd.s32 %v5864, 127
        %v5866 = vshll.u32 %v5865, 23
        %v5867 = vor.u32 4788187, %v5866
        %v5868 = vand.u32 2147483647, %v5867
        %v5870 = vcvt.s32.f32 %v5863
        %v5871 = vmul.f32 %v5870, %v5868
        %v5872 = vxor.u32 %v5871, 2147483648
        %v5873 = vsel %vm5790, %v5872, %v5871
        %v5874 = vsub.s32 4, %v5850
        %v5875 = vsel %vm5790, %v5874, %v5850
        %v5876 = vsel %vm5789, %v1913, %v5873
        %v5877 = vsel %vm5789, 0, %v5875
        %v5878 = vcosq.f32.pop %v5876
        %v5879 = vsinq.f32.pop %v5876
        %vm5880 = vweird.f32 %v1913
        %v5881 = vand.u32 %v5877, 3
        %vm5882 = vcmp.lt.s32.totalorder %v5881, 2
        %vm5883 = vcmp.eq.s32.totalorder %v5881, 0
        %v5884 = vxor.u32 %v5879, 2147483648
        %v5885 = vsel %vm5883, %v5878, %v5884
        %vm5886 = vcmp.eq.s32.totalorder %v5881, 2
        %v5887 = vxor.u32 %v5878, 2147483648
        %v5888 = vsel %vm5886, %v5887, %v5879
        %v5889 = vsel %vm5882, %v5885, %v5888
        %v5890 = vsel %vm5880, nan, %v5889
        %v5891 = vand.u32 2147483647, %v1919
        %vm5892 = vcmp.le.f32.partialorder %v5891, 0.7853982
        %vm5893 = vcmp.lt.s32.totalorder %v1919, 0
        %v5894 = vand.u32 %v1919, 2139095040
        %v5895 = vshrl.u32 %v5894, 23
        %v5896 = vsub.s32 %v5895, 127
        %v5897 = vand.u32 2147483647, %v1919
        %v5898 = vand.u32 %v5897, 8388607
        %v5899 = vor.u32 %v5898, 8388608
        %v5900 = vsub.s32 0, %v5899
        %v5901 = vadd.s32 %v5896, 1
        %vm5902 = vcmp.gt.s32.totalorder %v5901, 0
        %v5903 = vsel %vm5902, %v5901, 0
        %v5904 = vshrl.u32 %v5903, 5
        %v5905 = vand.u32 %v5903, 31
        %v5906 = vsub.s32 32, %v5905
        %v5907 = vshrl.u32 683565275, %v5906
        %v5908 = vshll.u32 683565275, %v5905
        %v5909 = vshrl.u32 2475754826, %v5906
        %v5910 = vor.u32 %v5908, %v5909
        %v5911 = vshll.u32 2475754826, %v5905
        %v5912 = vshrl.u32 2131351028, %v5906
        %v5913 = vor.u32 %v5911, %v5912
        %v5914 = vshll.u32 2131351028, %v5905
        %v5915 = vshrl.u32 2102212464, %v5906
        %v5916 = vor.u32 %v5914, %v5915
        %v5917 = vshll.u32 2102212464, %v5905
        %v5918 = vshrl.u32 920167782, %v5906
        %v5919 = vor.u32 %v5917, %v5918
        %v5920 = vshll.u32 920167782, %v5905
        %v5921 = vshrl.u32 1326507024, %v5906
        %v5922 = vor.u32 %v5920, %v5921
        %vm5923 = vcmp.lt.s32.totalorder %v5904, 1
        %vm5924 = vcmp.lt.s32.totalorder %v5904, 2
        %vm5925 = vcmp.lt.s32.totalorder %v5904, 3
        %vm5926 = vcmp.lt.s32.totalorder %v5904, 4
        %v5927 = vsel %vm5923, %v5907, %v5910
        %v5928 = vsel %vm5926, %v5916, 2102212464
        %v5929 = vsel %vm5925, %v5913, %v5928
        %v5930 = vsel %vm5924, %v5927, %v5929
        %v5931 = vsel %vm5923, %v5910, %v5913
        %v5932 = vsel %vm5926, %v5919, 920167782
        %v5933 = vsel %vm5925, %v5916, %v5932
        %v5934 = vsel %vm5924, %v5931, %v5933
        %v5935 = vsel %vm5923, %v5913, %v5916
        %v5936 = vsel %vm5926, %v5922, 1326507024
        %v5937 = vsel %vm5925, %v5919, %v5936
        %v5938 = vsel %vm5924, %v5935, %v5937
        %v5939 = vshll.u32 %v5899, 8
        %v5940 = vmul.u32.u64.compose %v5939, %v5938
        %v5941 = vextract.low.u32 %v5940
        %v5942 = vextract.high.u32 %v5940
        %v5943 = vmul.u32.u64.compose %v5939, %v5934
        %v5944 = vextract.low.u32 %v5943
        %v5945 = vextract.high.u32 %v5943
        %v5946 = vmul.u32 %v5939, %v5930
        %v5947 = vadd.s32 %v5942, %v5944
        %vm5948 = vc.u32 %v5942, %v5944
        %v5949 = vadd.s32 %v5945, 1
        %v5950 = vsel %vm5948, %v5949, %v5945
        %v5951 = vadd.s32 %v5946, %v5950
        %v5952 = vadd.s32 %v5951, 536870912
        %v5953 = vshrl.u32 %v5952, 30
        %v5954 = vshll.u32 %v5953, 30
        %v5955 = vsub.s32 %v5951, %v5954
        %vm5956 = vcmp.lt.s32.totalorder %v5955, 0
        %v5957 = vsub.s32 0, %v5955
        %v5958 = vsel %vm5956, %v5957, %v5955
        %v5959 = vclz %v5958
        %v5960 = vsub.s32 %v5959, 2
        %vm5961 = vcmp.gt.s32.totalorder 0, %v5960
        %v5962 = vsel %vm5961, 0, %v5960
        %v5963 = vsub.s32 32, %v5962
        %v5964 = vshll.u32 %v5955, %v5962
        %v5965 = vshrl.u32 %v5947, %v5963
        %v5966 = vor.u32 %v5964, %v5965
        %v5967 = vsub.s32 4294967266, %v5962
        %v5968 = vadd.s32 %v5967, 127
        %v5969 = vshll.u32 %v5968, 23
        %v5970 = vor.u32 4788187, %v5969
        %v5971 = vand.u32 2147483647, %v5970
        %v5973 = vcvt.s32.f32 %v5966
        %v5974 = vmul.f32 %v5973, %v5971
        %v5975 = vxor.u32 %v5974, 2147483648
        %v5976 = vsel %vm5893, %v5975, %v5974
        %v5977 = vsub.s32 4, %v5953
        %v5978 = vsel %vm5893, %v5977, %v5953
        %v5979 = vsel %vm5892, %v1919, %v5976
        %v5980 = vsel %vm5892, 0, %v5978
        %v5981 = vcosq.f32.pop %v5979
        %v5982 = vsinq.f32.pop %v5979
        %vm5983 = vweird.f32 %v1919
        %v5984 = vand.u32 %v5980, 3
        %vm5985 = vcmp.lt.s32.totalorder %v5984, 2
        %vm5986 = vcmp.eq.s32.totalorder %v5984, 0
        %v5987 = vxor.u32 %v5982, 2147483648
        %v5988 = vsel %vm5986, %v5981, %v5987
        %vm5989 = vcmp.eq.s32.totalorder %v5984, 2
        %v5990 = vxor.u32 %v5981, 2147483648
        %v5991 = vsel %vm5989, %v5990, %v5982
        %v5992 = vsel %vm5985, %v5988, %v5991
        %v5993 = vsel %vm5983, nan, %v5992
        %v5994 = vand.u32 2147483647, %v1925
        %vm5995 = vcmp.le.f32.partialorder %v5994, 0.7853982
        %vm5996 = vcmp.lt.s32.totalorder %v1925, 0
        %v5997 = vand.u32 %v1925, 2139095040
        %v5998 = vshrl.u32 %v5997, 23
        %v5999 = vsub.s32 %v5998, 127
        %v6000 = vand.u32 2147483647, %v1925
        %v6001 = vand.u32 %v6000, 8388607
        %v6002 = vor.u32 %v6001, 8388608
        %v6003 = vsub.s32 0, %v6002
        %v6004 = vadd.s32 %v5999, 1
        %vm6005 = vcmp.gt.s32.totalorder %v6004, 0
        %v6006 = vsel %vm6005, %v6004, 0
        %v6007 = vshrl.u32 %v6006, 5
        %v6008 = vand.u32 %v6006, 31
        %v6009 = vsub.s32 32, %v6008
        %v6010 = vshrl.u32 683565275, %v6009
        %v6011 = vshll.u32 683565275, %v6008
        %v6012 = vshrl.u32 2475754826, %v6009
        %v6013 = vor.u32 %v6011, %v6012
        %v6014 = vshll.u32 2475754826, %v6008
        %v6015 = vshrl.u32 2131351028, %v6009
        %v6016 = vor.u32 %v6014, %v6015
        %v6017 = vshll.u32 2131351028, %v6008
        %v6018 = vshrl.u32 2102212464, %v6009
        %v6019 = vor.u32 %v6017, %v6018
        %v6020 = vshll.u32 2102212464, %v6008
        %v6021 = vshrl.u32 920167782, %v6009
        %v6022 = vor.u32 %v6020, %v6021
        %v6023 = vshll.u32 920167782, %v6008
        %v6024 = vshrl.u32 1326507024, %v6009
        %v6025 = vor.u32 %v6023, %v6024
        %vm6026 = vcmp.lt.s32.totalorder %v6007, 1
        %vm6027 = vcmp.lt.s32.totalorder %v6007, 2
        %vm6028 = vcmp.lt.s32.totalorder %v6007, 3
        %vm6029 = vcmp.lt.s32.totalorder %v6007, 4
        %v6030 = vsel %vm6026, %v6010, %v6013
        %v6031 = vsel %vm6029, %v6019, 2102212464
        %v6032 = vsel %vm6028, %v6016, %v6031
        %v6033 = vsel %vm6027, %v6030, %v6032
        %v6034 = vsel %vm6026, %v6013, %v6016
        %v6035 = vsel %vm6029, %v6022, 920167782
        %v6036 = vsel %vm6028, %v6019, %v6035
        %v6037 = vsel %vm6027, %v6034, %v6036
        %v6038 = vsel %vm6026, %v6016, %v6019
        %v6039 = vsel %vm6029, %v6025, 1326507024
        %v6040 = vsel %vm6028, %v6022, %v6039
        %v6041 = vsel %vm6027, %v6038, %v6040
        %v6042 = vshll.u32 %v6002, 8
        %v6043 = vmul.u32.u64.compose %v6042, %v6041
        %v6044 = vextract.low.u32 %v6043
        %v6045 = vextract.high.u32 %v6043
        %v6046 = vmul.u32.u64.compose %v6042, %v6037
        %v6047 = vextract.low.u32 %v6046
        %v6048 = vextract.high.u32 %v6046
        %v6049 = vmul.u32 %v6042, %v6033
        %v6050 = vadd.s32 %v6045, %v6047
        %vm6051 = vc.u32 %v6045, %v6047
        %v6052 = vadd.s32 %v6048, 1
        %v6053 = vsel %vm6051, %v6052, %v6048
        %v6054 = vadd.s32 %v6049, %v6053
        %v6055 = vadd.s32 %v6054, 536870912
        %v6056 = vshrl.u32 %v6055, 30
        %v6057 = vshll.u32 %v6056, 30
        %v6058 = vsub.s32 %v6054, %v6057
        %vm6059 = vcmp.lt.s32.totalorder %v6058, 0
        %v6060 = vsub.s32 0, %v6058
        %v6061 = vsel %vm6059, %v6060, %v6058
        %v6062 = vclz %v6061
        %v6063 = vsub.s32 %v6062, 2
        %vm6064 = vcmp.gt.s32.totalorder 0, %v6063
        %v6065 = vsel %vm6064, 0, %v6063
        %v6066 = vsub.s32 32, %v6065
        %v6067 = vshll.u32 %v6058, %v6065
        %v6068 = vshrl.u32 %v6050, %v6066
        %v6069 = vor.u32 %v6067, %v6068
        %v6070 = vsub.s32 4294967266, %v6065
        %v6071 = vadd.s32 %v6070, 127
        %v6072 = vshll.u32 %v6071, 23
        %v6073 = vor.u32 4788187, %v6072
        %v6074 = vand.u32 2147483647, %v6073
        %v6076 = vcvt.s32.f32 %v6069
        %v6077 = vmul.f32 %v6076, %v6074
        %v6078 = vxor.u32 %v6077, 2147483648
        %v6079 = vsel %vm5996, %v6078, %v6077
        %v6080 = vsub.s32 4, %v6056
        %v6081 = vsel %vm5996, %v6080, %v6056
        %v6082 = vsel %vm5995, %v1925, %v6079
        %v6083 = vsel %vm5995, 0, %v6081
        %v6084 = vcosq.f32.pop %v6082
        %v6085 = vsinq.f32.pop %v6082
        %vm6086 = vweird.f32 %v1925
        %v6087 = vand.u32 %v6083, 3
        %vm6088 = vcmp.lt.s32.totalorder %v6087, 2
        %vm6089 = vcmp.eq.s32.totalorder %v6087, 0
        %v6090 = vxor.u32 %v6085, 2147483648
        %v6091 = vsel %vm6089, %v6084, %v6090
        %vm6092 = vcmp.eq.s32.totalorder %v6087, 2
        %v6093 = vxor.u32 %v6084, 2147483648
        %v6094 = vsel %vm6092, %v6093, %v6085
        %v6095 = vsel %vm6088, %v6091, %v6094
        %v6096 = vsel %vm6086, nan, %v6095
        %v6097 = vand.u32 2147483647, %v1931
        %vm6098 = vcmp.le.f32.partialorder %v6097, 0.7853982
        %vm6099 = vcmp.lt.s32.totalorder %v1931, 0
        %v6100 = vand.u32 %v1931, 2139095040
        %v6101 = vshrl.u32 %v6100, 23
        %v6102 = vsub.s32 %v6101, 127
        %v6103 = vand.u32 2147483647, %v1931
        %v6104 = vand.u32 %v6103, 8388607
        %v6105 = vor.u32 %v6104, 8388608
        %v6106 = vsub.s32 0, %v6105
        %v6107 = vadd.s32 %v6102, 1
        %vm6108 = vcmp.gt.s32.totalorder %v6107, 0
        %v6109 = vsel %vm6108, %v6107, 0
        %v6110 = vshrl.u32 %v6109, 5
        %v6111 = vand.u32 %v6109, 31
        %v6112 = vsub.s32 32, %v6111
        %v6113 = vshrl.u32 683565275, %v6112
        %v6114 = vshll.u32 683565275, %v6111
        %v6115 = vshrl.u32 2475754826, %v6112
        %v6116 = vor.u32 %v6114, %v6115
        %v6117 = vshll.u32 2475754826, %v6111
        %v6118 = vshrl.u32 2131351028, %v6112
        %v6119 = vor.u32 %v6117, %v6118
        %v6120 = vshll.u32 2131351028, %v6111
        %v6121 = vshrl.u32 2102212464, %v6112
        %v6122 = vor.u32 %v6120, %v6121
        %v6123 = vshll.u32 2102212464, %v6111
        %v6124 = vshrl.u32 920167782, %v6112
        %v6125 = vor.u32 %v6123, %v6124
        %v6126 = vshll.u32 920167782, %v6111
        %v6127 = vshrl.u32 1326507024, %v6112
        %v6128 = vor.u32 %v6126, %v6127
        %vm6129 = vcmp.lt.s32.totalorder %v6110, 1
        %vm6130 = vcmp.lt.s32.totalorder %v6110, 2
        %vm6131 = vcmp.lt.s32.totalorder %v6110, 3
        %vm6132 = vcmp.lt.s32.totalorder %v6110, 4
        %v6133 = vsel %vm6129, %v6113, %v6116
        %v6134 = vsel %vm6132, %v6122, 2102212464
        %v6135 = vsel %vm6131, %v6119, %v6134
        %v6136 = vsel %vm6130, %v6133, %v6135
        %v6137 = vsel %vm6129, %v6116, %v6119
        %v6138 = vsel %vm6132, %v6125, 920167782
        %v6139 = vsel %vm6131, %v6122, %v6138
        %v6140 = vsel %vm6130, %v6137, %v6139
        %v6141 = vsel %vm6129, %v6119, %v6122
        %v6142 = vsel %vm6132, %v6128, 1326507024
        %v6143 = vsel %vm6131, %v6125, %v6142
        %v6144 = vsel %vm6130, %v6141, %v6143
        %v6145 = vshll.u32 %v6105, 8
        %v6146 = vmul.u32.u64.compose %v6145, %v6144
        %v6147 = vextract.low.u32 %v6146
        %v6148 = vextract.high.u32 %v6146
        %v6149 = vmul.u32.u64.compose %v6145, %v6140
        %v6150 = vextract.low.u32 %v6149
        %v6151 = vextract.high.u32 %v6149
        %v6152 = vmul.u32 %v6145, %v6136
        %v6153 = vadd.s32 %v6148, %v6150
        %vm6154 = vc.u32 %v6148, %v6150
        %v6155 = vadd.s32 %v6151, 1
        %v6156 = vsel %vm6154, %v6155, %v6151
        %v6157 = vadd.s32 %v6152, %v6156
        %v6158 = vadd.s32 %v6157, 536870912
        %v6159 = vshrl.u32 %v6158, 30
        %v6160 = vshll.u32 %v6159, 30
        %v6161 = vsub.s32 %v6157, %v6160
        %vm6162 = vcmp.lt.s32.totalorder %v6161, 0
        %v6163 = vsub.s32 0, %v6161
        %v6164 = vsel %vm6162, %v6163, %v6161
        %v6165 = vclz %v6164
        %v6166 = vsub.s32 %v6165, 2
        %vm6167 = vcmp.gt.s32.totalorder 0, %v6166
        %v6168 = vsel %vm6167, 0, %v6166
        %v6169 = vsub.s32 32, %v6168
        %v6170 = vshll.u32 %v6161, %v6168
        %v6171 = vshrl.u32 %v6153, %v6169
        %v6172 = vor.u32 %v6170, %v6171
        %v6173 = vsub.s32 4294967266, %v6168
        %v6174 = vadd.s32 %v6173, 127
        %v6175 = vshll.u32 %v6174, 23
        %v6176 = vor.u32 4788187, %v6175
        %v6177 = vand.u32 2147483647, %v6176
        %v6179 = vcvt.s32.f32 %v6172
        %v6180 = vmul.f32 %v6179, %v6177
        %v6181 = vxor.u32 %v6180, 2147483648
        %v6182 = vsel %vm6099, %v6181, %v6180
        %v6183 = vsub.s32 4, %v6159
        %v6184 = vsel %vm6099, %v6183, %v6159
        %v6185 = vsel %vm6098, %v1931, %v6182
        %v6186 = vsel %vm6098, 0, %v6184
        %v6187 = vcosq.f32.pop %v6185
        %v6188 = vsinq.f32.pop %v6185
        %vm6189 = vweird.f32 %v1931
        %v6190 = vand.u32 %v6186, 3
        %vm6191 = vcmp.lt.s32.totalorder %v6190, 2
        %vm6192 = vcmp.eq.s32.totalorder %v6190, 0
        %v6193 = vxor.u32 %v6188, 2147483648
        %v6194 = vsel %vm6192, %v6187, %v6193
        %vm6195 = vcmp.eq.s32.totalorder %v6190, 2
        %v6196 = vxor.u32 %v6187, 2147483648
        %v6197 = vsel %vm6195, %v6196, %v6188
        %v6198 = vsel %vm6191, %v6194, %v6197
        %v6199 = vsel %vm6189, nan, %v6198
        %v6200 = vand.u32 2147483647, %v1937
        %vm6201 = vcmp.le.f32.partialorder %v6200, 0.7853982
        %vm6202 = vcmp.lt.s32.totalorder %v1937, 0
        %v6203 = vand.u32 %v1937, 2139095040
        %v6204 = vshrl.u32 %v6203, 23
        %v6205 = vsub.s32 %v6204, 127
        %v6206 = vand.u32 2147483647, %v1937
        %v6207 = vand.u32 %v6206, 8388607
        %v6208 = vor.u32 %v6207, 8388608
        %v6209 = vsub.s32 0, %v6208
        %v6210 = vadd.s32 %v6205, 1
        %vm6211 = vcmp.gt.s32.totalorder %v6210, 0
        %v6212 = vsel %vm6211, %v6210, 0
        %v6213 = vshrl.u32 %v6212, 5
        %v6214 = vand.u32 %v6212, 31
        %v6215 = vsub.s32 32, %v6214
        %v6216 = vshrl.u32 683565275, %v6215
        %v6217 = vshll.u32 683565275, %v6214
        %v6218 = vshrl.u32 2475754826, %v6215
        %v6219 = vor.u32 %v6217, %v6218
        %v6220 = vshll.u32 2475754826, %v6214
        %v6221 = vshrl.u32 2131351028, %v6215
        %v6222 = vor.u32 %v6220, %v6221
        %v6223 = vshll.u32 2131351028, %v6214
        %v6224 = vshrl.u32 2102212464, %v6215
        %v6225 = vor.u32 %v6223, %v6224
        %v6226 = vshll.u32 2102212464, %v6214
        %v6227 = vshrl.u32 920167782, %v6215
        %v6228 = vor.u32 %v6226, %v6227
        %v6229 = vshll.u32 920167782, %v6214
        %v6230 = vshrl.u32 1326507024, %v6215
        %v6231 = vor.u32 %v6229, %v6230
        %vm6232 = vcmp.lt.s32.totalorder %v6213, 1
        %vm6233 = vcmp.lt.s32.totalorder %v6213, 2
        %vm6234 = vcmp.lt.s32.totalorder %v6213, 3
        %vm6235 = vcmp.lt.s32.totalorder %v6213, 4
        %v6236 = vsel %vm6232, %v6216, %v6219
        %v6237 = vsel %vm6235, %v6225, 2102212464
        %v6238 = vsel %vm6234, %v6222, %v6237
        %v6239 = vsel %vm6233, %v6236, %v6238
        %v6240 = vsel %vm6232, %v6219, %v6222
        %v6241 = vsel %vm6235, %v6228, 920167782
        %v6242 = vsel %vm6234, %v6225, %v6241
        %v6243 = vsel %vm6233, %v6240, %v6242
        %v6244 = vsel %vm6232, %v6222, %v6225
        %v6245 = vsel %vm6235, %v6231, 1326507024
        %v6246 = vsel %vm6234, %v6228, %v6245
        %v6247 = vsel %vm6233, %v6244, %v6246
        %v6248 = vshll.u32 %v6208, 8
        %v6249 = vmul.u32.u64.compose %v6248, %v6247
        %v6250 = vextract.low.u32 %v6249
        %v6251 = vextract.high.u32 %v6249
        %v6252 = vmul.u32.u64.compose %v6248, %v6243
        %v6253 = vextract.low.u32 %v6252
        %v6254 = vextract.high.u32 %v6252
        %v6255 = vmul.u32 %v6248, %v6239
        %v6256 = vadd.s32 %v6251, %v6253
        %vm6257 = vc.u32 %v6251, %v6253
        %v6258 = vadd.s32 %v6254, 1
        %v6259 = vsel %vm6257, %v6258, %v6254
        %v6260 = vadd.s32 %v6255, %v6259
        %v6261 = vadd.s32 %v6260, 536870912
        %v6262 = vshrl.u32 %v6261, 30
        %v6263 = vshll.u32 %v6262, 30
        %v6264 = vsub.s32 %v6260, %v6263
        %vm6265 = vcmp.lt.s32.totalorder %v6264, 0
        %v6266 = vsub.s32 0, %v6264
        %v6267 = vsel %vm6265, %v6266, %v6264
        %v6268 = vclz %v6267
        %v6269 = vsub.s32 %v6268, 2
        %vm6270 = vcmp.gt.s32.totalorder 0, %v6269
        %v6271 = vsel %vm6270, 0, %v6269
        %v6272 = vsub.s32 32, %v6271
        %v6273 = vshll.u32 %v6264, %v6271
        %v6274 = vshrl.u32 %v6256, %v6272
        %v6275 = vor.u32 %v6273, %v6274
        %v6276 = vsub.s32 4294967266, %v6271
        %v6277 = vadd.s32 %v6276, 127
        %v6278 = vshll.u32 %v6277, 23
        %v6279 = vor.u32 4788187, %v6278
        %v6280 = vand.u32 2147483647, %v6279
        %v6282 = vcvt.s32.f32 %v6275
        %v6283 = vmul.f32 %v6282, %v6280
        %v6284 = vxor.u32 %v6283, 2147483648
        %v6285 = vsel %vm6202, %v6284, %v6283
        %v6286 = vsub.s32 4, %v6262
        %v6287 = vsel %vm6202, %v6286, %v6262
        %v6288 = vsel %vm6201, %v1937, %v6285
        %v6289 = vsel %vm6201, 0, %v6287
        %v6290 = vcosq.f32.pop %v6288
        %v6291 = vsinq.f32.pop %v6288
        %vm6292 = vweird.f32 %v1937
        %v6293 = vand.u32 %v6289, 3
        %vm6294 = vcmp.lt.s32.totalorder %v6293, 2
        %vm6295 = vcmp.eq.s32.totalorder %v6293, 0
        %v6296 = vxor.u32 %v6291, 2147483648
        %v6297 = vsel %vm6295, %v6290, %v6296
        %vm6298 = vcmp.eq.s32.totalorder %v6293, 2
        %v6299 = vxor.u32 %v6290, 2147483648
        %v6300 = vsel %vm6298, %v6299, %v6291
        %v6301 = vsel %vm6294, %v6297, %v6300
        %v6302 = vsel %vm6292, nan, %v6301
        %v6303 = vand.u32 2147483647, %v1943
        %vm6304 = vcmp.le.f32.partialorder %v6303, 0.7853982
        %vm6305 = vcmp.lt.s32.totalorder %v1943, 0
        %v6306 = vand.u32 %v1943, 2139095040
        %v6307 = vshrl.u32 %v6306, 23
        %v6308 = vsub.s32 %v6307, 127
        %v6309 = vand.u32 2147483647, %v1943
        %v6310 = vand.u32 %v6309, 8388607
        %v6311 = vor.u32 %v6310, 8388608
        %v6312 = vsub.s32 0, %v6311
        %v6313 = vadd.s32 %v6308, 1
        %vm6314 = vcmp.gt.s32.totalorder %v6313, 0
        %v6315 = vsel %vm6314, %v6313, 0
        %v6316 = vshrl.u32 %v6315, 5
        %v6317 = vand.u32 %v6315, 31
        %v6318 = vsub.s32 32, %v6317
        %v6319 = vshrl.u32 683565275, %v6318
        %v6320 = vshll.u32 683565275, %v6317
        %v6321 = vshrl.u32 2475754826, %v6318
        %v6322 = vor.u32 %v6320, %v6321
        %v6323 = vshll.u32 2475754826, %v6317
        %v6324 = vshrl.u32 2131351028, %v6318
        %v6325 = vor.u32 %v6323, %v6324
        %v6326 = vshll.u32 2131351028, %v6317
        %v6327 = vshrl.u32 2102212464, %v6318
        %v6328 = vor.u32 %v6326, %v6327
        %v6329 = vshll.u32 2102212464, %v6317
        %v6330 = vshrl.u32 920167782, %v6318
        %v6331 = vor.u32 %v6329, %v6330
        %v6332 = vshll.u32 920167782, %v6317
        %v6333 = vshrl.u32 1326507024, %v6318
        %v6334 = vor.u32 %v6332, %v6333
        %vm6335 = vcmp.lt.s32.totalorder %v6316, 1
        %vm6336 = vcmp.lt.s32.totalorder %v6316, 2
        %vm6337 = vcmp.lt.s32.totalorder %v6316, 3
        %vm6338 = vcmp.lt.s32.totalorder %v6316, 4
        %v6339 = vsel %vm6335, %v6319, %v6322
        %v6340 = vsel %vm6338, %v6328, 2102212464
        %v6341 = vsel %vm6337, %v6325, %v6340
        %v6342 = vsel %vm6336, %v6339, %v6341
        %v6343 = vsel %vm6335, %v6322, %v6325
        %v6344 = vsel %vm6338, %v6331, 920167782
        %v6345 = vsel %vm6337, %v6328, %v6344
        %v6346 = vsel %vm6336, %v6343, %v6345
        %v6347 = vsel %vm6335, %v6325, %v6328
        %v6348 = vsel %vm6338, %v6334, 1326507024
        %v6349 = vsel %vm6337, %v6331, %v6348
        %v6350 = vsel %vm6336, %v6347, %v6349
        %v6351 = vshll.u32 %v6311, 8
        %v6352 = vmul.u32.u64.compose %v6351, %v6350
        %v6353 = vextract.low.u32 %v6352
        %v6354 = vextract.high.u32 %v6352
        %v6355 = vmul.u32.u64.compose %v6351, %v6346
        %v6356 = vextract.low.u32 %v6355
        %v6357 = vextract.high.u32 %v6355
        %v6358 = vmul.u32 %v6351, %v6342
        %v6359 = vadd.s32 %v6354, %v6356
        %vm6360 = vc.u32 %v6354, %v6356
        %v6361 = vadd.s32 %v6357, 1
        %v6362 = vsel %vm6360, %v6361, %v6357
        %v6363 = vadd.s32 %v6358, %v6362
        %v6364 = vadd.s32 %v6363, 536870912
        %v6365 = vshrl.u32 %v6364, 30
        %v6366 = vshll.u32 %v6365, 30
        %v6367 = vsub.s32 %v6363, %v6366
        %vm6368 = vcmp.lt.s32.totalorder %v6367, 0
        %v6369 = vsub.s32 0, %v6367
        %v6370 = vsel %vm6368, %v6369, %v6367
        %v6371 = vclz %v6370
        %v6372 = vsub.s32 %v6371, 2
        %vm6373 = vcmp.gt.s32.totalorder 0, %v6372
        %v6374 = vsel %vm6373, 0, %v6372
        %v6375 = vsub.s32 32, %v6374
        %v6376 = vshll.u32 %v6367, %v6374
        %v6377 = vshrl.u32 %v6359, %v6375
        %v6378 = vor.u32 %v6376, %v6377
        %v6379 = vsub.s32 4294967266, %v6374
        %v6380 = vadd.s32 %v6379, 127
        %v6381 = vshll.u32 %v6380, 23
        %v6382 = vor.u32 4788187, %v6381
        %v6383 = vand.u32 2147483647, %v6382
        %v6385 = vcvt.s32.f32 %v6378
        %v6386 = vmul.f32 %v6385, %v6383
        %v6387 = vxor.u32 %v6386, 2147483648
        %v6388 = vsel %vm6305, %v6387, %v6386
        %v6389 = vsub.s32 4, %v6365
        %v6390 = vsel %vm6305, %v6389, %v6365
        %v6391 = vsel %vm6304, %v1943, %v6388
        %v6392 = vsel %vm6304, 0, %v6390
        %v6393 = vcosq.f32.pop %v6391
        %v6394 = vsinq.f32.pop %v6391
        %vm6395 = vweird.f32 %v1943
        %v6396 = vand.u32 %v6392, 3
        %vm6397 = vcmp.lt.s32.totalorder %v6396, 2
        %vm6398 = vcmp.eq.s32.totalorder %v6396, 0
        %v6399 = vxor.u32 %v6394, 2147483648
        %v6400 = vsel %vm6398, %v6393, %v6399
        %vm6401 = vcmp.eq.s32.totalorder %v6396, 2
        %v6402 = vxor.u32 %v6393, 2147483648
        %v6403 = vsel %vm6401, %v6402, %v6394
        %v6404 = vsel %vm6397, %v6400, %v6403
        %v6405 = vsel %vm6395, nan, %v6404
        %v6406 = vand.u32 2147483647, %v1949
        %vm6407 = vcmp.le.f32.partialorder %v6406, 0.7853982
        %vm6408 = vcmp.lt.s32.totalorder %v1949, 0
        %v6409 = vand.u32 %v1949, 2139095040
        %v6410 = vshrl.u32 %v6409, 23
        %v6411 = vsub.s32 %v6410, 127
        %v6412 = vand.u32 2147483647, %v1949
        %v6413 = vand.u32 %v6412, 8388607
        %v6414 = vor.u32 %v6413, 8388608
        %v6415 = vsub.s32 0, %v6414
        %v6416 = vadd.s32 %v6411, 1
        %vm6417 = vcmp.gt.s32.totalorder %v6416, 0
        %v6418 = vsel %vm6417, %v6416, 0
        %v6419 = vshrl.u32 %v6418, 5
        %v6420 = vand.u32 %v6418, 31
        %v6421 = vsub.s32 32, %v6420
        %v6422 = vshrl.u32 683565275, %v6421
        %v6423 = vshll.u32 683565275, %v6420
        %v6424 = vshrl.u32 2475754826, %v6421
        %v6425 = vor.u32 %v6423, %v6424
        %v6426 = vshll.u32 2475754826, %v6420
        %v6427 = vshrl.u32 2131351028, %v6421
        %v6428 = vor.u32 %v6426, %v6427
        %v6429 = vshll.u32 2131351028, %v6420
        %v6430 = vshrl.u32 2102212464, %v6421
        %v6431 = vor.u32 %v6429, %v6430
        %v6432 = vshll.u32 2102212464, %v6420
        %v6433 = vshrl.u32 920167782, %v6421
        %v6434 = vor.u32 %v6432, %v6433
        %v6435 = vshll.u32 920167782, %v6420
        %v6436 = vshrl.u32 1326507024, %v6421
        %v6437 = vor.u32 %v6435, %v6436
        %vm6438 = vcmp.lt.s32.totalorder %v6419, 1
        %vm6439 = vcmp.lt.s32.totalorder %v6419, 2
        %vm6440 = vcmp.lt.s32.totalorder %v6419, 3
        %vm6441 = vcmp.lt.s32.totalorder %v6419, 4
        %v6442 = vsel %vm6438, %v6422, %v6425
        %v6443 = vsel %vm6441, %v6431, 2102212464
        %v6444 = vsel %vm6440, %v6428, %v6443
        %v6445 = vsel %vm6439, %v6442, %v6444
        %v6446 = vsel %vm6438, %v6425, %v6428
        %v6447 = vsel %vm6441, %v6434, 920167782
        %v6448 = vsel %vm6440, %v6431, %v6447
        %v6449 = vsel %vm6439, %v6446, %v6448
        %v6450 = vsel %vm6438, %v6428, %v6431
        %v6451 = vsel %vm6441, %v6437, 1326507024
        %v6452 = vsel %vm6440, %v6434, %v6451
        %v6453 = vsel %vm6439, %v6450, %v6452
        %v6454 = vshll.u32 %v6414, 8
        %v6455 = vmul.u32.u64.compose %v6454, %v6453
        %v6456 = vextract.low.u32 %v6455
        %v6457 = vextract.high.u32 %v6455
        %v6458 = vmul.u32.u64.compose %v6454, %v6449
        %v6459 = vextract.low.u32 %v6458
        %v6460 = vextract.high.u32 %v6458
        %v6461 = vmul.u32 %v6454, %v6445
        %v6462 = vadd.s32 %v6457, %v6459
        %vm6463 = vc.u32 %v6457, %v6459
        %v6464 = vadd.s32 %v6460, 1
        %v6465 = vsel %vm6463, %v6464, %v6460
        %v6466 = vadd.s32 %v6461, %v6465
        %v6467 = vadd.s32 %v6466, 536870912
        %v6468 = vshrl.u32 %v6467, 30
        %v6469 = vshll.u32 %v6468, 30
        %v6470 = vsub.s32 %v6466, %v6469
        %vm6471 = vcmp.lt.s32.totalorder %v6470, 0
        %v6472 = vsub.s32 0, %v6470
        %v6473 = vsel %vm6471, %v6472, %v6470
        %v6474 = vclz %v6473
        %v6475 = vsub.s32 %v6474, 2
        %vm6476 = vcmp.gt.s32.totalorder 0, %v6475
        %v6477 = vsel %vm6476, 0, %v6475
        %v6478 = vsub.s32 32, %v6477
        %v6479 = vshll.u32 %v6470, %v6477
        %v6480 = vshrl.u32 %v6462, %v6478
        %v6481 = vor.u32 %v6479, %v6480
        %v6482 = vsub.s32 4294967266, %v6477
        %v6483 = vadd.s32 %v6482, 127
        %v6484 = vshll.u32 %v6483, 23
        %v6485 = vor.u32 4788187, %v6484
        %v6486 = vand.u32 2147483647, %v6485
        %v6488 = vcvt.s32.f32 %v6481
        %v6489 = vmul.f32 %v6488, %v6486
        %v6490 = vxor.u32 %v6489, 2147483648
        %v6491 = vsel %vm6408, %v6490, %v6489
        %v6492 = vsub.s32 4, %v6468
        %v6493 = vsel %vm6408, %v6492, %v6468
        %v6494 = vsel %vm6407, %v1949, %v6491
        %v6495 = vsel %vm6407, 0, %v6493
        %v6496 = vcosq.f32.pop %v6494
        %v6497 = vsinq.f32.pop %v6494
        %vm6498 = vweird.f32 %v1949
        %v6499 = vand.u32 %v6495, 3
        %vm6500 = vcmp.lt.s32.totalorder %v6499, 2
        %vm6501 = vcmp.eq.s32.totalorder %v6499, 0
        %v6502 = vxor.u32 %v6497, 2147483648
        %v6503 = vsel %vm6501, %v6496, %v6502
        %vm6504 = vcmp.eq.s32.totalorder %v6499, 2
        %v6505 = vxor.u32 %v6496, 2147483648
        %v6506 = vsel %vm6504, %v6505, %v6497
        %v6507 = vsel %vm6500, %v6503, %v6506
        %v6508 = vsel %vm6498, nan, %v6507
        %v6509 = vand.u32 2147483647, %v1955
        %vm6510 = vcmp.le.f32.partialorder %v6509, 0.7853982
        %vm6511 = vcmp.lt.s32.totalorder %v1955, 0
        %v6512 = vand.u32 %v1955, 2139095040
        %v6513 = vshrl.u32 %v6512, 23
        %v6514 = vsub.s32 %v6513, 127
        %v6515 = vand.u32 2147483647, %v1955
        %v6516 = vand.u32 %v6515, 8388607
        %v6517 = vor.u32 %v6516, 8388608
        %v6518 = vsub.s32 0, %v6517
        %v6519 = vadd.s32 %v6514, 1
        %vm6520 = vcmp.gt.s32.totalorder %v6519, 0
        %v6521 = vsel %vm6520, %v6519, 0
        %v6522 = vshrl.u32 %v6521, 5
        %v6523 = vand.u32 %v6521, 31
        %v6524 = vsub.s32 32, %v6523
        %v6525 = vshrl.u32 683565275, %v6524
        %v6526 = vshll.u32 683565275, %v6523
        %v6527 = vshrl.u32 2475754826, %v6524
        %v6528 = vor.u32 %v6526, %v6527
        %v6529 = vshll.u32 2475754826, %v6523
        %v6530 = vshrl.u32 2131351028, %v6524
        %v6531 = vor.u32 %v6529, %v6530
        %v6532 = vshll.u32 2131351028, %v6523
        %v6533 = vshrl.u32 2102212464, %v6524
        %v6534 = vor.u32 %v6532, %v6533
        %v6535 = vshll.u32 2102212464, %v6523
        %v6536 = vshrl.u32 920167782, %v6524
        %v6537 = vor.u32 %v6535, %v6536
        %v6538 = vshll.u32 920167782, %v6523
        %v6539 = vshrl.u32 1326507024, %v6524
        %v6540 = vor.u32 %v6538, %v6539
        %vm6541 = vcmp.lt.s32.totalorder %v6522, 1
        %vm6542 = vcmp.lt.s32.totalorder %v6522, 2
        %vm6543 = vcmp.lt.s32.totalorder %v6522, 3
        %vm6544 = vcmp.lt.s32.totalorder %v6522, 4
        %v6545 = vsel %vm6541, %v6525, %v6528
        %v6546 = vsel %vm6544, %v6534, 2102212464
        %v6547 = vsel %vm6543, %v6531, %v6546
        %v6548 = vsel %vm6542, %v6545, %v6547
        %v6549 = vsel %vm6541, %v6528, %v6531
        %v6550 = vsel %vm6544, %v6537, 920167782
        %v6551 = vsel %vm6543, %v6534, %v6550
        %v6552 = vsel %vm6542, %v6549, %v6551
        %v6553 = vsel %vm6541, %v6531, %v6534
        %v6554 = vsel %vm6544, %v6540, 1326507024
        %v6555 = vsel %vm6543, %v6537, %v6554
        %v6556 = vsel %vm6542, %v6553, %v6555
        %v6557 = vshll.u32 %v6517, 8
        %v6558 = vmul.u32.u64.compose %v6557, %v6556
        %v6559 = vextract.low.u32 %v6558
        %v6560 = vextract.high.u32 %v6558
        %v6561 = vmul.u32.u64.compose %v6557, %v6552
        %v6562 = vextract.low.u32 %v6561
        %v6563 = vextract.high.u32 %v6561
        %v6564 = vmul.u32 %v6557, %v6548
        %v6565 = vadd.s32 %v6560, %v6562
        %vm6566 = vc.u32 %v6560, %v6562
        %v6567 = vadd.s32 %v6563, 1
        %v6568 = vsel %vm6566, %v6567, %v6563
        %v6569 = vadd.s32 %v6564, %v6568
        %v6570 = vadd.s32 %v6569, 536870912
        %v6571 = vshrl.u32 %v6570, 30
        %v6572 = vshll.u32 %v6571, 30
        %v6573 = vsub.s32 %v6569, %v6572
        %vm6574 = vcmp.lt.s32.totalorder %v6573, 0
        %v6575 = vsub.s32 0, %v6573
        %v6576 = vsel %vm6574, %v6575, %v6573
        %v6577 = vclz %v6576
        %v6578 = vsub.s32 %v6577, 2
        %vm6579 = vcmp.gt.s32.totalorder 0, %v6578
        %v6580 = vsel %vm6579, 0, %v6578
        %v6581 = vsub.s32 32, %v6580
        %v6582 = vshll.u32 %v6573, %v6580
        %v6583 = vshrl.u32 %v6565, %v6581
        %v6584 = vor.u32 %v6582, %v6583
        %v6585 = vsub.s32 4294967266, %v6580
        %v6586 = vadd.s32 %v6585, 127
        %v6587 = vshll.u32 %v6586, 23
        %v6588 = vor.u32 4788187, %v6587
        %v6589 = vand.u32 2147483647, %v6588
        %v6591 = vcvt.s32.f32 %v6584
        %v6592 = vmul.f32 %v6591, %v6589
        %v6593 = vxor.u32 %v6592, 2147483648
        %v6594 = vsel %vm6511, %v6593, %v6592
        %v6595 = vsub.s32 4, %v6571
        %v6596 = vsel %vm6511, %v6595, %v6571
        %v6597 = vsel %vm6510, %v1955, %v6594
        %v6598 = vsel %vm6510, 0, %v6596
        %v6599 = vcosq.f32.pop %v6597
        %v6600 = vsinq.f32.pop %v6597
        %vm6601 = vweird.f32 %v1955
        %v6602 = vand.u32 %v6598, 3
        %vm6603 = vcmp.lt.s32.totalorder %v6602, 2
        %vm6604 = vcmp.eq.s32.totalorder %v6602, 0
        %v6605 = vxor.u32 %v6600, 2147483648
        %v6606 = vsel %vm6604, %v6599, %v6605
        %vm6607 = vcmp.eq.s32.totalorder %v6602, 2
        %v6608 = vxor.u32 %v6599, 2147483648
        %v6609 = vsel %vm6607, %v6608, %v6600
        %v6610 = vsel %vm6603, %v6606, %v6609
        %v6611 = vsel %vm6601, nan, %v6610
        %v6612 = vand.u32 2147483647, %v1961
        %vm6613 = vcmp.le.f32.partialorder %v6612, 0.7853982
        %vm6614 = vcmp.lt.s32.totalorder %v1961, 0
        %v6615 = vand.u32 %v1961, 2139095040
        %v6616 = vshrl.u32 %v6615, 23
        %v6617 = vsub.s32 %v6616, 127
        %v6618 = vand.u32 2147483647, %v1961
        %v6619 = vand.u32 %v6618, 8388607
        %v6620 = vor.u32 %v6619, 8388608
        %v6621 = vsub.s32 0, %v6620
        %v6622 = vadd.s32 %v6617, 1
        %vm6623 = vcmp.gt.s32.totalorder %v6622, 0
        %v6624 = vsel %vm6623, %v6622, 0
        %v6625 = vshrl.u32 %v6624, 5
        %v6626 = vand.u32 %v6624, 31
        %v6627 = vsub.s32 32, %v6626
        %v6628 = vshrl.u32 683565275, %v6627
        %v6629 = vshll.u32 683565275, %v6626
        %v6630 = vshrl.u32 2475754826, %v6627
        %v6631 = vor.u32 %v6629, %v6630
        %v6632 = vshll.u32 2475754826, %v6626
        %v6633 = vshrl.u32 2131351028, %v6627
        %v6634 = vor.u32 %v6632, %v6633
        %v6635 = vshll.u32 2131351028, %v6626
        %v6636 = vshrl.u32 2102212464, %v6627
        %v6637 = vor.u32 %v6635, %v6636
        %v6638 = vshll.u32 2102212464, %v6626
        %v6639 = vshrl.u32 920167782, %v6627
        %v6640 = vor.u32 %v6638, %v6639
        %v6641 = vshll.u32 920167782, %v6626
        %v6642 = vshrl.u32 1326507024, %v6627
        %v6643 = vor.u32 %v6641, %v6642
        %vm6644 = vcmp.lt.s32.totalorder %v6625, 1
        %vm6645 = vcmp.lt.s32.totalorder %v6625, 2
        %vm6646 = vcmp.lt.s32.totalorder %v6625, 3
        %vm6647 = vcmp.lt.s32.totalorder %v6625, 4
        %v6648 = vsel %vm6644, %v6628, %v6631
        %v6649 = vsel %vm6647, %v6637, 2102212464
        %v6650 = vsel %vm6646, %v6634, %v6649
        %v6651 = vsel %vm6645, %v6648, %v6650
        %v6652 = vsel %vm6644, %v6631, %v6634
        %v6653 = vsel %vm6647, %v6640, 920167782
        %v6654 = vsel %vm6646, %v6637, %v6653
        %v6655 = vsel %vm6645, %v6652, %v6654
        %v6656 = vsel %vm6644, %v6634, %v6637
        %v6657 = vsel %vm6647, %v6643, 1326507024
        %v6658 = vsel %vm6646, %v6640, %v6657
        %v6659 = vsel %vm6645, %v6656, %v6658
        %v6660 = vshll.u32 %v6620, 8
        %v6661 = vmul.u32.u64.compose %v6660, %v6659
        %v6662 = vextract.low.u32 %v6661
        %v6663 = vextract.high.u32 %v6661
        %v6664 = vmul.u32.u64.compose %v6660, %v6655
        %v6665 = vextract.low.u32 %v6664
        %v6666 = vextract.high.u32 %v6664
        %v6667 = vmul.u32 %v6660, %v6651
        %v6668 = vadd.s32 %v6663, %v6665
        %vm6669 = vc.u32 %v6663, %v6665
        %v6670 = vadd.s32 %v6666, 1
        %v6671 = vsel %vm6669, %v6670, %v6666
        %v6672 = vadd.s32 %v6667, %v6671
        %v6673 = vadd.s32 %v6672, 536870912
        %v6674 = vshrl.u32 %v6673, 30
        %v6675 = vshll.u32 %v6674, 30
        %v6676 = vsub.s32 %v6672, %v6675
        %vm6677 = vcmp.lt.s32.totalorder %v6676, 0
        %v6678 = vsub.s32 0, %v6676
        %v6679 = vsel %vm6677, %v6678, %v6676
        %v6680 = vclz %v6679
        %v6681 = vsub.s32 %v6680, 2
        %vm6682 = vcmp.gt.s32.totalorder 0, %v6681
        %v6683 = vsel %vm6682, 0, %v6681
        %v6684 = vsub.s32 32, %v6683
        %v6685 = vshll.u32 %v6676, %v6683
        %v6686 = vshrl.u32 %v6668, %v6684
        %v6687 = vor.u32 %v6685, %v6686
        %v6688 = vsub.s32 4294967266, %v6683
        %v6689 = vadd.s32 %v6688, 127
        %v6690 = vshll.u32 %v6689, 23
        %v6691 = vor.u32 4788187, %v6690
        %v6692 = vand.u32 2147483647, %v6691
        %v6694 = vcvt.s32.f32 %v6687
        %v6695 = vmul.f32 %v6694, %v6692
        %v6696 = vxor.u32 %v6695, 2147483648
        %v6697 = vsel %vm6614, %v6696, %v6695
        %v6698 = vsub.s32 4, %v6674
        %v6699 = vsel %vm6614, %v6698, %v6674
        %v6700 = vsel %vm6613, %v1961, %v6697
        %v6701 = vsel %vm6613, 0, %v6699
        %v6702 = vcosq.f32.pop %v6700
        %v6703 = vsinq.f32.pop %v6700
        %vm6704 = vweird.f32 %v1961
        %v6705 = vand.u32 %v6701, 3
        %vm6706 = vcmp.lt.s32.totalorder %v6705, 2
        %vm6707 = vcmp.eq.s32.totalorder %v6705, 0
        %v6708 = vxor.u32 %v6703, 2147483648
        %v6709 = vsel %vm6707, %v6702, %v6708
        %vm6710 = vcmp.eq.s32.totalorder %v6705, 2
        %v6711 = vxor.u32 %v6702, 2147483648
        %v6712 = vsel %vm6710, %v6711, %v6703
        %v6713 = vsel %vm6706, %v6709, %v6712
        %v6714 = vsel %vm6704, nan, %v6713
        %v6715 = vand.u32 2147483647, %v1967
        %vm6716 = vcmp.le.f32.partialorder %v6715, 0.7853982
        %vm6717 = vcmp.lt.s32.totalorder %v1967, 0
        %v6718 = vand.u32 %v1967, 2139095040
        %v6719 = vshrl.u32 %v6718, 23
        %v6720 = vsub.s32 %v6719, 127
        %v6721 = vand.u32 2147483647, %v1967
        %v6722 = vand.u32 %v6721, 8388607
        %v6723 = vor.u32 %v6722, 8388608
        %v6724 = vsub.s32 0, %v6723
        %v6725 = vadd.s32 %v6720, 1
        %vm6726 = vcmp.gt.s32.totalorder %v6725, 0
        %v6727 = vsel %vm6726, %v6725, 0
        %v6728 = vshrl.u32 %v6727, 5
        %v6729 = vand.u32 %v6727, 31
        %v6730 = vsub.s32 32, %v6729
        %v6731 = vshrl.u32 683565275, %v6730
        %v6732 = vshll.u32 683565275, %v6729
        %v6733 = vshrl.u32 2475754826, %v6730
        %v6734 = vor.u32 %v6732, %v6733
        %v6735 = vshll.u32 2475754826, %v6729
        %v6736 = vshrl.u32 2131351028, %v6730
        %v6737 = vor.u32 %v6735, %v6736
        %v6738 = vshll.u32 2131351028, %v6729
        %v6739 = vshrl.u32 2102212464, %v6730
        %v6740 = vor.u32 %v6738, %v6739
        %v6741 = vshll.u32 2102212464, %v6729
        %v6742 = vshrl.u32 920167782, %v6730
        %v6743 = vor.u32 %v6741, %v6742
        %v6744 = vshll.u32 920167782, %v6729
        %v6745 = vshrl.u32 1326507024, %v6730
        %v6746 = vor.u32 %v6744, %v6745
        %vm6747 = vcmp.lt.s32.totalorder %v6728, 1
        %vm6748 = vcmp.lt.s32.totalorder %v6728, 2
        %vm6749 = vcmp.lt.s32.totalorder %v6728, 3
        %vm6750 = vcmp.lt.s32.totalorder %v6728, 4
        %v6751 = vsel %vm6747, %v6731, %v6734
        %v6752 = vsel %vm6750, %v6740, 2102212464
        %v6753 = vsel %vm6749, %v6737, %v6752
        %v6754 = vsel %vm6748, %v6751, %v6753
        %v6755 = vsel %vm6747, %v6734, %v6737
        %v6756 = vsel %vm6750, %v6743, 920167782
        %v6757 = vsel %vm6749, %v6740, %v6756
        %v6758 = vsel %vm6748, %v6755, %v6757
        %v6759 = vsel %vm6747, %v6737, %v6740
        %v6760 = vsel %vm6750, %v6746, 1326507024
        %v6761 = vsel %vm6749, %v6743, %v6760
        %v6762 = vsel %vm6748, %v6759, %v6761
        %v6763 = vshll.u32 %v6723, 8
        %v6764 = vmul.u32.u64.compose %v6763, %v6762
        %v6765 = vextract.low.u32 %v6764
        %v6766 = vextract.high.u32 %v6764
        %v6767 = vmul.u32.u64.compose %v6763, %v6758
        %v6768 = vextract.low.u32 %v6767
        %v6769 = vextract.high.u32 %v6767
        %v6770 = vmul.u32 %v6763, %v6754
        %v6771 = vadd.s32 %v6766, %v6768
        %vm6772 = vc.u32 %v6766, %v6768
        %v6773 = vadd.s32 %v6769, 1
        %v6774 = vsel %vm6772, %v6773, %v6769
        %v6775 = vadd.s32 %v6770, %v6774
        %v6776 = vadd.s32 %v6775, 536870912
        %v6777 = vshrl.u32 %v6776, 30
        %v6778 = vshll.u32 %v6777, 30
        %v6779 = vsub.s32 %v6775, %v6778
        %vm6780 = vcmp.lt.s32.totalorder %v6779, 0
        %v6781 = vsub.s32 0, %v6779
        %v6782 = vsel %vm6780, %v6781, %v6779
        %v6783 = vclz %v6782
        %v6784 = vsub.s32 %v6783, 2
        %vm6785 = vcmp.gt.s32.totalorder 0, %v6784
        %v6786 = vsel %vm6785, 0, %v6784
        %v6787 = vsub.s32 32, %v6786
        %v6788 = vshll.u32 %v6779, %v6786
        %v6789 = vshrl.u32 %v6771, %v6787
        %v6790 = vor.u32 %v6788, %v6789
        %v6791 = vsub.s32 4294967266, %v6786
        %v6792 = vadd.s32 %v6791, 127
        %v6793 = vshll.u32 %v6792, 23
        %v6794 = vor.u32 4788187, %v6793
        %v6795 = vand.u32 2147483647, %v6794
        %v6797 = vcvt.s32.f32 %v6790
        %v6798 = vmul.f32 %v6797, %v6795
        %v6799 = vxor.u32 %v6798, 2147483648
        %v6800 = vsel %vm6717, %v6799, %v6798
        %v6801 = vsub.s32 4, %v6777
        %v6802 = vsel %vm6717, %v6801, %v6777
        %v6803 = vsel %vm6716, %v1967, %v6800
        %v6804 = vsel %vm6716, 0, %v6802
        %v6805 = vcosq.f32.pop %v6803
        %v6806 = vsinq.f32.pop %v6803
        %vm6807 = vweird.f32 %v1967
        %v6808 = vand.u32 %v6804, 3
        %vm6809 = vcmp.lt.s32.totalorder %v6808, 2
        %vm6810 = vcmp.eq.s32.totalorder %v6808, 0
        %v6811 = vxor.u32 %v6806, 2147483648
        %v6812 = vsel %vm6810, %v6805, %v6811
        %vm6813 = vcmp.eq.s32.totalorder %v6808, 2
        %v6814 = vxor.u32 %v6805, 2147483648
        %v6815 = vsel %vm6813, %v6814, %v6806
        %v6816 = vsel %vm6809, %v6812, %v6815
        %v6817 = vsel %vm6807, nan, %v6816
        %v6818 = vand.u32 2147483647, %v1973
        %vm6819 = vcmp.le.f32.partialorder %v6818, 0.7853982
        %vm6820 = vcmp.lt.s32.totalorder %v1973, 0
        %v6821 = vand.u32 %v1973, 2139095040
        %v6822 = vshrl.u32 %v6821, 23
        %v6823 = vsub.s32 %v6822, 127
        %v6824 = vand.u32 2147483647, %v1973
        %v6825 = vand.u32 %v6824, 8388607
        %v6826 = vor.u32 %v6825, 8388608
        %v6827 = vsub.s32 0, %v6826
        %v6828 = vadd.s32 %v6823, 1
        %vm6829 = vcmp.gt.s32.totalorder %v6828, 0
        %v6830 = vsel %vm6829, %v6828, 0
        %v6831 = vshrl.u32 %v6830, 5
        %v6832 = vand.u32 %v6830, 31
        %v6833 = vsub.s32 32, %v6832
        %v6834 = vshrl.u32 683565275, %v6833
        %v6835 = vshll.u32 683565275, %v6832
        %v6836 = vshrl.u32 2475754826, %v6833
        %v6837 = vor.u32 %v6835, %v6836
        %v6838 = vshll.u32 2475754826, %v6832
        %v6839 = vshrl.u32 2131351028, %v6833
        %v6840 = vor.u32 %v6838, %v6839
        %v6841 = vshll.u32 2131351028, %v6832
        %v6842 = vshrl.u32 2102212464, %v6833
        %v6843 = vor.u32 %v6841, %v6842
        %v6844 = vshll.u32 2102212464, %v6832
        %v6845 = vshrl.u32 920167782, %v6833
        %v6846 = vor.u32 %v6844, %v6845
        %v6847 = vshll.u32 920167782, %v6832
        %v6848 = vshrl.u32 1326507024, %v6833
        %v6849 = vor.u32 %v6847, %v6848
        %vm6850 = vcmp.lt.s32.totalorder %v6831, 1
        %vm6851 = vcmp.lt.s32.totalorder %v6831, 2
        %vm6852 = vcmp.lt.s32.totalorder %v6831, 3
        %vm6853 = vcmp.lt.s32.totalorder %v6831, 4
        %v6854 = vsel %vm6850, %v6834, %v6837
        %v6855 = vsel %vm6853, %v6843, 2102212464
        %v6856 = vsel %vm6852, %v6840, %v6855
        %v6857 = vsel %vm6851, %v6854, %v6856
        %v6858 = vsel %vm6850, %v6837, %v6840
        %v6859 = vsel %vm6853, %v6846, 920167782
        %v6860 = vsel %vm6852, %v6843, %v6859
        %v6861 = vsel %vm6851, %v6858, %v6860
        %v6862 = vsel %vm6850, %v6840, %v6843
        %v6863 = vsel %vm6853, %v6849, 1326507024
        %v6864 = vsel %vm6852, %v6846, %v6863
        %v6865 = vsel %vm6851, %v6862, %v6864
        %v6866 = vshll.u32 %v6826, 8
        %v6867 = vmul.u32.u64.compose %v6866, %v6865
        %v6868 = vextract.low.u32 %v6867
        %v6869 = vextract.high.u32 %v6867
        %v6870 = vmul.u32.u64.compose %v6866, %v6861
        %v6871 = vextract.low.u32 %v6870
        %v6872 = vextract.high.u32 %v6870
        %v6873 = vmul.u32 %v6866, %v6857
        %v6874 = vadd.s32 %v6869, %v6871
        %vm6875 = vc.u32 %v6869, %v6871
        %v6876 = vadd.s32 %v6872, 1
        %v6877 = vsel %vm6875, %v6876, %v6872
        %v6878 = vadd.s32 %v6873, %v6877
        %v6879 = vadd.s32 %v6878, 536870912
        %v6880 = vshrl.u32 %v6879, 30
        %v6881 = vshll.u32 %v6880, 30
        %v6882 = vsub.s32 %v6878, %v6881
        %vm6883 = vcmp.lt.s32.totalorder %v6882, 0
        %v6884 = vsub.s32 0, %v6882
        %v6885 = vsel %vm6883, %v6884, %v6882
        %v6886 = vclz %v6885
        %v6887 = vsub.s32 %v6886, 2
        %vm6888 = vcmp.gt.s32.totalorder 0, %v6887
        %v6889 = vsel %vm6888, 0, %v6887
        %v6890 = vsub.s32 32, %v6889
        %v6891 = vshll.u32 %v6882, %v6889
        %v6892 = vshrl.u32 %v6874, %v6890
        %v6893 = vor.u32 %v6891, %v6892
        %v6894 = vsub.s32 4294967266, %v6889
        %v6895 = vadd.s32 %v6894, 127
        %v6896 = vshll.u32 %v6895, 23
        %v6897 = vor.u32 4788187, %v6896
        %v6898 = vand.u32 2147483647, %v6897
        %v6900 = vcvt.s32.f32 %v6893
        %v6901 = vmul.f32 %v6900, %v6898
        %v6902 = vxor.u32 %v6901, 2147483648
        %v6903 = vsel %vm6820, %v6902, %v6901
        %v6904 = vsub.s32 4, %v6880
        %v6905 = vsel %vm6820, %v6904, %v6880
        %v6906 = vsel %vm6819, %v1973, %v6903
        %v6907 = vsel %vm6819, 0, %v6905
        %v6908 = vcosq.f32.pop %v6906
        %v6909 = vsinq.f32.pop %v6906
        %vm6910 = vweird.f32 %v1973
        %v6911 = vand.u32 %v6907, 3
        %vm6912 = vcmp.lt.s32.totalorder %v6911, 2
        %vm6913 = vcmp.eq.s32.totalorder %v6911, 0
        %v6914 = vxor.u32 %v6909, 2147483648
        %v6915 = vsel %vm6913, %v6908, %v6914
        %vm6916 = vcmp.eq.s32.totalorder %v6911, 2
        %v6917 = vxor.u32 %v6908, 2147483648
        %v6918 = vsel %vm6916, %v6917, %v6909
        %v6919 = vsel %vm6912, %v6915, %v6918
        %v6920 = vsel %vm6910, nan, %v6919
        %v6921 = vand.u32 2147483647, %v1979
        %vm6922 = vcmp.le.f32.partialorder %v6921, 0.7853982
        %vm6923 = vcmp.lt.s32.totalorder %v1979, 0
        %v6924 = vand.u32 %v1979, 2139095040
        %v6925 = vshrl.u32 %v6924, 23
        %v6926 = vsub.s32 %v6925, 127
        %v6927 = vand.u32 2147483647, %v1979
        %v6928 = vand.u32 %v6927, 8388607
        %v6929 = vor.u32 %v6928, 8388608
        %v6930 = vsub.s32 0, %v6929
        %v6931 = vadd.s32 %v6926, 1
        %vm6932 = vcmp.gt.s32.totalorder %v6931, 0
        %v6933 = vsel %vm6932, %v6931, 0
        %v6934 = vshrl.u32 %v6933, 5
        %v6935 = vand.u32 %v6933, 31
        %v6936 = vsub.s32 32, %v6935
        %v6937 = vshrl.u32 683565275, %v6936
        %v6938 = vshll.u32 683565275, %v6935
        %v6939 = vshrl.u32 2475754826, %v6936
        %v6940 = vor.u32 %v6938, %v6939
        %v6941 = vshll.u32 2475754826, %v6935
        %v6942 = vshrl.u32 2131351028, %v6936
        %v6943 = vor.u32 %v6941, %v6942
        %v6944 = vshll.u32 2131351028, %v6935
        %v6945 = vshrl.u32 2102212464, %v6936
        %v6946 = vor.u32 %v6944, %v6945
        %v6947 = vshll.u32 2102212464, %v6935
        %v6948 = vshrl.u32 920167782, %v6936
        %v6949 = vor.u32 %v6947, %v6948
        %v6950 = vshll.u32 920167782, %v6935
        %v6951 = vshrl.u32 1326507024, %v6936
        %v6952 = vor.u32 %v6950, %v6951
        %vm6953 = vcmp.lt.s32.totalorder %v6934, 1
        %vm6954 = vcmp.lt.s32.totalorder %v6934, 2
        %vm6955 = vcmp.lt.s32.totalorder %v6934, 3
        %vm6956 = vcmp.lt.s32.totalorder %v6934, 4
        %v6957 = vsel %vm6953, %v6937, %v6940
        %v6958 = vsel %vm6956, %v6946, 2102212464
        %v6959 = vsel %vm6955, %v6943, %v6958
        %v6960 = vsel %vm6954, %v6957, %v6959
        %v6961 = vsel %vm6953, %v6940, %v6943
        %v6962 = vsel %vm6956, %v6949, 920167782
        %v6963 = vsel %vm6955, %v6946, %v6962
        %v6964 = vsel %vm6954, %v6961, %v6963
        %v6965 = vsel %vm6953, %v6943, %v6946
        %v6966 = vsel %vm6956, %v6952, 1326507024
        %v6967 = vsel %vm6955, %v6949, %v6966
        %v6968 = vsel %vm6954, %v6965, %v6967
        %v6969 = vshll.u32 %v6929, 8
        %v6970 = vmul.u32.u64.compose %v6969, %v6968
        %v6971 = vextract.low.u32 %v6970
        %v6972 = vextract.high.u32 %v6970
        %v6973 = vmul.u32.u64.compose %v6969, %v6964
        %v6974 = vextract.low.u32 %v6973
        %v6975 = vextract.high.u32 %v6973
        %v6976 = vmul.u32 %v6969, %v6960
        %v6977 = vadd.s32 %v6972, %v6974
        %vm6978 = vc.u32 %v6972, %v6974
        %v6979 = vadd.s32 %v6975, 1
        %v6980 = vsel %vm6978, %v6979, %v6975
        %v6981 = vadd.s32 %v6976, %v6980
        %v6982 = vadd.s32 %v6981, 536870912
        %v6983 = vshrl.u32 %v6982, 30
        %v6984 = vshll.u32 %v6983, 30
        %v6985 = vsub.s32 %v6981, %v6984
        %vm6986 = vcmp.lt.s32.totalorder %v6985, 0
        %v6987 = vsub.s32 0, %v6985
        %v6988 = vsel %vm6986, %v6987, %v6985
        %v6989 = vclz %v6988
        %v6990 = vsub.s32 %v6989, 2
        %vm6991 = vcmp.gt.s32.totalorder 0, %v6990
        %v6992 = vsel %vm6991, 0, %v6990
        %v6993 = vsub.s32 32, %v6992
        %v6994 = vshll.u32 %v6985, %v6992
        %v6995 = vshrl.u32 %v6977, %v6993
        %v6996 = vor.u32 %v6994, %v6995
        %v6997 = vsub.s32 4294967266, %v6992
        %v6998 = vadd.s32 %v6997, 127
        %v6999 = vshll.u32 %v6998, 23
        %v7000 = vor.u32 4788187, %v6999
        %v7001 = vand.u32 2147483647, %v7000
        %v7003 = vcvt.s32.f32 %v6996
        %v7004 = vmul.f32 %v7003, %v7001
        %v7005 = vxor.u32 %v7004, 2147483648
        %v7006 = vsel %vm6923, %v7005, %v7004
        %v7007 = vsub.s32 4, %v6983
        %v7008 = vsel %vm6923, %v7007, %v6983
        %v7009 = vsel %vm6922, %v1979, %v7006
        %v7010 = vsel %vm6922, 0, %v7008
        %v7011 = vcosq.f32.pop %v7009
        %v7012 = vsinq.f32.pop %v7009
        %vm7013 = vweird.f32 %v1979
        %v7014 = vand.u32 %v7010, 3
        %vm7015 = vcmp.lt.s32.totalorder %v7014, 2
        %vm7016 = vcmp.eq.s32.totalorder %v7014, 0
        %v7017 = vxor.u32 %v7012, 2147483648
        %v7018 = vsel %vm7016, %v7011, %v7017
        %vm7019 = vcmp.eq.s32.totalorder %v7014, 2
        %v7020 = vxor.u32 %v7011, 2147483648
        %v7021 = vsel %vm7019, %v7020, %v7012
        %v7022 = vsel %vm7015, %v7018, %v7021
        %v7023 = vsel %vm7013, nan, %v7022
        %v7024 = vand.u32 2147483647, %v1985
        %vm7025 = vcmp.le.f32.partialorder %v7024, 0.7853982
        %vm7026 = vcmp.lt.s32.totalorder %v1985, 0
        %v7027 = vand.u32 %v1985, 2139095040
        %v7028 = vshrl.u32 %v7027, 23
        %v7029 = vsub.s32 %v7028, 127
        %v7030 = vand.u32 2147483647, %v1985
        %v7031 = vand.u32 %v7030, 8388607
        %v7032 = vor.u32 %v7031, 8388608
        %v7033 = vsub.s32 0, %v7032
        %v7034 = vadd.s32 %v7029, 1
        %vm7035 = vcmp.gt.s32.totalorder %v7034, 0
        %v7036 = vsel %vm7035, %v7034, 0
        %v7037 = vshrl.u32 %v7036, 5
        %v7038 = vand.u32 %v7036, 31
        %v7039 = vsub.s32 32, %v7038
        %v7040 = vshrl.u32 683565275, %v7039
        %v7041 = vshll.u32 683565275, %v7038
        %v7042 = vshrl.u32 2475754826, %v7039
        %v7043 = vor.u32 %v7041, %v7042
        %v7044 = vshll.u32 2475754826, %v7038
        %v7045 = vshrl.u32 2131351028, %v7039
        %v7046 = vor.u32 %v7044, %v7045
        %v7047 = vshll.u32 2131351028, %v7038
        %v7048 = vshrl.u32 2102212464, %v7039
        %v7049 = vor.u32 %v7047, %v7048
        %v7050 = vshll.u32 2102212464, %v7038
        %v7051 = vshrl.u32 920167782, %v7039
        %v7052 = vor.u32 %v7050, %v7051
        %v7053 = vshll.u32 920167782, %v7038
        %v7054 = vshrl.u32 1326507024, %v7039
        %v7055 = vor.u32 %v7053, %v7054
        %vm7056 = vcmp.lt.s32.totalorder %v7037, 1
        %vm7057 = vcmp.lt.s32.totalorder %v7037, 2
        %vm7058 = vcmp.lt.s32.totalorder %v7037, 3
        %vm7059 = vcmp.lt.s32.totalorder %v7037, 4
        %v7060 = vsel %vm7056, %v7040, %v7043
        %v7061 = vsel %vm7059, %v7049, 2102212464
        %v7062 = vsel %vm7058, %v7046, %v7061
        %v7063 = vsel %vm7057, %v7060, %v7062
        %v7064 = vsel %vm7056, %v7043, %v7046
        %v7065 = vsel %vm7059, %v7052, 920167782
        %v7066 = vsel %vm7058, %v7049, %v7065
        %v7067 = vsel %vm7057, %v7064, %v7066
        %v7068 = vsel %vm7056, %v7046, %v7049
        %v7069 = vsel %vm7059, %v7055, 1326507024
        %v7070 = vsel %vm7058, %v7052, %v7069
        %v7071 = vsel %vm7057, %v7068, %v7070
        %v7072 = vshll.u32 %v7032, 8
        %v7073 = vmul.u32.u64.compose %v7072, %v7071
        %v7074 = vextract.low.u32 %v7073
        %v7075 = vextract.high.u32 %v7073
        %v7076 = vmul.u32.u64.compose %v7072, %v7067
        %v7077 = vextract.low.u32 %v7076
        %v7078 = vextract.high.u32 %v7076
        %v7079 = vmul.u32 %v7072, %v7063
        %v7080 = vadd.s32 %v7075, %v7077
        %vm7081 = vc.u32 %v7075, %v7077
        %v7082 = vadd.s32 %v7078, 1
        %v7083 = vsel %vm7081, %v7082, %v7078
        %v7084 = vadd.s32 %v7079, %v7083
        %v7085 = vadd.s32 %v7084, 536870912
        %v7086 = vshrl.u32 %v7085, 30
        %v7087 = vshll.u32 %v7086, 30
        %v7088 = vsub.s32 %v7084, %v7087
        %vm7089 = vcmp.lt.s32.totalorder %v7088, 0
        %v7090 = vsub.s32 0, %v7088
        %v7091 = vsel %vm7089, %v7090, %v7088
        %v7092 = vclz %v7091
        %v7093 = vsub.s32 %v7092, 2
        %vm7094 = vcmp.gt.s32.totalorder 0, %v7093
        %v7095 = vsel %vm7094, 0, %v7093
        %v7096 = vsub.s32 32, %v7095
        %v7097 = vshll.u32 %v7088, %v7095
        %v7098 = vshrl.u32 %v7080, %v7096
        %v7099 = vor.u32 %v7097, %v7098
        %v7100 = vsub.s32 4294967266, %v7095
        %v7101 = vadd.s32 %v7100, 127
        %v7102 = vshll.u32 %v7101, 23
        %v7103 = vor.u32 4788187, %v7102
        %v7104 = vand.u32 2147483647, %v7103
        %v7106 = vcvt.s32.f32 %v7099
        %v7107 = vmul.f32 %v7106, %v7104
        %v7108 = vxor.u32 %v7107, 2147483648
        %v7109 = vsel %vm7026, %v7108, %v7107
        %v7110 = vsub.s32 4, %v7086
        %v7111 = vsel %vm7026, %v7110, %v7086
        %v7112 = vsel %vm7025, %v1985, %v7109
        %v7113 = vsel %vm7025, 0, %v7111
        %v7114 = vcosq.f32.pop %v7112
        %v7115 = vsinq.f32.pop %v7112
        %vm7116 = vweird.f32 %v1985
        %v7117 = vand.u32 %v7113, 3
        %vm7118 = vcmp.lt.s32.totalorder %v7117, 2
        %vm7119 = vcmp.eq.s32.totalorder %v7117, 0
        %v7120 = vxor.u32 %v7115, 2147483648
        %v7121 = vsel %vm7119, %v7114, %v7120
        %vm7122 = vcmp.eq.s32.totalorder %v7117, 2
        %v7123 = vxor.u32 %v7114, 2147483648
        %v7124 = vsel %vm7122, %v7123, %v7115
        %v7125 = vsel %vm7118, %v7121, %v7124
        %v7126 = vsel %vm7116, nan, %v7125
        %v7127 = vand.u32 2147483647, %v1991
        %vm7128 = vcmp.le.f32.partialorder %v7127, 0.7853982
        %vm7129 = vcmp.lt.s32.totalorder %v1991, 0
        %v7130 = vand.u32 %v1991, 2139095040
        %v7131 = vshrl.u32 %v7130, 23
        %v7132 = vsub.s32 %v7131, 127
        %v7133 = vand.u32 2147483647, %v1991
        %v7134 = vand.u32 %v7133, 8388607
        %v7135 = vor.u32 %v7134, 8388608
        %v7136 = vsub.s32 0, %v7135
        %v7137 = vadd.s32 %v7132, 1
        %vm7138 = vcmp.gt.s32.totalorder %v7137, 0
        %v7139 = vsel %vm7138, %v7137, 0
        %v7140 = vshrl.u32 %v7139, 5
        %v7141 = vand.u32 %v7139, 31
        %v7142 = vsub.s32 32, %v7141
        %v7143 = vshrl.u32 683565275, %v7142
        %v7144 = vshll.u32 683565275, %v7141
        %v7145 = vshrl.u32 2475754826, %v7142
        %v7146 = vor.u32 %v7144, %v7145
        %v7147 = vshll.u32 2475754826, %v7141
        %v7148 = vshrl.u32 2131351028, %v7142
        %v7149 = vor.u32 %v7147, %v7148
        %v7150 = vshll.u32 2131351028, %v7141
        %v7151 = vshrl.u32 2102212464, %v7142
        %v7152 = vor.u32 %v7150, %v7151
        %v7153 = vshll.u32 2102212464, %v7141
        %v7154 = vshrl.u32 920167782, %v7142
        %v7155 = vor.u32 %v7153, %v7154
        %v7156 = vshll.u32 920167782, %v7141
        %v7157 = vshrl.u32 1326507024, %v7142
        %v7158 = vor.u32 %v7156, %v7157
        %vm7159 = vcmp.lt.s32.totalorder %v7140, 1
        %vm7160 = vcmp.lt.s32.totalorder %v7140, 2
        %vm7161 = vcmp.lt.s32.totalorder %v7140, 3
        %vm7162 = vcmp.lt.s32.totalorder %v7140, 4
        %v7163 = vsel %vm7159, %v7143, %v7146
        %v7164 = vsel %vm7162, %v7152, 2102212464
        %v7165 = vsel %vm7161, %v7149, %v7164
        %v7166 = vsel %vm7160, %v7163, %v7165
        %v7167 = vsel %vm7159, %v7146, %v7149
        %v7168 = vsel %vm7162, %v7155, 920167782
        %v7169 = vsel %vm7161, %v7152, %v7168
        %v7170 = vsel %vm7160, %v7167, %v7169
        %v7171 = vsel %vm7159, %v7149, %v7152
        %v7172 = vsel %vm7162, %v7158, 1326507024
        %v7173 = vsel %vm7161, %v7155, %v7172
        %v7174 = vsel %vm7160, %v7171, %v7173
        %v7175 = vshll.u32 %v7135, 8
        %v7176 = vmul.u32.u64.compose %v7175, %v7174
        %v7177 = vextract.low.u32 %v7176
        %v7178 = vextract.high.u32 %v7176
        %v7179 = vmul.u32.u64.compose %v7175, %v7170
        %v7180 = vextract.low.u32 %v7179
        %v7181 = vextract.high.u32 %v7179
        %v7182 = vmul.u32 %v7175, %v7166
        %v7183 = vadd.s32 %v7178, %v7180
        %vm7184 = vc.u32 %v7178, %v7180
        %v7185 = vadd.s32 %v7181, 1
        %v7186 = vsel %vm7184, %v7185, %v7181
        %v7187 = vadd.s32 %v7182, %v7186
        %v7188 = vadd.s32 %v7187, 536870912
        %v7189 = vshrl.u32 %v7188, 30
        %v7190 = vshll.u32 %v7189, 30
        %v7191 = vsub.s32 %v7187, %v7190
        %vm7192 = vcmp.lt.s32.totalorder %v7191, 0
        %v7193 = vsub.s32 0, %v7191
        %v7194 = vsel %vm7192, %v7193, %v7191
        %v7195 = vclz %v7194
        %v7196 = vsub.s32 %v7195, 2
        %vm7197 = vcmp.gt.s32.totalorder 0, %v7196
        %v7198 = vsel %vm7197, 0, %v7196
        %v7199 = vsub.s32 32, %v7198
        %v7200 = vshll.u32 %v7191, %v7198
        %v7201 = vshrl.u32 %v7183, %v7199
        %v7202 = vor.u32 %v7200, %v7201
        %v7203 = vsub.s32 4294967266, %v7198
        %v7204 = vadd.s32 %v7203, 127
        %v7205 = vshll.u32 %v7204, 23
        %v7206 = vor.u32 4788187, %v7205
        %v7207 = vand.u32 2147483647, %v7206
        %v7209 = vcvt.s32.f32 %v7202
        %v7210 = vmul.f32 %v7209, %v7207
        %v7211 = vxor.u32 %v7210, 2147483648
        %v7212 = vsel %vm7129, %v7211, %v7210
        %v7213 = vsub.s32 4, %v7189
        %v7214 = vsel %vm7129, %v7213, %v7189
        %v7215 = vsel %vm7128, %v1991, %v7212
        %v7216 = vsel %vm7128, 0, %v7214
        %v7217 = vcosq.f32.pop %v7215
        %v7218 = vsinq.f32.pop %v7215
        %vm7219 = vweird.f32 %v1991
        %v7220 = vand.u32 %v7216, 3
        %vm7221 = vcmp.lt.s32.totalorder %v7220, 2
        %vm7222 = vcmp.eq.s32.totalorder %v7220, 0
        %v7223 = vxor.u32 %v7218, 2147483648
        %v7224 = vsel %vm7222, %v7217, %v7223
        %vm7225 = vcmp.eq.s32.totalorder %v7220, 2
        %v7226 = vxor.u32 %v7217, 2147483648
        %v7227 = vsel %vm7225, %v7226, %v7218
        %v7228 = vsel %vm7221, %v7224, %v7227
        %v7229 = vsel %vm7219, nan, %v7228
        %v7230 = vstv %s1748
        %v7231 = vmul.f32 %v7230, %v5684
        %v7232 = vmul.f32 %v7230, %v5787
        %v7233 = vmul.f32 %v7230, %v5890
        %v7234 = vmul.f32 %v7230, %v5993
        %v7235 = vmul.f32 %v7230, %v6096
        %v7236 = vmul.f32 %v7230, %v6199
        %v7237 = vmul.f32 %v7230, %v6302
        %v7238 = vmul.f32 %v7230, %v6405
        %v7239 = vmul.f32 %v7230, %v6508
        %v7240 = vmul.f32 %v7230, %v6611
        %v7241 = vmul.f32 %v7230, %v6714
        %v7242 = vmul.f32 %v7230, %v6817
        %v7243 = vmul.f32 %v7230, %v6920
        %v7244 = vmul.f32 %v7230, %v7023
        %v7245 = vmul.f32 %v7230, %v7126
        %v7246 = vmul.f32 %v7230, %v7229
        %7247 = vst [vmem:[%s436 + $0x10] sm:$0xff] %v7231
        %7248 = vst [vmem:[%s436 + $0x30] sm:$0xff] %v7232
        %7249 = vst [vmem:[%s436 + $0x50] sm:$0xff] %v7233
        %7250 = vst [vmem:[%s436 + $0x70] sm:$0xff] %v7234
        %7251 = vst [vmem:[%s436 + $0x90] sm:$0xff] %v7235
        %7252 = vst [vmem:[%s436 + $0xb0] sm:$0xff] %v7236
        %7253 = vst [vmem:[%s436 + $0xd0] sm:$0xff] %v7237
        %7254 = vst [vmem:[%s436 + $0xf0] sm:$0xff] %v7238
        %7255 = vst [vmem:[%s436 + $0x110] sm:$0xff] %v7239
        %7256 = vst [vmem:[%s436 + $0x130] sm:$0xff] %v7240
        %7257 = vst [vmem:[%s436 + $0x150] sm:$0xff] %v7241
        %7258 = vst [vmem:[%s436 + $0x170] sm:$0xff] %v7242
        %7259 = vst [vmem:[%s436 + $0x190] sm:$0xff] %v7243
        %7260 = vst [vmem:[%s436 + $0x1b0] sm:$0xff] %v7244
        %7261 = vst [vmem:[%s436 + $0x1d0] sm:$0xff] %v7245
        %7262 = vst [vmem:[%s436 + $0x1f0] sm:$0xff] %v7246
        %v7263 = vand.u32 2147483647, %v1901
        %vm7264 = vcmp.le.f32.partialorder %v7263, 0.7853982
        %vm7265 = vcmp.lt.s32.totalorder %v1901, 0
        %v7266 = vand.u32 %v1901, 2139095040
        %v7267 = vshrl.u32 %v7266, 23
        %v7268 = vsub.s32 %v7267, 127
        %v7269 = vand.u32 2147483647, %v1901
        %v7270 = vand.u32 %v7269, 8388607
        %v7271 = vor.u32 %v7270, 8388608
        %v7272 = vsub.s32 0, %v7271
        %v7273 = vadd.s32 %v7268, 1
        %vm7274 = vcmp.gt.s32.totalorder %v7273, 0
        %v7275 = vsel %vm7274, %v7273, 0
        %v7276 = vshrl.u32 %v7275, 5
        %v7277 = vand.u32 %v7275, 31
        %v7278 = vsub.s32 32, %v7277
        %v7279 = vshrl.u32 683565275, %v7278
        %v7280 = vshll.u32 683565275, %v7277
        %v7281 = vshrl.u32 2475754826, %v7278
        %v7282 = vor.u32 %v7280, %v7281
        %v7283 = vshll.u32 2475754826, %v7277
        %v7284 = vshrl.u32 2131351028, %v7278
        %v7285 = vor.u32 %v7283, %v7284
        %v7286 = vshll.u32 2131351028, %v7277
        %v7287 = vshrl.u32 2102212464, %v7278
        %v7288 = vor.u32 %v7286, %v7287
        %v7289 = vshll.u32 2102212464, %v7277
        %v7290 = vshrl.u32 920167782, %v7278
        %v7291 = vor.u32 %v7289, %v7290
        %v7292 = vshll.u32 920167782, %v7277
        %v7293 = vshrl.u32 1326507024, %v7278
        %v7294 = vor.u32 %v7292, %v7293
        %vm7295 = vcmp.lt.s32.totalorder %v7276, 1
        %vm7296 = vcmp.lt.s32.totalorder %v7276, 2
        %vm7297 = vcmp.lt.s32.totalorder %v7276, 3
        %vm7298 = vcmp.lt.s32.totalorder %v7276, 4
        %v7299 = vsel %vm7295, %v7279, %v7282
        %v7300 = vsel %vm7298, %v7288, 2102212464
        %v7301 = vsel %vm7297, %v7285, %v7300
        %v7302 = vsel %vm7296, %v7299, %v7301
        %v7303 = vsel %vm7295, %v7282, %v7285
        %v7304 = vsel %vm7298, %v7291, 920167782
        %v7305 = vsel %vm7297, %v7288, %v7304
        %v7306 = vsel %vm7296, %v7303, %v7305
        %v7307 = vsel %vm7295, %v7285, %v7288
        %v7308 = vsel %vm7298, %v7294, 1326507024
        %v7309 = vsel %vm7297, %v7291, %v7308
        %v7310 = vsel %vm7296, %v7307, %v7309
        %v7311 = vshll.u32 %v7271, 8
        %v7312 = vmul.u32.u64.compose %v7311, %v7310
        %v7313 = vextract.low.u32 %v7312
        %v7314 = vextract.high.u32 %v7312
        %v7315 = vmul.u32.u64.compose %v7311, %v7306
        %v7316 = vextract.low.u32 %v7315
        %v7317 = vextract.high.u32 %v7315
        %v7318 = vmul.u32 %v7311, %v7302
        %v7319 = vadd.s32 %v7314, %v7316
        %vm7320 = vc.u32 %v7314, %v7316
        %v7321 = vadd.s32 %v7317, 1
        %v7322 = vsel %vm7320, %v7321, %v7317
        %v7323 = vadd.s32 %v7318, %v7322
        %v7324 = vadd.s32 %v7323, 536870912
        %v7325 = vshrl.u32 %v7324, 30
        %v7326 = vshll.u32 %v7325, 30
        %v7327 = vsub.s32 %v7323, %v7326
        %vm7328 = vcmp.lt.s32.totalorder %v7327, 0
        %v7329 = vsub.s32 0, %v7327
        %v7330 = vsel %vm7328, %v7329, %v7327
        %v7331 = vclz %v7330
        %v7332 = vsub.s32 %v7331, 2
        %vm7333 = vcmp.gt.s32.totalorder 0, %v7332
        %v7334 = vsel %vm7333, 0, %v7332
        %v7335 = vsub.s32 32, %v7334
        %v7336 = vshll.u32 %v7327, %v7334
        %v7337 = vshrl.u32 %v7319, %v7335
        %v7338 = vor.u32 %v7336, %v7337
        %v7339 = vsub.s32 4294967266, %v7334
        %v7340 = vadd.s32 %v7339, 127
        %v7341 = vshll.u32 %v7340, 23
        %v7342 = vor.u32 4788187, %v7341
        %v7343 = vand.u32 2147483647, %v7342
        %v7345 = vcvt.s32.f32 %v7338
        %v7346 = vmul.f32 %v7345, %v7343
        %v7347 = vxor.u32 %v7346, 2147483648
        %v7348 = vsel %vm7265, %v7347, %v7346
        %v7349 = vsub.s32 4, %v7325
        %v7350 = vsel %vm7265, %v7349, %v7325
        %v7351 = vsel %vm7264, %v1901, %v7348
        %v7352 = vsel %vm7264, 0, %v7350
        %v7353 = vcosq.f32.pop %v7351
        %v7354 = vsinq.f32.pop %v7351
        %vm7355 = vweird.f32 %v1901
        %v7356 = vadd.s32 %v7352, 3
        %v7357 = vand.u32 %v7356, 3
        %vm7358 = vcmp.lt.s32.totalorder %v7357, 2
        %vm7359 = vcmp.eq.s32.totalorder %v7357, 0
        %v7360 = vxor.u32 %v7354, 2147483648
        %v7361 = vsel %vm7359, %v7353, %v7360
        %vm7362 = vcmp.eq.s32.totalorder %v7357, 2
        %v7363 = vxor.u32 %v7353, 2147483648
        %v7364 = vsel %vm7362, %v7363, %v7354
        %v7365 = vsel %vm7358, %v7361, %v7364
        %v7366 = vsel %vm7355, nan, %v7365
        %v7367 = vand.u32 2147483647, %v1907
        %vm7368 = vcmp.le.f32.partialorder %v7367, 0.7853982
        %vm7369 = vcmp.lt.s32.totalorder %v1907, 0
        %v7370 = vand.u32 %v1907, 2139095040
        %v7371 = vshrl.u32 %v7370, 23
        %v7372 = vsub.s32 %v7371, 127
        %v7373 = vand.u32 2147483647, %v1907
        %v7374 = vand.u32 %v7373, 8388607
        %v7375 = vor.u32 %v7374, 8388608
        %v7376 = vsub.s32 0, %v7375
        %v7377 = vadd.s32 %v7372, 1
        %vm7378 = vcmp.gt.s32.totalorder %v7377, 0
        %v7379 = vsel %vm7378, %v7377, 0
        %v7380 = vshrl.u32 %v7379, 5
        %v7381 = vand.u32 %v7379, 31
        %v7382 = vsub.s32 32, %v7381
        %v7383 = vshrl.u32 683565275, %v7382
        %v7384 = vshll.u32 683565275, %v7381
        %v7385 = vshrl.u32 2475754826, %v7382
        %v7386 = vor.u32 %v7384, %v7385
        %v7387 = vshll.u32 2475754826, %v7381
        %v7388 = vshrl.u32 2131351028, %v7382
        %v7389 = vor.u32 %v7387, %v7388
        %v7390 = vshll.u32 2131351028, %v7381
        %v7391 = vshrl.u32 2102212464, %v7382
        %v7392 = vor.u32 %v7390, %v7391
        %v7393 = vshll.u32 2102212464, %v7381
        %v7394 = vshrl.u32 920167782, %v7382
        %v7395 = vor.u32 %v7393, %v7394
        %v7396 = vshll.u32 920167782, %v7381
        %v7397 = vshrl.u32 1326507024, %v7382
        %v7398 = vor.u32 %v7396, %v7397
        %vm7399 = vcmp.lt.s32.totalorder %v7380, 1
        %vm7400 = vcmp.lt.s32.totalorder %v7380, 2
        %vm7401 = vcmp.lt.s32.totalorder %v7380, 3
        %vm7402 = vcmp.lt.s32.totalorder %v7380, 4
        %v7403 = vsel %vm7399, %v7383, %v7386
        %v7404 = vsel %vm7402, %v7392, 2102212464
        %v7405 = vsel %vm7401, %v7389, %v7404
        %v7406 = vsel %vm7400, %v7403, %v7405
        %v7407 = vsel %vm7399, %v7386, %v7389
        %v7408 = vsel %vm7402, %v7395, 920167782
        %v7409 = vsel %vm7401, %v7392, %v7408
        %v7410 = vsel %vm7400, %v7407, %v7409
        %v7411 = vsel %vm7399, %v7389, %v7392
        %v7412 = vsel %vm7402, %v7398, 1326507024
        %v7413 = vsel %vm7401, %v7395, %v7412
        %v7414 = vsel %vm7400, %v7411, %v7413
        %v7415 = vshll.u32 %v7375, 8
        %v7416 = vmul.u32.u64.compose %v7415, %v7414
        %v7417 = vextract.low.u32 %v7416
        %v7418 = vextract.high.u32 %v7416
        %v7419 = vmul.u32.u64.compose %v7415, %v7410
        %v7420 = vextract.low.u32 %v7419
        %v7421 = vextract.high.u32 %v7419
        %v7422 = vmul.u32 %v7415, %v7406
        %v7423 = vadd.s32 %v7418, %v7420
        %vm7424 = vc.u32 %v7418, %v7420
        %v7425 = vadd.s32 %v7421, 1
        %v7426 = vsel %vm7424, %v7425, %v7421
        %v7427 = vadd.s32 %v7422, %v7426
        %v7428 = vadd.s32 %v7427, 536870912
        %v7429 = vshrl.u32 %v7428, 30
        %v7430 = vshll.u32 %v7429, 30
        %v7431 = vsub.s32 %v7427, %v7430
        %vm7432 = vcmp.lt.s32.totalorder %v7431, 0
        %v7433 = vsub.s32 0, %v7431
        %v7434 = vsel %vm7432, %v7433, %v7431
        %v7435 = vclz %v7434
        %v7436 = vsub.s32 %v7435, 2
        %vm7437 = vcmp.gt.s32.totalorder 0, %v7436
        %v7438 = vsel %vm7437, 0, %v7436
        %v7439 = vsub.s32 32, %v7438
        %v7440 = vshll.u32 %v7431, %v7438
        %v7441 = vshrl.u32 %v7423, %v7439
        %v7442 = vor.u32 %v7440, %v7441
        %v7443 = vsub.s32 4294967266, %v7438
        %v7444 = vadd.s32 %v7443, 127
        %v7445 = vshll.u32 %v7444, 23
        %v7446 = vor.u32 4788187, %v7445
        %v7447 = vand.u32 2147483647, %v7446
        %v7449 = vcvt.s32.f32 %v7442
        %v7450 = vmul.f32 %v7449, %v7447
        %v7451 = vxor.u32 %v7450, 2147483648
        %v7452 = vsel %vm7369, %v7451, %v7450
        %v7453 = vsub.s32 4, %v7429
        %v7454 = vsel %vm7369, %v7453, %v7429
        %v7455 = vsel %vm7368, %v1907, %v7452
        %v7456 = vsel %vm7368, 0, %v7454
        %v7457 = vcosq.f32.pop %v7455
        %v7458 = vsinq.f32.pop %v7455
        %vm7459 = vweird.f32 %v1907
        %v7460 = vadd.s32 %v7456, 3
        %v7461 = vand.u32 %v7460, 3
        %vm7462 = vcmp.lt.s32.totalorder %v7461, 2
        %vm7463 = vcmp.eq.s32.totalorder %v7461, 0
        %v7464 = vxor.u32 %v7458, 2147483648
        %v7465 = vsel %vm7463, %v7457, %v7464
        %vm7466 = vcmp.eq.s32.totalorder %v7461, 2
        %v7467 = vxor.u32 %v7457, 2147483648
        %v7468 = vsel %vm7466, %v7467, %v7458
        %v7469 = vsel %vm7462, %v7465, %v7468
        %v7470 = vsel %vm7459, nan, %v7469
        %v7471 = vand.u32 2147483647, %v1913
        %vm7472 = vcmp.le.f32.partialorder %v7471, 0.7853982
        %vm7473 = vcmp.lt.s32.totalorder %v1913, 0
        %v7474 = vand.u32 %v1913, 2139095040
        %v7475 = vshrl.u32 %v7474, 23
        %v7476 = vsub.s32 %v7475, 127
        %v7477 = vand.u32 2147483647, %v1913
        %v7478 = vand.u32 %v7477, 8388607
        %v7479 = vor.u32 %v7478, 8388608
        %v7480 = vsub.s32 0, %v7479
        %v7481 = vadd.s32 %v7476, 1
        %vm7482 = vcmp.gt.s32.totalorder %v7481, 0
        %v7483 = vsel %vm7482, %v7481, 0
        %v7484 = vshrl.u32 %v7483, 5
        %v7485 = vand.u32 %v7483, 31
        %v7486 = vsub.s32 32, %v7485
        %v7487 = vshrl.u32 683565275, %v7486
        %v7488 = vshll.u32 683565275, %v7485
        %v7489 = vshrl.u32 2475754826, %v7486
        %v7490 = vor.u32 %v7488, %v7489
        %v7491 = vshll.u32 2475754826, %v7485
        %v7492 = vshrl.u32 2131351028, %v7486
        %v7493 = vor.u32 %v7491, %v7492
        %v7494 = vshll.u32 2131351028, %v7485
        %v7495 = vshrl.u32 2102212464, %v7486
        %v7496 = vor.u32 %v7494, %v7495
        %v7497 = vshll.u32 2102212464, %v7485
        %v7498 = vshrl.u32 920167782, %v7486
        %v7499 = vor.u32 %v7497, %v7498
        %v7500 = vshll.u32 920167782, %v7485
        %v7501 = vshrl.u32 1326507024, %v7486
        %v7502 = vor.u32 %v7500, %v7501
        %vm7503 = vcmp.lt.s32.totalorder %v7484, 1
        %vm7504 = vcmp.lt.s32.totalorder %v7484, 2
        %vm7505 = vcmp.lt.s32.totalorder %v7484, 3
        %vm7506 = vcmp.lt.s32.totalorder %v7484, 4
        %v7507 = vsel %vm7503, %v7487, %v7490
        %v7508 = vsel %vm7506, %v7496, 2102212464
        %v7509 = vsel %vm7505, %v7493, %v7508
        %v7510 = vsel %vm7504, %v7507, %v7509
        %v7511 = vsel %vm7503, %v7490, %v7493
        %v7512 = vsel %vm7506, %v7499, 920167782
        %v7513 = vsel %vm7505, %v7496, %v7512
        %v7514 = vsel %vm7504, %v7511, %v7513
        %v7515 = vsel %vm7503, %v7493, %v7496
        %v7516 = vsel %vm7506, %v7502, 1326507024
        %v7517 = vsel %vm7505, %v7499, %v7516
        %v7518 = vsel %vm7504, %v7515, %v7517
        %v7519 = vshll.u32 %v7479, 8
        %v7520 = vmul.u32.u64.compose %v7519, %v7518
        %v7521 = vextract.low.u32 %v7520
        %v7522 = vextract.high.u32 %v7520
        %v7523 = vmul.u32.u64.compose %v7519, %v7514
        %v7524 = vextract.low.u32 %v7523
        %v7525 = vextract.high.u32 %v7523
        %v7526 = vmul.u32 %v7519, %v7510
        %v7527 = vadd.s32 %v7522, %v7524
        %vm7528 = vc.u32 %v7522, %v7524
        %v7529 = vadd.s32 %v7525, 1
        %v7530 = vsel %vm7528, %v7529, %v7525
        %v7531 = vadd.s32 %v7526, %v7530
        %v7532 = vadd.s32 %v7531, 536870912
        %v7533 = vshrl.u32 %v7532, 30
        %v7534 = vshll.u32 %v7533, 30
        %v7535 = vsub.s32 %v7531, %v7534
        %vm7536 = vcmp.lt.s32.totalorder %v7535, 0
        %v7537 = vsub.s32 0, %v7535
        %v7538 = vsel %vm7536, %v7537, %v7535
        %v7539 = vclz %v7538
        %v7540 = vsub.s32 %v7539, 2
        %vm7541 = vcmp.gt.s32.totalorder 0, %v7540
        %v7542 = vsel %vm7541, 0, %v7540
        %v7543 = vsub.s32 32, %v7542
        %v7544 = vshll.u32 %v7535, %v7542
        %v7545 = vshrl.u32 %v7527, %v7543
        %v7546 = vor.u32 %v7544, %v7545
        %v7547 = vsub.s32 4294967266, %v7542
        %v7548 = vadd.s32 %v7547, 127
        %v7549 = vshll.u32 %v7548, 23
        %v7550 = vor.u32 4788187, %v7549
        %v7551 = vand.u32 2147483647, %v7550
        %v7553 = vcvt.s32.f32 %v7546
        %v7554 = vmul.f32 %v7553, %v7551
        %v7555 = vxor.u32 %v7554, 2147483648
        %v7556 = vsel %vm7473, %v7555, %v7554
        %v7557 = vsub.s32 4, %v7533
        %v7558 = vsel %vm7473, %v7557, %v7533
        %v7559 = vsel %vm7472, %v1913, %v7556
        %v7560 = vsel %vm7472, 0, %v7558
        %v7561 = vcosq.f32.pop %v7559
        %v7562 = vsinq.f32.pop %v7559
        %vm7563 = vweird.f32 %v1913
        %v7564 = vadd.s32 %v7560, 3
        %v7565 = vand.u32 %v7564, 3
        %vm7566 = vcmp.lt.s32.totalorder %v7565, 2
        %vm7567 = vcmp.eq.s32.totalorder %v7565, 0
        %v7568 = vxor.u32 %v7562, 2147483648
        %v7569 = vsel %vm7567, %v7561, %v7568
        %vm7570 = vcmp.eq.s32.totalorder %v7565, 2
        %v7571 = vxor.u32 %v7561, 2147483648
        %v7572 = vsel %vm7570, %v7571, %v7562
        %v7573 = vsel %vm7566, %v7569, %v7572
        %v7574 = vsel %vm7563, nan, %v7573
        %v7575 = vand.u32 2147483647, %v1919
        %vm7576 = vcmp.le.f32.partialorder %v7575, 0.7853982
        %vm7577 = vcmp.lt.s32.totalorder %v1919, 0
        %v7578 = vand.u32 %v1919, 2139095040
        %v7579 = vshrl.u32 %v7578, 23
        %v7580 = vsub.s32 %v7579, 127
        %v7581 = vand.u32 2147483647, %v1919
        %v7582 = vand.u32 %v7581, 8388607
        %v7583 = vor.u32 %v7582, 8388608
        %v7584 = vsub.s32 0, %v7583
        %v7585 = vadd.s32 %v7580, 1
        %vm7586 = vcmp.gt.s32.totalorder %v7585, 0
        %v7587 = vsel %vm7586, %v7585, 0
        %v7588 = vshrl.u32 %v7587, 5
        %v7589 = vand.u32 %v7587, 31
        %v7590 = vsub.s32 32, %v7589
        %v7591 = vshrl.u32 683565275, %v7590
        %v7592 = vshll.u32 683565275, %v7589
        %v7593 = vshrl.u32 2475754826, %v7590
        %v7594 = vor.u32 %v7592, %v7593
        %v7595 = vshll.u32 2475754826, %v7589
        %v7596 = vshrl.u32 2131351028, %v7590
        %v7597 = vor.u32 %v7595, %v7596
        %v7598 = vshll.u32 2131351028, %v7589
        %v7599 = vshrl.u32 2102212464, %v7590
        %v7600 = vor.u32 %v7598, %v7599
        %v7601 = vshll.u32 2102212464, %v7589
        %v7602 = vshrl.u32 920167782, %v7590
        %v7603 = vor.u32 %v7601, %v7602
        %v7604 = vshll.u32 920167782, %v7589
        %v7605 = vshrl.u32 1326507024, %v7590
        %v7606 = vor.u32 %v7604, %v7605
        %vm7607 = vcmp.lt.s32.totalorder %v7588, 1
        %vm7608 = vcmp.lt.s32.totalorder %v7588, 2
        %vm7609 = vcmp.lt.s32.totalorder %v7588, 3
        %vm7610 = vcmp.lt.s32.totalorder %v7588, 4
        %v7611 = vsel %vm7607, %v7591, %v7594
        %v7612 = vsel %vm7610, %v7600, 2102212464
        %v7613 = vsel %vm7609, %v7597, %v7612
        %v7614 = vsel %vm7608, %v7611, %v7613
        %v7615 = vsel %vm7607, %v7594, %v7597
        %v7616 = vsel %vm7610, %v7603, 920167782
        %v7617 = vsel %vm7609, %v7600, %v7616
        %v7618 = vsel %vm7608, %v7615, %v7617
        %v7619 = vsel %vm7607, %v7597, %v7600
        %v7620 = vsel %vm7610, %v7606, 1326507024
        %v7621 = vsel %vm7609, %v7603, %v7620
        %v7622 = vsel %vm7608, %v7619, %v7621
        %v7623 = vshll.u32 %v7583, 8
        %v7624 = vmul.u32.u64.compose %v7623, %v7622
        %v7625 = vextract.low.u32 %v7624
        %v7626 = vextract.high.u32 %v7624
        %v7627 = vmul.u32.u64.compose %v7623, %v7618
        %v7628 = vextract.low.u32 %v7627
        %v7629 = vextract.high.u32 %v7627
        %v7630 = vmul.u32 %v7623, %v7614
        %v7631 = vadd.s32 %v7626, %v7628
        %vm7632 = vc.u32 %v7626, %v7628
        %v7633 = vadd.s32 %v7629, 1
        %v7634 = vsel %vm7632, %v7633, %v7629
        %v7635 = vadd.s32 %v7630, %v7634
        %v7636 = vadd.s32 %v7635, 536870912
        %v7637 = vshrl.u32 %v7636, 30
        %v7638 = vshll.u32 %v7637, 30
        %v7639 = vsub.s32 %v7635, %v7638
        %vm7640 = vcmp.lt.s32.totalorder %v7639, 0
        %v7641 = vsub.s32 0, %v7639
        %v7642 = vsel %vm7640, %v7641, %v7639
        %v7643 = vclz %v7642
        %v7644 = vsub.s32 %v7643, 2
        %vm7645 = vcmp.gt.s32.totalorder 0, %v7644
        %v7646 = vsel %vm7645, 0, %v7644
        %v7647 = vsub.s32 32, %v7646
        %v7648 = vshll.u32 %v7639, %v7646
        %v7649 = vshrl.u32 %v7631, %v7647
        %v7650 = vor.u32 %v7648, %v7649
        %v7651 = vsub.s32 4294967266, %v7646
        %v7652 = vadd.s32 %v7651, 127
        %v7653 = vshll.u32 %v7652, 23
        %v7654 = vor.u32 4788187, %v7653
        %v7655 = vand.u32 2147483647, %v7654
        %v7657 = vcvt.s32.f32 %v7650
        %v7658 = vmul.f32 %v7657, %v7655
        %v7659 = vxor.u32 %v7658, 2147483648
        %v7660 = vsel %vm7577, %v7659, %v7658
        %v7661 = vsub.s32 4, %v7637
        %v7662 = vsel %vm7577, %v7661, %v7637
        %v7663 = vsel %vm7576, %v1919, %v7660
        %v7664 = vsel %vm7576, 0, %v7662
        %v7665 = vcosq.f32.pop %v7663
        %v7666 = vsinq.f32.pop %v7663
        %vm7667 = vweird.f32 %v1919
        %v7668 = vadd.s32 %v7664, 3
        %v7669 = vand.u32 %v7668, 3
        %vm7670 = vcmp.lt.s32.totalorder %v7669, 2
        %vm7671 = vcmp.eq.s32.totalorder %v7669, 0
        %v7672 = vxor.u32 %v7666, 2147483648
        %v7673 = vsel %vm7671, %v7665, %v7672
        %vm7674 = vcmp.eq.s32.totalorder %v7669, 2
        %v7675 = vxor.u32 %v7665, 2147483648
        %v7676 = vsel %vm7674, %v7675, %v7666
        %v7677 = vsel %vm7670, %v7673, %v7676
        %v7678 = vsel %vm7667, nan, %v7677
        %v7679 = vand.u32 2147483647, %v1925
        %vm7680 = vcmp.le.f32.partialorder %v7679, 0.7853982
        %vm7681 = vcmp.lt.s32.totalorder %v1925, 0
        %v7682 = vand.u32 %v1925, 2139095040
        %v7683 = vshrl.u32 %v7682, 23
        %v7684 = vsub.s32 %v7683, 127
        %v7685 = vand.u32 2147483647, %v1925
        %v7686 = vand.u32 %v7685, 8388607
        %v7687 = vor.u32 %v7686, 8388608
        %v7688 = vsub.s32 0, %v7687
        %v7689 = vadd.s32 %v7684, 1
        %vm7690 = vcmp.gt.s32.totalorder %v7689, 0
        %v7691 = vsel %vm7690, %v7689, 0
        %v7692 = vshrl.u32 %v7691, 5
        %v7693 = vand.u32 %v7691, 31
        %v7694 = vsub.s32 32, %v7693
        %v7695 = vshrl.u32 683565275, %v7694
        %v7696 = vshll.u32 683565275, %v7693
        %v7697 = vshrl.u32 2475754826, %v7694
        %v7698 = vor.u32 %v7696, %v7697
        %v7699 = vshll.u32 2475754826, %v7693
        %v7700 = vshrl.u32 2131351028, %v7694
        %v7701 = vor.u32 %v7699, %v7700
        %v7702 = vshll.u32 2131351028, %v7693
        %v7703 = vshrl.u32 2102212464, %v7694
        %v7704 = vor.u32 %v7702, %v7703
        %v7705 = vshll.u32 2102212464, %v7693
        %v7706 = vshrl.u32 920167782, %v7694
        %v7707 = vor.u32 %v7705, %v7706
        %v7708 = vshll.u32 920167782, %v7693
        %v7709 = vshrl.u32 1326507024, %v7694
        %v7710 = vor.u32 %v7708, %v7709
        %vm7711 = vcmp.lt.s32.totalorder %v7692, 1
        %vm7712 = vcmp.lt.s32.totalorder %v7692, 2
        %vm7713 = vcmp.lt.s32.totalorder %v7692, 3
        %vm7714 = vcmp.lt.s32.totalorder %v7692, 4
        %v7715 = vsel %vm7711, %v7695, %v7698
        %v7716 = vsel %vm7714, %v7704, 2102212464
        %v7717 = vsel %vm7713, %v7701, %v7716
        %v7718 = vsel %vm7712, %v7715, %v7717
        %v7719 = vsel %vm7711, %v7698, %v7701
        %v7720 = vsel %vm7714, %v7707, 920167782
        %v7721 = vsel %vm7713, %v7704, %v7720
        %v7722 = vsel %vm7712, %v7719, %v7721
        %v7723 = vsel %vm7711, %v7701, %v7704
        %v7724 = vsel %vm7714, %v7710, 1326507024
        %v7725 = vsel %vm7713, %v7707, %v7724
        %v7726 = vsel %vm7712, %v7723, %v7725
        %v7727 = vshll.u32 %v7687, 8
        %v7728 = vmul.u32.u64.compose %v7727, %v7726
        %v7729 = vextract.low.u32 %v7728
        %v7730 = vextract.high.u32 %v7728
        %v7731 = vmul.u32.u64.compose %v7727, %v7722
        %v7732 = vextract.low.u32 %v7731
        %v7733 = vextract.high.u32 %v7731
        %v7734 = vmul.u32 %v7727, %v7718
        %v7735 = vadd.s32 %v7730, %v7732
        %vm7736 = vc.u32 %v7730, %v7732
        %v7737 = vadd.s32 %v7733, 1
        %v7738 = vsel %vm7736, %v7737, %v7733
        %v7739 = vadd.s32 %v7734, %v7738
        %v7740 = vadd.s32 %v7739, 536870912
        %v7741 = vshrl.u32 %v7740, 30
        %v7742 = vshll.u32 %v7741, 30
        %v7743 = vsub.s32 %v7739, %v7742
        %vm7744 = vcmp.lt.s32.totalorder %v7743, 0
        %v7745 = vsub.s32 0, %v7743
        %v7746 = vsel %vm7744, %v7745, %v7743
        %v7747 = vclz %v7746
        %v7748 = vsub.s32 %v7747, 2
        %vm7749 = vcmp.gt.s32.totalorder 0, %v7748
        %v7750 = vsel %vm7749, 0, %v7748
        %v7751 = vsub.s32 32, %v7750
        %v7752 = vshll.u32 %v7743, %v7750
        %v7753 = vshrl.u32 %v7735, %v7751
        %v7754 = vor.u32 %v7752, %v7753
        %v7755 = vsub.s32 4294967266, %v7750
        %v7756 = vadd.s32 %v7755, 127
        %v7757 = vshll.u32 %v7756, 23
        %v7758 = vor.u32 4788187, %v7757
        %v7759 = vand.u32 2147483647, %v7758
        %v7761 = vcvt.s32.f32 %v7754
        %v7762 = vmul.f32 %v7761, %v7759
        %v7763 = vxor.u32 %v7762, 2147483648
        %v7764 = vsel %vm7681, %v7763, %v7762
        %v7765 = vsub.s32 4, %v7741
        %v7766 = vsel %vm7681, %v7765, %v7741
        %v7767 = vsel %vm7680, %v1925, %v7764
        %v7768 = vsel %vm7680, 0, %v7766
        %v7769 = vcosq.f32.pop %v7767
        %v7770 = vsinq.f32.pop %v7767
        %vm7771 = vweird.f32 %v1925
        %v7772 = vadd.s32 %v7768, 3
        %v7773 = vand.u32 %v7772, 3
        %vm7774 = vcmp.lt.s32.totalorder %v7773, 2
        %vm7775 = vcmp.eq.s32.totalorder %v7773, 0
        %v7776 = vxor.u32 %v7770, 2147483648
        %v7777 = vsel %vm7775, %v7769, %v7776
        %vm7778 = vcmp.eq.s32.totalorder %v7773, 2
        %v7779 = vxor.u32 %v7769, 2147483648
        %v7780 = vsel %vm7778, %v7779, %v7770
        %v7781 = vsel %vm7774, %v7777, %v7780
        %v7782 = vsel %vm7771, nan, %v7781
        %v7783 = vand.u32 2147483647, %v1931
        %vm7784 = vcmp.le.f32.partialorder %v7783, 0.7853982
        %vm7785 = vcmp.lt.s32.totalorder %v1931, 0
        %v7786 = vand.u32 %v1931, 2139095040
        %v7787 = vshrl.u32 %v7786, 23
        %v7788 = vsub.s32 %v7787, 127
        %v7789 = vand.u32 2147483647, %v1931
        %v7790 = vand.u32 %v7789, 8388607
        %v7791 = vor.u32 %v7790, 8388608
        %v7792 = vsub.s32 0, %v7791
        %v7793 = vadd.s32 %v7788, 1
        %vm7794 = vcmp.gt.s32.totalorder %v7793, 0
        %v7795 = vsel %vm7794, %v7793, 0
        %v7796 = vshrl.u32 %v7795, 5
        %v7797 = vand.u32 %v7795, 31
        %v7798 = vsub.s32 32, %v7797
        %v7799 = vshrl.u32 683565275, %v7798
        %v7800 = vshll.u32 683565275, %v7797
        %v7801 = vshrl.u32 2475754826, %v7798
        %v7802 = vor.u32 %v7800, %v7801
        %v7803 = vshll.u32 2475754826, %v7797
        %v7804 = vshrl.u32 2131351028, %v7798
        %v7805 = vor.u32 %v7803, %v7804
        %v7806 = vshll.u32 2131351028, %v7797
        %v7807 = vshrl.u32 2102212464, %v7798
        %v7808 = vor.u32 %v7806, %v7807
        %v7809 = vshll.u32 2102212464, %v7797
        %v7810 = vshrl.u32 920167782, %v7798
        %v7811 = vor.u32 %v7809, %v7810
        %v7812 = vshll.u32 920167782, %v7797
        %v7813 = vshrl.u32 1326507024, %v7798
        %v7814 = vor.u32 %v7812, %v7813
        %vm7815 = vcmp.lt.s32.totalorder %v7796, 1
        %vm7816 = vcmp.lt.s32.totalorder %v7796, 2
        %vm7817 = vcmp.lt.s32.totalorder %v7796, 3
        %vm7818 = vcmp.lt.s32.totalorder %v7796, 4
        %v7819 = vsel %vm7815, %v7799, %v7802
        %v7820 = vsel %vm7818, %v7808, 2102212464
        %v7821 = vsel %vm7817, %v7805, %v7820
        %v7822 = vsel %vm7816, %v7819, %v7821
        %v7823 = vsel %vm7815, %v7802, %v7805
        %v7824 = vsel %vm7818, %v7811, 920167782
        %v7825 = vsel %vm7817, %v7808, %v7824
        %v7826 = vsel %vm7816, %v7823, %v7825
        %v7827 = vsel %vm7815, %v7805, %v7808
        %v7828 = vsel %vm7818, %v7814, 1326507024
        %v7829 = vsel %vm7817, %v7811, %v7828
        %v7830 = vsel %vm7816, %v7827, %v7829
        %v7831 = vshll.u32 %v7791, 8
        %v7832 = vmul.u32.u64.compose %v7831, %v7830
        %v7833 = vextract.low.u32 %v7832
        %v7834 = vextract.high.u32 %v7832
        %v7835 = vmul.u32.u64.compose %v7831, %v7826
        %v7836 = vextract.low.u32 %v7835
        %v7837 = vextract.high.u32 %v7835
        %v7838 = vmul.u32 %v7831, %v7822
        %v7839 = vadd.s32 %v7834, %v7836
        %vm7840 = vc.u32 %v7834, %v7836
        %v7841 = vadd.s32 %v7837, 1
        %v7842 = vsel %vm7840, %v7841, %v7837
        %v7843 = vadd.s32 %v7838, %v7842
        %v7844 = vadd.s32 %v7843, 536870912
        %v7845 = vshrl.u32 %v7844, 30
        %v7846 = vshll.u32 %v7845, 30
        %v7847 = vsub.s32 %v7843, %v7846
        %vm7848 = vcmp.lt.s32.totalorder %v7847, 0
        %v7849 = vsub.s32 0, %v7847
        %v7850 = vsel %vm7848, %v7849, %v7847
        %v7851 = vclz %v7850
        %v7852 = vsub.s32 %v7851, 2
        %vm7853 = vcmp.gt.s32.totalorder 0, %v7852
        %v7854 = vsel %vm7853, 0, %v7852
        %v7855 = vsub.s32 32, %v7854
        %v7856 = vshll.u32 %v7847, %v7854
        %v7857 = vshrl.u32 %v7839, %v7855
        %v7858 = vor.u32 %v7856, %v7857
        %v7859 = vsub.s32 4294967266, %v7854
        %v7860 = vadd.s32 %v7859, 127
        %v7861 = vshll.u32 %v7860, 23
        %v7862 = vor.u32 4788187, %v7861
        %v7863 = vand.u32 2147483647, %v7862
        %v7865 = vcvt.s32.f32 %v7858
        %v7866 = vmul.f32 %v7865, %v7863
        %v7867 = vxor.u32 %v7866, 2147483648
        %v7868 = vsel %vm7785, %v7867, %v7866
        %v7869 = vsub.s32 4, %v7845
        %v7870 = vsel %vm7785, %v7869, %v7845
        %v7871 = vsel %vm7784, %v1931, %v7868
        %v7872 = vsel %vm7784, 0, %v7870
        %v7873 = vcosq.f32.pop %v7871
        %v7874 = vsinq.f32.pop %v7871
        %vm7875 = vweird.f32 %v1931
        %v7876 = vadd.s32 %v7872, 3
        %v7877 = vand.u32 %v7876, 3
        %vm7878 = vcmp.lt.s32.totalorder %v7877, 2
        %vm7879 = vcmp.eq.s32.totalorder %v7877, 0
        %v7880 = vxor.u32 %v7874, 2147483648
        %v7881 = vsel %vm7879, %v7873, %v7880
        %vm7882 = vcmp.eq.s32.totalorder %v7877, 2
        %v7883 = vxor.u32 %v7873, 2147483648
        %v7884 = vsel %vm7882, %v7883, %v7874
        %v7885 = vsel %vm7878, %v7881, %v7884
        %v7886 = vsel %vm7875, nan, %v7885
        %v7887 = vand.u32 2147483647, %v1937
        %vm7888 = vcmp.le.f32.partialorder %v7887, 0.7853982
        %vm7889 = vcmp.lt.s32.totalorder %v1937, 0
        %v7890 = vand.u32 %v1937, 2139095040
        %v7891 = vshrl.u32 %v7890, 23
        %v7892 = vsub.s32 %v7891, 127
        %v7893 = vand.u32 2147483647, %v1937
        %v7894 = vand.u32 %v7893, 8388607
        %v7895 = vor.u32 %v7894, 8388608
        %v7896 = vsub.s32 0, %v7895
        %v7897 = vadd.s32 %v7892, 1
        %vm7898 = vcmp.gt.s32.totalorder %v7897, 0
        %v7899 = vsel %vm7898, %v7897, 0
        %v7900 = vshrl.u32 %v7899, 5
        %v7901 = vand.u32 %v7899, 31
        %v7902 = vsub.s32 32, %v7901
        %v7903 = vshrl.u32 683565275, %v7902
        %v7904 = vshll.u32 683565275, %v7901
        %v7905 = vshrl.u32 2475754826, %v7902
        %v7906 = vor.u32 %v7904, %v7905
        %v7907 = vshll.u32 2475754826, %v7901
        %v7908 = vshrl.u32 2131351028, %v7902
        %v7909 = vor.u32 %v7907, %v7908
        %v7910 = vshll.u32 2131351028, %v7901
        %v7911 = vshrl.u32 2102212464, %v7902
        %v7912 = vor.u32 %v7910, %v7911
        %v7913 = vshll.u32 2102212464, %v7901
        %v7914 = vshrl.u32 920167782, %v7902
        %v7915 = vor.u32 %v7913, %v7914
        %v7916 = vshll.u32 920167782, %v7901
        %v7917 = vshrl.u32 1326507024, %v7902
        %v7918 = vor.u32 %v7916, %v7917
        %vm7919 = vcmp.lt.s32.totalorder %v7900, 1
        %vm7920 = vcmp.lt.s32.totalorder %v7900, 2
        %vm7921 = vcmp.lt.s32.totalorder %v7900, 3
        %vm7922 = vcmp.lt.s32.totalorder %v7900, 4
        %v7923 = vsel %vm7919, %v7903, %v7906
        %v7924 = vsel %vm7922, %v7912, 2102212464
        %v7925 = vsel %vm7921, %v7909, %v7924
        %v7926 = vsel %vm7920, %v7923, %v7925
        %v7927 = vsel %vm7919, %v7906, %v7909
        %v7928 = vsel %vm7922, %v7915, 920167782
        %v7929 = vsel %vm7921, %v7912, %v7928
        %v7930 = vsel %vm7920, %v7927, %v7929
        %v7931 = vsel %vm7919, %v7909, %v7912
        %v7932 = vsel %vm7922, %v7918, 1326507024
        %v7933 = vsel %vm7921, %v7915, %v7932
        %v7934 = vsel %vm7920, %v7931, %v7933
        %v7935 = vshll.u32 %v7895, 8
        %v7936 = vmul.u32.u64.compose %v7935, %v7934
        %v7937 = vextract.low.u32 %v7936
        %v7938 = vextract.high.u32 %v7936
        %v7939 = vmul.u32.u64.compose %v7935, %v7930
        %v7940 = vextract.low.u32 %v7939
        %v7941 = vextract.high.u32 %v7939
        %v7942 = vmul.u32 %v7935, %v7926
        %v7943 = vadd.s32 %v7938, %v7940
        %vm7944 = vc.u32 %v7938, %v7940
        %v7945 = vadd.s32 %v7941, 1
        %v7946 = vsel %vm7944, %v7945, %v7941
        %v7947 = vadd.s32 %v7942, %v7946
        %v7948 = vadd.s32 %v7947, 536870912
        %v7949 = vshrl.u32 %v7948, 30
        %v7950 = vshll.u32 %v7949, 30
        %v7951 = vsub.s32 %v7947, %v7950
        %vm7952 = vcmp.lt.s32.totalorder %v7951, 0
        %v7953 = vsub.s32 0, %v7951
        %v7954 = vsel %vm7952, %v7953, %v7951
        %v7955 = vclz %v7954
        %v7956 = vsub.s32 %v7955, 2
        %vm7957 = vcmp.gt.s32.totalorder 0, %v7956
        %v7958 = vsel %vm7957, 0, %v7956
        %v7959 = vsub.s32 32, %v7958
        %v7960 = vshll.u32 %v7951, %v7958
        %v7961 = vshrl.u32 %v7943, %v7959
        %v7962 = vor.u32 %v7960, %v7961
        %v7963 = vsub.s32 4294967266, %v7958
        %v7964 = vadd.s32 %v7963, 127
        %v7965 = vshll.u32 %v7964, 23
        %v7966 = vor.u32 4788187, %v7965
        %v7967 = vand.u32 2147483647, %v7966
        %v7969 = vcvt.s32.f32 %v7962
        %v7970 = vmul.f32 %v7969, %v7967
        %v7971 = vxor.u32 %v7970, 2147483648
        %v7972 = vsel %vm7889, %v7971, %v7970
        %v7973 = vsub.s32 4, %v7949
        %v7974 = vsel %vm7889, %v7973, %v7949
        %v7975 = vsel %vm7888, %v1937, %v7972
        %v7976 = vsel %vm7888, 0, %v7974
        %v7977 = vcosq.f32.pop %v7975
        %v7978 = vsinq.f32.pop %v7975
        %vm7979 = vweird.f32 %v1937
        %v7980 = vadd.s32 %v7976, 3
        %v7981 = vand.u32 %v7980, 3
        %vm7982 = vcmp.lt.s32.totalorder %v7981, 2
        %vm7983 = vcmp.eq.s32.totalorder %v7981, 0
        %v7984 = vxor.u32 %v7978, 2147483648
        %v7985 = vsel %vm7983, %v7977, %v7984
        %vm7986 = vcmp.eq.s32.totalorder %v7981, 2
        %v7987 = vxor.u32 %v7977, 2147483648
        %v7988 = vsel %vm7986, %v7987, %v7978
        %v7989 = vsel %vm7982, %v7985, %v7988
        %v7990 = vsel %vm7979, nan, %v7989
        %v7991 = vand.u32 2147483647, %v1943
        %vm7992 = vcmp.le.f32.partialorder %v7991, 0.7853982
        %vm7993 = vcmp.lt.s32.totalorder %v1943, 0
        %v7994 = vand.u32 %v1943, 2139095040
        %v7995 = vshrl.u32 %v7994, 23
        %v7996 = vsub.s32 %v7995, 127
        %v7997 = vand.u32 2147483647, %v1943
        %v7998 = vand.u32 %v7997, 8388607
        %v7999 = vor.u32 %v7998, 8388608
        %v8000 = vsub.s32 0, %v7999
        %v8001 = vadd.s32 %v7996, 1
        %vm8002 = vcmp.gt.s32.totalorder %v8001, 0
        %v8003 = vsel %vm8002, %v8001, 0
        %v8004 = vshrl.u32 %v8003, 5
        %v8005 = vand.u32 %v8003, 31
        %v8006 = vsub.s32 32, %v8005
        %v8007 = vshrl.u32 683565275, %v8006
        %v8008 = vshll.u32 683565275, %v8005
        %v8009 = vshrl.u32 2475754826, %v8006
        %v8010 = vor.u32 %v8008, %v8009
        %v8011 = vshll.u32 2475754826, %v8005
        %v8012 = vshrl.u32 2131351028, %v8006
        %v8013 = vor.u32 %v8011, %v8012
        %v8014 = vshll.u32 2131351028, %v8005
        %v8015 = vshrl.u32 2102212464, %v8006
        %v8016 = vor.u32 %v8014, %v8015
        %v8017 = vshll.u32 2102212464, %v8005
        %v8018 = vshrl.u32 920167782, %v8006
        %v8019 = vor.u32 %v8017, %v8018
        %v8020 = vshll.u32 920167782, %v8005
        %v8021 = vshrl.u32 1326507024, %v8006
        %v8022 = vor.u32 %v8020, %v8021
        %vm8023 = vcmp.lt.s32.totalorder %v8004, 1
        %vm8024 = vcmp.lt.s32.totalorder %v8004, 2
        %vm8025 = vcmp.lt.s32.totalorder %v8004, 3
        %vm8026 = vcmp.lt.s32.totalorder %v8004, 4
        %v8027 = vsel %vm8023, %v8007, %v8010
        %v8028 = vsel %vm8026, %v8016, 2102212464
        %v8029 = vsel %vm8025, %v8013, %v8028
        %v8030 = vsel %vm8024, %v8027, %v8029
        %v8031 = vsel %vm8023, %v8010, %v8013
        %v8032 = vsel %vm8026, %v8019, 920167782
        %v8033 = vsel %vm8025, %v8016, %v8032
        %v8034 = vsel %vm8024, %v8031, %v8033
        %v8035 = vsel %vm8023, %v8013, %v8016
        %v8036 = vsel %vm8026, %v8022, 1326507024
        %v8037 = vsel %vm8025, %v8019, %v8036
        %v8038 = vsel %vm8024, %v8035, %v8037
        %v8039 = vshll.u32 %v7999, 8
        %v8040 = vmul.u32.u64.compose %v8039, %v8038
        %v8041 = vextract.low.u32 %v8040
        %v8042 = vextract.high.u32 %v8040
        %v8043 = vmul.u32.u64.compose %v8039, %v8034
        %v8044 = vextract.low.u32 %v8043
        %v8045 = vextract.high.u32 %v8043
        %v8046 = vmul.u32 %v8039, %v8030
        %v8047 = vadd.s32 %v8042, %v8044
        %vm8048 = vc.u32 %v8042, %v8044
        %v8049 = vadd.s32 %v8045, 1
        %v8050 = vsel %vm8048, %v8049, %v8045
        %v8051 = vadd.s32 %v8046, %v8050
        %v8052 = vadd.s32 %v8051, 536870912
        %v8053 = vshrl.u32 %v8052, 30
        %v8054 = vshll.u32 %v8053, 30
        %v8055 = vsub.s32 %v8051, %v8054
        %vm8056 = vcmp.lt.s32.totalorder %v8055, 0
        %v8057 = vsub.s32 0, %v8055
        %v8058 = vsel %vm8056, %v8057, %v8055
        %v8059 = vclz %v8058
        %v8060 = vsub.s32 %v8059, 2
        %vm8061 = vcmp.gt.s32.totalorder 0, %v8060
        %v8062 = vsel %vm8061, 0, %v8060
        %v8063 = vsub.s32 32, %v8062
        %v8064 = vshll.u32 %v8055, %v8062
        %v8065 = vshrl.u32 %v8047, %v8063
        %v8066 = vor.u32 %v8064, %v8065
        %v8067 = vsub.s32 4294967266, %v8062
        %v8068 = vadd.s32 %v8067, 127
        %v8069 = vshll.u32 %v8068, 23
        %v8070 = vor.u32 4788187, %v8069
        %v8071 = vand.u32 2147483647, %v8070
        %v8073 = vcvt.s32.f32 %v8066
        %v8074 = vmul.f32 %v8073, %v8071
        %v8075 = vxor.u32 %v8074, 2147483648
        %v8076 = vsel %vm7993, %v8075, %v8074
        %v8077 = vsub.s32 4, %v8053
        %v8078 = vsel %vm7993, %v8077, %v8053
        %v8079 = vsel %vm7992, %v1943, %v8076
        %v8080 = vsel %vm7992, 0, %v8078
        %v8081 = vcosq.f32.pop %v8079
        %v8082 = vsinq.f32.pop %v8079
        %vm8083 = vweird.f32 %v1943
        %v8084 = vadd.s32 %v8080, 3
        %v8085 = vand.u32 %v8084, 3
        %vm8086 = vcmp.lt.s32.totalorder %v8085, 2
        %vm8087 = vcmp.eq.s32.totalorder %v8085, 0
        %v8088 = vxor.u32 %v8082, 2147483648
        %v8089 = vsel %vm8087, %v8081, %v8088
        %vm8090 = vcmp.eq.s32.totalorder %v8085, 2
        %v8091 = vxor.u32 %v8081, 2147483648
        %v8092 = vsel %vm8090, %v8091, %v8082
        %v8093 = vsel %vm8086, %v8089, %v8092
        %v8094 = vsel %vm8083, nan, %v8093
        %v8095 = vand.u32 2147483647, %v1949
        %vm8096 = vcmp.le.f32.partialorder %v8095, 0.7853982
        %vm8097 = vcmp.lt.s32.totalorder %v1949, 0
        %v8098 = vand.u32 %v1949, 2139095040
        %v8099 = vshrl.u32 %v8098, 23
        %v8100 = vsub.s32 %v8099, 127
        %v8101 = vand.u32 2147483647, %v1949
        %v8102 = vand.u32 %v8101, 8388607
        %v8103 = vor.u32 %v8102, 8388608
        %v8104 = vsub.s32 0, %v8103
        %v8105 = vadd.s32 %v8100, 1
        %vm8106 = vcmp.gt.s32.totalorder %v8105, 0
        %v8107 = vsel %vm8106, %v8105, 0
        %v8108 = vshrl.u32 %v8107, 5
        %v8109 = vand.u32 %v8107, 31
        %v8110 = vsub.s32 32, %v8109
        %v8111 = vshrl.u32 683565275, %v8110
        %v8112 = vshll.u32 683565275, %v8109
        %v8113 = vshrl.u32 2475754826, %v8110
        %v8114 = vor.u32 %v8112, %v8113
        %v8115 = vshll.u32 2475754826, %v8109
        %v8116 = vshrl.u32 2131351028, %v8110
        %v8117 = vor.u32 %v8115, %v8116
        %v8118 = vshll.u32 2131351028, %v8109
        %v8119 = vshrl.u32 2102212464, %v8110
        %v8120 = vor.u32 %v8118, %v8119
        %v8121 = vshll.u32 2102212464, %v8109
        %v8122 = vshrl.u32 920167782, %v8110
        %v8123 = vor.u32 %v8121, %v8122
        %v8124 = vshll.u32 920167782, %v8109
        %v8125 = vshrl.u32 1326507024, %v8110
        %v8126 = vor.u32 %v8124, %v8125
        %vm8127 = vcmp.lt.s32.totalorder %v8108, 1
        %vm8128 = vcmp.lt.s32.totalorder %v8108, 2
        %vm8129 = vcmp.lt.s32.totalorder %v8108, 3
        %vm8130 = vcmp.lt.s32.totalorder %v8108, 4
        %v8131 = vsel %vm8127, %v8111, %v8114
        %v8132 = vsel %vm8130, %v8120, 2102212464
        %v8133 = vsel %vm8129, %v8117, %v8132
        %v8134 = vsel %vm8128, %v8131, %v8133
        %v8135 = vsel %vm8127, %v8114, %v8117
        %v8136 = vsel %vm8130, %v8123, 920167782
        %v8137 = vsel %vm8129, %v8120, %v8136
        %v8138 = vsel %vm8128, %v8135, %v8137
        %v8139 = vsel %vm8127, %v8117, %v8120
        %v8140 = vsel %vm8130, %v8126, 1326507024
        %v8141 = vsel %vm8129, %v8123, %v8140
        %v8142 = vsel %vm8128, %v8139, %v8141
        %v8143 = vshll.u32 %v8103, 8
        %v8144 = vmul.u32.u64.compose %v8143, %v8142
        %v8145 = vextract.low.u32 %v8144
        %v8146 = vextract.high.u32 %v8144
        %v8147 = vmul.u32.u64.compose %v8143, %v8138
        %v8148 = vextract.low.u32 %v8147
        %v8149 = vextract.high.u32 %v8147
        %v8150 = vmul.u32 %v8143, %v8134
        %v8151 = vadd.s32 %v8146, %v8148
        %vm8152 = vc.u32 %v8146, %v8148
        %v8153 = vadd.s32 %v8149, 1
        %v8154 = vsel %vm8152, %v8153, %v8149
        %v8155 = vadd.s32 %v8150, %v8154
        %v8156 = vadd.s32 %v8155, 536870912
        %v8157 = vshrl.u32 %v8156, 30
        %v8158 = vshll.u32 %v8157, 30
        %v8159 = vsub.s32 %v8155, %v8158
        %vm8160 = vcmp.lt.s32.totalorder %v8159, 0
        %v8161 = vsub.s32 0, %v8159
        %v8162 = vsel %vm8160, %v8161, %v8159
        %v8163 = vclz %v8162
        %v8164 = vsub.s32 %v8163, 2
        %vm8165 = vcmp.gt.s32.totalorder 0, %v8164
        %v8166 = vsel %vm8165, 0, %v8164
        %v8167 = vsub.s32 32, %v8166
        %v8168 = vshll.u32 %v8159, %v8166
        %v8169 = vshrl.u32 %v8151, %v8167
        %v8170 = vor.u32 %v8168, %v8169
        %v8171 = vsub.s32 4294967266, %v8166
        %v8172 = vadd.s32 %v8171, 127
        %v8173 = vshll.u32 %v8172, 23
        %v8174 = vor.u32 4788187, %v8173
        %v8175 = vand.u32 2147483647, %v8174
        %v8177 = vcvt.s32.f32 %v8170
        %v8178 = vmul.f32 %v8177, %v8175
        %v8179 = vxor.u32 %v8178, 2147483648
        %v8180 = vsel %vm8097, %v8179, %v8178
        %v8181 = vsub.s32 4, %v8157
        %v8182 = vsel %vm8097, %v8181, %v8157
        %v8183 = vsel %vm8096, %v1949, %v8180
        %v8184 = vsel %vm8096, 0, %v8182
        %v8185 = vcosq.f32.pop %v8183
        %v8186 = vsinq.f32.pop %v8183
        %vm8187 = vweird.f32 %v1949
        %v8188 = vadd.s32 %v8184, 3
        %v8189 = vand.u32 %v8188, 3
        %vm8190 = vcmp.lt.s32.totalorder %v8189, 2
        %vm8191 = vcmp.eq.s32.totalorder %v8189, 0
        %v8192 = vxor.u32 %v8186, 2147483648
        %v8193 = vsel %vm8191, %v8185, %v8192
        %vm8194 = vcmp.eq.s32.totalorder %v8189, 2
        %v8195 = vxor.u32 %v8185, 2147483648
        %v8196 = vsel %vm8194, %v8195, %v8186
        %v8197 = vsel %vm8190, %v8193, %v8196
        %v8198 = vsel %vm8187, nan, %v8197
        %v8199 = vand.u32 2147483647, %v1955
        %vm8200 = vcmp.le.f32.partialorder %v8199, 0.7853982
        %vm8201 = vcmp.lt.s32.totalorder %v1955, 0
        %v8202 = vand.u32 %v1955, 2139095040
        %v8203 = vshrl.u32 %v8202, 23
        %v8204 = vsub.s32 %v8203, 127
        %v8205 = vand.u32 2147483647, %v1955
        %v8206 = vand.u32 %v8205, 8388607
        %v8207 = vor.u32 %v8206, 8388608
        %v8208 = vsub.s32 0, %v8207
        %v8209 = vadd.s32 %v8204, 1
        %vm8210 = vcmp.gt.s32.totalorder %v8209, 0
        %v8211 = vsel %vm8210, %v8209, 0
        %v8212 = vshrl.u32 %v8211, 5
        %v8213 = vand.u32 %v8211, 31
        %v8214 = vsub.s32 32, %v8213
        %v8215 = vshrl.u32 683565275, %v8214
        %v8216 = vshll.u32 683565275, %v8213
        %v8217 = vshrl.u32 2475754826, %v8214
        %v8218 = vor.u32 %v8216, %v8217
        %v8219 = vshll.u32 2475754826, %v8213
        %v8220 = vshrl.u32 2131351028, %v8214
        %v8221 = vor.u32 %v8219, %v8220
        %v8222 = vshll.u32 2131351028, %v8213
        %v8223 = vshrl.u32 2102212464, %v8214
        %v8224 = vor.u32 %v8222, %v8223
        %v8225 = vshll.u32 2102212464, %v8213
        %v8226 = vshrl.u32 920167782, %v8214
        %v8227 = vor.u32 %v8225, %v8226
        %v8228 = vshll.u32 920167782, %v8213
        %v8229 = vshrl.u32 1326507024, %v8214
        %v8230 = vor.u32 %v8228, %v8229
        %vm8231 = vcmp.lt.s32.totalorder %v8212, 1
        %vm8232 = vcmp.lt.s32.totalorder %v8212, 2
        %vm8233 = vcmp.lt.s32.totalorder %v8212, 3
        %vm8234 = vcmp.lt.s32.totalorder %v8212, 4
        %v8235 = vsel %vm8231, %v8215, %v8218
        %v8236 = vsel %vm8234, %v8224, 2102212464
        %v8237 = vsel %vm8233, %v8221, %v8236
        %v8238 = vsel %vm8232, %v8235, %v8237
        %v8239 = vsel %vm8231, %v8218, %v8221
        %v8240 = vsel %vm8234, %v8227, 920167782
        %v8241 = vsel %vm8233, %v8224, %v8240
        %v8242 = vsel %vm8232, %v8239, %v8241
        %v8243 = vsel %vm8231, %v8221, %v8224
        %v8244 = vsel %vm8234, %v8230, 1326507024
        %v8245 = vsel %vm8233, %v8227, %v8244
        %v8246 = vsel %vm8232, %v8243, %v8245
        %v8247 = vshll.u32 %v8207, 8
        %v8248 = vmul.u32.u64.compose %v8247, %v8246
        %v8249 = vextract.low.u32 %v8248
        %v8250 = vextract.high.u32 %v8248
        %v8251 = vmul.u32.u64.compose %v8247, %v8242
        %v8252 = vextract.low.u32 %v8251
        %v8253 = vextract.high.u32 %v8251
        %v8254 = vmul.u32 %v8247, %v8238
        %v8255 = vadd.s32 %v8250, %v8252
        %vm8256 = vc.u32 %v8250, %v8252
        %v8257 = vadd.s32 %v8253, 1
        %v8258 = vsel %vm8256, %v8257, %v8253
        %v8259 = vadd.s32 %v8254, %v8258
        %v8260 = vadd.s32 %v8259, 536870912
        %v8261 = vshrl.u32 %v8260, 30
        %v8262 = vshll.u32 %v8261, 30
        %v8263 = vsub.s32 %v8259, %v8262
        %vm8264 = vcmp.lt.s32.totalorder %v8263, 0
        %v8265 = vsub.s32 0, %v8263
        %v8266 = vsel %vm8264, %v8265, %v8263
        %v8267 = vclz %v8266
        %v8268 = vsub.s32 %v8267, 2
        %vm8269 = vcmp.gt.s32.totalorder 0, %v8268
        %v8270 = vsel %vm8269, 0, %v8268
        %v8271 = vsub.s32 32, %v8270
        %v8272 = vshll.u32 %v8263, %v8270
        %v8273 = vshrl.u32 %v8255, %v8271
        %v8274 = vor.u32 %v8272, %v8273
        %v8275 = vsub.s32 4294967266, %v8270
        %v8276 = vadd.s32 %v8275, 127
        %v8277 = vshll.u32 %v8276, 23
        %v8278 = vor.u32 4788187, %v8277
        %v8279 = vand.u32 2147483647, %v8278
        %v8281 = vcvt.s32.f32 %v8274
        %v8282 = vmul.f32 %v8281, %v8279
        %v8283 = vxor.u32 %v8282, 2147483648
        %v8284 = vsel %vm8201, %v8283, %v8282
        %v8285 = vsub.s32 4, %v8261
        %v8286 = vsel %vm8201, %v8285, %v8261
        %v8287 = vsel %vm8200, %v1955, %v8284
        %v8288 = vsel %vm8200, 0, %v8286
        %v8289 = vcosq.f32.pop %v8287
        %v8290 = vsinq.f32.pop %v8287
        %vm8291 = vweird.f32 %v1955
        %v8292 = vadd.s32 %v8288, 3
        %v8293 = vand.u32 %v8292, 3
        %vm8294 = vcmp.lt.s32.totalorder %v8293, 2
        %vm8295 = vcmp.eq.s32.totalorder %v8293, 0
        %v8296 = vxor.u32 %v8290, 2147483648
        %v8297 = vsel %vm8295, %v8289, %v8296
        %vm8298 = vcmp.eq.s32.totalorder %v8293, 2
        %v8299 = vxor.u32 %v8289, 2147483648
        %v8300 = vsel %vm8298, %v8299, %v8290
        %v8301 = vsel %vm8294, %v8297, %v8300
        %v8302 = vsel %vm8291, nan, %v8301
        %v8303 = vand.u32 2147483647, %v1961
        %vm8304 = vcmp.le.f32.partialorder %v8303, 0.7853982
        %vm8305 = vcmp.lt.s32.totalorder %v1961, 0
        %v8306 = vand.u32 %v1961, 2139095040
        %v8307 = vshrl.u32 %v8306, 23
        %v8308 = vsub.s32 %v8307, 127
        %v8309 = vand.u32 2147483647, %v1961
        %v8310 = vand.u32 %v8309, 8388607
        %v8311 = vor.u32 %v8310, 8388608
        %v8312 = vsub.s32 0, %v8311
        %v8313 = vadd.s32 %v8308, 1
        %vm8314 = vcmp.gt.s32.totalorder %v8313, 0
        %v8315 = vsel %vm8314, %v8313, 0
        %v8316 = vshrl.u32 %v8315, 5
        %v8317 = vand.u32 %v8315, 31
        %v8318 = vsub.s32 32, %v8317
        %v8319 = vshrl.u32 683565275, %v8318
        %v8320 = vshll.u32 683565275, %v8317
        %v8321 = vshrl.u32 2475754826, %v8318
        %v8322 = vor.u32 %v8320, %v8321
        %v8323 = vshll.u32 2475754826, %v8317
        %v8324 = vshrl.u32 2131351028, %v8318
        %v8325 = vor.u32 %v8323, %v8324
        %v8326 = vshll.u32 2131351028, %v8317
        %v8327 = vshrl.u32 2102212464, %v8318
        %v8328 = vor.u32 %v8326, %v8327
        %v8329 = vshll.u32 2102212464, %v8317
        %v8330 = vshrl.u32 920167782, %v8318
        %v8331 = vor.u32 %v8329, %v8330
        %v8332 = vshll.u32 920167782, %v8317
        %v8333 = vshrl.u32 1326507024, %v8318
        %v8334 = vor.u32 %v8332, %v8333
        %vm8335 = vcmp.lt.s32.totalorder %v8316, 1
        %vm8336 = vcmp.lt.s32.totalorder %v8316, 2
        %vm8337 = vcmp.lt.s32.totalorder %v8316, 3
        %vm8338 = vcmp.lt.s32.totalorder %v8316, 4
        %v8339 = vsel %vm8335, %v8319, %v8322
        %v8340 = vsel %vm8338, %v8328, 2102212464
        %v8341 = vsel %vm8337, %v8325, %v8340
        %v8342 = vsel %vm8336, %v8339, %v8341
        %v8343 = vsel %vm8335, %v8322, %v8325
        %v8344 = vsel %vm8338, %v8331, 920167782
        %v8345 = vsel %vm8337, %v8328, %v8344
        %v8346 = vsel %vm8336, %v8343, %v8345
        %v8347 = vsel %vm8335, %v8325, %v8328
        %v8348 = vsel %vm8338, %v8334, 1326507024
        %v8349 = vsel %vm8337, %v8331, %v8348
        %v8350 = vsel %vm8336, %v8347, %v8349
        %v8351 = vshll.u32 %v8311, 8
        %v8352 = vmul.u32.u64.compose %v8351, %v8350
        %v8353 = vextract.low.u32 %v8352
        %v8354 = vextract.high.u32 %v8352
        %v8355 = vmul.u32.u64.compose %v8351, %v8346
        %v8356 = vextract.low.u32 %v8355
        %v8357 = vextract.high.u32 %v8355
        %v8358 = vmul.u32 %v8351, %v8342
        %v8359 = vadd.s32 %v8354, %v8356
        %vm8360 = vc.u32 %v8354, %v8356
        %v8361 = vadd.s32 %v8357, 1
        %v8362 = vsel %vm8360, %v8361, %v8357
        %v8363 = vadd.s32 %v8358, %v8362
        %v8364 = vadd.s32 %v8363, 536870912
        %v8365 = vshrl.u32 %v8364, 30
        %v8366 = vshll.u32 %v8365, 30
        %v8367 = vsub.s32 %v8363, %v8366
        %vm8368 = vcmp.lt.s32.totalorder %v8367, 0
        %v8369 = vsub.s32 0, %v8367
        %v8370 = vsel %vm8368, %v8369, %v8367
        %v8371 = vclz %v8370
        %v8372 = vsub.s32 %v8371, 2
        %vm8373 = vcmp.gt.s32.totalorder 0, %v8372
        %v8374 = vsel %vm8373, 0, %v8372
        %v8375 = vsub.s32 32, %v8374
        %v8376 = vshll.u32 %v8367, %v8374
        %v8377 = vshrl.u32 %v8359, %v8375
        %v8378 = vor.u32 %v8376, %v8377
        %v8379 = vsub.s32 4294967266, %v8374
        %v8380 = vadd.s32 %v8379, 127
        %v8381 = vshll.u32 %v8380, 23
        %v8382 = vor.u32 4788187, %v8381
        %v8383 = vand.u32 2147483647, %v8382
        %v8385 = vcvt.s32.f32 %v8378
        %v8386 = vmul.f32 %v8385, %v8383
        %v8387 = vxor.u32 %v8386, 2147483648
        %v8388 = vsel %vm8305, %v8387, %v8386
        %v8389 = vsub.s32 4, %v8365
        %v8390 = vsel %vm8305, %v8389, %v8365
        %v8391 = vsel %vm8304, %v1961, %v8388
        %v8392 = vsel %vm8304, 0, %v8390
        %v8393 = vcosq.f32.pop %v8391
        %v8394 = vsinq.f32.pop %v8391
        %vm8395 = vweird.f32 %v1961
        %v8396 = vadd.s32 %v8392, 3
        %v8397 = vand.u32 %v8396, 3
        %vm8398 = vcmp.lt.s32.totalorder %v8397, 2
        %vm8399 = vcmp.eq.s32.totalorder %v8397, 0
        %v8400 = vxor.u32 %v8394, 2147483648
        %v8401 = vsel %vm8399, %v8393, %v8400
        %vm8402 = vcmp.eq.s32.totalorder %v8397, 2
        %v8403 = vxor.u32 %v8393, 2147483648
        %v8404 = vsel %vm8402, %v8403, %v8394
        %v8405 = vsel %vm8398, %v8401, %v8404
        %v8406 = vsel %vm8395, nan, %v8405
        %v8407 = vand.u32 2147483647, %v1967
        %vm8408 = vcmp.le.f32.partialorder %v8407, 0.7853982
        %vm8409 = vcmp.lt.s32.totalorder %v1967, 0
        %v8410 = vand.u32 %v1967, 2139095040
        %v8411 = vshrl.u32 %v8410, 23
        %v8412 = vsub.s32 %v8411, 127
        %v8413 = vand.u32 2147483647, %v1967
        %v8414 = vand.u32 %v8413, 8388607
        %v8415 = vor.u32 %v8414, 8388608
        %v8416 = vsub.s32 0, %v8415
        %v8417 = vadd.s32 %v8412, 1
        %vm8418 = vcmp.gt.s32.totalorder %v8417, 0
        %v8419 = vsel %vm8418, %v8417, 0
        %v8420 = vshrl.u32 %v8419, 5
        %v8421 = vand.u32 %v8419, 31
        %v8422 = vsub.s32 32, %v8421
        %v8423 = vshrl.u32 683565275, %v8422
        %v8424 = vshll.u32 683565275, %v8421
        %v8425 = vshrl.u32 2475754826, %v8422
        %v8426 = vor.u32 %v8424, %v8425
        %v8427 = vshll.u32 2475754826, %v8421
        %v8428 = vshrl.u32 2131351028, %v8422
        %v8429 = vor.u32 %v8427, %v8428
        %v8430 = vshll.u32 2131351028, %v8421
        %v8431 = vshrl.u32 2102212464, %v8422
        %v8432 = vor.u32 %v8430, %v8431
        %v8433 = vshll.u32 2102212464, %v8421
        %v8434 = vshrl.u32 920167782, %v8422
        %v8435 = vor.u32 %v8433, %v8434
        %v8436 = vshll.u32 920167782, %v8421
        %v8437 = vshrl.u32 1326507024, %v8422
        %v8438 = vor.u32 %v8436, %v8437
        %vm8439 = vcmp.lt.s32.totalorder %v8420, 1
        %vm8440 = vcmp.lt.s32.totalorder %v8420, 2
        %vm8441 = vcmp.lt.s32.totalorder %v8420, 3
        %vm8442 = vcmp.lt.s32.totalorder %v8420, 4
        %v8443 = vsel %vm8439, %v8423, %v8426
        %v8444 = vsel %vm8442, %v8432, 2102212464
        %v8445 = vsel %vm8441, %v8429, %v8444
        %v8446 = vsel %vm8440, %v8443, %v8445
        %v8447 = vsel %vm8439, %v8426, %v8429
        %v8448 = vsel %vm8442, %v8435, 920167782
        %v8449 = vsel %vm8441, %v8432, %v8448
        %v8450 = vsel %vm8440, %v8447, %v8449
        %v8451 = vsel %vm8439, %v8429, %v8432
        %v8452 = vsel %vm8442, %v8438, 1326507024
        %v8453 = vsel %vm8441, %v8435, %v8452
        %v8454 = vsel %vm8440, %v8451, %v8453
        %v8455 = vshll.u32 %v8415, 8
        %v8456 = vmul.u32.u64.compose %v8455, %v8454
        %v8457 = vextract.low.u32 %v8456
        %v8458 = vextract.high.u32 %v8456
        %v8459 = vmul.u32.u64.compose %v8455, %v8450
        %v8460 = vextract.low.u32 %v8459
        %v8461 = vextract.high.u32 %v8459
        %v8462 = vmul.u32 %v8455, %v8446
        %v8463 = vadd.s32 %v8458, %v8460
        %vm8464 = vc.u32 %v8458, %v8460
        %v8465 = vadd.s32 %v8461, 1
        %v8466 = vsel %vm8464, %v8465, %v8461
        %v8467 = vadd.s32 %v8462, %v8466
        %v8468 = vadd.s32 %v8467, 536870912
        %v8469 = vshrl.u32 %v8468, 30
        %v8470 = vshll.u32 %v8469, 30
        %v8471 = vsub.s32 %v8467, %v8470
        %vm8472 = vcmp.lt.s32.totalorder %v8471, 0
        %v8473 = vsub.s32 0, %v8471
        %v8474 = vsel %vm8472, %v8473, %v8471
        %v8475 = vclz %v8474
        %v8476 = vsub.s32 %v8475, 2
        %vm8477 = vcmp.gt.s32.totalorder 0, %v8476
        %v8478 = vsel %vm8477, 0, %v8476
        %v8479 = vsub.s32 32, %v8478
        %v8480 = vshll.u32 %v8471, %v8478
        %v8481 = vshrl.u32 %v8463, %v8479
        %v8482 = vor.u32 %v8480, %v8481
        %v8483 = vsub.s32 4294967266, %v8478
        %v8484 = vadd.s32 %v8483, 127
        %v8485 = vshll.u32 %v8484, 23
        %v8486 = vor.u32 4788187, %v8485
        %v8487 = vand.u32 2147483647, %v8486
        %v8489 = vcvt.s32.f32 %v8482
        %v8490 = vmul.f32 %v8489, %v8487
        %v8491 = vxor.u32 %v8490, 2147483648
        %v8492 = vsel %vm8409, %v8491, %v8490
        %v8493 = vsub.s32 4, %v8469
        %v8494 = vsel %vm8409, %v8493, %v8469
        %v8495 = vsel %vm8408, %v1967, %v8492
        %v8496 = vsel %vm8408, 0, %v8494
        %v8497 = vcosq.f32.pop %v8495
        %v8498 = vsinq.f32.pop %v8495
        %vm8499 = vweird.f32 %v1967
        %v8500 = vadd.s32 %v8496, 3
        %v8501 = vand.u32 %v8500, 3
        %vm8502 = vcmp.lt.s32.totalorder %v8501, 2
        %vm8503 = vcmp.eq.s32.totalorder %v8501, 0
        %v8504 = vxor.u32 %v8498, 2147483648
        %v8505 = vsel %vm8503, %v8497, %v8504
        %vm8506 = vcmp.eq.s32.totalorder %v8501, 2
        %v8507 = vxor.u32 %v8497, 2147483648
        %v8508 = vsel %vm8506, %v8507, %v8498
        %v8509 = vsel %vm8502, %v8505, %v8508
        %v8510 = vsel %vm8499, nan, %v8509
        %v8511 = vand.u32 2147483647, %v1973
        %vm8512 = vcmp.le.f32.partialorder %v8511, 0.7853982
        %vm8513 = vcmp.lt.s32.totalorder %v1973, 0
        %v8514 = vand.u32 %v1973, 2139095040
        %v8515 = vshrl.u32 %v8514, 23
        %v8516 = vsub.s32 %v8515, 127
        %v8517 = vand.u32 2147483647, %v1973
        %v8518 = vand.u32 %v8517, 8388607
        %v8519 = vor.u32 %v8518, 8388608
        %v8520 = vsub.s32 0, %v8519
        %v8521 = vadd.s32 %v8516, 1
        %vm8522 = vcmp.gt.s32.totalorder %v8521, 0
        %v8523 = vsel %vm8522, %v8521, 0
        %v8524 = vshrl.u32 %v8523, 5
        %v8525 = vand.u32 %v8523, 31
        %v8526 = vsub.s32 32, %v8525
        %v8527 = vshrl.u32 683565275, %v8526
        %v8528 = vshll.u32 683565275, %v8525
        %v8529 = vshrl.u32 2475754826, %v8526
        %v8530 = vor.u32 %v8528, %v8529
        %v8531 = vshll.u32 2475754826, %v8525
        %v8532 = vshrl.u32 2131351028, %v8526
        %v8533 = vor.u32 %v8531, %v8532
        %v8534 = vshll.u32 2131351028, %v8525
        %v8535 = vshrl.u32 2102212464, %v8526
        %v8536 = vor.u32 %v8534, %v8535
        %v8537 = vshll.u32 2102212464, %v8525
        %v8538 = vshrl.u32 920167782, %v8526
        %v8539 = vor.u32 %v8537, %v8538
        %v8540 = vshll.u32 920167782, %v8525
        %v8541 = vshrl.u32 1326507024, %v8526
        %v8542 = vor.u32 %v8540, %v8541
        %vm8543 = vcmp.lt.s32.totalorder %v8524, 1
        %vm8544 = vcmp.lt.s32.totalorder %v8524, 2
        %vm8545 = vcmp.lt.s32.totalorder %v8524, 3
        %vm8546 = vcmp.lt.s32.totalorder %v8524, 4
        %v8547 = vsel %vm8543, %v8527, %v8530
        %v8548 = vsel %vm8546, %v8536, 2102212464
        %v8549 = vsel %vm8545, %v8533, %v8548
        %v8550 = vsel %vm8544, %v8547, %v8549
        %v8551 = vsel %vm8543, %v8530, %v8533
        %v8552 = vsel %vm8546, %v8539, 920167782
        %v8553 = vsel %vm8545, %v8536, %v8552
        %v8554 = vsel %vm8544, %v8551, %v8553
        %v8555 = vsel %vm8543, %v8533, %v8536
        %v8556 = vsel %vm8546, %v8542, 1326507024
        %v8557 = vsel %vm8545, %v8539, %v8556
        %v8558 = vsel %vm8544, %v8555, %v8557
        %v8559 = vshll.u32 %v8519, 8
        %v8560 = vmul.u32.u64.compose %v8559, %v8558
        %v8561 = vextract.low.u32 %v8560
        %v8562 = vextract.high.u32 %v8560
        %v8563 = vmul.u32.u64.compose %v8559, %v8554
        %v8564 = vextract.low.u32 %v8563
        %v8565 = vextract.high.u32 %v8563
        %v8566 = vmul.u32 %v8559, %v8550
        %v8567 = vadd.s32 %v8562, %v8564
        %vm8568 = vc.u32 %v8562, %v8564
        %v8569 = vadd.s32 %v8565, 1
        %v8570 = vsel %vm8568, %v8569, %v8565
        %v8571 = vadd.s32 %v8566, %v8570
        %v8572 = vadd.s32 %v8571, 536870912
        %v8573 = vshrl.u32 %v8572, 30
        %v8574 = vshll.u32 %v8573, 30
        %v8575 = vsub.s32 %v8571, %v8574
        %vm8576 = vcmp.lt.s32.totalorder %v8575, 0
        %v8577 = vsub.s32 0, %v8575
        %v8578 = vsel %vm8576, %v8577, %v8575
        %v8579 = vclz %v8578
        %v8580 = vsub.s32 %v8579, 2
        %vm8581 = vcmp.gt.s32.totalorder 0, %v8580
        %v8582 = vsel %vm8581, 0, %v8580
        %v8583 = vsub.s32 32, %v8582
        %v8584 = vshll.u32 %v8575, %v8582
        %v8585 = vshrl.u32 %v8567, %v8583
        %v8586 = vor.u32 %v8584, %v8585
        %v8587 = vsub.s32 4294967266, %v8582
        %v8588 = vadd.s32 %v8587, 127
        %v8589 = vshll.u32 %v8588, 23
        %v8590 = vor.u32 4788187, %v8589
        %v8591 = vand.u32 2147483647, %v8590
        %v8593 = vcvt.s32.f32 %v8586
        %v8594 = vmul.f32 %v8593, %v8591
        %v8595 = vxor.u32 %v8594, 2147483648
        %v8596 = vsel %vm8513, %v8595, %v8594
        %v8597 = vsub.s32 4, %v8573
        %v8598 = vsel %vm8513, %v8597, %v8573
        %v8599 = vsel %vm8512, %v1973, %v8596
        %v8600 = vsel %vm8512, 0, %v8598
        %v8601 = vcosq.f32.pop %v8599
        %v8602 = vsinq.f32.pop %v8599
        %vm8603 = vweird.f32 %v1973
        %v8604 = vadd.s32 %v8600, 3
        %v8605 = vand.u32 %v8604, 3
        %vm8606 = vcmp.lt.s32.totalorder %v8605, 2
        %vm8607 = vcmp.eq.s32.totalorder %v8605, 0
        %v8608 = vxor.u32 %v8602, 2147483648
        %v8609 = vsel %vm8607, %v8601, %v8608
        %vm8610 = vcmp.eq.s32.totalorder %v8605, 2
        %v8611 = vxor.u32 %v8601, 2147483648
        %v8612 = vsel %vm8610, %v8611, %v8602
        %v8613 = vsel %vm8606, %v8609, %v8612
        %v8614 = vsel %vm8603, nan, %v8613
        %v8615 = vand.u32 2147483647, %v1979
        %vm8616 = vcmp.le.f32.partialorder %v8615, 0.7853982
        %vm8617 = vcmp.lt.s32.totalorder %v1979, 0
        %v8618 = vand.u32 %v1979, 2139095040
        %v8619 = vshrl.u32 %v8618, 23
        %v8620 = vsub.s32 %v8619, 127
        %v8621 = vand.u32 2147483647, %v1979
        %v8622 = vand.u32 %v8621, 8388607
        %v8623 = vor.u32 %v8622, 8388608
        %v8624 = vsub.s32 0, %v8623
        %v8625 = vadd.s32 %v8620, 1
        %vm8626 = vcmp.gt.s32.totalorder %v8625, 0
        %v8627 = vsel %vm8626, %v8625, 0
        %v8628 = vshrl.u32 %v8627, 5
        %v8629 = vand.u32 %v8627, 31
        %v8630 = vsub.s32 32, %v8629
        %v8631 = vshrl.u32 683565275, %v8630
        %v8632 = vshll.u32 683565275, %v8629
        %v8633 = vshrl.u32 2475754826, %v8630
        %v8634 = vor.u32 %v8632, %v8633
        %v8635 = vshll.u32 2475754826, %v8629
        %v8636 = vshrl.u32 2131351028, %v8630
        %v8637 = vor.u32 %v8635, %v8636
        %v8638 = vshll.u32 2131351028, %v8629
        %v8639 = vshrl.u32 2102212464, %v8630
        %v8640 = vor.u32 %v8638, %v8639
        %v8641 = vshll.u32 2102212464, %v8629
        %v8642 = vshrl.u32 920167782, %v8630
        %v8643 = vor.u32 %v8641, %v8642
        %v8644 = vshll.u32 920167782, %v8629
        %v8645 = vshrl.u32 1326507024, %v8630
        %v8646 = vor.u32 %v8644, %v8645
        %vm8647 = vcmp.lt.s32.totalorder %v8628, 1
        %vm8648 = vcmp.lt.s32.totalorder %v8628, 2
        %vm8649 = vcmp.lt.s32.totalorder %v8628, 3
        %vm8650 = vcmp.lt.s32.totalorder %v8628, 4
        %v8651 = vsel %vm8647, %v8631, %v8634
        %v8652 = vsel %vm8650, %v8640, 2102212464
        %v8653 = vsel %vm8649, %v8637, %v8652
        %v8654 = vsel %vm8648, %v8651, %v8653
        %v8655 = vsel %vm8647, %v8634, %v8637
        %v8656 = vsel %vm8650, %v8643, 920167782
        %v8657 = vsel %vm8649, %v8640, %v8656
        %v8658 = vsel %vm8648, %v8655, %v8657
        %v8659 = vsel %vm8647, %v8637, %v8640
        %v8660 = vsel %vm8650, %v8646, 1326507024
        %v8661 = vsel %vm8649, %v8643, %v8660
        %v8662 = vsel %vm8648, %v8659, %v8661
        %v8663 = vshll.u32 %v8623, 8
        %v8664 = vmul.u32.u64.compose %v8663, %v8662
        %v8665 = vextract.low.u32 %v8664
        %v8666 = vextract.high.u32 %v8664
        %v8667 = vmul.u32.u64.compose %v8663, %v8658
        %v8668 = vextract.low.u32 %v8667
        %v8669 = vextract.high.u32 %v8667
        %v8670 = vmul.u32 %v8663, %v8654
        %v8671 = vadd.s32 %v8666, %v8668
        %vm8672 = vc.u32 %v8666, %v8668
        %v8673 = vadd.s32 %v8669, 1
        %v8674 = vsel %vm8672, %v8673, %v8669
        %v8675 = vadd.s32 %v8670, %v8674
        %v8676 = vadd.s32 %v8675, 536870912
        %v8677 = vshrl.u32 %v8676, 30
        %v8678 = vshll.u32 %v8677, 30
        %v8679 = vsub.s32 %v8675, %v8678
        %vm8680 = vcmp.lt.s32.totalorder %v8679, 0
        %v8681 = vsub.s32 0, %v8679
        %v8682 = vsel %vm8680, %v8681, %v8679
        %v8683 = vclz %v8682
        %v8684 = vsub.s32 %v8683, 2
        %vm8685 = vcmp.gt.s32.totalorder 0, %v8684
        %v8686 = vsel %vm8685, 0, %v8684
        %v8687 = vsub.s32 32, %v8686
        %v8688 = vshll.u32 %v8679, %v8686
        %v8689 = vshrl.u32 %v8671, %v8687
        %v8690 = vor.u32 %v8688, %v8689
        %v8691 = vsub.s32 4294967266, %v8686
        %v8692 = vadd.s32 %v8691, 127
        %v8693 = vshll.u32 %v8692, 23
        %v8694 = vor.u32 4788187, %v8693
        %v8695 = vand.u32 2147483647, %v8694
        %v8697 = vcvt.s32.f32 %v8690
        %v8698 = vmul.f32 %v8697, %v8695
        %v8699 = vxor.u32 %v8698, 2147483648
        %v8700 = vsel %vm8617, %v8699, %v8698
        %v8701 = vsub.s32 4, %v8677
        %v8702 = vsel %vm8617, %v8701, %v8677
        %v8703 = vsel %vm8616, %v1979, %v8700
        %v8704 = vsel %vm8616, 0, %v8702
        %v8705 = vcosq.f32.pop %v8703
        %v8706 = vsinq.f32.pop %v8703
        %vm8707 = vweird.f32 %v1979
        %v8708 = vadd.s32 %v8704, 3
        %v8709 = vand.u32 %v8708, 3
        %vm8710 = vcmp.lt.s32.totalorder %v8709, 2
        %vm8711 = vcmp.eq.s32.totalorder %v8709, 0
        %v8712 = vxor.u32 %v8706, 2147483648
        %v8713 = vsel %vm8711, %v8705, %v8712
        %vm8714 = vcmp.eq.s32.totalorder %v8709, 2
        %v8715 = vxor.u32 %v8705, 2147483648
        %v8716 = vsel %vm8714, %v8715, %v8706
        %v8717 = vsel %vm8710, %v8713, %v8716
        %v8718 = vsel %vm8707, nan, %v8717
        %v8719 = vand.u32 2147483647, %v1985
        %vm8720 = vcmp.le.f32.partialorder %v8719, 0.7853982
        %vm8721 = vcmp.lt.s32.totalorder %v1985, 0
        %v8722 = vand.u32 %v1985, 2139095040
        %v8723 = vshrl.u32 %v8722, 23
        %v8724 = vsub.s32 %v8723, 127
        %v8725 = vand.u32 2147483647, %v1985
        %v8726 = vand.u32 %v8725, 8388607
        %v8727 = vor.u32 %v8726, 8388608
        %v8728 = vsub.s32 0, %v8727
        %v8729 = vadd.s32 %v8724, 1
        %vm8730 = vcmp.gt.s32.totalorder %v8729, 0
        %v8731 = vsel %vm8730, %v8729, 0
        %v8732 = vshrl.u32 %v8731, 5
        %v8733 = vand.u32 %v8731, 31
        %v8734 = vsub.s32 32, %v8733
        %v8735 = vshrl.u32 683565275, %v8734
        %v8736 = vshll.u32 683565275, %v8733
        %v8737 = vshrl.u32 2475754826, %v8734
        %v8738 = vor.u32 %v8736, %v8737
        %v8739 = vshll.u32 2475754826, %v8733
        %v8740 = vshrl.u32 2131351028, %v8734
        %v8741 = vor.u32 %v8739, %v8740
        %v8742 = vshll.u32 2131351028, %v8733
        %v8743 = vshrl.u32 2102212464, %v8734
        %v8744 = vor.u32 %v8742, %v8743
        %v8745 = vshll.u32 2102212464, %v8733
        %v8746 = vshrl.u32 920167782, %v8734
        %v8747 = vor.u32 %v8745, %v8746
        %v8748 = vshll.u32 920167782, %v8733
        %v8749 = vshrl.u32 1326507024, %v8734
        %v8750 = vor.u32 %v8748, %v8749
        %vm8751 = vcmp.lt.s32.totalorder %v8732, 1
        %vm8752 = vcmp.lt.s32.totalorder %v8732, 2
        %vm8753 = vcmp.lt.s32.totalorder %v8732, 3
        %vm8754 = vcmp.lt.s32.totalorder %v8732, 4
        %v8755 = vsel %vm8751, %v8735, %v8738
        %v8756 = vsel %vm8754, %v8744, 2102212464
        %v8757 = vsel %vm8753, %v8741, %v8756
        %v8758 = vsel %vm8752, %v8755, %v8757
        %v8759 = vsel %vm8751, %v8738, %v8741
        %v8760 = vsel %vm8754, %v8747, 920167782
        %v8761 = vsel %vm8753, %v8744, %v8760
        %v8762 = vsel %vm8752, %v8759, %v8761
        %v8763 = vsel %vm8751, %v8741, %v8744
        %v8764 = vsel %vm8754, %v8750, 1326507024
        %v8765 = vsel %vm8753, %v8747, %v8764
        %v8766 = vsel %vm8752, %v8763, %v8765
        %v8767 = vshll.u32 %v8727, 8
        %v8768 = vmul.u32.u64.compose %v8767, %v8766
        %v8769 = vextract.low.u32 %v8768
        %v8770 = vextract.high.u32 %v8768
        %v8771 = vmul.u32.u64.compose %v8767, %v8762
        %v8772 = vextract.low.u32 %v8771
        %v8773 = vextract.high.u32 %v8771
        %v8774 = vmul.u32 %v8767, %v8758
        %v8775 = vadd.s32 %v8770, %v8772
        %vm8776 = vc.u32 %v8770, %v8772
        %v8777 = vadd.s32 %v8773, 1
        %v8778 = vsel %vm8776, %v8777, %v8773
        %v8779 = vadd.s32 %v8774, %v8778
        %v8780 = vadd.s32 %v8779, 536870912
        %v8781 = vshrl.u32 %v8780, 30
        %v8782 = vshll.u32 %v8781, 30
        %v8783 = vsub.s32 %v8779, %v8782
        %vm8784 = vcmp.lt.s32.totalorder %v8783, 0
        %v8785 = vsub.s32 0, %v8783
        %v8786 = vsel %vm8784, %v8785, %v8783
        %v8787 = vclz %v8786
        %v8788 = vsub.s32 %v8787, 2
        %vm8789 = vcmp.gt.s32.totalorder 0, %v8788
        %v8790 = vsel %vm8789, 0, %v8788
        %v8791 = vsub.s32 32, %v8790
        %v8792 = vshll.u32 %v8783, %v8790
        %v8793 = vshrl.u32 %v8775, %v8791
        %v8794 = vor.u32 %v8792, %v8793
        %v8795 = vsub.s32 4294967266, %v8790
        %v8796 = vadd.s32 %v8795, 127
        %v8797 = vshll.u32 %v8796, 23
        %v8798 = vor.u32 4788187, %v8797
        %v8799 = vand.u32 2147483647, %v8798
        %v8801 = vcvt.s32.f32 %v8794
        %v8802 = vmul.f32 %v8801, %v8799
        %v8803 = vxor.u32 %v8802, 2147483648
        %v8804 = vsel %vm8721, %v8803, %v8802
        %v8805 = vsub.s32 4, %v8781
        %v8806 = vsel %vm8721, %v8805, %v8781
        %v8807 = vsel %vm8720, %v1985, %v8804
        %v8808 = vsel %vm8720, 0, %v8806
        %v8809 = vcosq.f32.pop %v8807
        %v8810 = vsinq.f32.pop %v8807
        %vm8811 = vweird.f32 %v1985
        %v8812 = vadd.s32 %v8808, 3
        %v8813 = vand.u32 %v8812, 3
        %vm8814 = vcmp.lt.s32.totalorder %v8813, 2
        %vm8815 = vcmp.eq.s32.totalorder %v8813, 0
        %v8816 = vxor.u32 %v8810, 2147483648
        %v8817 = vsel %vm8815, %v8809, %v8816
        %vm8818 = vcmp.eq.s32.totalorder %v8813, 2
        %v8819 = vxor.u32 %v8809, 2147483648
        %v8820 = vsel %vm8818, %v8819, %v8810
        %v8821 = vsel %vm8814, %v8817, %v8820
        %v8822 = vsel %vm8811, nan, %v8821
        %v8823 = vand.u32 2147483647, %v1991
        %vm8824 = vcmp.le.f32.partialorder %v8823, 0.7853982
        %vm8825 = vcmp.lt.s32.totalorder %v1991, 0
        %v8826 = vand.u32 %v1991, 2139095040
        %v8827 = vshrl.u32 %v8826, 23
        %v8828 = vsub.s32 %v8827, 127
        %v8829 = vand.u32 2147483647, %v1991
        %v8830 = vand.u32 %v8829, 8388607
        %v8831 = vor.u32 %v8830, 8388608
        %v8832 = vsub.s32 0, %v8831
        %v8833 = vadd.s32 %v8828, 1
        %vm8834 = vcmp.gt.s32.totalorder %v8833, 0
        %v8835 = vsel %vm8834, %v8833, 0
        %v8836 = vshrl.u32 %v8835, 5
        %v8837 = vand.u32 %v8835, 31
        %v8838 = vsub.s32 32, %v8837
        %v8839 = vshrl.u32 683565275, %v8838
        %v8840 = vshll.u32 683565275, %v8837
        %v8841 = vshrl.u32 2475754826, %v8838
        %v8842 = vor.u32 %v8840, %v8841
        %v8843 = vshll.u32 2475754826, %v8837
        %v8844 = vshrl.u32 2131351028, %v8838
        %v8845 = vor.u32 %v8843, %v8844
        %v8846 = vshll.u32 2131351028, %v8837
        %v8847 = vshrl.u32 2102212464, %v8838
        %v8848 = vor.u32 %v8846, %v8847
        %v8849 = vshll.u32 2102212464, %v8837
        %v8850 = vshrl.u32 920167782, %v8838
        %v8851 = vor.u32 %v8849, %v8850
        %v8852 = vshll.u32 920167782, %v8837
        %v8853 = vshrl.u32 1326507024, %v8838
        %v8854 = vor.u32 %v8852, %v8853
        %vm8855 = vcmp.lt.s32.totalorder %v8836, 1
        %vm8856 = vcmp.lt.s32.totalorder %v8836, 2
        %vm8857 = vcmp.lt.s32.totalorder %v8836, 3
        %vm8858 = vcmp.lt.s32.totalorder %v8836, 4
        %v8859 = vsel %vm8855, %v8839, %v8842
        %v8860 = vsel %vm8858, %v8848, 2102212464
        %v8861 = vsel %vm8857, %v8845, %v8860
        %v8862 = vsel %vm8856, %v8859, %v8861
        %v8863 = vsel %vm8855, %v8842, %v8845
        %v8864 = vsel %vm8858, %v8851, 920167782
        %v8865 = vsel %vm8857, %v8848, %v8864
        %v8866 = vsel %vm8856, %v8863, %v8865
        %v8867 = vsel %vm8855, %v8845, %v8848
        %v8868 = vsel %vm8858, %v8854, 1326507024
        %v8869 = vsel %vm8857, %v8851, %v8868
        %v8870 = vsel %vm8856, %v8867, %v8869
        %v8871 = vshll.u32 %v8831, 8
        %v8872 = vmul.u32.u64.compose %v8871, %v8870
        %v8873 = vextract.low.u32 %v8872
        %v8874 = vextract.high.u32 %v8872
        %v8875 = vmul.u32.u64.compose %v8871, %v8866
        %v8876 = vextract.low.u32 %v8875
        %v8877 = vextract.high.u32 %v8875
        %v8878 = vmul.u32 %v8871, %v8862
        %v8879 = vadd.s32 %v8874, %v8876
        %vm8880 = vc.u32 %v8874, %v8876
        %v8881 = vadd.s32 %v8877, 1
        %v8882 = vsel %vm8880, %v8881, %v8877
        %v8883 = vadd.s32 %v8878, %v8882
        %v8884 = vadd.s32 %v8883, 536870912
        %v8885 = vshrl.u32 %v8884, 30
        %v8886 = vshll.u32 %v8885, 30
        %v8887 = vsub.s32 %v8883, %v8886
        %vm8888 = vcmp.lt.s32.totalorder %v8887, 0
        %v8889 = vsub.s32 0, %v8887
        %v8890 = vsel %vm8888, %v8889, %v8887
        %v8891 = vclz %v8890
        %v8892 = vsub.s32 %v8891, 2
        %vm8893 = vcmp.gt.s32.totalorder 0, %v8892
        %v8894 = vsel %vm8893, 0, %v8892
        %v8895 = vsub.s32 32, %v8894
        %v8896 = vshll.u32 %v8887, %v8894
        %v8897 = vshrl.u32 %v8879, %v8895
        %v8898 = vor.u32 %v8896, %v8897
        %v8899 = vsub.s32 4294967266, %v8894
        %v8900 = vadd.s32 %v8899, 127
        %v8901 = vshll.u32 %v8900, 23
        %v8902 = vor.u32 4788187, %v8901
        %v8903 = vand.u32 2147483647, %v8902
        %v8905 = vcvt.s32.f32 %v8898
        %v8906 = vmul.f32 %v8905, %v8903
        %v8907 = vxor.u32 %v8906, 2147483648
        %v8908 = vsel %vm8825, %v8907, %v8906
        %v8909 = vsub.s32 4, %v8885
        %v8910 = vsel %vm8825, %v8909, %v8885
        %v8911 = vsel %vm8824, %v1991, %v8908
        %v8912 = vsel %vm8824, 0, %v8910
        %v8913 = vcosq.f32.pop %v8911
        %v8914 = vsinq.f32.pop %v8911
        %vm8915 = vweird.f32 %v1991
        %v8916 = vadd.s32 %v8912, 3
        %v8917 = vand.u32 %v8916, 3
        %vm8918 = vcmp.lt.s32.totalorder %v8917, 2
        %vm8919 = vcmp.eq.s32.totalorder %v8917, 0
        %v8920 = vxor.u32 %v8914, 2147483648
        %v8921 = vsel %vm8919, %v8913, %v8920
        %vm8922 = vcmp.eq.s32.totalorder %v8917, 2
        %v8923 = vxor.u32 %v8913, 2147483648
        %v8924 = vsel %vm8922, %v8923, %v8914
        %v8925 = vsel %vm8918, %v8921, %v8924
        %v8926 = vsel %vm8915, nan, %v8925
        %v8927 = vmul.f32 %v7230, %v7366
        %v8928 = vmul.f32 %v7230, %v7470
        %v8929 = vmul.f32 %v7230, %v7574
        %v8930 = vmul.f32 %v7230, %v7678
        %v8931 = vmul.f32 %v7230, %v7782
        %v8932 = vmul.f32 %v7230, %v7886
        %v8933 = vmul.f32 %v7230, %v7990
        %v8934 = vmul.f32 %v7230, %v8094
        %v8935 = vmul.f32 %v7230, %v8198
        %v8936 = vmul.f32 %v7230, %v8302
        %v8937 = vmul.f32 %v7230, %v8406
        %v8938 = vmul.f32 %v7230, %v8510
        %v8939 = vmul.f32 %v7230, %v8614
        %v8940 = vmul.f32 %v7230, %v8718
        %v8941 = vmul.f32 %v7230, %v8822
        %v8942 = vmul.f32 %v7230, %v8926
        %8943 = vst [vmem:[%s436 + $0x18] sm:$0xff] %v8927
        %8944 = vst [vmem:[%s436 + $0x38] sm:$0xff] %v8928
        %8945 = vst [vmem:[%s436 + $0x58] sm:$0xff] %v8929
        %8946 = vst [vmem:[%s436 + $0x78] sm:$0xff] %v8930
        %8947 = vst [vmem:[%s436 + $0x98] sm:$0xff] %v8931
        %8948 = vst [vmem:[%s436 + $0xb8] sm:$0xff] %v8932
        %8949 = vst [vmem:[%s436 + $0xd8] sm:$0xff] %v8933
        %8950 = vst [vmem:[%s436 + $0xf8] sm:$0xff] %v8934
        %8951 = vst [vmem:[%s436 + $0x118] sm:$0xff] %v8935
        %8952 = vst [vmem:[%s436 + $0x138] sm:$0xff] %v8936
        %8953 = vst [vmem:[%s436 + $0x158] sm:$0xff] %v8937
        %8954 = vst [vmem:[%s436 + $0x178] sm:$0xff] %v8938
        %8955 = vst [vmem:[%s436 + $0x198] sm:$0xff] %v8939
        %8956 = vst [vmem:[%s436 + $0x1b8] sm:$0xff] %v8940
        %8957 = vst [vmem:[%s436 + $0x1d8] sm:$0xff] %v8941
        %8958 = vst [vmem:[%s436 + $0x1f8] sm:$0xff] %v8942
        %s8959 = sand.u32 %s315, 1
        %s8960 = scalar_lea.sflag [#allocation5], %s8959
        %s8961 = sand.u32 %s315, 1
        %s8962 = smul.addr %s8961, 512
        %s8963 = scalar_lea.vmem [#allocation4], %s8962
        // Predicated region
        $region73: #{tpu_custom_call.1} parent=71 // pred_check
          %p8964 = pneg %p325
        $region74: #{tpu_custom_call.1} parent=71 // pred_check_branch
          %8966 = sbr.rel (%p8964) target = $region76
        $region75: #{tpu_custom_call.1} parent=71 // pred_region
          %s8967 = smul.u32 16, %s29
          %s8969 = ssub.s32 8192, 8192
          %8970 = vsyncadd %s8960, %s8969
          %s8971 = smul.addr %s8967, 4
          %s8972 = smul.addr %s8971, 128
          %s8973 = scalar_lea.hbm %s13, %s8972
          %s8974 = sshll.u32 %s8963, 4
          %s8975 = int_to_ptr.vmem [resolvable:$true] %s8974
          %8980 = dma.vmem_to_hbm [thread:$0]  %s8975, 8192, %s8973, %s8960, 512, 512, 32
        $region76: #{tpu_custom_call.1} parent=71 // pred_fallthru
          _
      $region72: #{tpu_custom_call.1} parent=5 // pred_fallthru
        _
      %p8981 = scmp.le.s32.totalorder 2, %s24
      // Predicated region
      $region77: #{tpu_custom_call.1} parent=5 // pred_check
        %p8982 = pneg %p8981
      $region78: #{tpu_custom_call.1} parent=5 // pred_check_branch
        %8984 = sbr.rel (%p8982) target = $region80
      $region79: #{tpu_custom_call.1} parent=5 // pred_region
        %s8985 = ssub.s32 %s24, 2
        // Predicated region
        $region81: #{tpu_custom_call.1} parent=79 // pred_check
          %p8986 = pneg %p331
        $region82: #{tpu_custom_call.1} parent=79 // pred_check_branch
          %8988 = sbr.rel (%p8986) target = $region84
        $region83: #{tpu_custom_call.1} parent=79 // pred_region
          %s8989 = sand.u32 %s316, 1
          %s8990 = scalar_lea.sflag [#allocation5], %s8989
          %s8991 = sand.u32 %s316, 1
          %s8992 = smul.addr %s8991, 512
          %s8993 = scalar_lea.vmem [#allocation4], %s8992
          %8994 = dma.done %s8990, 8192
        $region84: #{tpu_custom_call.1} parent=79 // pred_fallthru
          _
      $region80: #{tpu_custom_call.1} parent=5 // pred_fallthru
        _
    $region6: #{tpu_custom_call.1} parent=1 // loop_footer
      %s28 = sadd.s32 1, %s24
    $region7: #{tpu_custom_call.1} parent=1 // loop_footer_branch
      %23 = sbr.rel target = $region3
    $region8: #{tpu_custom_call.1} parent=1 // loop_exit
      _
    %8995 = vsyncpa [#allocation5], 1
    %s8996 = scalar_lea.sflag [#allocation5], 1
    %8997 = vsyncpa %s8996, 1

</llo_original>
